<compile_context>
chip_gen: v5e
topology: v5e:2x2
jax: 0.10.0
libtpu: 0.0.40
codegen_flags: <defaults>
</compile_context>

<pallas_src>
import functools

import jax
import jax.numpy as jnp
from jax.experimental import pallas as pl
from jax.experimental.pallas import tpu as pltpu


# ----------------------------- Pallas kernel --------------------------------


def _grn_block(xb, w_in_ref, b_in_ref, w2_ref, b2_ref, w_gv_ref, b_gv_ref,
               gamma_ref, beta_ref, ln_sum=None, ln_scale=None):
    """Gated Residual Network in the flat (tb, features) layout.

    w_in_ref = [fc1 | skip] fused weights, w_gv_ref = [gate | value] fused weights.
    If `ln_sum` is given, LayerNorm statistics are computed per contiguous column
    group (per-variable LN of the block-diagonal GRN) via a 0/1 group-sum matmul;
    otherwise LayerNorm is over the full last dim.
    """
    hid_w = w2_ref.shape[0]
    t = jnp.dot(xb, w_in_ref[...], preferred_element_type=jnp.float32) + b_in_ref[...]
    h = t[:, :hid_w]                       # split at a 128-lane boundary
    skip = t[:, hid_w:]
    h = jnp.where(h > 0, h, jnp.exp(jnp.minimum(h, 0.0)) - 1.0)        # inf-safe ELU
    e = jnp.dot(h.astype(jnp.bfloat16), w2_ref[...],
                preferred_element_type=jnp.float32) + b2_ref[...]
    gv = jnp.dot(e.astype(jnp.bfloat16), w_gv_ref[...],
                 preferred_element_type=jnp.float32) + b_gv_ref[...]
    half = gv.shape[-1] // 2
    y = jax.nn.sigmoid(gv[:, :half]) * gv[:, half:] + skip             # GLU + skip
    if ln_sum is None:                     # LayerNorm over the full last dim
        mu = jnp.mean(y, axis=-1, keepdims=True)
        d = y - mu
        var = jnp.mean(d * d, axis=-1, keepdims=True)
    else:                                  # per-variable (grouped) LayerNorm
        mu = jnp.dot(y, ln_sum, preferred_element_type=jnp.float32) * ln_scale
        d = y - mu
        var = jnp.dot(d * d, ln_sum, preferred_element_type=jnp.float32) * ln_scale
    return d * jax.lax.rsqrt(var + 1e-5) * gamma_ref[...] + beta_ref[...]


def vsn_kernel(nv, out_f,
               x_ref,
               # grn_concat (fused fc1|skip, gate|value)
               w_in_c, b_in_c, w2_c, b2_c, w_gv_c, b_gv_c, g_c, be_c,
               # softmax block (plain Linear)
               w_sm, b_sm,
               # grn_variables[0] as block-diagonal matrices (shared by all variables)
               w_in_v, b_in_v, w2_v, b2_v, w_gv_v, b_gv_v, g_v, be_v,
               # 0/1 per-variable group-sum matrix for the block-diagonal LayerNorm
               ln_sum_ref,
               # 0/1 same-feature-offset (across variables) sum matrix for the softmax
               var_sum_ref,
               out_ref):
    xb = x_ref[...].astype(jnp.bfloat16)                   # (tb, nv*in_f)

    # --- grn_concat over the flattened inputs (LN over all nv*out_f features) ---
    v = _grn_block(xb, w_in_c, b_in_c, w2_c, b2_c, w_gv_c, b_gv_c, g_c, be_c)

    # --- softmax block (Linear) ---
    s = jnp.dot(v.astype(jnp.bfloat16), w_sm[...],
                preferred_element_type=jnp.float32) + b_sm[...]        # (tb, nv*out_f)

    # --- softmax over the variable axis, kept in the flat lane-dense layout ---
    # Subtracting the per-row max (a constant across variables) leaves the softmax
    # unchanged; the per-feature sum over variables is a 0/1 group-sum matmul on the
    # MXU (lanes stay dense, no reshapes / rolls / lane slicing).
    m = jnp.max(s, axis=-1, keepdims=True)
    es = jnp.exp(s - m)
    denom = jnp.dot(es, var_sum_ref[...], preferred_element_type=jnp.float32)
    sel = es / denom

    # --- per-variable GRN: only grn_variables[0] is ever used (PyTorch zip/split
    #     quirk), so one block-diagonal GRN processes all variables at once ---
    xg = _grn_block(xb, w_in_v, b_in_v, w2_v, b2_v, w_gv_v, b_gv_v, g_v, be_v,
                    ln_sum=ln_sum_ref[...], ln_scale=1.0 / out_f)

    out_ref[...] = (sel * xg).astype(out_ref.dtype)         # single lane-dense store


# ------------------------------- wrapper -------------------------------------


def variable_selection_network(x, packed, *, nv, in_f, out_f, tb=256):
    """x: (B, nv*in_f) float32 -> (B, nv, out_f) float32."""
    B = x.shape[0]
    IN, OUT = nv * in_f, nv * out_f
    assert B % tb == 0 and x.shape[1] == IN

    kernel = functools.partial(vsn_kernel, nv, out_f)
    in_specs = [pl.BlockSpec((tb, IN), lambda i: (i, 0))]
    in_specs += [pl.BlockSpec(w.shape, lambda i: (0, 0)) for w in packed]

    out = pl.pallas_call(
        kernel,
        out_shape=jax.ShapeDtypeStruct((B, OUT), jnp.float32),
        grid=(B // tb,),
        in_specs=in_specs,
        out_specs=pl.BlockSpec((tb, OUT), lambda i: (i, 0)),
        compiler_params=pltpu.CompilerParams(
            dimension_semantics=("parallel",)),   # VMEM use is ~1-2 MiB; default
                                                  # scoped limit is plenty even on v7x
    )(x, *packed)
    return out.reshape(B, nv, out_f)


# --------------------------- parameter construction --------------------------


def make_params(key, *, nv, in_f, out_f, hid):
    """Deterministic synthetic parameters (standard GRN structure), float32."""
    IN, HID, OUT = nv * in_f, nv * hid, nv * out_f
    keys = iter(jax.random.split(key, 32))
    lin = lambda i, o: 0.1 * jax.random.normal(next(keys), (i, o), jnp.float32)
    bias = lambda o: 0.05 * jax.random.normal(next(keys), (o,), jnp.float32)

    def grn(i, h, o, tag):
        return {
            'w1' + tag: lin(i, h), 'b1' + tag: bias(h),     # fc1
            'w2' + tag: lin(h, o), 'b2' + tag: bias(o),     # fc2
            'wg' + tag: lin(o, o), 'bg' + tag: bias(o),     # gate
            'wv' + tag: lin(o, o), 'bv' + tag: bias(o),     # value
            'ws' + tag: lin(i, o), 'bs' + tag: bias(o),     # skip projection
            'g' + tag: jnp.ones((o,), jnp.float32),         # LayerNorm gamma
            'be' + tag: jnp.zeros((o,), jnp.float32),       # LayerNorm beta
        }

    p = {}
    p.update(grn(IN, HID, OUT, 'c'))          # grn_concat
    p['wsm'] = lin(OUT, OUT)                  # softmax block (Linear)
    p['bsm'] = bias(OUT)
    p.update(grn(in_f, hid, out_f, 'v'))      # grn_variables[0]
    return p


def _block_diag(w, n):
    i, o = w.shape
    m = jnp.zeros((n * i, n * o), w.dtype)
    for j in range(n):
        m = m.at[j * i:(j + 1) * i, j * o:(j + 1) * o].set(w)
    return m


def _group_sum_mat(nv, out_f):
    """0/1 matrix summing over each variable's contiguous out_f features."""
    g = jnp.arange(nv * out_f) // out_f
    return (g[:, None] == g[None, :]).astype(jnp.float32)


def _var_sum_mat(nv, out_f):
    """0/1 matrix summing over variables at the same within-variable feature offset."""
    g = jnp.arange(nv * out_f) % out_f
    return (g[:, None] == g[None, :]).astype(jnp.float32)


def pack_params(p, *, nv):
    """Fuse/pack logical params into the kernel's bf16-weight, lane-dense layout."""
    bf = jnp.bfloat16
    row = lambda v: v.reshape(1, -1).astype(jnp.float32)
    bd = lambda w: _block_diag(w, nv)
    tile = lambda v: jnp.tile(v, nv)
    out_f = p['gv'].shape[0]
    return [
        # grn_concat: fused [fc1 | skip] and [gate | value]
        jnp.concatenate([p['w1c'], p['wsc']], axis=1).astype(bf),
        row(jnp.concatenate([p['b1c'], p['bsc']])),
        p['w2c'].astype(bf), row(p['b2c']),
        jnp.concatenate([p['wgc'], p['wvc']], axis=1).astype(bf),
        row(jnp.concatenate([p['bgc'], p['bvc']])),
        row(p['gc']), row(p['bec']),
        # softmax block
        p['wsm'].astype(bf), row(p['bsm']),
        # grn_variables[0] -> block-diagonal (same weights for every variable)
        jnp.concatenate([bd(p['w1v']), bd(p['wsv'])], axis=1).astype(bf),
        row(jnp.concatenate([tile(p['b1v']), tile(p['bsv'])])),
        bd(p['w2v']).astype(bf), row(tile(p['b2v'])),
        jnp.concatenate([bd(p['wgv']), bd(p['wvv'])], axis=1).astype(bf),
        row(jnp.concatenate([tile(p['bgv']), tile(p['bvv'])])),
        row(tile(p['gv'])), row(tile(p['bev'])),
        # per-variable LayerNorm 0/1 group-sum matrix
        _group_sum_mat(nv, out_f),
        # softmax over-variables 0/1 sum matrix
        _var_sum_mat(nv, out_f),
    ]


# ------------------------------ pure JAX reference ---------------------------


def _ref_grn(x, w1, b1, w2, b2, wg, bg, wv, bv, ws, bs, gamma, beta):
    bf = jnp.bfloat16
    dot = lambda a, w: jnp.dot(a.astype(bf), w.astype(bf),
                               preferred_element_type=jnp.float32)
    h = dot(x, w1) + b1
    h = jnp.where(h > 0, h, jnp.exp(jnp.minimum(h, 0.0)) - 1.0)
    e = dot(h, w2) + b2
    y = jax.nn.sigmoid(dot(e, wg) + bg) * (dot(e, wv) + bv) + dot(x, ws) + bs
    mu = jnp.mean(y, axis=-1, keepdims=True)
    d = y - mu
    var = jnp.mean(d * d, axis=-1, keepdims=True)
    return d * jax.lax.rsqrt(var + 1e-5) * gamma + beta


def ref_forward(x, p, *, nv, in_f, out_f):
    bf = jnp.bfloat16
    v = _ref_grn(x, p['w1c'], p['b1c'], p['w2c'], p['b2c'], p['wgc'], p['bgc'],
                 p['wvc'], p['bvc'], p['wsc'], p['bsc'], p['gc'], p['bec'])
    s = jnp.dot(v.astype(bf), p['wsm'].astype(bf),
                preferred_element_type=jnp.float32) + p['bsm']
    sel = jax.nn.softmax(s.reshape(-1, nv, out_f), axis=-2)
    xr = x.reshape(-1, nv, in_f)
    xg = _ref_grn(xr, p['w1v'], p['b1v'], p['w2v'], p['b2v'], p['wgv'], p['bgv'],
                  p['wvv'], p['bvv'], p['wsv'], p['bsv'], p['gv'], p['bev'])
    return sel * xg


# ----------------------------------- main ------------------------------------

if __name__ == "__main__":
    # flat widths: nv*in_f = 64, nv*hid = 128, nv*out_f = 128 (lane-dense output)
    NV, IN_F, OUT_F, HID = 4, 16, 32, 32
    B, TB = 512, 256                            # grid = 2 -> both v7x TCs get a tile

    key = jax.random.PRNGKey(0)
    k_x, k_p = jax.random.split(key)
    x = jax.random.normal(k_x, (B, NV * IN_F), jnp.float32)
    params = make_params(k_p, nv=NV, in_f=IN_F, out_f=OUT_F, hid=HID)
    packed = pack_params(params, nv=NV)

    out = variable_selection_network(x, packed, nv=NV, in_f=IN_F, out_f=OUT_F, tb=TB)
    out = jax.block_until_ready(out)

    ref = ref_forward(x, params, nv=NV, in_f=IN_F, out_f=OUT_F)
    assert out.shape == (B, NV, OUT_F)
    # Tolerance covers bf16 MXU paths and the group-LN / softmax-sum matmuls;
    # structural bugs would be orders of magnitude larger.
    err = float(jnp.max(jnp.abs(out - ref)))
    assert jnp.allclose(out, ref, atol=2e-2, rtol=2e-2), \
        f"mismatch vs reference (max abs err {err})"

    print("KERNEL_OK")
</pallas_src>

<mosaic_0001>
module attributes {stable_mosaic.version = 11 : i64} {
  func.func @vsn_kernel(%arg0: i32, %arg1: memref<256x64xf32, #tpu.memory_space<vmem>>, %arg2: memref<64x256xbf16, #tpu.memory_space<vmem>>, %arg3: memref<1x256xf32, #tpu.memory_space<vmem>>, %arg4: memref<128x128xbf16, #tpu.memory_space<vmem>>, %arg5: memref<1x128xf32, #tpu.memory_space<vmem>>, %arg6: memref<128x256xbf16, #tpu.memory_space<vmem>>, %arg7: memref<1x256xf32, #tpu.memory_space<vmem>>, %arg8: memref<1x128xf32, #tpu.memory_space<vmem>>, %arg9: memref<1x128xf32, #tpu.memory_space<vmem>>, %arg10: memref<128x128xbf16, #tpu.memory_space<vmem>>, %arg11: memref<1x128xf32, #tpu.memory_space<vmem>>, %arg12: memref<64x256xbf16, #tpu.memory_space<vmem>>, %arg13: memref<1x256xf32, #tpu.memory_space<vmem>>, %arg14: memref<128x128xbf16, #tpu.memory_space<vmem>>, %arg15: memref<1x128xf32, #tpu.memory_space<vmem>>, %arg16: memref<128x256xbf16, #tpu.memory_space<vmem>>, %arg17: memref<1x256xf32, #tpu.memory_space<vmem>>, %arg18: memref<1x128xf32, #tpu.memory_space<vmem>>, %arg19: memref<1x128xf32, #tpu.memory_space<vmem>>, %arg20: memref<128x128xf32, #tpu.memory_space<vmem>>, %arg21: memref<128x128xf32, #tpu.memory_space<vmem>>, %arg22: memref<256x128xf32, #tpu.memory_space<vmem>>) attributes {dimension_semantics = [#tpu.dimension_semantics<parallel>], iteration_bounds = array<i64: 2>, scalar_prefetch = 0 : i64, scratch_operands = 0 : i64, tpu.core_type = #tpu.core_type<tc>, window_params = [{transform_indices = @transform_0, window_bounds = array<i64: 256, 64>}, {pipeline_mode = #tpu.pipeline_mode<synchronous>, transform_indices = @transform_1, window_bounds = array<i64: 64, 256>}, {pipeline_mode = #tpu.pipeline_mode<synchronous>, transform_indices = @transform_2, window_bounds = array<i64: 1, 256>}, {pipeline_mode = #tpu.pipeline_mode<synchronous>, transform_indices = @transform_3, window_bounds = array<i64: 128, 128>}, {pipeline_mode = #tpu.pipeline_mode<synchronous>, transform_indices = @transform_4, window_bounds = array<i64: 1, 128>}, {pipeline_mode = #tpu.pipeline_mode<synchronous>, transform_indices = @transform_5, window_bounds = array<i64: 128, 256>}, {pipeline_mode = #tpu.pipeline_mode<synchronous>, transform_indices = @transform_6, window_bounds = array<i64: 1, 256>}, {pipeline_mode = #tpu.pipeline_mode<synchronous>, transform_indices = @transform_7, window_bounds = array<i64: 1, 128>}, {pipeline_mode = #tpu.pipeline_mode<synchronous>, transform_indices = @transform_8, window_bounds = array<i64: 1, 128>}, {pipeline_mode = #tpu.pipeline_mode<synchronous>, transform_indices = @transform_9, window_bounds = array<i64: 128, 128>}, {pipeline_mode = #tpu.pipeline_mode<synchronous>, transform_indices = @transform_10, window_bounds = array<i64: 1, 128>}, {pipeline_mode = #tpu.pipeline_mode<synchronous>, transform_indices = @transform_11, window_bounds = array<i64: 64, 256>}, {pipeline_mode = #tpu.pipeline_mode<synchronous>, transform_indices = @transform_12, window_bounds = array<i64: 1, 256>}, {pipeline_mode = #tpu.pipeline_mode<synchronous>, transform_indices = @transform_13, window_bounds = array<i64: 128, 128>}, {pipeline_mode = #tpu.pipeline_mode<synchronous>, transform_indices = @transform_14, window_bounds = array<i64: 1, 128>}, {pipeline_mode = #tpu.pipeline_mode<synchronous>, transform_indices = @transform_15, window_bounds = array<i64: 128, 256>}, {pipeline_mode = #tpu.pipeline_mode<synchronous>, transform_indices = @transform_16, window_bounds = array<i64: 1, 256>}, {pipeline_mode = #tpu.pipeline_mode<synchronous>, transform_indices = @transform_17, window_bounds = array<i64: 1, 128>}, {pipeline_mode = #tpu.pipeline_mode<synchronous>, transform_indices = @transform_18, window_bounds = array<i64: 1, 128>}, {pipeline_mode = #tpu.pipeline_mode<synchronous>, transform_indices = @transform_19, window_bounds = array<i64: 128, 128>}, {pipeline_mode = #tpu.pipeline_mode<synchronous>, transform_indices = @transform_20, window_bounds = array<i64: 128, 128>}, {transform_indices = @transform_21, window_bounds = array<i64: 256, 128>}]} {
    %c0 = arith.constant 0 : index
    %c0_0 = arith.constant 0 : index
    %0 = vector.load %arg1[%c0, %c0_0] : memref<256x64xf32, #tpu.memory_space<vmem>>, vector<256x64xf32>
    %1 = arith.truncf %0 : vector<256x64xf32> to vector<256x64xbf16>
    %c0_1 = arith.constant 0 : index
    %c0_2 = arith.constant 0 : index
    %2 = vector.load %arg2[%c0_1, %c0_2] : memref<64x256xbf16, #tpu.memory_space<vmem>>, vector<64x256xbf16>
    %cst = arith.constant dense<0.000000e+00> : vector<256x256xf32>
    %3 = tpu.matmul %1, %2, %cst {dimension_numbers = #tpu.dot_dimension_numbers<[1], [0], [0], [1], [0, 0, 1, 1], [], []>} : vector<256x64xbf16>, vector<64x256xbf16>, vector<256x256xf32> -> vector<256x256xf32>
    %c0_3 = arith.constant 0 : index
    %c0_4 = arith.constant 0 : index
    %4 = vector.load %arg3[%c0_3, %c0_4] : memref<1x256xf32, #tpu.memory_space<vmem>>, vector<1x256xf32>
    %5 = vector.broadcast %4 : vector<1x256xf32> to vector<256x256xf32>
    %6 = arith.addf %3, %5 : vector<256x256xf32>
    %7 = vector.extract_strided_slice %6 {offsets = [0, 0], sizes = [256, 128], strides = [1, 1]} : vector<256x256xf32> to vector<256x128xf32>
    %8 = vector.extract_strided_slice %6 {offsets = [0, 128], sizes = [256, 128], strides = [1, 1]} : vector<256x256xf32> to vector<256x128xf32>
    %cst_5 = arith.constant 0.000000e+00 : f32
    %9 = vector.broadcast %cst_5 : f32 to vector<256x128xf32>
    %10 = arith.cmpf ogt, %7, %9 : vector<256x128xf32>
    %cst_6 = arith.constant 0.000000e+00 : f32
    %11 = vector.broadcast %cst_6 : f32 to vector<256x128xf32>
    %12 = arith.minimumf %7, %11 : vector<256x128xf32>
    %13 = math.exp %12 : vector<256x128xf32>
    %cst_7 = arith.constant 1.000000e+00 : f32
    %14 = vector.broadcast %cst_7 : f32 to vector<256x128xf32>
    %15 = arith.subf %13, %14 : vector<256x128xf32>
    %16 = arith.select %10, %7, %15 : vector<256x128xi1>, vector<256x128xf32>
    %17 = arith.truncf %16 : vector<256x128xf32> to vector<256x128xbf16>
    %c0_8 = arith.constant 0 : index
    %c0_9 = arith.constant 0 : index
    %18 = vector.load %arg4[%c0_8, %c0_9] : memref<128x128xbf16, #tpu.memory_space<vmem>>, vector<128x128xbf16>
    %cst_10 = arith.constant dense<0.000000e+00> : vector<256x128xf32>
    %19 = tpu.matmul %17, %18, %cst_10 {dimension_numbers = #tpu.dot_dimension_numbers<[1], [0], [0], [1], [0, 0, 1, 1], [], []>} : vector<256x128xbf16>, vector<128x128xbf16>, vector<256x128xf32> -> vector<256x128xf32>
    %c0_11 = arith.constant 0 : index
    %c0_12 = arith.constant 0 : index
    %20 = vector.load %arg5[%c0_11, %c0_12] : memref<1x128xf32, #tpu.memory_space<vmem>>, vector<1x128xf32>
    %21 = vector.broadcast %20 : vector<1x128xf32> to vector<256x128xf32>
    %22 = arith.addf %19, %21 : vector<256x128xf32>
    %23 = arith.truncf %22 : vector<256x128xf32> to vector<256x128xbf16>
    %c0_13 = arith.constant 0 : index
    %c0_14 = arith.constant 0 : index
    %24 = vector.load %arg6[%c0_13, %c0_14] : memref<128x256xbf16, #tpu.memory_space<vmem>>, vector<128x256xbf16>
    %cst_15 = arith.constant dense<0.000000e+00> : vector<256x256xf32>
    %25 = tpu.matmul %23, %24, %cst_15 {dimension_numbers = #tpu.dot_dimension_numbers<[1], [0], [0], [1], [0, 0, 1, 1], [], []>} : vector<256x128xbf16>, vector<128x256xbf16>, vector<256x256xf32> -> vector<256x256xf32>
    %c0_16 = arith.constant 0 : index
    %c0_17 = arith.constant 0 : index
    %26 = vector.load %arg7[%c0_16, %c0_17] : memref<1x256xf32, #tpu.memory_space<vmem>>, vector<1x256xf32>
    %27 = vector.broadcast %26 : vector<1x256xf32> to vector<256x256xf32>
    %28 = arith.addf %25, %27 : vector<256x256xf32>
    %29 = vector.extract_strided_slice %28 {offsets = [0, 0], sizes = [256, 128], strides = [1, 1]} : vector<256x256xf32> to vector<256x128xf32>
    %30 = arith.negf %29 : vector<256x128xf32>
    %31 = math.exp %30 : vector<256x128xf32>
    %cst_18 = arith.constant 1.000000e+00 : f32
    %32 = vector.broadcast %cst_18 : f32 to vector<256x128xf32>
    %33 = arith.addf %32, %31 : vector<256x128xf32>
    %34 = arith.divf %32, %33 : vector<256x128xf32>
    %35 = vector.extract_strided_slice %28 {offsets = [0, 128], sizes = [256, 128], strides = [1, 1]} : vector<256x256xf32> to vector<256x128xf32>
    %36 = arith.mulf %34, %35 : vector<256x128xf32>
    %37 = arith.addf %36, %8 : vector<256x128xf32>
    %cst_19 = arith.constant dense<0.000000e+00> : vector<256xf32>
    %38 = vector.multi_reduction <add>, %37, %cst_19 [1] : vector<256x128xf32> to vector<256xf32>
    %39 = vector.shape_cast %38 : vector<256xf32> to vector<256x1xf32>
    %cst_20 = arith.constant 1.280000e+02 : f32
    %40 = vector.broadcast %cst_20 : f32 to vector<256x1xf32>
    %41 = arith.divf %39, %40 : vector<256x1xf32>
    %42 = vector.broadcast %41 : vector<256x1xf32> to vector<256x128xf32>
    %43 = arith.subf %37, %42 : vector<256x128xf32>
    %44 = arith.mulf %43, %43 : vector<256x128xf32>
    %cst_21 = arith.constant dense<0.000000e+00> : vector<256xf32>
    %45 = vector.multi_reduction <add>, %44, %cst_21 [1] : vector<256x128xf32> to vector<256xf32>
    %46 = vector.shape_cast %45 : vector<256xf32> to vector<256x1xf32>
    %cst_22 = arith.constant 1.280000e+02 : f32
    %47 = vector.broadcast %cst_22 : f32 to vector<256x1xf32>
    %48 = arith.divf %46, %47 : vector<256x1xf32>
    %cst_23 = arith.constant 9.99999974E-6 : f32
    %49 = vector.broadcast %cst_23 : f32 to vector<256x1xf32>
    %50 = arith.addf %48, %49 : vector<256x1xf32>
    %51 = math.rsqrt %50 : vector<256x1xf32>
    %52 = vector.broadcast %51 : vector<256x1xf32> to vector<256x128xf32>
    %53 = arith.mulf %43, %52 : vector<256x128xf32>
    %c0_24 = arith.constant 0 : index
    %c0_25 = arith.constant 0 : index
    %54 = vector.load %arg8[%c0_24, %c0_25] : memref<1x128xf32, #tpu.memory_space<vmem>>, vector<1x128xf32>
    %55 = vector.broadcast %54 : vector<1x128xf32> to vector<256x128xf32>
    %56 = arith.mulf %53, %55 : vector<256x128xf32>
    %c0_26 = arith.constant 0 : index
    %c0_27 = arith.constant 0 : index
    %57 = vector.load %arg9[%c0_26, %c0_27] : memref<1x128xf32, #tpu.memory_space<vmem>>, vector<1x128xf32>
    %58 = vector.broadcast %57 : vector<1x128xf32> to vector<256x128xf32>
    %59 = arith.addf %56, %58 : vector<256x128xf32>
    %60 = arith.truncf %59 : vector<256x128xf32> to vector<256x128xbf16>
    %c0_28 = arith.constant 0 : index
    %c0_29 = arith.constant 0 : index
    %61 = vector.load %arg10[%c0_28, %c0_29] : memref<128x128xbf16, #tpu.memory_space<vmem>>, vector<128x128xbf16>
    %cst_30 = arith.constant dense<0.000000e+00> : vector<256x128xf32>
    %62 = tpu.matmul %60, %61, %cst_30 {dimension_numbers = #tpu.dot_dimension_numbers<[1], [0], [0], [1], [0, 0, 1, 1], [], []>} : vector<256x128xbf16>, vector<128x128xbf16>, vector<256x128xf32> -> vector<256x128xf32>
    %c0_31 = arith.constant 0 : index
    %c0_32 = arith.constant 0 : index
    %63 = vector.load %arg11[%c0_31, %c0_32] : memref<1x128xf32, #tpu.memory_space<vmem>>, vector<1x128xf32>
    %64 = vector.broadcast %63 : vector<1x128xf32> to vector<256x128xf32>
    %65 = arith.addf %62, %64 : vector<256x128xf32>
    %cst_33 = arith.constant dense<0xFF800000> : vector<256xf32>
    %66 = vector.multi_reduction <maximumf>, %65, %cst_33 [1] : vector<256x128xf32> to vector<256xf32>
    %67 = vector.shape_cast %66 : vector<256xf32> to vector<256x1xf32>
    %68 = vector.broadcast %67 : vector<256x1xf32> to vector<256x128xf32>
    %69 = arith.subf %65, %68 : vector<256x128xf32>
    %70 = math.exp %69 : vector<256x128xf32>
    %c0_34 = arith.constant 0 : index
    %c0_35 = arith.constant 0 : index
    %71 = vector.load %arg21[%c0_34, %c0_35] : memref<128x128xf32, #tpu.memory_space<vmem>>, vector<128x128xf32>
    %cst_36 = arith.constant dense<0.000000e+00> : vector<256x128xf32>
    %72 = tpu.matmul %70, %71, %cst_36 {dimension_numbers = #tpu.dot_dimension_numbers<[1], [0], [0], [1], [0, 0, 1, 1], [], []>} : vector<256x128xf32>, vector<128x128xf32>, vector<256x128xf32> -> vector<256x128xf32>
    %73 = arith.divf %70, %72 : vector<256x128xf32>
    %c0_37 = arith.constant 0 : index
    %c0_38 = arith.constant 0 : index
    %74 = vector.load %arg20[%c0_37, %c0_38] : memref<128x128xf32, #tpu.memory_space<vmem>>, vector<128x128xf32>
    %c0_39 = arith.constant 0 : index
    %c0_40 = arith.constant 0 : index
    %75 = vector.load %arg12[%c0_39, %c0_40] : memref<64x256xbf16, #tpu.memory_space<vmem>>, vector<64x256xbf16>
    %cst_41 = arith.constant dense<0.000000e+00> : vector<256x256xf32>
    %76 = tpu.matmul %1, %75, %cst_41 {dimension_numbers = #tpu.dot_dimension_numbers<[1], [0], [0], [1], [0, 0, 1, 1], [], []>} : vector<256x64xbf16>, vector<64x256xbf16>, vector<256x256xf32> -> vector<256x256xf32>
    %c0_42 = arith.constant 0 : index
    %c0_43 = arith.constant 0 : index
    %77 = vector.load %arg13[%c0_42, %c0_43] : memref<1x256xf32, #tpu.memory_space<vmem>>, vector<1x256xf32>
    %78 = vector.broadcast %77 : vector<1x256xf32> to vector<256x256xf32>
    %79 = arith.addf %76, %78 : vector<256x256xf32>
    %80 = vector.extract_strided_slice %79 {offsets = [0, 0], sizes = [256, 128], strides = [1, 1]} : vector<256x256xf32> to vector<256x128xf32>
    %81 = vector.extract_strided_slice %79 {offsets = [0, 128], sizes = [256, 128], strides = [1, 1]} : vector<256x256xf32> to vector<256x128xf32>
    %cst_44 = arith.constant 0.000000e+00 : f32
    %82 = vector.broadcast %cst_44 : f32 to vector<256x128xf32>
    %83 = arith.cmpf ogt, %80, %82 : vector<256x128xf32>
    %cst_45 = arith.constant 0.000000e+00 : f32
    %84 = vector.broadcast %cst_45 : f32 to vector<256x128xf32>
    %85 = arith.minimumf %80, %84 : vector<256x128xf32>
    %86 = math.exp %85 : vector<256x128xf32>
    %cst_46 = arith.constant 1.000000e+00 : f32
    %87 = vector.broadcast %cst_46 : f32 to vector<256x128xf32>
    %88 = arith.subf %86, %87 : vector<256x128xf32>
    %89 = arith.select %83, %80, %88 : vector<256x128xi1>, vector<256x128xf32>
    %90 = arith.truncf %89 : vector<256x128xf32> to vector<256x128xbf16>
    %c0_47 = arith.constant 0 : index
    %c0_48 = arith.constant 0 : index
    %91 = vector.load %arg14[%c0_47, %c0_48] : memref<128x128xbf16, #tpu.memory_space<vmem>>, vector<128x128xbf16>
    %cst_49 = arith.constant dense<0.000000e+00> : vector<256x128xf32>
    %92 = tpu.matmul %90, %91, %cst_49 {dimension_numbers = #tpu.dot_dimension_numbers<[1], [0], [0], [1], [0, 0, 1, 1], [], []>} : vector<256x128xbf16>, vector<128x128xbf16>, vector<256x128xf32> -> vector<256x128xf32>
    %c0_50 = arith.constant 0 : index
    %c0_51 = arith.constant 0 : index
    %93 = vector.load %arg15[%c0_50, %c0_51] : memref<1x128xf32, #tpu.memory_space<vmem>>, vector<1x128xf32>
    %94 = vector.broadcast %93 : vector<1x128xf32> to vector<256x128xf32>
    %95 = arith.addf %92, %94 : vector<256x128xf32>
    %96 = arith.truncf %95 : vector<256x128xf32> to vector<256x128xbf16>
    %c0_52 = arith.constant 0 : index
    %c0_53 = arith.constant 0 : index
    %97 = vector.load %arg16[%c0_52, %c0_53] : memref<128x256xbf16, #tpu.memory_space<vmem>>, vector<128x256xbf16>
    %cst_54 = arith.constant dense<0.000000e+00> : vector<256x256xf32>
    %98 = tpu.matmul %96, %97, %cst_54 {dimension_numbers = #tpu.dot_dimension_numbers<[1], [0], [0], [1], [0, 0, 1, 1], [], []>} : vector<256x128xbf16>, vector<128x256xbf16>, vector<256x256xf32> -> vector<256x256xf32>
    %c0_55 = arith.constant 0 : index
    %c0_56 = arith.constant 0 : index
    %99 = vector.load %arg17[%c0_55, %c0_56] : memref<1x256xf32, #tpu.memory_space<vmem>>, vector<1x256xf32>
    %100 = vector.broadcast %99 : vector<1x256xf32> to vector<256x256xf32>
    %101 = arith.addf %98, %100 : vector<256x256xf32>
    %102 = vector.extract_strided_slice %101 {offsets = [0, 0], sizes = [256, 128], strides = [1, 1]} : vector<256x256xf32> to vector<256x128xf32>
    %103 = arith.negf %102 : vector<256x128xf32>
    %104 = math.exp %103 : vector<256x128xf32>
    %cst_57 = arith.constant 1.000000e+00 : f32
    %105 = vector.broadcast %cst_57 : f32 to vector<256x128xf32>
    %106 = arith.addf %105, %104 : vector<256x128xf32>
    %107 = arith.divf %105, %106 : vector<256x128xf32>
    %108 = vector.extract_strided_slice %101 {offsets = [0, 128], sizes = [256, 128], strides = [1, 1]} : vector<256x256xf32> to vector<256x128xf32>
    %109 = arith.mulf %107, %108 : vector<256x128xf32>
    %110 = arith.addf %109, %81 : vector<256x128xf32>
    %cst_58 = arith.constant dense<0.000000e+00> : vector<256x128xf32>
    %111 = tpu.matmul %110, %74, %cst_58 {dimension_numbers = #tpu.dot_dimension_numbers<[1], [0], [0], [1], [0, 0, 1, 1], [], []>} : vector<256x128xf32>, vector<128x128xf32>, vector<256x128xf32> -> vector<256x128xf32>
    %cst_59 = arith.constant 3.125000e-02 : f32
    %112 = vector.broadcast %cst_59 : f32 to vector<256x128xf32>
    %113 = arith.mulf %111, %112 : vector<256x128xf32>
    %114 = arith.subf %110, %113 : vector<256x128xf32>
    %115 = arith.mulf %114, %114 : vector<256x128xf32>
    %cst_60 = arith.constant dense<0.000000e+00> : vector<256x128xf32>
    %116 = tpu.matmul %115, %74, %cst_60 {dimension_numbers = #tpu.dot_dimension_numbers<[1], [0], [0], [1], [0, 0, 1, 1], [], []>} : vector<256x128xf32>, vector<128x128xf32>, vector<256x128xf32> -> vector<256x128xf32>
    %cst_61 = arith.constant 3.125000e-02 : f32
    %117 = vector.broadcast %cst_61 : f32 to vector<256x128xf32>
    %118 = arith.mulf %116, %117 : vector<256x128xf32>
    %cst_62 = arith.constant 9.99999974E-6 : f32
    %119 = vector.broadcast %cst_62 : f32 to vector<256x128xf32>
    %120 = arith.addf %118, %119 : vector<256x128xf32>
    %121 = math.rsqrt %120 : vector<256x128xf32>
    %122 = arith.mulf %114, %121 : vector<256x128xf32>
    %c0_63 = arith.constant 0 : index
    %c0_64 = arith.constant 0 : index
    %123 = vector.load %arg18[%c0_63, %c0_64] : memref<1x128xf32, #tpu.memory_space<vmem>>, vector<1x128xf32>
    %124 = vector.broadcast %123 : vector<1x128xf32> to vector<256x128xf32>
    %125 = arith.mulf %122, %124 : vector<256x128xf32>
    %c0_65 = arith.constant 0 : index
    %c0_66 = arith.constant 0 : index
    %126 = vector.load %arg19[%c0_65, %c0_66] : memref<1x128xf32, #tpu.memory_space<vmem>>, vector<1x128xf32>
    %127 = vector.broadcast %126 : vector<1x128xf32> to vector<256x128xf32>
    %128 = arith.addf %125, %127 : vector<256x128xf32>
    %129 = arith.mulf %73, %128 : vector<256x128xf32>
    %c0_67 = arith.constant 0 : index
    %c0_68 = arith.constant 0 : index
    %130 = vector.load %arg22[%c0_67, %c0_68] : memref<256x128xf32, #tpu.memory_space<vmem>>, vector<256x128xf32>
    tpu.vector_store %arg22[%c0_67, %c0_68], %129 {strides = array<i32>} : memref<256x128xf32, #tpu.memory_space<vmem>>, vector<256x128xf32>,
    return
  }
  func.func @transform_0(%arg0: i32) -> (i32, i32) {
    %c0_i32 = arith.constant 0 : i32
    %c0_i32_0 = arith.constant 0 : i32
    return %arg0, %c0_i32 : i32, i32
  }
  func.func @transform_1(%arg0: i32) -> (i32, i32) {
    %c0_i32 = arith.constant 0 : i32
    %c0_i32_0 = arith.constant 0 : i32
    %c0_i32_1 = arith.constant 0 : i32
    return %c0_i32, %c0_i32_0 : i32, i32
  }
  func.func @transform_2(%arg0: i32) -> (i32, i32) {
    %c0_i32 = arith.constant 0 : i32
    %c0_i32_0 = arith.constant 0 : i32
    %c0_i32_1 = arith.constant 0 : i32
    return %c0_i32, %c0_i32_0 : i32, i32
  }
  func.func @transform_3(%arg0: i32) -> (i32, i32) {
    %c0_i32 = arith.constant 0 : i32
    %c0_i32_0 = arith.constant 0 : i32
    %c0_i32_1 = arith.constant 0 : i32
    return %c0_i32, %c0_i32_0 : i32, i32
  }
  func.func @transform_4(%arg0: i32) -> (i32, i32) {
    %c0_i32 = arith.constant 0 : i32
    %c0_i32_0 = arith.constant 0 : i32
    %c0_i32_1 = arith.constant 0 : i32
    return %c0_i32, %c0_i32_0 : i32, i32
  }
  func.func @transform_5(%arg0: i32) -> (i32, i32) {
    %c0_i32 = arith.constant 0 : i32
    %c0_i32_0 = arith.constant 0 : i32
    %c0_i32_1 = arith.constant 0 : i32
    return %c0_i32, %c0_i32_0 : i32, i32
  }
  func.func @transform_6(%arg0: i32) -> (i32, i32) {
    %c0_i32 = arith.constant 0 : i32
    %c0_i32_0 = arith.constant 0 : i32
    %c0_i32_1 = arith.constant 0 : i32
    return %c0_i32, %c0_i32_0 : i32, i32
  }
  func.func @transform_7(%arg0: i32) -> (i32, i32) {
    %c0_i32 = arith.constant 0 : i32
    %c0_i32_0 = arith.constant 0 : i32
    %c0_i32_1 = arith.constant 0 : i32
    return %c0_i32, %c0_i32_0 : i32, i32
  }
  func.func @transform_8(%arg0: i32) -> (i32, i32) {
    %c0_i32 = arith.constant 0 : i32
    %c0_i32_0 = arith.constant 0 : i32
    %c0_i32_1 = arith.constant 0 : i32
    return %c0_i32, %c0_i32_0 : i32, i32
  }
  func.func @transform_9(%arg0: i32) -> (i32, i32) {
    %c0_i32 = arith.constant 0 : i32
    %c0_i32_0 = arith.constant 0 : i32
    %c0_i32_1 = arith.constant 0 : i32
    return %c0_i32, %c0_i32_0 : i32, i32
  }
  func.func @transform_10(%arg0: i32) -> (i32, i32) {
    %c0_i32 = arith.constant 0 : i32
    %c0_i32_0 = arith.constant 0 : i32
    %c0_i32_1 = arith.constant 0 : i32
    return %c0_i32, %c0_i32_0 : i32, i32
  }
  func.func @transform_11(%arg0: i32) -> (i32, i32) {
    %c0_i32 = arith.constant 0 : i32
    %c0_i32_0 = arith.constant 0 : i32
    %c0_i32_1 = arith.constant 0 : i32
    return %c0_i32, %c0_i32_0 : i32, i32
  }
  func.func @transform_12(%arg0: i32) -> (i32, i32) {
    %c0_i32 = arith.constant 0 : i32
    %c0_i32_0 = arith.constant 0 : i32
    %c0_i32_1 = arith.constant 0 : i32
    return %c0_i32, %c0_i32_0 : i32, i32
  }
  func.func @transform_13(%arg0: i32) -> (i32, i32) {
    %c0_i32 = arith.constant 0 : i32
    %c0_i32_0 = arith.constant 0 : i32
    %c0_i32_1 = arith.constant 0 : i32
    return %c0_i32, %c0_i32_0 : i32, i32
  }
  func.func @transform_14(%arg0: i32) -> (i32, i32) {
    %c0_i32 = arith.constant 0 : i32
    %c0_i32_0 = arith.constant 0 : i32
    %c0_i32_1 = arith.constant 0 : i32
    return %c0_i32, %c0_i32_0 : i32, i32
  }
  func.func @transform_15(%arg0: i32) -> (i32, i32) {
    %c0_i32 = arith.constant 0 : i32
    %c0_i32_0 = arith.constant 0 : i32
    %c0_i32_1 = arith.constant 0 : i32
    return %c0_i32, %c0_i32_0 : i32, i32
  }
  func.func @transform_16(%arg0: i32) -> (i32, i32) {
    %c0_i32 = arith.constant 0 : i32
    %c0_i32_0 = arith.constant 0 : i32
    %c0_i32_1 = arith.constant 0 : i32
    return %c0_i32, %c0_i32_0 : i32, i32
  }
  func.func @transform_17(%arg0: i32) -> (i32, i32) {
    %c0_i32 = arith.constant 0 : i32
    %c0_i32_0 = arith.constant 0 : i32
    %c0_i32_1 = arith.constant 0 : i32
    return %c0_i32, %c0_i32_0 : i32, i32
  }
  func.func @transform_18(%arg0: i32) -> (i32, i32) {
    %c0_i32 = arith.constant 0 : i32
    %c0_i32_0 = arith.constant 0 : i32
    %c0_i32_1 = arith.constant 0 : i32
    return %c0_i32, %c0_i32_0 : i32, i32
  }
  func.func @transform_19(%arg0: i32) -> (i32, i32) {
    %c0_i32 = arith.constant 0 : i32
    %c0_i32_0 = arith.constant 0 : i32
    %c0_i32_1 = arith.constant 0 : i32
    return %c0_i32, %c0_i32_0 : i32, i32
  }
  func.func @transform_20(%arg0: i32) -> (i32, i32) {
    %c0_i32 = arith.constant 0 : i32
    %c0_i32_0 = arith.constant 0 : i32
    %c0_i32_1 = arith.constant 0 : i32
    return %c0_i32, %c0_i32_0 : i32, i32
  }
  func.func @transform_21(%arg0: i32) -> (i32, i32) {
    %c0_i32 = arith.constant 0 : i32
    %c0_i32_0 = arith.constant 0 : i32
    return %arg0, %c0_i32 : i32, i32
  }
}

</mosaic_0001>

<llo_original>
// kernel: tpu_custom_call.1
$region0: #{tpu_custom_call.1}
  #allocation0 [shape = 'u32[]', space=smem, size = 0x4, offset = 0x4, fixed_abs, tag = 'smem constant byte address 0x4 - core index']
  #allocation1 [shape = 'u32[72,128]{1,0:T(1,128)}', space=vmem, size = 0x9000, scoped, tag = 'internal scratch']
  %s0 = inlined_call_operand.vmem [shape: f32[512,64], index: 0, kind: input, shape index: {}]
  %s1 = inlined_call_operand.vmem [shape: bf16[64,256], index: 1, kind: input, shape index: {}]
  %s2 = inlined_call_operand.hbm [shape: f32[1,256], index: 2, kind: input, shape index: {}]
  %s3 = inlined_call_operand.vmem [shape: bf16[128,128], index: 3, kind: input, shape index: {}]
  %s4 = inlined_call_operand.hbm [shape: f32[1,128], index: 4, kind: input, shape index: {}]
  %s5 = inlined_call_operand.vmem [shape: bf16[128,256], index: 5, kind: input, shape index: {}]
  %s6 = inlined_call_operand.hbm [shape: f32[1,256], index: 6, kind: input, shape index: {}]
  %s7 = inlined_call_operand.hbm [shape: f32[1,128], index: 7, kind: input, shape index: {}]
  %s8 = inlined_call_operand.hbm [shape: f32[1,128], index: 8, kind: input, shape index: {}]
  %s9 = inlined_call_operand.vmem [shape: bf16[128,128], index: 9, kind: input, shape index: {}]
  %s10 = inlined_call_operand.vmem [shape: f32[1,128], index: 10, kind: input, shape index: {}]
  %s11 = inlined_call_operand.vmem [shape: bf16[64,256], index: 11, kind: input, shape index: {}]
  %s12 = inlined_call_operand.vmem [shape: f32[1,256], index: 12, kind: input, shape index: {}]
  %s13 = inlined_call_operand.hbm [shape: bf16[128,128], index: 13, kind: input, shape index: {}]
  %s14 = inlined_call_operand.vmem [shape: f32[1,128], index: 14, kind: input, shape index: {}]
  %s15 = inlined_call_operand.vmem [shape: bf16[128,256], index: 15, kind: input, shape index: {}]
  %s16 = inlined_call_operand.vmem [shape: f32[1,256], index: 16, kind: input, shape index: {}]
  %s17 = inlined_call_operand.vmem [shape: f32[1,128], index: 17, kind: input, shape index: {}]
  %s18 = inlined_call_operand.vmem [shape: f32[1,128], index: 18, kind: input, shape index: {}]
  %s19 = inlined_call_operand.vmem [shape: f32[128,128], index: 19, kind: input, shape index: {}]
  %s20 = inlined_call_operand.vmem [shape: f32[128,128], index: 20, kind: input, shape index: {}]
  %s21 = inlined_call_operand.hbm [shape: f32[512,128], index: 21, kind: output, shape index: {}]
  %s22 = sld [smem:[#allocation0]]
  $region141: #{tpu_custom_call.1} parent=0
    _
  %s24 = ssub.s32 1, %s22
  %s25 = scalar_select 0, %s24, %s22
  $region1: #{tpu_custom_call.1} parent=0
    #allocation2 [shape = 'u8[1024]{0}', space=vmem, size = 0x400, scoped, tag = 'input window, operand 2, single buffered']
    #allocation3 [shape = 's32[2]{0}', space=sflag, size = 0x8, scoped, tag = 'scoped memory for tpu_custom_call.1']
    #allocation4 [shape = 's32[2]{0}', space=sflag, size = 0x8, scoped, tag = 'scoped memory for tpu_custom_call.1']
    #allocation5 [shape = 'u8[512]{0}', space=vmem, size = 0x400, scoped, tag = 'input window, operand 4, single buffered']
    #allocation6 [shape = 's32[1]{0}', space=sflag, size = 0x4, scoped, tag = 'scoped memory for tpu_custom_call.1']
    #allocation7 [shape = 'u8[1024]{0}', space=vmem, size = 0x400, scoped, tag = 'input window, operand 6, single buffered']
    #allocation8 [shape = 'u8[512]{0}', space=vmem, size = 0x400, scoped, tag = 'input window, operand 7, single buffered']
    #allocation9 [shape = 's32[1]{0}', space=sflag, size = 0x4, scoped, tag = 'scoped memory for tpu_custom_call.1']
    #allocation10 [shape = 'u8[512]{0}', space=vmem, size = 0x400, scoped, tag = 'input window, operand 8, single buffered']
    #allocation11 [shape = 'u8[32768]{0}', space=vmem, size = 0x8000, scoped, tag = 'input window, operand 13, single buffered']
    #allocation12 [shape = 's32[1]{0}', space=sflag, size = 0x4, scoped, tag = 'scoped memory for tpu_custom_call.1']
    #allocation13 [shape = 'u8[262144]{0}', space=vmem, size = 0x40000, scoped, tag = 'output window, operand 0']
    %26 = vsyncpa [#allocation3], 0
    %27 = vsyncpa [#allocation6], 0
    %28 = vsyncpa [#allocation9], 0
    %29 = vsyncpa [#allocation12], 0
    %30 = vsyncpa [#allocation4], 0
    %s31 = scalar_lea.sflag [#allocation4], 1
    %32 = vsyncpa %s31, 0
    loop: start=0, step=1, limit=4
    $region2: #{tpu_custom_call.1} parent=1 // loop_pre_header
      _
    $region3: #{tpu_custom_call.1} parent=1 // loop_header
      %s34 = sphi 0, %s38
      %p35 = scmp.ge.s32.totalorder %s34, 4
      %s44 = sphi 0, %s46
      %s47 = sphi 0, %s44
      %s48 = sphi 0, %s47
      %s64 = sphi 0, %s48
      %s68 = sphi 0, %s68
      %s70 = sphi 0, %s68
      %s71 = sphi 0, %s70
      %s85 = sphi 0, %s71
      %s89 = sphi 0, %s89
      %s91 = sphi 0, %s89
      %s92 = sphi 0, %s91
      %s106 = sphi 0, %s92
      %s110 = sphi 0, %s110
      %s112 = sphi 0, %s110
      %s113 = sphi 0, %s112
      %s127 = sphi 0, %s113
      %s131 = sphi 0, %s131
      %s133 = sphi 0, %s131
      %s134 = sphi 0, %s133
      %s148 = sphi 0, %s134
      %s152 = sphi 0, %s152
      %s154 = sphi 0, %s152
      %s155 = sphi 0, %s154
      %s169 = sphi 0, %s155
      %s173 = sphi 0, %s173
      %s175 = sphi 0, %s173
      %s176 = sphi 0, %s175
      %s190 = sphi 0, %s176
      %s194 = sphi 0, %s194
      %s196 = sphi 0, %s194
      %s197 = sphi 0, %s196
      %s211 = sphi 0, %s197
      %s215 = sphi 0, %s215
      %s217 = sphi 0, %s215
      %s218 = sphi 0, %s217
      %s232 = sphi 0, %s218
      %s236 = sphi 0, %s236
      %s238 = sphi 0, %s236
      %s239 = sphi 0, %s238
      %s253 = sphi 0, %s239
      %s257 = sphi 0, %s257
      %s259 = sphi 0, %s257
      %s260 = sphi 0, %s259
      %s274 = sphi 0, %s260
      %s278 = sphi 0, %s278
      %s280 = sphi 0, %s278
      %s281 = sphi 0, %s280
      %s295 = sphi 0, %s281
      %s299 = sphi 0, %s299
      %s301 = sphi 0, %s299
      %s302 = sphi 0, %s301
      %s316 = sphi 0, %s302
      %s320 = sphi 0, %s320
      %s322 = sphi 0, %s320
      %s323 = sphi 0, %s322
      %s337 = sphi 0, %s323
      %s341 = sphi 0, %s341
      %s343 = sphi 0, %s341
      %s344 = sphi 0, %s343
      %s358 = sphi 0, %s344
      %s362 = sphi 0, %s362
      %s364 = sphi 0, %s362
      %s365 = sphi 0, %s364
      %s379 = sphi 0, %s365
      %s383 = sphi 0, %s383
      %s385 = sphi 0, %s383
      %s386 = sphi 0, %s385
      %s400 = sphi 0, %s386
      %s404 = sphi 0, %s404
      %s406 = sphi 0, %s404
      %s407 = sphi 0, %s406
      %s421 = sphi 0, %s407
      %s425 = sphi 0, %s425
      %s427 = sphi 0, %s425
      %s428 = sphi 0, %s427
      %s442 = sphi 0, %s428
      %s446 = sphi 0, %s446
      %s448 = sphi 0, %s446
      %s449 = sphi 0, %s448
      %s463 = sphi 0, %s449
      %s467 = sphi 0, %s467
      %s469 = sphi 0, %s467
      %s470 = sphi 0, %s469
      %s484 = sphi 0, %s470
      %s490 = sphi 0, %s492
      %s493 = sphi 0, %s490
      %s494 = sphi 0, %s493
      %s510 = sphi 0, %s494
    $region4: #{tpu_custom_call.1} parent=1 // loop_header_branch
      %37 = sbr.rel (%p35) target = $region8
    $region5: #{tpu_custom_call.1} parent=1 // loop_body
      %s39 = ssub.s32 %s34, 1
      %s40 = ssub.s32 %s34, 2
      %s41 = sadd.s32 %s34, 1
      %s42 = ssub.s32 %s34, %s41
      %p43 = scmp.eq.s32.totalorder %s42, 0
      %s45 = sadd.s32 %s44, 1
      %s46 = scalar_select %p43, %s44, %s45
      %p49 = pneg %p43
      %p50 = scmp.eq.s32.totalorder %s34, 1
      %p51 = por %p49, %p50
      %p52 = scmp.ne.s32.totalorder %s44, %s47
      %p53 = scmp.eq.s32.totalorder %s34, 0
      %p54 = por %p52, %p53
      %p55 = scmp.ne.s32.totalorder %s44, %s47
      %p56 = scmp.eq.s32.totalorder %s39, 1
      %p57 = por %p55, %p56
      %p58 = scmp.ne.s32.totalorder %s47, %s48
      %p59 = scmp.eq.s32.totalorder %s39, 0
      %p60 = por %p58, %p59
      %p61 = scmp.ne.s32.totalorder %s47, %s48
      %p62 = scmp.eq.s32.totalorder %s40, 1
      %p63 = por %p61, %p62
      %p65 = scmp.ne.s32.totalorder %s48, %s64
      %p66 = scmp.eq.s32.totalorder %s40, 0
      %p67 = por %p65, %p66
      %s69 = sadd.s32 %s68, 1
      %p72 = scmp.eq.s32.totalorder %s34, 1
      %p73 = scmp.ne.s32.totalorder %s68, %s70
      %p74 = scmp.eq.s32.totalorder %s34, 0
      %p75 = por %p73, %p74
      %p76 = scmp.ne.s32.totalorder %s68, %s70
      %p77 = scmp.eq.s32.totalorder %s39, 1
      %p78 = por %p76, %p77
      %p79 = scmp.ne.s32.totalorder %s70, %s71
      %p80 = scmp.eq.s32.totalorder %s39, 0
      %p81 = por %p79, %p80
      %p82 = scmp.ne.s32.totalorder %s70, %s71
      %p83 = scmp.eq.s32.totalorder %s40, 1
      %p84 = por %p82, %p83
      %p86 = scmp.ne.s32.totalorder %s71, %s85
      %p87 = scmp.eq.s32.totalorder %s40, 0
      %p88 = por %p86, %p87
      %s90 = sadd.s32 %s89, 1
      %p93 = scmp.eq.s32.totalorder %s34, 1
      %p94 = scmp.ne.s32.totalorder %s89, %s91
      %p95 = scmp.eq.s32.totalorder %s34, 0
      %p96 = por %p94, %p95
      %p97 = scmp.ne.s32.totalorder %s89, %s91
      %p98 = scmp.eq.s32.totalorder %s39, 1
      %p99 = por %p97, %p98
      %p100 = scmp.ne.s32.totalorder %s91, %s92
      %p101 = scmp.eq.s32.totalorder %s39, 0
      %p102 = por %p100, %p101
      %p103 = scmp.ne.s32.totalorder %s91, %s92
      %p104 = scmp.eq.s32.totalorder %s40, 1
      %p105 = por %p103, %p104
      %p107 = scmp.ne.s32.totalorder %s92, %s106
      %p108 = scmp.eq.s32.totalorder %s40, 0
      %p109 = por %p107, %p108
      %s111 = sadd.s32 %s110, 1
      %p114 = scmp.eq.s32.totalorder %s34, 1
      %p115 = scmp.ne.s32.totalorder %s110, %s112
      %p116 = scmp.eq.s32.totalorder %s34, 0
      %p117 = por %p115, %p116
      %p118 = scmp.ne.s32.totalorder %s110, %s112
      %p119 = scmp.eq.s32.totalorder %s39, 1
      %p120 = por %p118, %p119
      %p121 = scmp.ne.s32.totalorder %s112, %s113
      %p122 = scmp.eq.s32.totalorder %s39, 0
      %p123 = por %p121, %p122
      %p124 = scmp.ne.s32.totalorder %s112, %s113
      %p125 = scmp.eq.s32.totalorder %s40, 1
      %p126 = por %p124, %p125
      %p128 = scmp.ne.s32.totalorder %s113, %s127
      %p129 = scmp.eq.s32.totalorder %s40, 0
      %p130 = por %p128, %p129
      %s132 = sadd.s32 %s131, 1
      %p135 = scmp.eq.s32.totalorder %s34, 1
      %p136 = scmp.ne.s32.totalorder %s131, %s133
      %p137 = scmp.eq.s32.totalorder %s34, 0
      %p138 = por %p136, %p137
      %p139 = scmp.ne.s32.totalorder %s131, %s133
      %p140 = scmp.eq.s32.totalorder %s39, 1
      %p141 = por %p139, %p140
      %p142 = scmp.ne.s32.totalorder %s133, %s134
      %p143 = scmp.eq.s32.totalorder %s39, 0
      %p144 = por %p142, %p143
      %p145 = scmp.ne.s32.totalorder %s133, %s134
      %p146 = scmp.eq.s32.totalorder %s40, 1
      %p147 = por %p145, %p146
      %p149 = scmp.ne.s32.totalorder %s134, %s148
      %p150 = scmp.eq.s32.totalorder %s40, 0
      %p151 = por %p149, %p150
      %s153 = sadd.s32 %s152, 1
      %p156 = scmp.eq.s32.totalorder %s34, 1
      %p157 = scmp.ne.s32.totalorder %s152, %s154
      %p158 = scmp.eq.s32.totalorder %s34, 0
      %p159 = por %p157, %p158
      %p160 = scmp.ne.s32.totalorder %s152, %s154
      %p161 = scmp.eq.s32.totalorder %s39, 1
      %p162 = por %p160, %p161
      %p163 = scmp.ne.s32.totalorder %s154, %s155
      %p164 = scmp.eq.s32.totalorder %s39, 0
      %p165 = por %p163, %p164
      %p166 = scmp.ne.s32.totalorder %s154, %s155
      %p167 = scmp.eq.s32.totalorder %s40, 1
      %p168 = por %p166, %p167
      %p170 = scmp.ne.s32.totalorder %s155, %s169
      %p171 = scmp.eq.s32.totalorder %s40, 0
      %p172 = por %p170, %p171
      %s174 = sadd.s32 %s173, 1
      %p177 = scmp.eq.s32.totalorder %s34, 1
      %p178 = scmp.ne.s32.totalorder %s173, %s175
      %p179 = scmp.eq.s32.totalorder %s34, 0
      %p180 = por %p178, %p179
      %p181 = scmp.ne.s32.totalorder %s173, %s175
      %p182 = scmp.eq.s32.totalorder %s39, 1
      %p183 = por %p181, %p182
      %p184 = scmp.ne.s32.totalorder %s175, %s176
      %p185 = scmp.eq.s32.totalorder %s39, 0
      %p186 = por %p184, %p185
      %p187 = scmp.ne.s32.totalorder %s175, %s176
      %p188 = scmp.eq.s32.totalorder %s40, 1
      %p189 = por %p187, %p188
      %p191 = scmp.ne.s32.totalorder %s176, %s190
      %p192 = scmp.eq.s32.totalorder %s40, 0
      %p193 = por %p191, %p192
      %s195 = sadd.s32 %s194, 1
      %p198 = scmp.eq.s32.totalorder %s34, 1
      %p199 = scmp.ne.s32.totalorder %s194, %s196
      %p200 = scmp.eq.s32.totalorder %s34, 0
      %p201 = por %p199, %p200
      %p202 = scmp.ne.s32.totalorder %s194, %s196
      %p203 = scmp.eq.s32.totalorder %s39, 1
      %p204 = por %p202, %p203
      %p205 = scmp.ne.s32.totalorder %s196, %s197
      %p206 = scmp.eq.s32.totalorder %s39, 0
      %p207 = por %p205, %p206
      %p208 = scmp.ne.s32.totalorder %s196, %s197
      %p209 = scmp.eq.s32.totalorder %s40, 1
      %p210 = por %p208, %p209
      %p212 = scmp.ne.s32.totalorder %s197, %s211
      %p213 = scmp.eq.s32.totalorder %s40, 0
      %p214 = por %p212, %p213
      %s216 = sadd.s32 %s215, 1
      %p219 = scmp.eq.s32.totalorder %s34, 1
      %p220 = scmp.ne.s32.totalorder %s215, %s217
      %p221 = scmp.eq.s32.totalorder %s34, 0
      %p222 = por %p220, %p221
      %p223 = scmp.ne.s32.totalorder %s215, %s217
      %p224 = scmp.eq.s32.totalorder %s39, 1
      %p225 = por %p223, %p224
      %p226 = scmp.ne.s32.totalorder %s217, %s218
      %p227 = scmp.eq.s32.totalorder %s39, 0
      %p228 = por %p226, %p227
      %p229 = scmp.ne.s32.totalorder %s217, %s218
      %p230 = scmp.eq.s32.totalorder %s40, 1
      %p231 = por %p229, %p230
      %p233 = scmp.ne.s32.totalorder %s218, %s232
      %p234 = scmp.eq.s32.totalorder %s40, 0
      %p235 = por %p233, %p234
      %s237 = sadd.s32 %s236, 1
      %p240 = scmp.eq.s32.totalorder %s34, 1
      %p241 = scmp.ne.s32.totalorder %s236, %s238
      %p242 = scmp.eq.s32.totalorder %s34, 0
      %p243 = por %p241, %p242
      %p244 = scmp.ne.s32.totalorder %s236, %s238
      %p245 = scmp.eq.s32.totalorder %s39, 1
      %p246 = por %p244, %p245
      %p247 = scmp.ne.s32.totalorder %s238, %s239
      %p248 = scmp.eq.s32.totalorder %s39, 0
      %p249 = por %p247, %p248
      %p250 = scmp.ne.s32.totalorder %s238, %s239
      %p251 = scmp.eq.s32.totalorder %s40, 1
      %p252 = por %p250, %p251
      %p254 = scmp.ne.s32.totalorder %s239, %s253
      %p255 = scmp.eq.s32.totalorder %s40, 0
      %p256 = por %p254, %p255
      %s258 = sadd.s32 %s257, 1
      %p261 = scmp.eq.s32.totalorder %s34, 1
      %p262 = scmp.ne.s32.totalorder %s257, %s259
      %p263 = scmp.eq.s32.totalorder %s34, 0
      %p264 = por %p262, %p263
      %p265 = scmp.ne.s32.totalorder %s257, %s259
      %p266 = scmp.eq.s32.totalorder %s39, 1
      %p267 = por %p265, %p266
      %p268 = scmp.ne.s32.totalorder %s259, %s260
      %p269 = scmp.eq.s32.totalorder %s39, 0
      %p270 = por %p268, %p269
      %p271 = scmp.ne.s32.totalorder %s259, %s260
      %p272 = scmp.eq.s32.totalorder %s40, 1
      %p273 = por %p271, %p272
      %p275 = scmp.ne.s32.totalorder %s260, %s274
      %p276 = scmp.eq.s32.totalorder %s40, 0
      %p277 = por %p275, %p276
      %s279 = sadd.s32 %s278, 1
      %p282 = scmp.eq.s32.totalorder %s34, 1
      %p283 = scmp.ne.s32.totalorder %s278, %s280
      %p284 = scmp.eq.s32.totalorder %s34, 0
      %p285 = por %p283, %p284
      %p286 = scmp.ne.s32.totalorder %s278, %s280
      %p287 = scmp.eq.s32.totalorder %s39, 1
      %p288 = por %p286, %p287
      %p289 = scmp.ne.s32.totalorder %s280, %s281
      %p290 = scmp.eq.s32.totalorder %s39, 0
      %p291 = por %p289, %p290
      %p292 = scmp.ne.s32.totalorder %s280, %s281
      %p293 = scmp.eq.s32.totalorder %s40, 1
      %p294 = por %p292, %p293
      %p296 = scmp.ne.s32.totalorder %s281, %s295
      %p297 = scmp.eq.s32.totalorder %s40, 0
      %p298 = por %p296, %p297
      %s300 = sadd.s32 %s299, 1
      %p303 = scmp.eq.s32.totalorder %s34, 1
      %p304 = scmp.ne.s32.totalorder %s299, %s301
      %p305 = scmp.eq.s32.totalorder %s34, 0
      %p306 = por %p304, %p305
      %p307 = scmp.ne.s32.totalorder %s299, %s301
      %p308 = scmp.eq.s32.totalorder %s39, 1
      %p309 = por %p307, %p308
      %p310 = scmp.ne.s32.totalorder %s301, %s302
      %p311 = scmp.eq.s32.totalorder %s39, 0
      %p312 = por %p310, %p311
      %p313 = scmp.ne.s32.totalorder %s301, %s302
      %p314 = scmp.eq.s32.totalorder %s40, 1
      %p315 = por %p313, %p314
      %p317 = scmp.ne.s32.totalorder %s302, %s316
      %p318 = scmp.eq.s32.totalorder %s40, 0
      %p319 = por %p317, %p318
      %s321 = sadd.s32 %s320, 1
      %p324 = scmp.eq.s32.totalorder %s34, 1
      %p325 = scmp.ne.s32.totalorder %s320, %s322
      %p326 = scmp.eq.s32.totalorder %s34, 0
      %p327 = por %p325, %p326
      %p328 = scmp.ne.s32.totalorder %s320, %s322
      %p329 = scmp.eq.s32.totalorder %s39, 1
      %p330 = por %p328, %p329
      %p331 = scmp.ne.s32.totalorder %s322, %s323
      %p332 = scmp.eq.s32.totalorder %s39, 0
      %p333 = por %p331, %p332
      %p334 = scmp.ne.s32.totalorder %s322, %s323
      %p335 = scmp.eq.s32.totalorder %s40, 1
      %p336 = por %p334, %p335
      %p338 = scmp.ne.s32.totalorder %s323, %s337
      %p339 = scmp.eq.s32.totalorder %s40, 0
      %p340 = por %p338, %p339
      %s342 = sadd.s32 %s341, 1
      %p345 = scmp.eq.s32.totalorder %s34, 1
      %p346 = scmp.ne.s32.totalorder %s341, %s343
      %p347 = scmp.eq.s32.totalorder %s34, 0
      %p348 = por %p346, %p347
      %p349 = scmp.ne.s32.totalorder %s341, %s343
      %p350 = scmp.eq.s32.totalorder %s39, 1
      %p351 = por %p349, %p350
      %p352 = scmp.ne.s32.totalorder %s343, %s344
      %p353 = scmp.eq.s32.totalorder %s39, 0
      %p354 = por %p352, %p353
      %p355 = scmp.ne.s32.totalorder %s343, %s344
      %p356 = scmp.eq.s32.totalorder %s40, 1
      %p357 = por %p355, %p356
      %p359 = scmp.ne.s32.totalorder %s344, %s358
      %p360 = scmp.eq.s32.totalorder %s40, 0
      %p361 = por %p359, %p360
      %s363 = sadd.s32 %s362, 1
      %p366 = scmp.eq.s32.totalorder %s34, 1
      %p367 = scmp.ne.s32.totalorder %s362, %s364
      %p368 = scmp.eq.s32.totalorder %s34, 0
      %p369 = por %p367, %p368
      %p370 = scmp.ne.s32.totalorder %s362, %s364
      %p371 = scmp.eq.s32.totalorder %s39, 1
      %p372 = por %p370, %p371
      %p373 = scmp.ne.s32.totalorder %s364, %s365
      %p374 = scmp.eq.s32.totalorder %s39, 0
      %p375 = por %p373, %p374
      %p376 = scmp.ne.s32.totalorder %s364, %s365
      %p377 = scmp.eq.s32.totalorder %s40, 1
      %p378 = por %p376, %p377
      %p380 = scmp.ne.s32.totalorder %s365, %s379
      %p381 = scmp.eq.s32.totalorder %s40, 0
      %p382 = por %p380, %p381
      %s384 = sadd.s32 %s383, 1
      %p387 = scmp.eq.s32.totalorder %s34, 1
      %p388 = scmp.ne.s32.totalorder %s383, %s385
      %p389 = scmp.eq.s32.totalorder %s34, 0
      %p390 = por %p388, %p389
      %p391 = scmp.ne.s32.totalorder %s383, %s385
      %p392 = scmp.eq.s32.totalorder %s39, 1
      %p393 = por %p391, %p392
      %p394 = scmp.ne.s32.totalorder %s385, %s386
      %p395 = scmp.eq.s32.totalorder %s39, 0
      %p396 = por %p394, %p395
      %p397 = scmp.ne.s32.totalorder %s385, %s386
      %p398 = scmp.eq.s32.totalorder %s40, 1
      %p399 = por %p397, %p398
      %p401 = scmp.ne.s32.totalorder %s386, %s400
      %p402 = scmp.eq.s32.totalorder %s40, 0
      %p403 = por %p401, %p402
      %s405 = sadd.s32 %s404, 1
      %p408 = scmp.eq.s32.totalorder %s34, 1
      %p409 = scmp.ne.s32.totalorder %s404, %s406
      %p410 = scmp.eq.s32.totalorder %s34, 0
      %p411 = por %p409, %p410
      %p412 = scmp.ne.s32.totalorder %s404, %s406
      %p413 = scmp.eq.s32.totalorder %s39, 1
      %p414 = por %p412, %p413
      %p415 = scmp.ne.s32.totalorder %s406, %s407
      %p416 = scmp.eq.s32.totalorder %s39, 0
      %p417 = por %p415, %p416
      %p418 = scmp.ne.s32.totalorder %s406, %s407
      %p419 = scmp.eq.s32.totalorder %s40, 1
      %p420 = por %p418, %p419
      %p422 = scmp.ne.s32.totalorder %s407, %s421
      %p423 = scmp.eq.s32.totalorder %s40, 0
      %p424 = por %p422, %p423
      %s426 = sadd.s32 %s425, 1
      %p429 = scmp.eq.s32.totalorder %s34, 1
      %p430 = scmp.ne.s32.totalorder %s425, %s427
      %p431 = scmp.eq.s32.totalorder %s34, 0
      %p432 = por %p430, %p431
      %p433 = scmp.ne.s32.totalorder %s425, %s427
      %p434 = scmp.eq.s32.totalorder %s39, 1
      %p435 = por %p433, %p434
      %p436 = scmp.ne.s32.totalorder %s427, %s428
      %p437 = scmp.eq.s32.totalorder %s39, 0
      %p438 = por %p436, %p437
      %p439 = scmp.ne.s32.totalorder %s427, %s428
      %p440 = scmp.eq.s32.totalorder %s40, 1
      %p441 = por %p439, %p440
      %p443 = scmp.ne.s32.totalorder %s428, %s442
      %p444 = scmp.eq.s32.totalorder %s40, 0
      %p445 = por %p443, %p444
      %s447 = sadd.s32 %s446, 1
      %p450 = scmp.eq.s32.totalorder %s34, 1
      %p451 = scmp.ne.s32.totalorder %s446, %s448
      %p452 = scmp.eq.s32.totalorder %s34, 0
      %p453 = por %p451, %p452
      %p454 = scmp.ne.s32.totalorder %s446, %s448
      %p455 = scmp.eq.s32.totalorder %s39, 1
      %p456 = por %p454, %p455
      %p457 = scmp.ne.s32.totalorder %s448, %s449
      %p458 = scmp.eq.s32.totalorder %s39, 0
      %p459 = por %p457, %p458
      %p460 = scmp.ne.s32.totalorder %s448, %s449
      %p461 = scmp.eq.s32.totalorder %s40, 1
      %p462 = por %p460, %p461
      %p464 = scmp.ne.s32.totalorder %s449, %s463
      %p465 = scmp.eq.s32.totalorder %s40, 0
      %p466 = por %p464, %p465
      %s468 = sadd.s32 %s467, 1
      %p471 = scmp.eq.s32.totalorder %s34, 1
      %p472 = scmp.ne.s32.totalorder %s467, %s469
      %p473 = scmp.eq.s32.totalorder %s34, 0
      %p474 = por %p472, %p473
      %p475 = scmp.ne.s32.totalorder %s467, %s469
      %p476 = scmp.eq.s32.totalorder %s39, 1
      %p477 = por %p475, %p476
      %p478 = scmp.ne.s32.totalorder %s469, %s470
      %p479 = scmp.eq.s32.totalorder %s39, 0
      %p480 = por %p478, %p479
      %p481 = scmp.ne.s32.totalorder %s469, %s470
      %p482 = scmp.eq.s32.totalorder %s40, 1
      %p483 = por %p481, %p482
      %p485 = scmp.ne.s32.totalorder %s470, %s484
      %p486 = scmp.eq.s32.totalorder %s40, 0
      %p487 = por %p485, %p486
      %s488 = ssub.s32 %s34, %s41
      %p489 = scmp.eq.s32.totalorder %s488, 0
      %s491 = sadd.s32 %s490, 1
      %s492 = scalar_select %p489, %s490, %s491
      %p495 = pneg %p489
      %p496 = scmp.eq.s32.totalorder %s34, 1
      %p497 = por %p495, %p496
      %p498 = scmp.ne.s32.totalorder %s490, %s493
      %p499 = scmp.eq.s32.totalorder %s34, 0
      %p500 = por %p498, %p499
      %p501 = scmp.ne.s32.totalorder %s490, %s493
      %p502 = scmp.eq.s32.totalorder %s39, 1
      %p503 = por %p501, %p502
      %p504 = scmp.ne.s32.totalorder %s493, %s494
      %p505 = scmp.eq.s32.totalorder %s39, 0
      %p506 = por %p504, %p505
      %p507 = scmp.ne.s32.totalorder %s493, %s494
      %p508 = scmp.eq.s32.totalorder %s40, 1
      %p509 = por %p507, %p508
      %p511 = scmp.ne.s32.totalorder %s494, %s510
      %p512 = scmp.eq.s32.totalorder %s40, 0
      %p513 = por %p511, %p512
      %p514 = scmp.le.s32.totalorder 1, %s34
      %p515 = scmp.lt.s32.totalorder %s34, 3
      %p516 = pnand %p514, %p515
      %p517 = pneg %p516
      // Predicated region
      $region9: #{tpu_custom_call.1} parent=5 // pred_check
        _
      $region10: #{tpu_custom_call.1} parent=5 // pred_check_branch
        %519 = sbr.rel (%p516) target = $region12
      $region11: #{tpu_custom_call.1} parent=5 // pred_region
        %s520 = ssub.s32 %s34, 1
        // Predicated region
        $region13: #{tpu_custom_call.1} parent=11 // pred_check
          %p521 = pneg %p81
        $region14: #{tpu_custom_call.1} parent=11 // pred_check_branch
          %523 = sbr.rel (%p521) target = $region16
        $region15: #{tpu_custom_call.1} parent=11 // pred_region
          _
        $region16: #{tpu_custom_call.1} parent=11 // pred_fallthru
          _
        // Predicated region
        $region17: #{tpu_custom_call.1} parent=11 // pred_check
          %p524 = pneg %p102
        $region18: #{tpu_custom_call.1} parent=11 // pred_check_branch
          %526 = sbr.rel (%p524) target = $region20
        $region19: #{tpu_custom_call.1} parent=11 // pred_region
          %528 = vsyncadd [#allocation3], 0
          %s530 = sshll.u32 %s2, 4
          %s531 = int_to_ptr.hbm [resolvable:$true] %s530
          %s532 = sshll.u32 [#allocation2], 4
          %s533 = int_to_ptr.vmem [resolvable:$true] %s532
          %535 = dma.hbm_to_vmem [thread:$0]  %s531, 32, %s533, [#allocation3]
        $region20: #{tpu_custom_call.1} parent=11 // pred_fallthru
          _
        // Predicated region
        $region21: #{tpu_custom_call.1} parent=11 // pred_check
          %p536 = pneg %p123
        $region22: #{tpu_custom_call.1} parent=11 // pred_check_branch
          %538 = sbr.rel (%p536) target = $region24
        $region23: #{tpu_custom_call.1} parent=11 // pred_region
          _
        $region24: #{tpu_custom_call.1} parent=11 // pred_fallthru
          _
        // Predicated region
        $region25: #{tpu_custom_call.1} parent=11 // pred_check
          %p539 = pneg %p144
        $region26: #{tpu_custom_call.1} parent=11 // pred_check_branch
          %541 = sbr.rel (%p539) target = $region28
        $region27: #{tpu_custom_call.1} parent=11 // pred_region
          %543 = vsyncadd [#allocation6], 0
          %s545 = sshll.u32 %s4, 4
          %s546 = int_to_ptr.hbm [resolvable:$true] %s545
          %s547 = sshll.u32 [#allocation5], 4
          %s548 = int_to_ptr.vmem [resolvable:$true] %s547
          %550 = dma.hbm_to_vmem [thread:$0]  %s546, 16, %s548, [#allocation6]
        $region28: #{tpu_custom_call.1} parent=11 // pred_fallthru
          _
        // Predicated region
        $region29: #{tpu_custom_call.1} parent=11 // pred_check
          %p551 = pneg %p165
        $region30: #{tpu_custom_call.1} parent=11 // pred_check_branch
          %553 = sbr.rel (%p551) target = $region32
        $region31: #{tpu_custom_call.1} parent=11 // pred_region
          _
        $region32: #{tpu_custom_call.1} parent=11 // pred_fallthru
          _
        // Predicated region
        $region33: #{tpu_custom_call.1} parent=11 // pred_check
          %p554 = pneg %p186
        $region34: #{tpu_custom_call.1} parent=11 // pred_check_branch
          %556 = sbr.rel (%p554) target = $region36
        $region35: #{tpu_custom_call.1} parent=11 // pred_region
          %558 = vsyncadd [#allocation6], 0
          %s560 = sshll.u32 %s6, 4
          %s561 = int_to_ptr.hbm [resolvable:$true] %s560
          %s562 = sshll.u32 [#allocation7], 4
          %s563 = int_to_ptr.vmem [resolvable:$true] %s562
          %565 = dma.hbm_to_vmem [thread:$0]  %s561, 32, %s563, [#allocation6]
        $region36: #{tpu_custom_call.1} parent=11 // pred_fallthru
          _
        // Predicated region
        $region37: #{tpu_custom_call.1} parent=11 // pred_check
          %p566 = pneg %p207
        $region38: #{tpu_custom_call.1} parent=11 // pred_check_branch
          %568 = sbr.rel (%p566) target = $region40
        $region39: #{tpu_custom_call.1} parent=11 // pred_region
          %570 = vsyncadd [#allocation9], 0
          %s572 = sshll.u32 %s7, 4
          %s573 = int_to_ptr.hbm [resolvable:$true] %s572
          %s574 = sshll.u32 [#allocation8], 4
          %s575 = int_to_ptr.vmem [resolvable:$true] %s574
          %577 = dma.hbm_to_vmem [thread:$0]  %s573, 16, %s575, [#allocation9]
        $region40: #{tpu_custom_call.1} parent=11 // pred_fallthru
          _
        // Predicated region
        $region41: #{tpu_custom_call.1} parent=11 // pred_check
          %p578 = pneg %p228
        $region42: #{tpu_custom_call.1} parent=11 // pred_check_branch
          %580 = sbr.rel (%p578) target = $region44
        $region43: #{tpu_custom_call.1} parent=11 // pred_region
          %582 = vsyncadd [#allocation9], 0
          %s584 = sshll.u32 %s8, 4
          %s585 = int_to_ptr.hbm [resolvable:$true] %s584
          %s586 = sshll.u32 [#allocation10], 4
          %s587 = int_to_ptr.vmem [resolvable:$true] %s586
          %589 = dma.hbm_to_vmem [thread:$0]  %s585, 16, %s587, [#allocation9]
        $region44: #{tpu_custom_call.1} parent=11 // pred_fallthru
          _
        // Predicated region
        $region45: #{tpu_custom_call.1} parent=11 // pred_check
          %p590 = pneg %p249
        $region46: #{tpu_custom_call.1} parent=11 // pred_check_branch
          %592 = sbr.rel (%p590) target = $region48
        $region47: #{tpu_custom_call.1} parent=11 // pred_region
          _
        $region48: #{tpu_custom_call.1} parent=11 // pred_fallthru
          _
        // Predicated region
        $region49: #{tpu_custom_call.1} parent=11 // pred_check
          %p593 = pneg %p270
        $region50: #{tpu_custom_call.1} parent=11 // pred_check_branch
          %595 = sbr.rel (%p593) target = $region52
        $region51: #{tpu_custom_call.1} parent=11 // pred_region
          _
        $region52: #{tpu_custom_call.1} parent=11 // pred_fallthru
          _
        // Predicated region
        $region53: #{tpu_custom_call.1} parent=11 // pred_check
          %p596 = pneg %p291
        $region54: #{tpu_custom_call.1} parent=11 // pred_check_branch
          %598 = sbr.rel (%p596) target = $region56
        $region55: #{tpu_custom_call.1} parent=11 // pred_region
          _
        $region56: #{tpu_custom_call.1} parent=11 // pred_fallthru
          _
        // Predicated region
        $region57: #{tpu_custom_call.1} parent=11 // pred_check
          %p599 = pneg %p312
        $region58: #{tpu_custom_call.1} parent=11 // pred_check_branch
          %601 = sbr.rel (%p599) target = $region60
        $region59: #{tpu_custom_call.1} parent=11 // pred_region
          _
        $region60: #{tpu_custom_call.1} parent=11 // pred_fallthru
          _
        // Predicated region
        $region61: #{tpu_custom_call.1} parent=11 // pred_check
          %p602 = pneg %p333
        $region62: #{tpu_custom_call.1} parent=11 // pred_check_branch
          %604 = sbr.rel (%p602) target = $region64
        $region63: #{tpu_custom_call.1} parent=11 // pred_region
          %606 = vsyncadd [#allocation12], 0
          %s607 = sshll.u32 %s13, 4
          %s608 = int_to_ptr.hbm [resolvable:$true] %s607
          %s609 = sshll.u32 [#allocation11], 4
          %s610 = int_to_ptr.vmem [resolvable:$true] %s609
          %615 = dma.hbm_to_vmem [thread:$0]  %s608, 1024, %s610, [#allocation12], 64, 64, 4
        $region64: #{tpu_custom_call.1} parent=11 // pred_fallthru
          _
        // Predicated region
        $region65: #{tpu_custom_call.1} parent=11 // pred_check
          %p616 = pneg %p354
        $region66: #{tpu_custom_call.1} parent=11 // pred_check_branch
          %618 = sbr.rel (%p616) target = $region68
        $region67: #{tpu_custom_call.1} parent=11 // pred_region
          _
        $region68: #{tpu_custom_call.1} parent=11 // pred_fallthru
          _
        // Predicated region
        $region69: #{tpu_custom_call.1} parent=11 // pred_check
          %p619 = pneg %p375
        $region70: #{tpu_custom_call.1} parent=11 // pred_check_branch
          %621 = sbr.rel (%p619) target = $region72
        $region71: #{tpu_custom_call.1} parent=11 // pred_region
          _
        $region72: #{tpu_custom_call.1} parent=11 // pred_fallthru
          _
        // Predicated region
        $region73: #{tpu_custom_call.1} parent=11 // pred_check
          %p622 = pneg %p396
        $region74: #{tpu_custom_call.1} parent=11 // pred_check_branch
          %624 = sbr.rel (%p622) target = $region76
        $region75: #{tpu_custom_call.1} parent=11 // pred_region
          _
        $region76: #{tpu_custom_call.1} parent=11 // pred_fallthru
          _
        // Predicated region
        $region77: #{tpu_custom_call.1} parent=11 // pred_check
          %p625 = pneg %p417
        $region78: #{tpu_custom_call.1} parent=11 // pred_check_branch
          %627 = sbr.rel (%p625) target = $region80
        $region79: #{tpu_custom_call.1} parent=11 // pred_region
          _
        $region80: #{tpu_custom_call.1} parent=11 // pred_fallthru
          _
        // Predicated region
        $region81: #{tpu_custom_call.1} parent=11 // pred_check
          %p628 = pneg %p438
        $region82: #{tpu_custom_call.1} parent=11 // pred_check_branch
          %630 = sbr.rel (%p628) target = $region84
        $region83: #{tpu_custom_call.1} parent=11 // pred_region
          _
        $region84: #{tpu_custom_call.1} parent=11 // pred_fallthru
          _
        // Predicated region
        $region85: #{tpu_custom_call.1} parent=11 // pred_check
          %p631 = pneg %p459
        $region86: #{tpu_custom_call.1} parent=11 // pred_check_branch
          %633 = sbr.rel (%p631) target = $region88
        $region87: #{tpu_custom_call.1} parent=11 // pred_region
          _
        $region88: #{tpu_custom_call.1} parent=11 // pred_fallthru
          _
        // Predicated region
        $region89: #{tpu_custom_call.1} parent=11 // pred_check
          %p634 = pneg %p480
        $region90: #{tpu_custom_call.1} parent=11 // pred_check_branch
          %636 = sbr.rel (%p634) target = $region92
        $region91: #{tpu_custom_call.1} parent=11 // pred_region
          _
        $region92: #{tpu_custom_call.1} parent=11 // pred_fallthru
          _
      $region12: #{tpu_custom_call.1} parent=5 // pred_fallthru
        _
      %p637 = scmp.lt.s32.totalorder %s34, 2
      // Predicated region
      $region93: #{tpu_custom_call.1} parent=5 // pred_check
        %p638 = pneg %p637
      $region94: #{tpu_custom_call.1} parent=5 // pred_check_branch
        %640 = sbr.rel (%p638) target = $region96
      $region95: #{tpu_custom_call.1} parent=5 // pred_region
        // Predicated region
        $region97: #{tpu_custom_call.1} parent=95 // pred_check
          %p641 = pneg %p54
        $region98: #{tpu_custom_call.1} parent=95 // pred_check_branch
          %643 = sbr.rel (%p641) target = $region100
        $region99: #{tpu_custom_call.1} parent=95 // pred_region
          %s644 = smul.u32 32, %s34
          %p645 = scmp.lt.s32.totalorder %s644, 63
          %s646 = scalar_select %p645, %s644, 63
          %s647 = smul.addr %s646, 8
          %s648 = scalar_lea.vmem %s0, %s647
          %s649 = smul.u32 32, %s34
        $region100: #{tpu_custom_call.1} parent=95 // pred_fallthru
          _
      $region96: #{tpu_custom_call.1} parent=5 // pred_fallthru
        _
      %p650 = scmp.le.s32.totalorder 1, %s34
      %p651 = scmp.lt.s32.totalorder %s34, 3
      %p652 = pnand %p650, %p651
      %p653 = pneg %p652
      // Predicated region
      $region101: #{tpu_custom_call.1} parent=5 // pred_check
        _
      $region102: #{tpu_custom_call.1} parent=5 // pred_check_branch
        %655 = sbr.rel (%p652) target = $region104
      $region103: #{tpu_custom_call.1} parent=5 // pred_region
        %s656 = ssub.s32 %s34, 1
        // Predicated region
        $region105: #{tpu_custom_call.1} parent=103 // pred_check
          %p657 = pneg %p102
        $region106: #{tpu_custom_call.1} parent=103 // pred_check_branch
          %659 = sbr.rel (%p657) target = $region108
        $region107: #{tpu_custom_call.1} parent=103 // pred_region
          %661 = dma.done [#allocation3], 32
        $region108: #{tpu_custom_call.1} parent=103 // pred_fallthru
          _
        // Predicated region
        $region109: #{tpu_custom_call.1} parent=103 // pred_check
          %p662 = pneg %p144
        $region110: #{tpu_custom_call.1} parent=103 // pred_check_branch
          %664 = sbr.rel (%p662) target = $region112
        $region111: #{tpu_custom_call.1} parent=103 // pred_region
          %666 = dma.done [#allocation6], 16
        $region112: #{tpu_custom_call.1} parent=103 // pred_fallthru
          _
        // Predicated region
        $region113: #{tpu_custom_call.1} parent=103 // pred_check
          %p667 = pneg %p186
        $region114: #{tpu_custom_call.1} parent=103 // pred_check_branch
          %669 = sbr.rel (%p667) target = $region116
        $region115: #{tpu_custom_call.1} parent=103 // pred_region
          %671 = dma.done [#allocation6], 32
        $region116: #{tpu_custom_call.1} parent=103 // pred_fallthru
          _
        // Predicated region
        $region117: #{tpu_custom_call.1} parent=103 // pred_check
          %p672 = pneg %p207
        $region118: #{tpu_custom_call.1} parent=103 // pred_check_branch
          %674 = sbr.rel (%p672) target = $region120
        $region119: #{tpu_custom_call.1} parent=103 // pred_region
          %676 = dma.done [#allocation9], 16
        $region120: #{tpu_custom_call.1} parent=103 // pred_fallthru
          _
        // Predicated region
        $region121: #{tpu_custom_call.1} parent=103 // pred_check
          %p677 = pneg %p228
        $region122: #{tpu_custom_call.1} parent=103 // pred_check_branch
          %679 = sbr.rel (%p677) target = $region124
        $region123: #{tpu_custom_call.1} parent=103 // pred_region
          %681 = dma.done [#allocation9], 16
        $region124: #{tpu_custom_call.1} parent=103 // pred_fallthru
          _
        // Predicated region
        $region125: #{tpu_custom_call.1} parent=103 // pred_check
          %p682 = pneg %p333
        $region126: #{tpu_custom_call.1} parent=103 // pred_check_branch
          %684 = sbr.rel (%p682) target = $region128
        $region127: #{tpu_custom_call.1} parent=103 // pred_region
          %686 = dma.done [#allocation12], 1024
        $region128: #{tpu_custom_call.1} parent=103 // pred_fallthru
          _
        %s687 = smul.u32 32, %s39
        %p688 = scmp.lt.s32.totalorder %s687, 63
        %s689 = scalar_select %p688, %s687, 63
        %s690 = smul.addr %s689, 8
        %s691 = scalar_lea.vmem %s0, %s690
        %p692 = pneg %p60
        %p693 = pneg %p57
        %p694 = pneg %p81
        %p695 = pneg %p78
        %p696 = pneg %p102
        %p697 = pneg %p99
        %p698 = pneg %p123
        %p699 = pneg %p120
        %p700 = pneg %p144
        %p701 = pneg %p141
        %p702 = pneg %p165
        %p703 = pneg %p162
        %p704 = pneg %p186
        %p705 = pneg %p183
        %p706 = pneg %p207
        %p707 = pneg %p204
        %p708 = pneg %p228
        %p709 = pneg %p225
        %p710 = pneg %p249
        %p711 = pneg %p246
        %p712 = pneg %p270
        %p713 = pneg %p267
        %p714 = pneg %p291
        %p715 = pneg %p288
        %p716 = pneg %p312
        %p717 = pneg %p309
        %p718 = pneg %p333
        %p719 = pneg %p330
        %p720 = pneg %p354
        %p721 = pneg %p351
        %p722 = pneg %p375
        %p723 = pneg %p372
        %p724 = pneg %p396
        %p725 = pneg %p393
        %p726 = pneg %p417
        %p727 = pneg %p414
        %p728 = pneg %p438
        %p729 = pneg %p435
        %p730 = pneg %p459
        %p731 = pneg %p456
        %p732 = pneg %p480
        %p733 = pneg %p477
        %p734 = pneg %p506
        %p735 = pneg %p503
        %s736 = sand.u32 %s493, 1
        %s737 = scalar_lea.sflag [#allocation4], %s736
        %s738 = sand.u32 %s493, 1
        %s739 = smul.addr %s738, 256
        %s740 = scalar_lea.vmem [#allocation13], %s739
        %s741 = smul.u32 32, %s39
        %p742 = scmp.lt.s32.totalorder %s741, 63
        %s743 = scalar_select %p742, %s741, 63
        %s744 = smul.addr %s743, 8
        %s745 = scalar_lea.vmem %s0, %s744
        %s746 = smul.u32 32, %s39
        %s747 = smul.u32 32, %s39
        %v749 = vld [vmem:[%s745] sm:$0xff]
        %v750 = vld [vmem:[%s745 + $0x8] sm:$0xff]
        %v751 = vld [vmem:[%s745 + $0x10] sm:$0xff]
        %v752 = vld [vmem:[%s745 + $0x18] sm:$0xff]
        %v753 = vld [vmem:[%s745 + $0x20] sm:$0xff]
        %v754 = vld [vmem:[%s745 + $0x28] sm:$0xff]
        %v755 = vld [vmem:[%s745 + $0x30] sm:$0xff]
        %v756 = vld [vmem:[%s745 + $0x38] sm:$0xff]
        %v757 = vld [vmem:[%s745 + $0x40] sm:$0xff]
        %v758 = vld [vmem:[%s745 + $0x48] sm:$0xff]
        %v759 = vld [vmem:[%s745 + $0x50] sm:$0xff]
        %v760 = vld [vmem:[%s745 + $0x58] sm:$0xff]
        %v761 = vld [vmem:[%s745 + $0x60] sm:$0xff]
        %v762 = vld [vmem:[%s745 + $0x68] sm:$0xff]
        %v763 = vld [vmem:[%s745 + $0x70] sm:$0xff]
        %v764 = vld [vmem:[%s745 + $0x78] sm:$0xff]
        %v765 = vld [vmem:[%s745 + $0x80] sm:$0xff]
        %v766 = vld [vmem:[%s745 + $0x88] sm:$0xff]
        %v767 = vld [vmem:[%s745 + $0x90] sm:$0xff]
        %v768 = vld [vmem:[%s745 + $0x98] sm:$0xff]
        %v769 = vld [vmem:[%s745 + $0xa0] sm:$0xff]
        %v770 = vld [vmem:[%s745 + $0xa8] sm:$0xff]
        %v771 = vld [vmem:[%s745 + $0xb0] sm:$0xff]
        %v772 = vld [vmem:[%s745 + $0xb8] sm:$0xff]
        %v773 = vld [vmem:[%s745 + $0xc0] sm:$0xff]
        %v774 = vld [vmem:[%s745 + $0xc8] sm:$0xff]
        %v775 = vld [vmem:[%s745 + $0xd0] sm:$0xff]
        %v776 = vld [vmem:[%s745 + $0xd8] sm:$0xff]
        %v777 = vld [vmem:[%s745 + $0xe0] sm:$0xff]
        %v778 = vld [vmem:[%s745 + $0xe8] sm:$0xff]
        %v779 = vld [vmem:[%s745 + $0xf0] sm:$0xff]
        %v780 = vld [vmem:[%s745 + $0xf8] sm:$0xff]
        %v781 = vpack.c.bf16 %v750, %v749
        %v782 = vpack.c.bf16 %v752, %v751
        %v783 = vpack.c.bf16 %v754, %v753
        %v784 = vpack.c.bf16 %v756, %v755
        %v785 = vpack.c.bf16 %v758, %v757
        %v786 = vpack.c.bf16 %v760, %v759
        %v787 = vpack.c.bf16 %v762, %v761
        %v788 = vpack.c.bf16 %v764, %v763
        %v789 = vpack.c.bf16 %v766, %v765
        %v790 = vpack.c.bf16 %v768, %v767
        %v791 = vpack.c.bf16 %v770, %v769
        %v792 = vpack.c.bf16 %v772, %v771
        %v793 = vpack.c.bf16 %v774, %v773
        %v794 = vpack.c.bf16 %v776, %v775
        %v795 = vpack.c.bf16 %v778, %v777
        %v796 = vpack.c.bf16 %v780, %v779
        %v797 = vld [vmem:[%s1] sm:$0xff]
        %v798 = vld [vmem:[%s1 + $0x8] sm:$0xff]
        %v799 = vld [vmem:[%s1 + $0x10] sm:$0xff]
        %v800 = vld [vmem:[%s1 + $0x18] sm:$0xff]
        %v801 = vld [vmem:[%s1 + $0x20] sm:$0xff]
        %v802 = vld [vmem:[%s1 + $0x28] sm:$0xff]
        %v803 = vld [vmem:[%s1 + $0x30] sm:$0xff]
        %v804 = vld [vmem:[%s1 + $0x38] sm:$0xff]
        %v805 = vld [vmem:[#allocation2] sm:$0x3]
        %v807 = vperm.slane %v805, 0
        %v808 = vperm.slane %v805, 1
        %v819 = vunpack.c.l.b16 %v797
        %v820 = vunpack.c.h.b16 %v797
        %v821 = vunpack.c.l.b16 %v798
        %v822 = vunpack.c.h.b16 %v798
        %v823 = vunpack.c.l.b16 %v799
        %v824 = vunpack.c.h.b16 %v799
        %v825 = vunpack.c.l.b16 %v800
        %v826 = vunpack.c.h.b16 %v800
        %v827 = vunpack.c.l.b16 %v801
        %v828 = vunpack.c.h.b16 %v801
        %v829 = vunpack.c.l.b16 %v802
        %v830 = vunpack.c.h.b16 %v802
        %v831 = vunpack.c.l.b16 %v803
        %v832 = vunpack.c.h.b16 %v803
        %v833 = vunpack.c.l.b16 %v804
        %v834 = vunpack.c.h.b16 %v804
        %v835 = vpack.c.b16 %v821, %v819
        %v836 = vpack.c.b16 %v822, %v820
        %v837 = vpack.c.b16 %v825, %v823
        %v838 = vpack.c.b16 %v826, %v824
        %v839 = vpack.c.b16 %v829, %v827
        %v840 = vpack.c.b16 %v830, %v828
        %v841 = vpack.c.b16 %v833, %v831
        %v842 = vpack.c.b16 %v834, %v832
        %vm851 = vcmask 523264
        %v853 = vsel %vm851, %v781, 0
        %v856 = vsel %vm851, %v782, 0
        %v859 = vsel %vm851, %v783, 0
        %v862 = vsel %vm851, %v784, 0
        %v865 = vsel %vm851, %v785, 0
        %v868 = vsel %vm851, %v786, 0
        %v871 = vsel %vm851, %v787, 0
        %v874 = vsel %vm851, %v788, 0
        %v877 = vsel %vm851, %v789, 0
        %v880 = vsel %vm851, %v790, 0
        %v883 = vsel %vm851, %v791, 0
        %v886 = vsel %vm851, %v792, 0
        %v889 = vsel %vm851, %v793, 0
        %v892 = vsel %vm851, %v794, 0
        %v895 = vsel %vm851, %v795, 0
        %v898 = vsel %vm851, %v796, 0
        %900 = vmatpush.bf16.msra.mxu0 0
        %901 = vmatpush.bf16.msra.mxu0 0
        %902 = vmatpush.bf16.msra.mxu0 0
        %903 = vmatpush.bf16.msra.mxu0 0
        %904 = vmatpush.bf16.msra.mxu0 %v841
        %905 = vmatpush.bf16.msra.mxu0 %v839
        %906 = vmatpush.bf16.msra.mxu0 %v837
        %907 = vmatpush.bf16.msra.mxu0 %v835
        %908 = vmatmul.bf16.gmra.mxu0 %v853
        %v909 = vpop.f32.mrf.mxu0
        %v910 = vadd.f32 %v807, %v909
        %v911 = vpop.f32.mrf.mxu0
        %v912 = vadd.f32 %v807, %v911
        %913 = vmatmul.bf16.gmra.mxu0 %v856
        %v914 = vpop.f32.mrf.mxu0
        %v915 = vadd.f32 %v807, %v914
        %v916 = vpop.f32.mrf.mxu0
        %v917 = vadd.f32 %v807, %v916
        %918 = vmatmul.bf16.gmra.mxu0 %v859
        %v919 = vpop.f32.mrf.mxu0
        %v920 = vadd.f32 %v807, %v919
        %v921 = vpop.f32.mrf.mxu0
        %v922 = vadd.f32 %v807, %v921
        %923 = vmatmul.bf16.gmra.mxu0 %v862
        %v924 = vpop.f32.mrf.mxu0
        %v925 = vadd.f32 %v807, %v924
        %v926 = vpop.f32.mrf.mxu0
        %v927 = vadd.f32 %v807, %v926
        %928 = vmatmul.bf16.gmra.mxu0 %v865
        %v929 = vpop.f32.mrf.mxu0
        %v930 = vadd.f32 %v807, %v929
        %v931 = vpop.f32.mrf.mxu0
        %v932 = vadd.f32 %v807, %v931
        %933 = vmatmul.bf16.gmra.mxu0 %v868
        %v934 = vpop.f32.mrf.mxu0
        %v935 = vadd.f32 %v807, %v934
        %v936 = vpop.f32.mrf.mxu0
        %v937 = vadd.f32 %v807, %v936
        %938 = vmatmul.bf16.gmra.mxu0 %v871
        %v939 = vpop.f32.mrf.mxu0
        %v940 = vadd.f32 %v807, %v939
        %v941 = vpop.f32.mrf.mxu0
        %v942 = vadd.f32 %v807, %v941
        %943 = vmatmul.bf16.gmra.mxu0 %v874
        %v944 = vpop.f32.mrf.mxu0
        %v945 = vadd.f32 %v807, %v944
        %v946 = vpop.f32.mrf.mxu0
        %v947 = vadd.f32 %v807, %v946
        %948 = vmatmul.bf16.gmra.mxu0 %v877
        %v949 = vpop.f32.mrf.mxu0
        %v950 = vadd.f32 %v807, %v949
        %v951 = vpop.f32.mrf.mxu0
        %v952 = vadd.f32 %v807, %v951
        %953 = vmatmul.bf16.gmra.mxu0 %v880
        %v954 = vpop.f32.mrf.mxu0
        %v955 = vadd.f32 %v807, %v954
        %v956 = vpop.f32.mrf.mxu0
        %v957 = vadd.f32 %v807, %v956
        %958 = vmatmul.bf16.gmra.mxu0 %v883
        %v959 = vpop.f32.mrf.mxu0
        %v960 = vadd.f32 %v807, %v959
        %v961 = vpop.f32.mrf.mxu0
        %v962 = vadd.f32 %v807, %v961
        %963 = vmatmul.bf16.gmra.mxu0 %v886
        %v964 = vpop.f32.mrf.mxu0
        %v965 = vadd.f32 %v807, %v964
        %v966 = vpop.f32.mrf.mxu0
        %v967 = vadd.f32 %v807, %v966
        %968 = vmatmul.bf16.gmra.mxu0 %v889
        %v969 = vpop.f32.mrf.mxu0
        %v970 = vadd.f32 %v807, %v969
        %v971 = vpop.f32.mrf.mxu0
        %v972 = vadd.f32 %v807, %v971
        %973 = vmatmul.bf16.gmra.mxu0 %v892
        %v974 = vpop.f32.mrf.mxu0
        %v975 = vadd.f32 %v807, %v974
        %v976 = vpop.f32.mrf.mxu0
        %v977 = vadd.f32 %v807, %v976
        %978 = vmatmul.bf16.gmra.mxu0 %v895
        %v979 = vpop.f32.mrf.mxu0
        %v980 = vadd.f32 %v807, %v979
        %v981 = vpop.f32.mrf.mxu0
        %v982 = vadd.f32 %v807, %v981
        %983 = vmatmul.bf16.gmra.mxu0 %v898
        %v984 = vpop.f32.mrf.mxu0
        %v985 = vadd.f32 %v807, %v984
        %v986 = vpop.f32.mrf.mxu0
        %v987 = vadd.f32 %v807, %v986
        %988 = vdwg.mxu0
        %989 = vmatpush.bf16.msra.mxu0 0
        %990 = vmatpush.bf16.msra.mxu0 0
        %991 = vmatpush.bf16.msra.mxu0 0
        %992 = vmatpush.bf16.msra.mxu0 0
        %993 = vmatpush.bf16.msra.mxu0 %v842
        %994 = vmatpush.bf16.msra.mxu0 %v840
        %995 = vmatpush.bf16.msra.mxu0 %v838
        %996 = vmatpush.bf16.msra.mxu0 %v836
        %997 = vmatmul.bf16.gmra.mxu0 %v853
        %v998 = vpop.f32.mrf.mxu0
        %v999 = vadd.f32 %v808, %v998
        %v1000 = vpop.f32.mrf.mxu0
        %v1001 = vadd.f32 %v808, %v1000
        %1002 = vmatmul.bf16.gmra.mxu0 %v856
        %v1003 = vpop.f32.mrf.mxu0
        %v1004 = vadd.f32 %v808, %v1003
        %v1005 = vpop.f32.mrf.mxu0
        %v1006 = vadd.f32 %v808, %v1005
        %1007 = vmatmul.bf16.gmra.mxu0 %v859
        %v1008 = vpop.f32.mrf.mxu0
        %v1009 = vadd.f32 %v808, %v1008
        %v1010 = vpop.f32.mrf.mxu0
        %v1011 = vadd.f32 %v808, %v1010
        %1012 = vmatmul.bf16.gmra.mxu0 %v862
        %v1013 = vpop.f32.mrf.mxu0
        %v1014 = vadd.f32 %v808, %v1013
        %v1015 = vpop.f32.mrf.mxu0
        %v1016 = vadd.f32 %v808, %v1015
        %1017 = vmatmul.bf16.gmra.mxu0 %v865
        %v1018 = vpop.f32.mrf.mxu0
        %v1019 = vadd.f32 %v808, %v1018
        %v1020 = vpop.f32.mrf.mxu0
        %v1021 = vadd.f32 %v808, %v1020
        %1022 = vmatmul.bf16.gmra.mxu0 %v868
        %v1023 = vpop.f32.mrf.mxu0
        %v1024 = vadd.f32 %v808, %v1023
        %v1025 = vpop.f32.mrf.mxu0
        %v1026 = vadd.f32 %v808, %v1025
        %1027 = vmatmul.bf16.gmra.mxu0 %v871
        %v1028 = vpop.f32.mrf.mxu0
        %v1029 = vadd.f32 %v808, %v1028
        %v1030 = vpop.f32.mrf.mxu0
        %v1031 = vadd.f32 %v808, %v1030
        %1032 = vmatmul.bf16.gmra.mxu0 %v874
        %v1033 = vpop.f32.mrf.mxu0
        %v1034 = vadd.f32 %v808, %v1033
        %v1035 = vpop.f32.mrf.mxu0
        %v1036 = vadd.f32 %v808, %v1035
        %1037 = vmatmul.bf16.gmra.mxu0 %v877
        %v1038 = vpop.f32.mrf.mxu0
        %v1039 = vadd.f32 %v808, %v1038
        %v1040 = vpop.f32.mrf.mxu0
        %v1041 = vadd.f32 %v808, %v1040
        %1042 = vmatmul.bf16.gmra.mxu0 %v880
        %v1043 = vpop.f32.mrf.mxu0
        %v1044 = vadd.f32 %v808, %v1043
        %v1045 = vpop.f32.mrf.mxu0
        %v1046 = vadd.f32 %v808, %v1045
        %1047 = vmatmul.bf16.gmra.mxu0 %v883
        %v1048 = vpop.f32.mrf.mxu0
        %v1049 = vadd.f32 %v808, %v1048
        %v1050 = vpop.f32.mrf.mxu0
        %v1051 = vadd.f32 %v808, %v1050
        %1052 = vmatmul.bf16.gmra.mxu0 %v886
        %v1053 = vpop.f32.mrf.mxu0
        %v1054 = vadd.f32 %v808, %v1053
        %v1055 = vpop.f32.mrf.mxu0
        %v1056 = vadd.f32 %v808, %v1055
        %1057 = vmatmul.bf16.gmra.mxu0 %v889
        %v1058 = vpop.f32.mrf.mxu0
        %v1059 = vadd.f32 %v808, %v1058
        %v1060 = vpop.f32.mrf.mxu0
        %v1061 = vadd.f32 %v808, %v1060
        %1062 = vmatmul.bf16.gmra.mxu0 %v892
        %v1063 = vpop.f32.mrf.mxu0
        %v1064 = vadd.f32 %v808, %v1063
        %v1065 = vpop.f32.mrf.mxu0
        %v1066 = vadd.f32 %v808, %v1065
        %1067 = vmatmul.bf16.gmra.mxu0 %v895
        %v1068 = vpop.f32.mrf.mxu0
        %v1069 = vadd.f32 %v808, %v1068
        %v1070 = vpop.f32.mrf.mxu0
        %v1071 = vadd.f32 %v808, %v1070
        %1072 = vmatmul.bf16.gmra.mxu0 %v898
        %v1073 = vpop.f32.mrf.mxu0
        %v1074 = vadd.f32 %v808, %v1073
        %v1075 = vpop.f32.mrf.mxu0
        %v1076 = vadd.f32 %v808, %v1075
        %1077 = vdwg.mxu0
        %vm1078 = vcmp.gt.f32.partialorder %v910, 0.0
        %vm1079 = vcmp.gt.f32.partialorder %v912, 0.0
        %vm1080 = vcmp.gt.f32.partialorder %v915, 0.0
        %vm1081 = vcmp.gt.f32.partialorder %v917, 0.0
        %vm1082 = vcmp.gt.f32.partialorder %v920, 0.0
        %vm1083 = vcmp.gt.f32.partialorder %v922, 0.0
        %vm1084 = vcmp.gt.f32.partialorder %v925, 0.0
        %vm1085 = vcmp.gt.f32.partialorder %v927, 0.0
        %vm1086 = vcmp.gt.f32.partialorder %v930, 0.0
        %vm1087 = vcmp.gt.f32.partialorder %v932, 0.0
        %vm1088 = vcmp.gt.f32.partialorder %v935, 0.0
        %vm1089 = vcmp.gt.f32.partialorder %v937, 0.0
        %vm1090 = vcmp.gt.f32.partialorder %v940, 0.0
        %vm1091 = vcmp.gt.f32.partialorder %v942, 0.0
        %vm1092 = vcmp.gt.f32.partialorder %v945, 0.0
        %vm1093 = vcmp.gt.f32.partialorder %v947, 0.0
        %vm1094 = vcmp.gt.f32.partialorder %v950, 0.0
        %vm1095 = vcmp.gt.f32.partialorder %v952, 0.0
        %vm1096 = vcmp.gt.f32.partialorder %v955, 0.0
        %vm1097 = vcmp.gt.f32.partialorder %v957, 0.0
        %vm1098 = vcmp.gt.f32.partialorder %v960, 0.0
        %vm1099 = vcmp.gt.f32.partialorder %v962, 0.0
        %vm1100 = vcmp.gt.f32.partialorder %v965, 0.0
        %vm1101 = vcmp.gt.f32.partialorder %v967, 0.0
        %vm1102 = vcmp.gt.f32.partialorder %v970, 0.0
        %vm1103 = vcmp.gt.f32.partialorder %v972, 0.0
        %vm1104 = vcmp.gt.f32.partialorder %v975, 0.0
        %vm1105 = vcmp.gt.f32.partialorder %v977, 0.0
        %vm1106 = vcmp.gt.f32.partialorder %v980, 0.0
        %vm1107 = vcmp.gt.f32.partialorder %v982, 0.0
        %vm1108 = vcmp.gt.f32.partialorder %v985, 0.0
        %vm1109 = vcmp.gt.f32.partialorder %v987, 0.0
        %v1110 = vmin.f32 %v910, 0.0
        %v1111 = vmin.f32 %v912, 0.0
        %v1112 = vmin.f32 %v915, 0.0
        %v1113 = vmin.f32 %v917, 0.0
        %v1114 = vmin.f32 %v920, 0.0
        %v1115 = vmin.f32 %v922, 0.0
        %v1116 = vmin.f32 %v925, 0.0
        %v1117 = vmin.f32 %v927, 0.0
        %v1118 = vmin.f32 %v930, 0.0
        %v1119 = vmin.f32 %v932, 0.0
        %v1120 = vmin.f32 %v935, 0.0
        %v1121 = vmin.f32 %v937, 0.0
        %v1122 = vmin.f32 %v940, 0.0
        %v1123 = vmin.f32 %v942, 0.0
        %v1124 = vmin.f32 %v945, 0.0
        %v1125 = vmin.f32 %v947, 0.0
        %v1126 = vmin.f32 %v950, 0.0
        %v1127 = vmin.f32 %v952, 0.0
        %v1128 = vmin.f32 %v955, 0.0
        %v1129 = vmin.f32 %v957, 0.0
        %v1130 = vmin.f32 %v960, 0.0
        %v1131 = vmin.f32 %v962, 0.0
        %v1132 = vmin.f32 %v965, 0.0
        %v1133 = vmin.f32 %v967, 0.0
        %v1134 = vmin.f32 %v970, 0.0
        %v1135 = vmin.f32 %v972, 0.0
        %v1136 = vmin.f32 %v975, 0.0
        %v1137 = vmin.f32 %v977, 0.0
        %v1138 = vmin.f32 %v980, 0.0
        %v1139 = vmin.f32 %v982, 0.0
        %v1140 = vmin.f32 %v985, 0.0
        %v1141 = vmin.f32 %v987, 0.0
        %v1142 = vmul.f32 %v1110, 1.442695
        %v1143 = vpow.pop %v1142
        %v1144 = vmul.f32 %v1111, 1.442695
        %v1145 = vpow.pop %v1144
        %v1146 = vmul.f32 %v1112, 1.442695
        %v1147 = vpow.pop %v1146
        %v1148 = vmul.f32 %v1113, 1.442695
        %v1149 = vpow.pop %v1148
        %v1150 = vmul.f32 %v1114, 1.442695
        %v1151 = vpow.pop %v1150
        %v1152 = vmul.f32 %v1115, 1.442695
        %v1153 = vpow.pop %v1152
        %v1154 = vmul.f32 %v1116, 1.442695
        %v1155 = vpow.pop %v1154
        %v1156 = vmul.f32 %v1117, 1.442695
        %v1157 = vpow.pop %v1156
        %v1158 = vmul.f32 %v1118, 1.442695
        %v1159 = vpow.pop %v1158
        %v1160 = vmul.f32 %v1119, 1.442695
        %v1161 = vpow.pop %v1160
        %v1162 = vmul.f32 %v1120, 1.442695
        %v1163 = vpow.pop %v1162
        %v1164 = vmul.f32 %v1121, 1.442695
        %v1165 = vpow.pop %v1164
        %v1166 = vmul.f32 %v1122, 1.442695
        %v1167 = vpow.pop %v1166
        %v1168 = vmul.f32 %v1123, 1.442695
        %v1169 = vpow.pop %v1168
        %v1170 = vmul.f32 %v1124, 1.442695
        %v1171 = vpow.pop %v1170
        %v1172 = vmul.f32 %v1125, 1.442695
        %v1173 = vpow.pop %v1172
        %v1174 = vmul.f32 %v1126, 1.442695
        %v1175 = vpow.pop %v1174
        %v1176 = vmul.f32 %v1127, 1.442695
        %v1177 = vpow.pop %v1176
        %v1178 = vmul.f32 %v1128, 1.442695
        %v1179 = vpow.pop %v1178
        %v1180 = vmul.f32 %v1129, 1.442695
        %v1181 = vpow.pop %v1180
        %v1182 = vmul.f32 %v1130, 1.442695
        %v1183 = vpow.pop %v1182
        %v1184 = vmul.f32 %v1131, 1.442695
        %v1185 = vpow.pop %v1184
        %v1186 = vmul.f32 %v1132, 1.442695
        %v1187 = vpow.pop %v1186
        %v1188 = vmul.f32 %v1133, 1.442695
        %v1189 = vpow.pop %v1188
        %v1190 = vmul.f32 %v1134, 1.442695
        %v1191 = vpow.pop %v1190
        %v1192 = vmul.f32 %v1135, 1.442695
        %v1193 = vpow.pop %v1192
        %v1194 = vmul.f32 %v1136, 1.442695
        %v1195 = vpow.pop %v1194
        %v1196 = vmul.f32 %v1137, 1.442695
        %v1197 = vpow.pop %v1196
        %v1198 = vmul.f32 %v1138, 1.442695
        %v1199 = vpow.pop %v1198
        %v1200 = vmul.f32 %v1139, 1.442695
        %v1201 = vpow.pop %v1200
        %v1202 = vmul.f32 %v1140, 1.442695
        %v1203 = vpow.pop %v1202
        %v1204 = vmul.f32 %v1141, 1.442695
        %v1205 = vpow.pop %v1204
        %v1206 = vsub.f32 %v1143, 1.0
        %v1207 = vsub.f32 %v1145, 1.0
        %v1208 = vsub.f32 %v1147, 1.0
        %v1209 = vsub.f32 %v1149, 1.0
        %v1210 = vsub.f32 %v1151, 1.0
        %v1211 = vsub.f32 %v1153, 1.0
        %v1212 = vsub.f32 %v1155, 1.0
        %v1213 = vsub.f32 %v1157, 1.0
        %v1214 = vsub.f32 %v1159, 1.0
        %v1215 = vsub.f32 %v1161, 1.0
        %v1216 = vsub.f32 %v1163, 1.0
        %v1217 = vsub.f32 %v1165, 1.0
        %v1218 = vsub.f32 %v1167, 1.0
        %v1219 = vsub.f32 %v1169, 1.0
        %v1220 = vsub.f32 %v1171, 1.0
        %v1221 = vsub.f32 %v1173, 1.0
        %v1222 = vsub.f32 %v1175, 1.0
        %v1223 = vsub.f32 %v1177, 1.0
        %v1224 = vsub.f32 %v1179, 1.0
        %v1225 = vsub.f32 %v1181, 1.0
        %v1226 = vsub.f32 %v1183, 1.0
        %v1227 = vsub.f32 %v1185, 1.0
        %v1228 = vsub.f32 %v1187, 1.0
        %v1229 = vsub.f32 %v1189, 1.0
        %v1230 = vsub.f32 %v1191, 1.0
        %v1231 = vsub.f32 %v1193, 1.0
        %v1232 = vsub.f32 %v1195, 1.0
        %v1233 = vsub.f32 %v1197, 1.0
        %v1234 = vsub.f32 %v1199, 1.0
        %v1235 = vsub.f32 %v1201, 1.0
        %v1236 = vsub.f32 %v1203, 1.0
        %v1237 = vsub.f32 %v1205, 1.0
        %v1238 = vsel %vm1078, %v910, %v1206
        %v1239 = vsel %vm1079, %v912, %v1207
        %v1240 = vsel %vm1080, %v915, %v1208
        %v1241 = vsel %vm1081, %v917, %v1209
        %v1242 = vsel %vm1082, %v920, %v1210
        %v1243 = vsel %vm1083, %v922, %v1211
        %v1244 = vsel %vm1084, %v925, %v1212
        %v1245 = vsel %vm1085, %v927, %v1213
        %v1246 = vsel %vm1086, %v930, %v1214
        %v1247 = vsel %vm1087, %v932, %v1215
        %v1248 = vsel %vm1088, %v935, %v1216
        %v1249 = vsel %vm1089, %v937, %v1217
        %v1250 = vsel %vm1090, %v940, %v1218
        %v1251 = vsel %vm1091, %v942, %v1219
        %v1252 = vsel %vm1092, %v945, %v1220
        %v1253 = vsel %vm1093, %v947, %v1221
        %v1254 = vsel %vm1094, %v950, %v1222
        %v1255 = vsel %vm1095, %v952, %v1223
        %v1256 = vsel %vm1096, %v955, %v1224
        %v1257 = vsel %vm1097, %v957, %v1225
        %v1258 = vsel %vm1098, %v960, %v1226
        %v1259 = vsel %vm1099, %v962, %v1227
        %v1260 = vsel %vm1100, %v965, %v1228
        %v1261 = vsel %vm1101, %v967, %v1229
        %v1262 = vsel %vm1102, %v970, %v1230
        %v1263 = vsel %vm1103, %v972, %v1231
        %v1264 = vsel %vm1104, %v975, %v1232
        %v1265 = vsel %vm1105, %v977, %v1233
        %v1266 = vsel %vm1106, %v980, %v1234
        %v1267 = vsel %vm1107, %v982, %v1235
        %v1268 = vsel %vm1108, %v985, %v1236
        %v1269 = vsel %vm1109, %v987, %v1237
        %v1270 = vpack.c.bf16 %v1239, %v1238
        %v1271 = vpack.c.bf16 %v1241, %v1240
        %v1272 = vpack.c.bf16 %v1243, %v1242
        %v1273 = vpack.c.bf16 %v1245, %v1244
        %v1274 = vpack.c.bf16 %v1247, %v1246
        %v1275 = vpack.c.bf16 %v1249, %v1248
        %v1276 = vpack.c.bf16 %v1251, %v1250
        %v1277 = vpack.c.bf16 %v1253, %v1252
        %v1278 = vpack.c.bf16 %v1255, %v1254
        %v1279 = vpack.c.bf16 %v1257, %v1256
        %v1280 = vpack.c.bf16 %v1259, %v1258
        %v1281 = vpack.c.bf16 %v1261, %v1260
        %v1282 = vpack.c.bf16 %v1263, %v1262
        %v1283 = vpack.c.bf16 %v1265, %v1264
        %v1284 = vpack.c.bf16 %v1267, %v1266
        %v1285 = vpack.c.bf16 %v1269, %v1268
        %v1286 = vld [vmem:[%s3] sm:$0xf]
        %v1287 = vld [vmem:[%s3 + $0x4] sm:$0xf]
        %v1288 = vld [vmem:[%s3 + $0x8] sm:$0xf]
        %v1289 = vld [vmem:[%s3 + $0xc] sm:$0xf]
        %v1290 = vld [vmem:[%s3 + $0x10] sm:$0xf]
        %v1291 = vld [vmem:[%s3 + $0x14] sm:$0xf]
        %v1292 = vld [vmem:[%s3 + $0x18] sm:$0xf]
        %v1293 = vld [vmem:[%s3 + $0x1c] sm:$0xf]
        %v1294 = vld [vmem:[%s3 + $0x20] sm:$0xf]
        %v1295 = vld [vmem:[%s3 + $0x24] sm:$0xf]
        %v1296 = vld [vmem:[%s3 + $0x28] sm:$0xf]
        %v1297 = vld [vmem:[%s3 + $0x2c] sm:$0xf]
        %v1298 = vld [vmem:[%s3 + $0x30] sm:$0xf]
        %v1299 = vld [vmem:[%s3 + $0x34] sm:$0xf]
        %v1300 = vld [vmem:[%s3 + $0x38] sm:$0xf]
        %v1301 = vld [vmem:[%s3 + $0x3c] sm:$0xf]
        %v1302 = vld [vmem:[#allocation5] sm:$0x1]
        %v1304 = vperm.slane %v1302, 0
        %v1322 = vunpack.c.l.b16 %v1286
        %v1323 = vunpack.c.l.b16 %v1287
        %v1324 = vunpack.c.l.b16 %v1288
        %v1325 = vunpack.c.l.b16 %v1289
        %v1326 = vunpack.c.l.b16 %v1290
        %v1327 = vunpack.c.l.b16 %v1291
        %v1328 = vunpack.c.l.b16 %v1292
        %v1329 = vunpack.c.l.b16 %v1293
        %v1330 = vunpack.c.l.b16 %v1294
        %v1331 = vunpack.c.l.b16 %v1295
        %v1332 = vunpack.c.l.b16 %v1296
        %v1333 = vunpack.c.l.b16 %v1297
        %v1334 = vunpack.c.l.b16 %v1298
        %v1335 = vunpack.c.l.b16 %v1299
        %v1336 = vunpack.c.l.b16 %v1300
        %v1337 = vunpack.c.l.b16 %v1301
        %v1338 = vpack.c.b16 %v1323, %v1322
        %v1339 = vpack.c.b16 %v1325, %v1324
        %v1340 = vpack.c.b16 %v1327, %v1326
        %v1341 = vpack.c.b16 %v1329, %v1328
        %v1342 = vpack.c.b16 %v1331, %v1330
        %v1343 = vpack.c.b16 %v1333, %v1332
        %v1344 = vpack.c.b16 %v1335, %v1334
        %v1345 = vpack.c.b16 %v1337, %v1336
        %1354 = vmatpush.bf16.msra.mxu0 %v1345
        %1355 = vmatpush.bf16.msra.mxu0 %v1344
        %1356 = vmatpush.bf16.msra.mxu0 %v1343
        %1357 = vmatpush.bf16.msra.mxu0 %v1342
        %1358 = vmatpush.bf16.msra.mxu0 %v1341
        %1359 = vmatpush.bf16.msra.mxu0 %v1340
        %1360 = vmatpush.bf16.msra.mxu0 %v1339
        %1361 = vmatpush.bf16.msra.mxu0 %v1338
        %1362 = vmatmul.bf16.gmra.mxu0 %v1270
        %v1363 = vpop.f32.mrf.mxu0
        %v1364 = vadd.f32 %v1304, %v1363
        %v1365 = vpop.f32.mrf.mxu0
        %v1366 = vadd.f32 %v1304, %v1365
        %1367 = vmatmul.bf16.gmra.mxu0 %v1271
        %v1368 = vpop.f32.mrf.mxu0
        %v1369 = vadd.f32 %v1304, %v1368
        %v1370 = vpop.f32.mrf.mxu0
        %v1371 = vadd.f32 %v1304, %v1370
        %1372 = vmatmul.bf16.gmra.mxu0 %v1272
        %v1373 = vpop.f32.mrf.mxu0
        %v1374 = vadd.f32 %v1304, %v1373
        %v1375 = vpop.f32.mrf.mxu0
        %v1376 = vadd.f32 %v1304, %v1375
        %1377 = vmatmul.bf16.gmra.mxu0 %v1273
        %v1378 = vpop.f32.mrf.mxu0
        %v1379 = vadd.f32 %v1304, %v1378
        %v1380 = vpop.f32.mrf.mxu0
        %v1381 = vadd.f32 %v1304, %v1380
        %1382 = vmatmul.bf16.gmra.mxu0 %v1274
        %v1383 = vpop.f32.mrf.mxu0
        %v1384 = vadd.f32 %v1304, %v1383
        %v1385 = vpop.f32.mrf.mxu0
        %v1386 = vadd.f32 %v1304, %v1385
        %1387 = vmatmul.bf16.gmra.mxu0 %v1275
        %v1388 = vpop.f32.mrf.mxu0
        %v1389 = vadd.f32 %v1304, %v1388
        %v1390 = vpop.f32.mrf.mxu0
        %v1391 = vadd.f32 %v1304, %v1390
        %1392 = vmatmul.bf16.gmra.mxu0 %v1276
        %v1393 = vpop.f32.mrf.mxu0
        %v1394 = vadd.f32 %v1304, %v1393
        %v1395 = vpop.f32.mrf.mxu0
        %v1396 = vadd.f32 %v1304, %v1395
        %1397 = vmatmul.bf16.gmra.mxu0 %v1277
        %v1398 = vpop.f32.mrf.mxu0
        %v1399 = vadd.f32 %v1304, %v1398
        %v1400 = vpop.f32.mrf.mxu0
        %v1401 = vadd.f32 %v1304, %v1400
        %1402 = vmatmul.bf16.gmra.mxu0 %v1278
        %v1403 = vpop.f32.mrf.mxu0
        %v1404 = vadd.f32 %v1304, %v1403
        %v1405 = vpop.f32.mrf.mxu0
        %v1406 = vadd.f32 %v1304, %v1405
        %1407 = vmatmul.bf16.gmra.mxu0 %v1279
        %v1408 = vpop.f32.mrf.mxu0
        %v1409 = vadd.f32 %v1304, %v1408
        %v1410 = vpop.f32.mrf.mxu0
        %v1411 = vadd.f32 %v1304, %v1410
        %1412 = vmatmul.bf16.gmra.mxu0 %v1280
        %v1413 = vpop.f32.mrf.mxu0
        %v1414 = vadd.f32 %v1304, %v1413
        %v1415 = vpop.f32.mrf.mxu0
        %v1416 = vadd.f32 %v1304, %v1415
        %1417 = vmatmul.bf16.gmra.mxu0 %v1281
        %v1418 = vpop.f32.mrf.mxu0
        %v1419 = vadd.f32 %v1304, %v1418
        %v1420 = vpop.f32.mrf.mxu0
        %v1421 = vadd.f32 %v1304, %v1420
        %1422 = vmatmul.bf16.gmra.mxu0 %v1282
        %v1423 = vpop.f32.mrf.mxu0
        %v1424 = vadd.f32 %v1304, %v1423
        %v1425 = vpop.f32.mrf.mxu0
        %v1426 = vadd.f32 %v1304, %v1425
        %1427 = vmatmul.bf16.gmra.mxu0 %v1283
        %v1428 = vpop.f32.mrf.mxu0
        %v1429 = vadd.f32 %v1304, %v1428
        %v1430 = vpop.f32.mrf.mxu0
        %v1431 = vadd.f32 %v1304, %v1430
        %1432 = vmatmul.bf16.gmra.mxu0 %v1284
        %v1433 = vpop.f32.mrf.mxu0
        %v1434 = vadd.f32 %v1304, %v1433
        %v1435 = vpop.f32.mrf.mxu0
        %v1436 = vadd.f32 %v1304, %v1435
        %1437 = vmatmul.bf16.gmra.mxu0 %v1285
        %v1438 = vpop.f32.mrf.mxu0
        %v1439 = vadd.f32 %v1304, %v1438
        %v1440 = vpop.f32.mrf.mxu0
        %v1441 = vadd.f32 %v1304, %v1440
        %1442 = vdwg.mxu0
        %v1443 = vpack.c.bf16 %v1366, %v1364
        %v1444 = vpack.c.bf16 %v1371, %v1369
        %v1445 = vpack.c.bf16 %v1376, %v1374
        %v1446 = vpack.c.bf16 %v1381, %v1379
        %v1447 = vpack.c.bf16 %v1386, %v1384
        %v1448 = vpack.c.bf16 %v1391, %v1389
        %v1449 = vpack.c.bf16 %v1396, %v1394
        %v1450 = vpack.c.bf16 %v1401, %v1399
        %v1451 = vpack.c.bf16 %v1406, %v1404
        %v1452 = vpack.c.bf16 %v1411, %v1409
        %v1453 = vpack.c.bf16 %v1416, %v1414
        %v1454 = vpack.c.bf16 %v1421, %v1419
        %v1455 = vpack.c.bf16 %v1426, %v1424
        %v1456 = vpack.c.bf16 %v1431, %v1429
        %v1457 = vpack.c.bf16 %v1436, %v1434
        %v1458 = vpack.c.bf16 %v1441, %v1439
        %v1459 = vld [vmem:[%s5] sm:$0xff]
        %v1460 = vld [vmem:[%s5 + $0x8] sm:$0xff]
        %v1461 = vld [vmem:[%s5 + $0x10] sm:$0xff]
        %v1462 = vld [vmem:[%s5 + $0x18] sm:$0xff]
        %v1463 = vld [vmem:[%s5 + $0x20] sm:$0xff]
        %v1464 = vld [vmem:[%s5 + $0x28] sm:$0xff]
        %v1465 = vld [vmem:[%s5 + $0x30] sm:$0xff]
        %v1466 = vld [vmem:[%s5 + $0x38] sm:$0xff]
        %v1467 = vld [vmem:[%s5 + $0x40] sm:$0xff]
        %v1468 = vld [vmem:[%s5 + $0x48] sm:$0xff]
        %v1469 = vld [vmem:[%s5 + $0x50] sm:$0xff]
        %v1470 = vld [vmem:[%s5 + $0x58] sm:$0xff]
        %v1471 = vld [vmem:[%s5 + $0x60] sm:$0xff]
        %v1472 = vld [vmem:[%s5 + $0x68] sm:$0xff]
        %v1473 = vld [vmem:[%s5 + $0x70] sm:$0xff]
        %v1474 = vld [vmem:[%s5 + $0x78] sm:$0xff]
        %v1475 = vld [vmem:[#allocation7] sm:$0x3]
        %v1477 = vperm.slane %v1475, 0
        %v1478 = vperm.slane %v1475, 1
        %v1497 = vunpack.c.l.b16 %v1459
        %v1498 = vunpack.c.h.b16 %v1459
        %v1499 = vunpack.c.l.b16 %v1460
        %v1500 = vunpack.c.h.b16 %v1460
        %v1501 = vunpack.c.l.b16 %v1461
        %v1502 = vunpack.c.h.b16 %v1461
        %v1503 = vunpack.c.l.b16 %v1462
        %v1504 = vunpack.c.h.b16 %v1462
        %v1505 = vunpack.c.l.b16 %v1463
        %v1506 = vunpack.c.h.b16 %v1463
        %v1507 = vunpack.c.l.b16 %v1464
        %v1508 = vunpack.c.h.b16 %v1464
        %v1509 = vunpack.c.l.b16 %v1465
        %v1510 = vunpack.c.h.b16 %v1465
        %v1511 = vunpack.c.l.b16 %v1466
        %v1512 = vunpack.c.h.b16 %v1466
        %v1513 = vunpack.c.l.b16 %v1467
        %v1514 = vunpack.c.h.b16 %v1467
        %v1515 = vunpack.c.l.b16 %v1468
        %v1516 = vunpack.c.h.b16 %v1468
        %v1517 = vunpack.c.l.b16 %v1469
        %v1518 = vunpack.c.h.b16 %v1469
        %v1519 = vunpack.c.l.b16 %v1470
        %v1520 = vunpack.c.h.b16 %v1470
        %v1521 = vunpack.c.l.b16 %v1471
        %v1522 = vunpack.c.h.b16 %v1471
        %v1523 = vunpack.c.l.b16 %v1472
        %v1524 = vunpack.c.h.b16 %v1472
        %v1525 = vunpack.c.l.b16 %v1473
        %v1526 = vunpack.c.h.b16 %v1473
        %v1527 = vunpack.c.l.b16 %v1474
        %v1528 = vunpack.c.h.b16 %v1474
        %v1529 = vpack.c.b16 %v1499, %v1497
        %v1530 = vpack.c.b16 %v1500, %v1498
        %v1531 = vpack.c.b16 %v1503, %v1501
        %v1532 = vpack.c.b16 %v1504, %v1502
        %v1533 = vpack.c.b16 %v1507, %v1505
        %v1534 = vpack.c.b16 %v1508, %v1506
        %v1535 = vpack.c.b16 %v1511, %v1509
        %v1536 = vpack.c.b16 %v1512, %v1510
        %v1537 = vpack.c.b16 %v1515, %v1513
        %v1538 = vpack.c.b16 %v1516, %v1514
        %v1539 = vpack.c.b16 %v1519, %v1517
        %v1540 = vpack.c.b16 %v1520, %v1518
        %v1541 = vpack.c.b16 %v1523, %v1521
        %v1542 = vpack.c.b16 %v1524, %v1522
        %v1543 = vpack.c.b16 %v1527, %v1525
        %v1544 = vpack.c.b16 %v1528, %v1526
        %1561 = vmatpush.bf16.msra.mxu0 %v1543
        %1562 = vmatpush.bf16.msra.mxu0 %v1541
        %1563 = vmatpush.bf16.msra.mxu0 %v1539
        %1564 = vmatpush.bf16.msra.mxu0 %v1537
        %1565 = vmatpush.bf16.msra.mxu0 %v1535
        %1566 = vmatpush.bf16.msra.mxu0 %v1533
        %1567 = vmatpush.bf16.msra.mxu0 %v1531
        %1568 = vmatpush.bf16.msra.mxu0 %v1529
        %1569 = vmatmul.bf16.gmra.mxu0 %v1443
        %v1570 = vpop.f32.mrf.mxu0
        %v1571 = vadd.f32 %v1477, %v1570
        %v1572 = vpop.f32.mrf.mxu0
        %v1573 = vadd.f32 %v1477, %v1572
        %1574 = vmatmul.bf16.gmra.mxu0 %v1444
        %v1575 = vpop.f32.mrf.mxu0
        %v1576 = vadd.f32 %v1477, %v1575
        %v1577 = vpop.f32.mrf.mxu0
        %v1578 = vadd.f32 %v1477, %v1577
        %1579 = vmatmul.bf16.gmra.mxu0 %v1445
        %v1580 = vpop.f32.mrf.mxu0
        %v1581 = vadd.f32 %v1477, %v1580
        %v1582 = vpop.f32.mrf.mxu0
        %v1583 = vadd.f32 %v1477, %v1582
        %1584 = vmatmul.bf16.gmra.mxu0 %v1446
        %v1585 = vpop.f32.mrf.mxu0
        %v1586 = vadd.f32 %v1477, %v1585
        %v1587 = vpop.f32.mrf.mxu0
        %v1588 = vadd.f32 %v1477, %v1587
        %1589 = vmatmul.bf16.gmra.mxu0 %v1447
        %v1590 = vpop.f32.mrf.mxu0
        %v1591 = vadd.f32 %v1477, %v1590
        %v1592 = vpop.f32.mrf.mxu0
        %v1593 = vadd.f32 %v1477, %v1592
        %1594 = vmatmul.bf16.gmra.mxu0 %v1448
        %v1595 = vpop.f32.mrf.mxu0
        %v1596 = vadd.f32 %v1477, %v1595
        %v1597 = vpop.f32.mrf.mxu0
        %v1598 = vadd.f32 %v1477, %v1597
        %1599 = vmatmul.bf16.gmra.mxu0 %v1449
        %v1600 = vpop.f32.mrf.mxu0
        %v1601 = vadd.f32 %v1477, %v1600
        %v1602 = vpop.f32.mrf.mxu0
        %v1603 = vadd.f32 %v1477, %v1602
        %1604 = vmatmul.bf16.gmra.mxu0 %v1450
        %v1605 = vpop.f32.mrf.mxu0
        %v1606 = vadd.f32 %v1477, %v1605
        %v1607 = vpop.f32.mrf.mxu0
        %v1608 = vadd.f32 %v1477, %v1607
        %1609 = vmatmul.bf16.gmra.mxu0 %v1451
        %v1610 = vpop.f32.mrf.mxu0
        %v1611 = vadd.f32 %v1477, %v1610
        %v1612 = vpop.f32.mrf.mxu0
        %v1613 = vadd.f32 %v1477, %v1612
        %1614 = vmatmul.bf16.gmra.mxu0 %v1452
        %v1615 = vpop.f32.mrf.mxu0
        %v1616 = vadd.f32 %v1477, %v1615
        %v1617 = vpop.f32.mrf.mxu0
        %v1618 = vadd.f32 %v1477, %v1617
        %1619 = vmatmul.bf16.gmra.mxu0 %v1453
        %v1620 = vpop.f32.mrf.mxu0
        %v1621 = vadd.f32 %v1477, %v1620
        %v1622 = vpop.f32.mrf.mxu0
        %v1623 = vadd.f32 %v1477, %v1622
        %1624 = vmatmul.bf16.gmra.mxu0 %v1454
        %v1625 = vpop.f32.mrf.mxu0
        %v1626 = vadd.f32 %v1477, %v1625
        %v1627 = vpop.f32.mrf.mxu0
        %v1628 = vadd.f32 %v1477, %v1627
        %1629 = vmatmul.bf16.gmra.mxu0 %v1455
        %v1630 = vpop.f32.mrf.mxu0
        %v1631 = vadd.f32 %v1477, %v1630
        %v1632 = vpop.f32.mrf.mxu0
        %v1633 = vadd.f32 %v1477, %v1632
        %1634 = vmatmul.bf16.gmra.mxu0 %v1456
        %v1635 = vpop.f32.mrf.mxu0
        %v1636 = vadd.f32 %v1477, %v1635
        %v1637 = vpop.f32.mrf.mxu0
        %v1638 = vadd.f32 %v1477, %v1637
        %1639 = vmatmul.bf16.gmra.mxu0 %v1457
        %v1640 = vpop.f32.mrf.mxu0
        %v1641 = vadd.f32 %v1477, %v1640
        %v1642 = vpop.f32.mrf.mxu0
        %v1643 = vadd.f32 %v1477, %v1642
        %1644 = vmatmul.bf16.gmra.mxu0 %v1458
        %v1645 = vpop.f32.mrf.mxu0
        %v1646 = vadd.f32 %v1477, %v1645
        %v1647 = vpop.f32.mrf.mxu0
        %v1648 = vadd.f32 %v1477, %v1647
        %1649 = vdwg.mxu0
        %1650 = vmatpush.bf16.msra.mxu0 %v1544
        %1651 = vmatpush.bf16.msra.mxu0 %v1542
        %1652 = vmatpush.bf16.msra.mxu0 %v1540
        %1653 = vmatpush.bf16.msra.mxu0 %v1538
        %1654 = vmatpush.bf16.msra.mxu0 %v1536
        %1655 = vmatpush.bf16.msra.mxu0 %v1534
        %1656 = vmatpush.bf16.msra.mxu0 %v1532
        %1657 = vmatpush.bf16.msra.mxu0 %v1530
        %1658 = vmatmul.bf16.gmra.mxu0 %v1443
        %v1659 = vpop.f32.mrf.mxu0
        %v1660 = vadd.f32 %v1478, %v1659
        %v1661 = vpop.f32.mrf.mxu0
        %v1662 = vadd.f32 %v1478, %v1661
        %1663 = vmatmul.bf16.gmra.mxu0 %v1444
        %v1664 = vpop.f32.mrf.mxu0
        %v1665 = vadd.f32 %v1478, %v1664
        %v1666 = vpop.f32.mrf.mxu0
        %v1667 = vadd.f32 %v1478, %v1666
        %1668 = vmatmul.bf16.gmra.mxu0 %v1445
        %v1669 = vpop.f32.mrf.mxu0
        %v1670 = vadd.f32 %v1478, %v1669
        %v1671 = vpop.f32.mrf.mxu0
        %v1672 = vadd.f32 %v1478, %v1671
        %1673 = vmatmul.bf16.gmra.mxu0 %v1446
        %v1674 = vpop.f32.mrf.mxu0
        %v1675 = vadd.f32 %v1478, %v1674
        %v1676 = vpop.f32.mrf.mxu0
        %v1677 = vadd.f32 %v1478, %v1676
        %1678 = vmatmul.bf16.gmra.mxu0 %v1447
        %v1679 = vpop.f32.mrf.mxu0
        %v1680 = vadd.f32 %v1478, %v1679
        %v1681 = vpop.f32.mrf.mxu0
        %v1682 = vadd.f32 %v1478, %v1681
        %1683 = vmatmul.bf16.gmra.mxu0 %v1448
        %v1684 = vpop.f32.mrf.mxu0
        %v1685 = vadd.f32 %v1478, %v1684
        %v1686 = vpop.f32.mrf.mxu0
        %v1687 = vadd.f32 %v1478, %v1686
        %1688 = vmatmul.bf16.gmra.mxu0 %v1449
        %v1689 = vpop.f32.mrf.mxu0
        %v1690 = vadd.f32 %v1478, %v1689
        %v1691 = vpop.f32.mrf.mxu0
        %v1692 = vadd.f32 %v1478, %v1691
        %1693 = vmatmul.bf16.gmra.mxu0 %v1450
        %v1694 = vpop.f32.mrf.mxu0
        %v1695 = vadd.f32 %v1478, %v1694
        %v1696 = vpop.f32.mrf.mxu0
        %v1697 = vadd.f32 %v1478, %v1696
        %1698 = vmatmul.bf16.gmra.mxu0 %v1451
        %v1699 = vpop.f32.mrf.mxu0
        %v1700 = vadd.f32 %v1478, %v1699
        %v1701 = vpop.f32.mrf.mxu0
        %v1702 = vadd.f32 %v1478, %v1701
        %1703 = vmatmul.bf16.gmra.mxu0 %v1452
        %v1704 = vpop.f32.mrf.mxu0
        %v1705 = vadd.f32 %v1478, %v1704
        %v1706 = vpop.f32.mrf.mxu0
        %v1707 = vadd.f32 %v1478, %v1706
        %1708 = vmatmul.bf16.gmra.mxu0 %v1453
        %v1709 = vpop.f32.mrf.mxu0
        %v1710 = vadd.f32 %v1478, %v1709
        %v1711 = vpop.f32.mrf.mxu0
        %v1712 = vadd.f32 %v1478, %v1711
        %1713 = vmatmul.bf16.gmra.mxu0 %v1454
        %v1714 = vpop.f32.mrf.mxu0
        %v1715 = vadd.f32 %v1478, %v1714
        %v1716 = vpop.f32.mrf.mxu0
        %v1717 = vadd.f32 %v1478, %v1716
        %1718 = vmatmul.bf16.gmra.mxu0 %v1455
        %v1719 = vpop.f32.mrf.mxu0
        %v1720 = vadd.f32 %v1478, %v1719
        %v1721 = vpop.f32.mrf.mxu0
        %v1722 = vadd.f32 %v1478, %v1721
        %1723 = vmatmul.bf16.gmra.mxu0 %v1456
        %v1724 = vpop.f32.mrf.mxu0
        %v1725 = vadd.f32 %v1478, %v1724
        %v1726 = vpop.f32.mrf.mxu0
        %v1727 = vadd.f32 %v1478, %v1726
        %1728 = vmatmul.bf16.gmra.mxu0 %v1457
        %v1729 = vpop.f32.mrf.mxu0
        %v1730 = vadd.f32 %v1478, %v1729
        %v1731 = vpop.f32.mrf.mxu0
        %v1732 = vadd.f32 %v1478, %v1731
        %1733 = vmatmul.bf16.gmra.mxu0 %v1458
        %v1734 = vpop.f32.mrf.mxu0
        %v1735 = vadd.f32 %v1478, %v1734
        %v1736 = vpop.f32.mrf.mxu0
        %v1737 = vadd.f32 %v1478, %v1736
        %1738 = vdwg.mxu0
        %v1739 = vxor.u32 %v1571, 2147483648
        %v1740 = vxor.u32 %v1573, 2147483648
        %v1741 = vxor.u32 %v1576, 2147483648
        %v1742 = vxor.u32 %v1578, 2147483648
        %v1743 = vxor.u32 %v1581, 2147483648
        %v1744 = vxor.u32 %v1583, 2147483648
        %v1745 = vxor.u32 %v1586, 2147483648
        %v1746 = vxor.u32 %v1588, 2147483648
        %v1747 = vxor.u32 %v1591, 2147483648
        %v1748 = vxor.u32 %v1593, 2147483648
        %v1749 = vxor.u32 %v1596, 2147483648
        %v1750 = vxor.u32 %v1598, 2147483648
        %v1751 = vxor.u32 %v1601, 2147483648
        %v1752 = vxor.u32 %v1603, 2147483648
        %v1753 = vxor.u32 %v1606, 2147483648
        %v1754 = vxor.u32 %v1608, 2147483648
        %v1755 = vxor.u32 %v1611, 2147483648
        %v1756 = vxor.u32 %v1613, 2147483648
        %v1757 = vxor.u32 %v1616, 2147483648
        %v1758 = vxor.u32 %v1618, 2147483648
        %v1759 = vxor.u32 %v1621, 2147483648
        %v1760 = vxor.u32 %v1623, 2147483648
        %v1761 = vxor.u32 %v1626, 2147483648
        %v1762 = vxor.u32 %v1628, 2147483648
        %v1763 = vxor.u32 %v1631, 2147483648
        %v1764 = vxor.u32 %v1633, 2147483648
        %v1765 = vxor.u32 %v1636, 2147483648
        %v1766 = vxor.u32 %v1638, 2147483648
        %v1767 = vxor.u32 %v1641, 2147483648
        %v1768 = vxor.u32 %v1643, 2147483648
        %v1769 = vxor.u32 %v1646, 2147483648
        %v1770 = vxor.u32 %v1648, 2147483648
        %v1771 = vmul.f32 %v1739, 1.442695
        %v1772 = vpow.pop %v1771
        %v1773 = vmul.f32 %v1740, 1.442695
        %v1774 = vpow.pop %v1773
        %v1775 = vmul.f32 %v1741, 1.442695
        %v1776 = vpow.pop %v1775
        %v1777 = vmul.f32 %v1742, 1.442695
        %v1778 = vpow.pop %v1777
        %v1779 = vmul.f32 %v1743, 1.442695
        %v1780 = vpow.pop %v1779
        %v1781 = vmul.f32 %v1744, 1.442695
        %v1782 = vpow.pop %v1781
        %v1783 = vmul.f32 %v1745, 1.442695
        %v1784 = vpow.pop %v1783
        %v1785 = vmul.f32 %v1746, 1.442695
        %v1786 = vpow.pop %v1785
        %v1787 = vmul.f32 %v1747, 1.442695
        %v1788 = vpow.pop %v1787
        %v1789 = vmul.f32 %v1748, 1.442695
        %v1790 = vpow.pop %v1789
        %v1791 = vmul.f32 %v1749, 1.442695
        %v1792 = vpow.pop %v1791
        %v1793 = vmul.f32 %v1750, 1.442695
        %v1794 = vpow.pop %v1793
        %v1795 = vmul.f32 %v1751, 1.442695
        %v1796 = vpow.pop %v1795
        %v1797 = vmul.f32 %v1752, 1.442695
        %v1798 = vpow.pop %v1797
        %v1799 = vmul.f32 %v1753, 1.442695
        %v1800 = vpow.pop %v1799
        %v1801 = vmul.f32 %v1754, 1.442695
        %v1802 = vpow.pop %v1801
        %v1803 = vmul.f32 %v1755, 1.442695
        %v1804 = vpow.pop %v1803
        %v1805 = vmul.f32 %v1756, 1.442695
        %v1806 = vpow.pop %v1805
        %v1807 = vmul.f32 %v1757, 1.442695
        %v1808 = vpow.pop %v1807
        %v1809 = vmul.f32 %v1758, 1.442695
        %v1810 = vpow.pop %v1809
        %v1811 = vmul.f32 %v1759, 1.442695
        %v1812 = vpow.pop %v1811
        %v1813 = vmul.f32 %v1760, 1.442695
        %v1814 = vpow.pop %v1813
        %v1815 = vmul.f32 %v1761, 1.442695
        %v1816 = vpow.pop %v1815
        %v1817 = vmul.f32 %v1762, 1.442695
        %v1818 = vpow.pop %v1817
        %v1819 = vmul.f32 %v1763, 1.442695
        %v1820 = vpow.pop %v1819
        %v1821 = vmul.f32 %v1764, 1.442695
        %v1822 = vpow.pop %v1821
        %v1823 = vmul.f32 %v1765, 1.442695
        %v1824 = vpow.pop %v1823
        %v1825 = vmul.f32 %v1766, 1.442695
        %v1826 = vpow.pop %v1825
        %v1827 = vmul.f32 %v1767, 1.442695
        %v1828 = vpow.pop %v1827
        %v1829 = vmul.f32 %v1768, 1.442695
        %v1830 = vpow.pop %v1829
        %v1831 = vmul.f32 %v1769, 1.442695
        %v1832 = vpow.pop %v1831
        %v1833 = vmul.f32 %v1770, 1.442695
        %v1834 = vpow.pop %v1833
        %v1835 = vadd.f32 %v1772, 1.0
        %v1836 = vadd.f32 %v1774, 1.0
        %v1837 = vadd.f32 %v1776, 1.0
        %v1838 = vadd.f32 %v1778, 1.0
        %v1839 = vadd.f32 %v1780, 1.0
        %v1840 = vadd.f32 %v1782, 1.0
        %v1841 = vadd.f32 %v1784, 1.0
        %v1842 = vadd.f32 %v1786, 1.0
        %v1843 = vadd.f32 %v1788, 1.0
        %v1844 = vadd.f32 %v1790, 1.0
        %v1845 = vadd.f32 %v1792, 1.0
        %v1846 = vadd.f32 %v1794, 1.0
        %v1847 = vadd.f32 %v1796, 1.0
        %v1848 = vadd.f32 %v1798, 1.0
        %v1849 = vadd.f32 %v1800, 1.0
        %v1850 = vadd.f32 %v1802, 1.0
        %v1851 = vadd.f32 %v1804, 1.0
        %v1852 = vadd.f32 %v1806, 1.0
        %v1853 = vadd.f32 %v1808, 1.0
        %v1854 = vadd.f32 %v1810, 1.0
        %v1855 = vadd.f32 %v1812, 1.0
        %v1856 = vadd.f32 %v1814, 1.0
        %v1857 = vadd.f32 %v1816, 1.0
        %v1858 = vadd.f32 %v1818, 1.0
        %v1859 = vadd.f32 %v1820, 1.0
        %v1860 = vadd.f32 %v1822, 1.0
        %v1861 = vadd.f32 %v1824, 1.0
        %v1862 = vadd.f32 %v1826, 1.0
        %v1863 = vadd.f32 %v1828, 1.0
        %v1864 = vadd.f32 %v1830, 1.0
        %v1865 = vadd.f32 %v1832, 1.0
        %v1866 = vadd.f32 %v1834, 1.0
        %v1867 = vrcp.pop %v1835
        %v1868 = vmul.f32 %v1835, %v1867
        %v1869 = vsub.f32 1.0, %v1868
        %v1870 = vmul.f32 %v1867, %v1869
        %v1871 = vadd.f32 %v1867, %v1870
        %vm1872 = vweird.f32 %v1835
        %vm1873 = vweird.f32 %v1867
        %vm1874 = vmor %vm1872, %vm1873
        %v1875 = vsel %vm1874, %v1867, %v1871
        %v1876 = vand.u32 2147483647, %v1835
        %vm1877 = vcmp.eq.f32.partialorder %v1876, 8.507059e+37
        %v1878 = vand.u32 %v1835, 2147483648
        %v1879 = vor.u32 1.1754944e-38, %v1878
        %v1880 = vsel %vm1877, %v1879, %v1875
        %v1881 = vmul.f32 1.0, %v1880
        %v1882 = vrcp.pop %v1836
        %v1883 = vmul.f32 %v1836, %v1882
        %v1884 = vsub.f32 1.0, %v1883
        %v1885 = vmul.f32 %v1882, %v1884
        %v1886 = vadd.f32 %v1882, %v1885
        %vm1887 = vweird.f32 %v1836
        %vm1888 = vweird.f32 %v1882
        %vm1889 = vmor %vm1887, %vm1888
        %v1890 = vsel %vm1889, %v1882, %v1886
        %v1891 = vand.u32 2147483647, %v1836
        %vm1892 = vcmp.eq.f32.partialorder %v1891, 8.507059e+37
        %v1893 = vand.u32 %v1836, 2147483648
        %v1894 = vor.u32 1.1754944e-38, %v1893
        %v1895 = vsel %vm1892, %v1894, %v1890
        %v1896 = vmul.f32 1.0, %v1895
        %v1897 = vrcp.pop %v1837
        %v1898 = vmul.f32 %v1837, %v1897
        %v1899 = vsub.f32 1.0, %v1898
        %v1900 = vmul.f32 %v1897, %v1899
        %v1901 = vadd.f32 %v1897, %v1900
        %vm1902 = vweird.f32 %v1837
        %vm1903 = vweird.f32 %v1897
        %vm1904 = vmor %vm1902, %vm1903
        %v1905 = vsel %vm1904, %v1897, %v1901
        %v1906 = vand.u32 2147483647, %v1837
        %vm1907 = vcmp.eq.f32.partialorder %v1906, 8.507059e+37
        %v1908 = vand.u32 %v1837, 2147483648
        %v1909 = vor.u32 1.1754944e-38, %v1908
        %v1910 = vsel %vm1907, %v1909, %v1905
        %v1911 = vmul.f32 1.0, %v1910
        %v1912 = vrcp.pop %v1838
        %v1913 = vmul.f32 %v1838, %v1912
        %v1914 = vsub.f32 1.0, %v1913
        %v1915 = vmul.f32 %v1912, %v1914
        %v1916 = vadd.f32 %v1912, %v1915
        %vm1917 = vweird.f32 %v1838
        %vm1918 = vweird.f32 %v1912
        %vm1919 = vmor %vm1917, %vm1918
        %v1920 = vsel %vm1919, %v1912, %v1916
        %v1921 = vand.u32 2147483647, %v1838
        %vm1922 = vcmp.eq.f32.partialorder %v1921, 8.507059e+37
        %v1923 = vand.u32 %v1838, 2147483648
        %v1924 = vor.u32 1.1754944e-38, %v1923
        %v1925 = vsel %vm1922, %v1924, %v1920
        %v1926 = vmul.f32 1.0, %v1925
        %v1927 = vrcp.pop %v1839
        %v1928 = vmul.f32 %v1839, %v1927
        %v1929 = vsub.f32 1.0, %v1928
        %v1930 = vmul.f32 %v1927, %v1929
        %v1931 = vadd.f32 %v1927, %v1930
        %vm1932 = vweird.f32 %v1839
        %vm1933 = vweird.f32 %v1927
        %vm1934 = vmor %vm1932, %vm1933
        %v1935 = vsel %vm1934, %v1927, %v1931
        %v1936 = vand.u32 2147483647, %v1839
        %vm1937 = vcmp.eq.f32.partialorder %v1936, 8.507059e+37
        %v1938 = vand.u32 %v1839, 2147483648
        %v1939 = vor.u32 1.1754944e-38, %v1938
        %v1940 = vsel %vm1937, %v1939, %v1935
        %v1941 = vmul.f32 1.0, %v1940
        %v1942 = vrcp.pop %v1840
        %v1943 = vmul.f32 %v1840, %v1942
        %v1944 = vsub.f32 1.0, %v1943
        %v1945 = vmul.f32 %v1942, %v1944
        %v1946 = vadd.f32 %v1942, %v1945
        %vm1947 = vweird.f32 %v1840
        %vm1948 = vweird.f32 %v1942
        %vm1949 = vmor %vm1947, %vm1948
        %v1950 = vsel %vm1949, %v1942, %v1946
        %v1951 = vand.u32 2147483647, %v1840
        %vm1952 = vcmp.eq.f32.partialorder %v1951, 8.507059e+37
        %v1953 = vand.u32 %v1840, 2147483648
        %v1954 = vor.u32 1.1754944e-38, %v1953
        %v1955 = vsel %vm1952, %v1954, %v1950
        %v1956 = vmul.f32 1.0, %v1955
        %v1957 = vrcp.pop %v1841
        %v1958 = vmul.f32 %v1841, %v1957
        %v1959 = vsub.f32 1.0, %v1958
        %v1960 = vmul.f32 %v1957, %v1959
        %v1961 = vadd.f32 %v1957, %v1960
        %vm1962 = vweird.f32 %v1841
        %vm1963 = vweird.f32 %v1957
        %vm1964 = vmor %vm1962, %vm1963
        %v1965 = vsel %vm1964, %v1957, %v1961
        %v1966 = vand.u32 2147483647, %v1841
        %vm1967 = vcmp.eq.f32.partialorder %v1966, 8.507059e+37
        %v1968 = vand.u32 %v1841, 2147483648
        %v1969 = vor.u32 1.1754944e-38, %v1968
        %v1970 = vsel %vm1967, %v1969, %v1965
        %v1971 = vmul.f32 1.0, %v1970
        %v1972 = vrcp.pop %v1842
        %v1973 = vmul.f32 %v1842, %v1972
        %v1974 = vsub.f32 1.0, %v1973
        %v1975 = vmul.f32 %v1972, %v1974
        %v1976 = vadd.f32 %v1972, %v1975
        %vm1977 = vweird.f32 %v1842
        %vm1978 = vweird.f32 %v1972
        %vm1979 = vmor %vm1977, %vm1978
        %v1980 = vsel %vm1979, %v1972, %v1976
        %v1981 = vand.u32 2147483647, %v1842
        %vm1982 = vcmp.eq.f32.partialorder %v1981, 8.507059e+37
        %v1983 = vand.u32 %v1842, 2147483648
        %v1984 = vor.u32 1.1754944e-38, %v1983
        %v1985 = vsel %vm1982, %v1984, %v1980
        %v1986 = vmul.f32 1.0, %v1985
        %v1987 = vrcp.pop %v1843
        %v1988 = vmul.f32 %v1843, %v1987
        %v1989 = vsub.f32 1.0, %v1988
        %v1990 = vmul.f32 %v1987, %v1989
        %v1991 = vadd.f32 %v1987, %v1990
        %vm1992 = vweird.f32 %v1843
        %vm1993 = vweird.f32 %v1987
        %vm1994 = vmor %vm1992, %vm1993
        %v1995 = vsel %vm1994, %v1987, %v1991
        %v1996 = vand.u32 2147483647, %v1843
        %vm1997 = vcmp.eq.f32.partialorder %v1996, 8.507059e+37
        %v1998 = vand.u32 %v1843, 2147483648
        %v1999 = vor.u32 1.1754944e-38, %v1998
        %v2000 = vsel %vm1997, %v1999, %v1995
        %v2001 = vmul.f32 1.0, %v2000
        %v2002 = vrcp.pop %v1844
        %v2003 = vmul.f32 %v1844, %v2002
        %v2004 = vsub.f32 1.0, %v2003
        %v2005 = vmul.f32 %v2002, %v2004
        %v2006 = vadd.f32 %v2002, %v2005
        %vm2007 = vweird.f32 %v1844
        %vm2008 = vweird.f32 %v2002
        %vm2009 = vmor %vm2007, %vm2008
        %v2010 = vsel %vm2009, %v2002, %v2006
        %v2011 = vand.u32 2147483647, %v1844
        %vm2012 = vcmp.eq.f32.partialorder %v2011, 8.507059e+37
        %v2013 = vand.u32 %v1844, 2147483648
        %v2014 = vor.u32 1.1754944e-38, %v2013
        %v2015 = vsel %vm2012, %v2014, %v2010
        %v2016 = vmul.f32 1.0, %v2015
        %v2017 = vrcp.pop %v1845
        %v2018 = vmul.f32 %v1845, %v2017
        %v2019 = vsub.f32 1.0, %v2018
        %v2020 = vmul.f32 %v2017, %v2019
        %v2021 = vadd.f32 %v2017, %v2020
        %vm2022 = vweird.f32 %v1845
        %vm2023 = vweird.f32 %v2017
        %vm2024 = vmor %vm2022, %vm2023
        %v2025 = vsel %vm2024, %v2017, %v2021
        %v2026 = vand.u32 2147483647, %v1845
        %vm2027 = vcmp.eq.f32.partialorder %v2026, 8.507059e+37
        %v2028 = vand.u32 %v1845, 2147483648
        %v2029 = vor.u32 1.1754944e-38, %v2028
        %v2030 = vsel %vm2027, %v2029, %v2025
        %v2031 = vmul.f32 1.0, %v2030
        %v2032 = vrcp.pop %v1846
        %v2033 = vmul.f32 %v1846, %v2032
        %v2034 = vsub.f32 1.0, %v2033
        %v2035 = vmul.f32 %v2032, %v2034
        %v2036 = vadd.f32 %v2032, %v2035
        %vm2037 = vweird.f32 %v1846
        %vm2038 = vweird.f32 %v2032
        %vm2039 = vmor %vm2037, %vm2038
        %v2040 = vsel %vm2039, %v2032, %v2036
        %v2041 = vand.u32 2147483647, %v1846
        %vm2042 = vcmp.eq.f32.partialorder %v2041, 8.507059e+37
        %v2043 = vand.u32 %v1846, 2147483648
        %v2044 = vor.u32 1.1754944e-38, %v2043
        %v2045 = vsel %vm2042, %v2044, %v2040
        %v2046 = vmul.f32 1.0, %v2045
        %v2047 = vrcp.pop %v1847
        %v2048 = vmul.f32 %v1847, %v2047
        %v2049 = vsub.f32 1.0, %v2048
        %v2050 = vmul.f32 %v2047, %v2049
        %v2051 = vadd.f32 %v2047, %v2050
        %vm2052 = vweird.f32 %v1847
        %vm2053 = vweird.f32 %v2047
        %vm2054 = vmor %vm2052, %vm2053
        %v2055 = vsel %vm2054, %v2047, %v2051
        %v2056 = vand.u32 2147483647, %v1847
        %vm2057 = vcmp.eq.f32.partialorder %v2056, 8.507059e+37
        %v2058 = vand.u32 %v1847, 2147483648
        %v2059 = vor.u32 1.1754944e-38, %v2058
        %v2060 = vsel %vm2057, %v2059, %v2055
        %v2061 = vmul.f32 1.0, %v2060
        %v2062 = vrcp.pop %v1848
        %v2063 = vmul.f32 %v1848, %v2062
        %v2064 = vsub.f32 1.0, %v2063
        %v2065 = vmul.f32 %v2062, %v2064
        %v2066 = vadd.f32 %v2062, %v2065
        %vm2067 = vweird.f32 %v1848
        %vm2068 = vweird.f32 %v2062
        %vm2069 = vmor %vm2067, %vm2068
        %v2070 = vsel %vm2069, %v2062, %v2066
        %v2071 = vand.u32 2147483647, %v1848
        %vm2072 = vcmp.eq.f32.partialorder %v2071, 8.507059e+37
        %v2073 = vand.u32 %v1848, 2147483648
        %v2074 = vor.u32 1.1754944e-38, %v2073
        %v2075 = vsel %vm2072, %v2074, %v2070
        %v2076 = vmul.f32 1.0, %v2075
        %v2077 = vrcp.pop %v1849
        %v2078 = vmul.f32 %v1849, %v2077
        %v2079 = vsub.f32 1.0, %v2078
        %v2080 = vmul.f32 %v2077, %v2079
        %v2081 = vadd.f32 %v2077, %v2080
        %vm2082 = vweird.f32 %v1849
        %vm2083 = vweird.f32 %v2077
        %vm2084 = vmor %vm2082, %vm2083
        %v2085 = vsel %vm2084, %v2077, %v2081
        %v2086 = vand.u32 2147483647, %v1849
        %vm2087 = vcmp.eq.f32.partialorder %v2086, 8.507059e+37
        %v2088 = vand.u32 %v1849, 2147483648
        %v2089 = vor.u32 1.1754944e-38, %v2088
        %v2090 = vsel %vm2087, %v2089, %v2085
        %v2091 = vmul.f32 1.0, %v2090
        %v2092 = vrcp.pop %v1850
        %v2093 = vmul.f32 %v1850, %v2092
        %v2094 = vsub.f32 1.0, %v2093
        %v2095 = vmul.f32 %v2092, %v2094
        %v2096 = vadd.f32 %v2092, %v2095
        %vm2097 = vweird.f32 %v1850
        %vm2098 = vweird.f32 %v2092
        %vm2099 = vmor %vm2097, %vm2098
        %v2100 = vsel %vm2099, %v2092, %v2096
        %v2101 = vand.u32 2147483647, %v1850
        %vm2102 = vcmp.eq.f32.partialorder %v2101, 8.507059e+37
        %v2103 = vand.u32 %v1850, 2147483648
        %v2104 = vor.u32 1.1754944e-38, %v2103
        %v2105 = vsel %vm2102, %v2104, %v2100
        %v2106 = vmul.f32 1.0, %v2105
        %v2107 = vrcp.pop %v1851
        %v2108 = vmul.f32 %v1851, %v2107
        %v2109 = vsub.f32 1.0, %v2108
        %v2110 = vmul.f32 %v2107, %v2109
        %v2111 = vadd.f32 %v2107, %v2110
        %vm2112 = vweird.f32 %v1851
        %vm2113 = vweird.f32 %v2107
        %vm2114 = vmor %vm2112, %vm2113
        %v2115 = vsel %vm2114, %v2107, %v2111
        %v2116 = vand.u32 2147483647, %v1851
        %vm2117 = vcmp.eq.f32.partialorder %v2116, 8.507059e+37
        %v2118 = vand.u32 %v1851, 2147483648
        %v2119 = vor.u32 1.1754944e-38, %v2118
        %v2120 = vsel %vm2117, %v2119, %v2115
        %v2121 = vmul.f32 1.0, %v2120
        %v2122 = vrcp.pop %v1852
        %v2123 = vmul.f32 %v1852, %v2122
        %v2124 = vsub.f32 1.0, %v2123
        %v2125 = vmul.f32 %v2122, %v2124
        %v2126 = vadd.f32 %v2122, %v2125
        %vm2127 = vweird.f32 %v1852
        %vm2128 = vweird.f32 %v2122
        %vm2129 = vmor %vm2127, %vm2128
        %v2130 = vsel %vm2129, %v2122, %v2126
        %v2131 = vand.u32 2147483647, %v1852
        %vm2132 = vcmp.eq.f32.partialorder %v2131, 8.507059e+37
        %v2133 = vand.u32 %v1852, 2147483648
        %v2134 = vor.u32 1.1754944e-38, %v2133
        %v2135 = vsel %vm2132, %v2134, %v2130
        %v2136 = vmul.f32 1.0, %v2135
        %v2137 = vrcp.pop %v1853
        %v2138 = vmul.f32 %v1853, %v2137
        %v2139 = vsub.f32 1.0, %v2138
        %v2140 = vmul.f32 %v2137, %v2139
        %v2141 = vadd.f32 %v2137, %v2140
        %vm2142 = vweird.f32 %v1853
        %vm2143 = vweird.f32 %v2137
        %vm2144 = vmor %vm2142, %vm2143
        %v2145 = vsel %vm2144, %v2137, %v2141
        %v2146 = vand.u32 2147483647, %v1853
        %vm2147 = vcmp.eq.f32.partialorder %v2146, 8.507059e+37
        %v2148 = vand.u32 %v1853, 2147483648
        %v2149 = vor.u32 1.1754944e-38, %v2148
        %v2150 = vsel %vm2147, %v2149, %v2145
        %v2151 = vmul.f32 1.0, %v2150
        %v2152 = vrcp.pop %v1854
        %v2153 = vmul.f32 %v1854, %v2152
        %v2154 = vsub.f32 1.0, %v2153
        %v2155 = vmul.f32 %v2152, %v2154
        %v2156 = vadd.f32 %v2152, %v2155
        %vm2157 = vweird.f32 %v1854
        %vm2158 = vweird.f32 %v2152
        %vm2159 = vmor %vm2157, %vm2158
        %v2160 = vsel %vm2159, %v2152, %v2156
        %v2161 = vand.u32 2147483647, %v1854
        %vm2162 = vcmp.eq.f32.partialorder %v2161, 8.507059e+37
        %v2163 = vand.u32 %v1854, 2147483648
        %v2164 = vor.u32 1.1754944e-38, %v2163
        %v2165 = vsel %vm2162, %v2164, %v2160
        %v2166 = vmul.f32 1.0, %v2165
        %v2167 = vrcp.pop %v1855
        %v2168 = vmul.f32 %v1855, %v2167
        %v2169 = vsub.f32 1.0, %v2168
        %v2170 = vmul.f32 %v2167, %v2169
        %v2171 = vadd.f32 %v2167, %v2170
        %vm2172 = vweird.f32 %v1855
        %vm2173 = vweird.f32 %v2167
        %vm2174 = vmor %vm2172, %vm2173
        %v2175 = vsel %vm2174, %v2167, %v2171
        %v2176 = vand.u32 2147483647, %v1855
        %vm2177 = vcmp.eq.f32.partialorder %v2176, 8.507059e+37
        %v2178 = vand.u32 %v1855, 2147483648
        %v2179 = vor.u32 1.1754944e-38, %v2178
        %v2180 = vsel %vm2177, %v2179, %v2175
        %v2181 = vmul.f32 1.0, %v2180
        %v2182 = vrcp.pop %v1856
        %v2183 = vmul.f32 %v1856, %v2182
        %v2184 = vsub.f32 1.0, %v2183
        %v2185 = vmul.f32 %v2182, %v2184
        %v2186 = vadd.f32 %v2182, %v2185
        %vm2187 = vweird.f32 %v1856
        %vm2188 = vweird.f32 %v2182
        %vm2189 = vmor %vm2187, %vm2188
        %v2190 = vsel %vm2189, %v2182, %v2186
        %v2191 = vand.u32 2147483647, %v1856
        %vm2192 = vcmp.eq.f32.partialorder %v2191, 8.507059e+37
        %v2193 = vand.u32 %v1856, 2147483648
        %v2194 = vor.u32 1.1754944e-38, %v2193
        %v2195 = vsel %vm2192, %v2194, %v2190
        %v2196 = vmul.f32 1.0, %v2195
        %v2197 = vrcp.pop %v1857
        %v2198 = vmul.f32 %v1857, %v2197
        %v2199 = vsub.f32 1.0, %v2198
        %v2200 = vmul.f32 %v2197, %v2199
        %v2201 = vadd.f32 %v2197, %v2200
        %vm2202 = vweird.f32 %v1857
        %vm2203 = vweird.f32 %v2197
        %vm2204 = vmor %vm2202, %vm2203
        %v2205 = vsel %vm2204, %v2197, %v2201
        %v2206 = vand.u32 2147483647, %v1857
        %vm2207 = vcmp.eq.f32.partialorder %v2206, 8.507059e+37
        %v2208 = vand.u32 %v1857, 2147483648
        %v2209 = vor.u32 1.1754944e-38, %v2208
        %v2210 = vsel %vm2207, %v2209, %v2205
        %v2211 = vmul.f32 1.0, %v2210
        %v2212 = vrcp.pop %v1858
        %v2213 = vmul.f32 %v1858, %v2212
        %v2214 = vsub.f32 1.0, %v2213
        %v2215 = vmul.f32 %v2212, %v2214
        %v2216 = vadd.f32 %v2212, %v2215
        %vm2217 = vweird.f32 %v1858
        %vm2218 = vweird.f32 %v2212
        %vm2219 = vmor %vm2217, %vm2218
        %v2220 = vsel %vm2219, %v2212, %v2216
        %v2221 = vand.u32 2147483647, %v1858
        %vm2222 = vcmp.eq.f32.partialorder %v2221, 8.507059e+37
        %v2223 = vand.u32 %v1858, 2147483648
        %v2224 = vor.u32 1.1754944e-38, %v2223
        %v2225 = vsel %vm2222, %v2224, %v2220
        %v2226 = vmul.f32 1.0, %v2225
        %v2227 = vrcp.pop %v1859
        %v2228 = vmul.f32 %v1859, %v2227
        %v2229 = vsub.f32 1.0, %v2228
        %v2230 = vmul.f32 %v2227, %v2229
        %v2231 = vadd.f32 %v2227, %v2230
        %vm2232 = vweird.f32 %v1859
        %vm2233 = vweird.f32 %v2227
        %vm2234 = vmor %vm2232, %vm2233
        %v2235 = vsel %vm2234, %v2227, %v2231
        %v2236 = vand.u32 2147483647, %v1859
        %vm2237 = vcmp.eq.f32.partialorder %v2236, 8.507059e+37
        %v2238 = vand.u32 %v1859, 2147483648
        %v2239 = vor.u32 1.1754944e-38, %v2238
        %v2240 = vsel %vm2237, %v2239, %v2235
        %v2241 = vmul.f32 1.0, %v2240
        %v2242 = vrcp.pop %v1860
        %v2243 = vmul.f32 %v1860, %v2242
        %v2244 = vsub.f32 1.0, %v2243
        %v2245 = vmul.f32 %v2242, %v2244
        %v2246 = vadd.f32 %v2242, %v2245
        %vm2247 = vweird.f32 %v1860
        %vm2248 = vweird.f32 %v2242
        %vm2249 = vmor %vm2247, %vm2248
        %v2250 = vsel %vm2249, %v2242, %v2246
        %v2251 = vand.u32 2147483647, %v1860
        %vm2252 = vcmp.eq.f32.partialorder %v2251, 8.507059e+37
        %v2253 = vand.u32 %v1860, 2147483648
        %v2254 = vor.u32 1.1754944e-38, %v2253
        %v2255 = vsel %vm2252, %v2254, %v2250
        %v2256 = vmul.f32 1.0, %v2255
        %v2257 = vrcp.pop %v1861
        %v2258 = vmul.f32 %v1861, %v2257
        %v2259 = vsub.f32 1.0, %v2258
        %v2260 = vmul.f32 %v2257, %v2259
        %v2261 = vadd.f32 %v2257, %v2260
        %vm2262 = vweird.f32 %v1861
        %vm2263 = vweird.f32 %v2257
        %vm2264 = vmor %vm2262, %vm2263
        %v2265 = vsel %vm2264, %v2257, %v2261
        %v2266 = vand.u32 2147483647, %v1861
        %vm2267 = vcmp.eq.f32.partialorder %v2266, 8.507059e+37
        %v2268 = vand.u32 %v1861, 2147483648
        %v2269 = vor.u32 1.1754944e-38, %v2268
        %v2270 = vsel %vm2267, %v2269, %v2265
        %v2271 = vmul.f32 1.0, %v2270
        %v2272 = vrcp.pop %v1862
        %v2273 = vmul.f32 %v1862, %v2272
        %v2274 = vsub.f32 1.0, %v2273
        %v2275 = vmul.f32 %v2272, %v2274
        %v2276 = vadd.f32 %v2272, %v2275
        %vm2277 = vweird.f32 %v1862
        %vm2278 = vweird.f32 %v2272
        %vm2279 = vmor %vm2277, %vm2278
        %v2280 = vsel %vm2279, %v2272, %v2276
        %v2281 = vand.u32 2147483647, %v1862
        %vm2282 = vcmp.eq.f32.partialorder %v2281, 8.507059e+37
        %v2283 = vand.u32 %v1862, 2147483648
        %v2284 = vor.u32 1.1754944e-38, %v2283
        %v2285 = vsel %vm2282, %v2284, %v2280
        %v2286 = vmul.f32 1.0, %v2285
        %v2287 = vrcp.pop %v1863
        %v2288 = vmul.f32 %v1863, %v2287
        %v2289 = vsub.f32 1.0, %v2288
        %v2290 = vmul.f32 %v2287, %v2289
        %v2291 = vadd.f32 %v2287, %v2290
        %vm2292 = vweird.f32 %v1863
        %vm2293 = vweird.f32 %v2287
        %vm2294 = vmor %vm2292, %vm2293
        %v2295 = vsel %vm2294, %v2287, %v2291
        %v2296 = vand.u32 2147483647, %v1863
        %vm2297 = vcmp.eq.f32.partialorder %v2296, 8.507059e+37
        %v2298 = vand.u32 %v1863, 2147483648
        %v2299 = vor.u32 1.1754944e-38, %v2298
        %v2300 = vsel %vm2297, %v2299, %v2295
        %v2301 = vmul.f32 1.0, %v2300
        %v2302 = vrcp.pop %v1864
        %v2303 = vmul.f32 %v1864, %v2302
        %v2304 = vsub.f32 1.0, %v2303
        %v2305 = vmul.f32 %v2302, %v2304
        %v2306 = vadd.f32 %v2302, %v2305
        %vm2307 = vweird.f32 %v1864
        %vm2308 = vweird.f32 %v2302
        %vm2309 = vmor %vm2307, %vm2308
        %v2310 = vsel %vm2309, %v2302, %v2306
        %v2311 = vand.u32 2147483647, %v1864
        %vm2312 = vcmp.eq.f32.partialorder %v2311, 8.507059e+37
        %v2313 = vand.u32 %v1864, 2147483648
        %v2314 = vor.u32 1.1754944e-38, %v2313
        %v2315 = vsel %vm2312, %v2314, %v2310
        %v2316 = vmul.f32 1.0, %v2315
        %v2317 = vrcp.pop %v1865
        %v2318 = vmul.f32 %v1865, %v2317
        %v2319 = vsub.f32 1.0, %v2318
        %v2320 = vmul.f32 %v2317, %v2319
        %v2321 = vadd.f32 %v2317, %v2320
        %vm2322 = vweird.f32 %v1865
        %vm2323 = vweird.f32 %v2317
        %vm2324 = vmor %vm2322, %vm2323
        %v2325 = vsel %vm2324, %v2317, %v2321
        %v2326 = vand.u32 2147483647, %v1865
        %vm2327 = vcmp.eq.f32.partialorder %v2326, 8.507059e+37
        %v2328 = vand.u32 %v1865, 2147483648
        %v2329 = vor.u32 1.1754944e-38, %v2328
        %v2330 = vsel %vm2327, %v2329, %v2325
        %v2331 = vmul.f32 1.0, %v2330
        %v2332 = vrcp.pop %v1866
        %v2333 = vmul.f32 %v1866, %v2332
        %v2334 = vsub.f32 1.0, %v2333
        %v2335 = vmul.f32 %v2332, %v2334
        %v2336 = vadd.f32 %v2332, %v2335
        %vm2337 = vweird.f32 %v1866
        %vm2338 = vweird.f32 %v2332
        %vm2339 = vmor %vm2337, %vm2338
        %v2340 = vsel %vm2339, %v2332, %v2336
        %v2341 = vand.u32 2147483647, %v1866
        %vm2342 = vcmp.eq.f32.partialorder %v2341, 8.507059e+37
        %v2343 = vand.u32 %v1866, 2147483648
        %v2344 = vor.u32 1.1754944e-38, %v2343
        %v2345 = vsel %vm2342, %v2344, %v2340
        %v2346 = vmul.f32 1.0, %v2345
        %v2347 = vmul.f32 %v1881, %v1660
        %v2348 = vmul.f32 %v1896, %v1662
        %v2349 = vmul.f32 %v1911, %v1665
        %v2350 = vmul.f32 %v1926, %v1667
        %v2351 = vmul.f32 %v1941, %v1670
        %v2352 = vmul.f32 %v1956, %v1672
        %v2353 = vmul.f32 %v1971, %v1675
        %v2354 = vmul.f32 %v1986, %v1677
        %v2355 = vmul.f32 %v2001, %v1680
        %v2356 = vmul.f32 %v2016, %v1682
        %v2357 = vmul.f32 %v2031, %v1685
        %v2358 = vmul.f32 %v2046, %v1687
        %v2359 = vmul.f32 %v2061, %v1690
        %v2360 = vmul.f32 %v2076, %v1692
        %v2361 = vmul.f32 %v2091, %v1695
        %v2362 = vmul.f32 %v2106, %v1697
        %v2363 = vmul.f32 %v2121, %v1700
        %v2364 = vmul.f32 %v2136, %v1702
        %v2365 = vmul.f32 %v2151, %v1705
        %v2366 = vmul.f32 %v2166, %v1707
        %v2367 = vmul.f32 %v2181, %v1710
        %v2368 = vmul.f32 %v2196, %v1712
        %v2369 = vmul.f32 %v2211, %v1715
        %v2370 = vmul.f32 %v2226, %v1717
        %v2371 = vmul.f32 %v2241, %v1720
        %v2372 = vmul.f32 %v2256, %v1722
        %v2373 = vmul.f32 %v2271, %v1725
        %v2374 = vmul.f32 %v2286, %v1727
        %v2375 = vmul.f32 %v2301, %v1730
        %v2376 = vmul.f32 %v2316, %v1732
        %v2377 = vmul.f32 %v2331, %v1735
        %v2378 = vmul.f32 %v2346, %v1737
        %v2379 = vadd.f32 %v2347, %v999
        %v2380 = vadd.f32 %v2348, %v1001
        %v2381 = vadd.f32 %v2349, %v1004
        %v2382 = vadd.f32 %v2350, %v1006
        %v2383 = vadd.f32 %v2351, %v1009
        %v2384 = vadd.f32 %v2352, %v1011
        %v2385 = vadd.f32 %v2353, %v1014
        %v2386 = vadd.f32 %v2354, %v1016
        %v2387 = vadd.f32 %v2355, %v1019
        %v2388 = vadd.f32 %v2356, %v1021
        %v2389 = vadd.f32 %v2357, %v1024
        %v2390 = vadd.f32 %v2358, %v1026
        %v2391 = vadd.f32 %v2359, %v1029
        %v2392 = vadd.f32 %v2360, %v1031
        %v2393 = vadd.f32 %v2361, %v1034
        %v2394 = vadd.f32 %v2362, %v1036
        %v2395 = vadd.f32 %v2363, %v1039
        %v2396 = vadd.f32 %v2364, %v1041
        %v2397 = vadd.f32 %v2365, %v1044
        %v2398 = vadd.f32 %v2366, %v1046
        %v2399 = vadd.f32 %v2367, %v1049
        %v2400 = vadd.f32 %v2368, %v1051
        %v2401 = vadd.f32 %v2369, %v1054
        %v2402 = vadd.f32 %v2370, %v1056
        %v2403 = vadd.f32 %v2371, %v1059
        %v2404 = vadd.f32 %v2372, %v1061
        %v2405 = vadd.f32 %v2373, %v1064
        %v2406 = vadd.f32 %v2374, %v1066
        %v2407 = vadd.f32 %v2375, %v1069
        %v2408 = vadd.f32 %v2376, %v1071
        %v2409 = vadd.f32 %v2377, %v1074
        %v2410 = vadd.f32 %v2378, %v1076
        %2411 = vadd.xlane.f32.xlu0 %v2379
        %v2412 = vpop.xlane.xlu0 %2411
        %2413 = vadd.xlane.f32.xlu0 %v2380
        %v2414 = vpop.xlane.xlu0 %2413
        %2415 = vadd.xlane.f32.xlu0 %v2381
        %v2416 = vpop.xlane.xlu0 %2415
        %2417 = vadd.xlane.f32.xlu0 %v2382
        %v2418 = vpop.xlane.xlu0 %2417
        %2419 = vadd.xlane.f32.xlu0 %v2383
        %v2420 = vpop.xlane.xlu0 %2419
        %2421 = vadd.xlane.f32.xlu0 %v2384
        %v2422 = vpop.xlane.xlu0 %2421
        %2423 = vadd.xlane.f32.xlu0 %v2385
        %v2424 = vpop.xlane.xlu0 %2423
        %2425 = vadd.xlane.f32.xlu0 %v2386
        %v2426 = vpop.xlane.xlu0 %2425
        %2427 = vadd.xlane.f32.xlu0 %v2387
        %v2428 = vpop.xlane.xlu0 %2427
        %2429 = vadd.xlane.f32.xlu0 %v2388
        %v2430 = vpop.xlane.xlu0 %2429
        %2431 = vadd.xlane.f32.xlu0 %v2389
        %v2432 = vpop.xlane.xlu0 %2431
        %2433 = vadd.xlane.f32.xlu0 %v2390
        %v2434 = vpop.xlane.xlu0 %2433
        %2435 = vadd.xlane.f32.xlu0 %v2391
        %v2436 = vpop.xlane.xlu0 %2435
        %2437 = vadd.xlane.f32.xlu0 %v2392
        %v2438 = vpop.xlane.xlu0 %2437
        %2439 = vadd.xlane.f32.xlu0 %v2393
        %v2440 = vpop.xlane.xlu0 %2439
        %2441 = vadd.xlane.f32.xlu0 %v2394
        %v2442 = vpop.xlane.xlu0 %2441
        %2443 = vadd.xlane.f32.xlu0 %v2395
        %v2444 = vpop.xlane.xlu0 %2443
        %2445 = vadd.xlane.f32.xlu0 %v2396
        %v2446 = vpop.xlane.xlu0 %2445
        %2447 = vadd.xlane.f32.xlu0 %v2397
        %v2448 = vpop.xlane.xlu0 %2447
        %2449 = vadd.xlane.f32.xlu0 %v2398
        %v2450 = vpop.xlane.xlu0 %2449
        %2451 = vadd.xlane.f32.xlu0 %v2399
        %v2452 = vpop.xlane.xlu0 %2451
        %2453 = vadd.xlane.f32.xlu0 %v2400
        %v2454 = vpop.xlane.xlu0 %2453
        %2455 = vadd.xlane.f32.xlu0 %v2401
        %v2456 = vpop.xlane.xlu0 %2455
        %2457 = vadd.xlane.f32.xlu0 %v2402
        %v2458 = vpop.xlane.xlu0 %2457
        %2459 = vadd.xlane.f32.xlu0 %v2403
        %v2460 = vpop.xlane.xlu0 %2459
        %2461 = vadd.xlane.f32.xlu0 %v2404
        %v2462 = vpop.xlane.xlu0 %2461
        %2463 = vadd.xlane.f32.xlu0 %v2405
        %v2464 = vpop.xlane.xlu0 %2463
        %2465 = vadd.xlane.f32.xlu0 %v2406
        %v2466 = vpop.xlane.xlu0 %2465
        %2467 = vadd.xlane.f32.xlu0 %v2407
        %v2468 = vpop.xlane.xlu0 %2467
        %2469 = vadd.xlane.f32.xlu0 %v2408
        %v2470 = vpop.xlane.xlu0 %2469
        %2471 = vadd.xlane.f32.xlu0 %v2409
        %v2472 = vpop.xlane.xlu0 %2471
        %2473 = vadd.xlane.f32.xlu0 %v2410
        %v2474 = vpop.xlane.xlu0 %2473
        %v2475 = vrcp.pop 128.0
        %v2476 = vmul.f32 128.0, %v2475
        %v2477 = vsub.f32 1.0, %v2476
        %v2478 = vmul.f32 %v2475, %v2477
        %v2479 = vadd.f32 %v2475, %v2478
        %vm2480 = vweird.f32 %v2475
        %v2481 = vsel %vm2480, %v2475, %v2479
        %v2482 = vmul.f32 %v2412, %v2481
        %v2483 = vmul.f32 %v2414, %v2481
        %v2484 = vmul.f32 %v2416, %v2481
        %v2485 = vmul.f32 %v2418, %v2481
        %v2486 = vmul.f32 %v2420, %v2481
        %v2487 = vmul.f32 %v2422, %v2481
        %v2488 = vmul.f32 %v2424, %v2481
        %v2489 = vmul.f32 %v2426, %v2481
        %v2490 = vmul.f32 %v2428, %v2481
        %v2491 = vmul.f32 %v2430, %v2481
        %v2492 = vmul.f32 %v2432, %v2481
        %v2493 = vmul.f32 %v2434, %v2481
        %v2494 = vmul.f32 %v2436, %v2481
        %v2495 = vmul.f32 %v2438, %v2481
        %v2496 = vmul.f32 %v2440, %v2481
        %v2497 = vmul.f32 %v2442, %v2481
        %v2498 = vmul.f32 %v2444, %v2481
        %v2499 = vmul.f32 %v2446, %v2481
        %v2500 = vmul.f32 %v2448, %v2481
        %v2501 = vmul.f32 %v2450, %v2481
        %v2502 = vmul.f32 %v2452, %v2481
        %v2503 = vmul.f32 %v2454, %v2481
        %v2504 = vmul.f32 %v2456, %v2481
        %v2505 = vmul.f32 %v2458, %v2481
        %v2506 = vmul.f32 %v2460, %v2481
        %v2507 = vmul.f32 %v2462, %v2481
        %v2508 = vmul.f32 %v2464, %v2481
        %v2509 = vmul.f32 %v2466, %v2481
        %v2510 = vmul.f32 %v2468, %v2481
        %v2511 = vmul.f32 %v2470, %v2481
        %v2512 = vmul.f32 %v2472, %v2481
        %v2513 = vmul.f32 %v2474, %v2481
        %v2514 = vsub.f32 %v2379, %v2482
        %v2515 = vsub.f32 %v2380, %v2483
        %v2516 = vsub.f32 %v2381, %v2484
        %v2517 = vsub.f32 %v2382, %v2485
        %v2518 = vsub.f32 %v2383, %v2486
        %v2519 = vsub.f32 %v2384, %v2487
        %v2520 = vsub.f32 %v2385, %v2488
        %v2521 = vsub.f32 %v2386, %v2489
        %v2522 = vsub.f32 %v2387, %v2490
        %v2523 = vsub.f32 %v2388, %v2491
        %v2524 = vsub.f32 %v2389, %v2492
        %v2525 = vsub.f32 %v2390, %v2493
        %v2526 = vsub.f32 %v2391, %v2494
        %v2527 = vsub.f32 %v2392, %v2495
        %v2528 = vsub.f32 %v2393, %v2496
        %v2529 = vsub.f32 %v2394, %v2497
        %v2530 = vsub.f32 %v2395, %v2498
        %v2531 = vsub.f32 %v2396, %v2499
        %v2532 = vsub.f32 %v2397, %v2500
        %v2533 = vsub.f32 %v2398, %v2501
        %v2534 = vsub.f32 %v2399, %v2502
        %v2535 = vsub.f32 %v2400, %v2503
        %v2536 = vsub.f32 %v2401, %v2504
        %v2537 = vsub.f32 %v2402, %v2505
        %v2538 = vsub.f32 %v2403, %v2506
        %v2539 = vsub.f32 %v2404, %v2507
        %v2540 = vsub.f32 %v2405, %v2508
        %v2541 = vsub.f32 %v2406, %v2509
        %v2542 = vsub.f32 %v2407, %v2510
        %v2543 = vsub.f32 %v2408, %v2511
        %v2544 = vsub.f32 %v2409, %v2512
        %v2545 = vsub.f32 %v2410, %v2513
        %v2546 = vmul.f32 %v2514, %v2514
        %v2547 = vmul.f32 %v2515, %v2515
        %v2548 = vmul.f32 %v2516, %v2516
        %v2549 = vmul.f32 %v2517, %v2517
        %v2550 = vmul.f32 %v2518, %v2518
        %v2551 = vmul.f32 %v2519, %v2519
        %v2552 = vmul.f32 %v2520, %v2520
        %v2553 = vmul.f32 %v2521, %v2521
        %v2554 = vmul.f32 %v2522, %v2522
        %v2555 = vmul.f32 %v2523, %v2523
        %v2556 = vmul.f32 %v2524, %v2524
        %v2557 = vmul.f32 %v2525, %v2525
        %v2558 = vmul.f32 %v2526, %v2526
        %v2559 = vmul.f32 %v2527, %v2527
        %v2560 = vmul.f32 %v2528, %v2528
        %v2561 = vmul.f32 %v2529, %v2529
        %v2562 = vmul.f32 %v2530, %v2530
        %v2563 = vmul.f32 %v2531, %v2531
        %v2564 = vmul.f32 %v2532, %v2532
        %v2565 = vmul.f32 %v2533, %v2533
        %v2566 = vmul.f32 %v2534, %v2534
        %v2567 = vmul.f32 %v2535, %v2535
        %v2568 = vmul.f32 %v2536, %v2536
        %v2569 = vmul.f32 %v2537, %v2537
        %v2570 = vmul.f32 %v2538, %v2538
        %v2571 = vmul.f32 %v2539, %v2539
        %v2572 = vmul.f32 %v2540, %v2540
        %v2573 = vmul.f32 %v2541, %v2541
        %v2574 = vmul.f32 %v2542, %v2542
        %v2575 = vmul.f32 %v2543, %v2543
        %v2576 = vmul.f32 %v2544, %v2544
        %v2577 = vmul.f32 %v2545, %v2545
        %2578 = vadd.xlane.f32.xlu0 %v2546
        %v2579 = vpop.xlane.xlu0 %2578
        %2580 = vadd.xlane.f32.xlu0 %v2547
        %v2581 = vpop.xlane.xlu0 %2580
        %2582 = vadd.xlane.f32.xlu0 %v2548
        %v2583 = vpop.xlane.xlu0 %2582
        %2584 = vadd.xlane.f32.xlu0 %v2549
        %v2585 = vpop.xlane.xlu0 %2584
        %2586 = vadd.xlane.f32.xlu0 %v2550
        %v2587 = vpop.xlane.xlu0 %2586
        %2588 = vadd.xlane.f32.xlu0 %v2551
        %v2589 = vpop.xlane.xlu0 %2588
        %2590 = vadd.xlane.f32.xlu0 %v2552
        %v2591 = vpop.xlane.xlu0 %2590
        %2592 = vadd.xlane.f32.xlu0 %v2553
        %v2593 = vpop.xlane.xlu0 %2592
        %2594 = vadd.xlane.f32.xlu0 %v2554
        %v2595 = vpop.xlane.xlu0 %2594
        %2596 = vadd.xlane.f32.xlu0 %v2555
        %v2597 = vpop.xlane.xlu0 %2596
        %2598 = vadd.xlane.f32.xlu0 %v2556
        %v2599 = vpop.xlane.xlu0 %2598
        %2600 = vadd.xlane.f32.xlu0 %v2557
        %v2601 = vpop.xlane.xlu0 %2600
        %2602 = vadd.xlane.f32.xlu0 %v2558
        %v2603 = vpop.xlane.xlu0 %2602
        %2604 = vadd.xlane.f32.xlu0 %v2559
        %v2605 = vpop.xlane.xlu0 %2604
        %2606 = vadd.xlane.f32.xlu0 %v2560
        %v2607 = vpop.xlane.xlu0 %2606
        %2608 = vadd.xlane.f32.xlu0 %v2561
        %v2609 = vpop.xlane.xlu0 %2608
        %2610 = vadd.xlane.f32.xlu0 %v2562
        %v2611 = vpop.xlane.xlu0 %2610
        %2612 = vadd.xlane.f32.xlu0 %v2563
        %v2613 = vpop.xlane.xlu0 %2612
        %2614 = vadd.xlane.f32.xlu0 %v2564
        %v2615 = vpop.xlane.xlu0 %2614
        %2616 = vadd.xlane.f32.xlu0 %v2565
        %v2617 = vpop.xlane.xlu0 %2616
        %2618 = vadd.xlane.f32.xlu0 %v2566
        %v2619 = vpop.xlane.xlu0 %2618
        %2620 = vadd.xlane.f32.xlu0 %v2567
        %v2621 = vpop.xlane.xlu0 %2620
        %2622 = vadd.xlane.f32.xlu0 %v2568
        %v2623 = vpop.xlane.xlu0 %2622
        %2624 = vadd.xlane.f32.xlu0 %v2569
        %v2625 = vpop.xlane.xlu0 %2624
        %2626 = vadd.xlane.f32.xlu0 %v2570
        %v2627 = vpop.xlane.xlu0 %2626
        %2628 = vadd.xlane.f32.xlu0 %v2571
        %v2629 = vpop.xlane.xlu0 %2628
        %2630 = vadd.xlane.f32.xlu0 %v2572
        %v2631 = vpop.xlane.xlu0 %2630
        %2632 = vadd.xlane.f32.xlu0 %v2573
        %v2633 = vpop.xlane.xlu0 %2632
        %2634 = vadd.xlane.f32.xlu0 %v2574
        %v2635 = vpop.xlane.xlu0 %2634
        %2636 = vadd.xlane.f32.xlu0 %v2575
        %v2637 = vpop.xlane.xlu0 %2636
        %2638 = vadd.xlane.f32.xlu0 %v2576
        %v2639 = vpop.xlane.xlu0 %2638
        %2640 = vadd.xlane.f32.xlu0 %v2577
        %v2641 = vpop.xlane.xlu0 %2640
        %v2642 = vmul.f32 %v2579, %v2481
        %v2643 = vmul.f32 %v2581, %v2481
        %v2644 = vmul.f32 %v2583, %v2481
        %v2645 = vmul.f32 %v2585, %v2481
        %v2646 = vmul.f32 %v2587, %v2481
        %v2647 = vmul.f32 %v2589, %v2481
        %v2648 = vmul.f32 %v2591, %v2481
        %v2649 = vmul.f32 %v2593, %v2481
        %v2650 = vmul.f32 %v2595, %v2481
        %v2651 = vmul.f32 %v2597, %v2481
        %v2652 = vmul.f32 %v2599, %v2481
        %v2653 = vmul.f32 %v2601, %v2481
        %v2654 = vmul.f32 %v2603, %v2481
        %v2655 = vmul.f32 %v2605, %v2481
        %v2656 = vmul.f32 %v2607, %v2481
        %v2657 = vmul.f32 %v2609, %v2481
        %v2658 = vmul.f32 %v2611, %v2481
        %v2659 = vmul.f32 %v2613, %v2481
        %v2660 = vmul.f32 %v2615, %v2481
        %v2661 = vmul.f32 %v2617, %v2481
        %v2662 = vmul.f32 %v2619, %v2481
        %v2663 = vmul.f32 %v2621, %v2481
        %v2664 = vmul.f32 %v2623, %v2481
        %v2665 = vmul.f32 %v2625, %v2481
        %v2666 = vmul.f32 %v2627, %v2481
        %v2667 = vmul.f32 %v2629, %v2481
        %v2668 = vmul.f32 %v2631, %v2481
        %v2669 = vmul.f32 %v2633, %v2481
        %v2670 = vmul.f32 %v2635, %v2481
        %v2671 = vmul.f32 %v2637, %v2481
        %v2672 = vmul.f32 %v2639, %v2481
        %v2673 = vmul.f32 %v2641, %v2481
        %v2674 = vadd.f32 %v2642, 1e-05
        %v2675 = vadd.f32 %v2643, 1e-05
        %v2676 = vadd.f32 %v2644, 1e-05
        %v2677 = vadd.f32 %v2645, 1e-05
        %v2678 = vadd.f32 %v2646, 1e-05
        %v2679 = vadd.f32 %v2647, 1e-05
        %v2680 = vadd.f32 %v2648, 1e-05
        %v2681 = vadd.f32 %v2649, 1e-05
        %v2682 = vadd.f32 %v2650, 1e-05
        %v2683 = vadd.f32 %v2651, 1e-05
        %v2684 = vadd.f32 %v2652, 1e-05
        %v2685 = vadd.f32 %v2653, 1e-05
        %v2686 = vadd.f32 %v2654, 1e-05
        %v2687 = vadd.f32 %v2655, 1e-05
        %v2688 = vadd.f32 %v2656, 1e-05
        %v2689 = vadd.f32 %v2657, 1e-05
        %v2690 = vadd.f32 %v2658, 1e-05
        %v2691 = vadd.f32 %v2659, 1e-05
        %v2692 = vadd.f32 %v2660, 1e-05
        %v2693 = vadd.f32 %v2661, 1e-05
        %v2694 = vadd.f32 %v2662, 1e-05
        %v2695 = vadd.f32 %v2663, 1e-05
        %v2696 = vadd.f32 %v2664, 1e-05
        %v2697 = vadd.f32 %v2665, 1e-05
        %v2698 = vadd.f32 %v2666, 1e-05
        %v2699 = vadd.f32 %v2667, 1e-05
        %v2700 = vadd.f32 %v2668, 1e-05
        %v2701 = vadd.f32 %v2669, 1e-05
        %v2702 = vadd.f32 %v2670, 1e-05
        %v2703 = vadd.f32 %v2671, 1e-05
        %v2704 = vadd.f32 %v2672, 1e-05
        %v2705 = vadd.f32 %v2673, 1e-05
        %v2706 = vrsqrt.pop %v2674
        %v2707 = vmul.f32 %v2706, %v2674
        %v2708 = vmul.f32 %v2707, %v2706
        %v2709 = vmul.f32 0.5, %v2708
        %v2710 = vsub.f32 1.5, %v2709
        %v2711 = vmul.f32 %v2706, %v2710
        %vm2712 = vweird.f32 %v2674
        %vm2713 = vweird.f32 %v2706
        %vm2714 = vmor %vm2712, %vm2713
        %v2715 = vsel %vm2714, %v2706, %v2711
        %v2716 = vrsqrt.pop %v2675
        %v2717 = vmul.f32 %v2716, %v2675
        %v2718 = vmul.f32 %v2717, %v2716
        %v2719 = vmul.f32 0.5, %v2718
        %v2720 = vsub.f32 1.5, %v2719
        %v2721 = vmul.f32 %v2716, %v2720
        %vm2722 = vweird.f32 %v2675
        %vm2723 = vweird.f32 %v2716
        %vm2724 = vmor %vm2722, %vm2723
        %v2725 = vsel %vm2724, %v2716, %v2721
        %v2726 = vrsqrt.pop %v2676
        %v2727 = vmul.f32 %v2726, %v2676
        %v2728 = vmul.f32 %v2727, %v2726
        %v2729 = vmul.f32 0.5, %v2728
        %v2730 = vsub.f32 1.5, %v2729
        %v2731 = vmul.f32 %v2726, %v2730
        %vm2732 = vweird.f32 %v2676
        %vm2733 = vweird.f32 %v2726
        %vm2734 = vmor %vm2732, %vm2733
        %v2735 = vsel %vm2734, %v2726, %v2731
        %v2736 = vrsqrt.pop %v2677
        %v2737 = vmul.f32 %v2736, %v2677
        %v2738 = vmul.f32 %v2737, %v2736
        %v2739 = vmul.f32 0.5, %v2738
        %v2740 = vsub.f32 1.5, %v2739
        %v2741 = vmul.f32 %v2736, %v2740
        %vm2742 = vweird.f32 %v2677
        %vm2743 = vweird.f32 %v2736
        %vm2744 = vmor %vm2742, %vm2743
        %v2745 = vsel %vm2744, %v2736, %v2741
        %v2746 = vrsqrt.pop %v2678
        %v2747 = vmul.f32 %v2746, %v2678
        %v2748 = vmul.f32 %v2747, %v2746
        %v2749 = vmul.f32 0.5, %v2748
        %v2750 = vsub.f32 1.5, %v2749
        %v2751 = vmul.f32 %v2746, %v2750
        %vm2752 = vweird.f32 %v2678
        %vm2753 = vweird.f32 %v2746
        %vm2754 = vmor %vm2752, %vm2753
        %v2755 = vsel %vm2754, %v2746, %v2751
        %v2756 = vrsqrt.pop %v2679
        %v2757 = vmul.f32 %v2756, %v2679
        %v2758 = vmul.f32 %v2757, %v2756
        %v2759 = vmul.f32 0.5, %v2758
        %v2760 = vsub.f32 1.5, %v2759
        %v2761 = vmul.f32 %v2756, %v2760
        %vm2762 = vweird.f32 %v2679
        %vm2763 = vweird.f32 %v2756
        %vm2764 = vmor %vm2762, %vm2763
        %v2765 = vsel %vm2764, %v2756, %v2761
        %v2766 = vrsqrt.pop %v2680
        %v2767 = vmul.f32 %v2766, %v2680
        %v2768 = vmul.f32 %v2767, %v2766
        %v2769 = vmul.f32 0.5, %v2768
        %v2770 = vsub.f32 1.5, %v2769
        %v2771 = vmul.f32 %v2766, %v2770
        %vm2772 = vweird.f32 %v2680
        %vm2773 = vweird.f32 %v2766
        %vm2774 = vmor %vm2772, %vm2773
        %v2775 = vsel %vm2774, %v2766, %v2771
        %v2776 = vrsqrt.pop %v2681
        %v2777 = vmul.f32 %v2776, %v2681
        %v2778 = vmul.f32 %v2777, %v2776
        %v2779 = vmul.f32 0.5, %v2778
        %v2780 = vsub.f32 1.5, %v2779
        %v2781 = vmul.f32 %v2776, %v2780
        %vm2782 = vweird.f32 %v2681
        %vm2783 = vweird.f32 %v2776
        %vm2784 = vmor %vm2782, %vm2783
        %v2785 = vsel %vm2784, %v2776, %v2781
        %v2786 = vrsqrt.pop %v2682
        %v2787 = vmul.f32 %v2786, %v2682
        %v2788 = vmul.f32 %v2787, %v2786
        %v2789 = vmul.f32 0.5, %v2788
        %v2790 = vsub.f32 1.5, %v2789
        %v2791 = vmul.f32 %v2786, %v2790
        %vm2792 = vweird.f32 %v2682
        %vm2793 = vweird.f32 %v2786
        %vm2794 = vmor %vm2792, %vm2793
        %v2795 = vsel %vm2794, %v2786, %v2791
        %v2796 = vrsqrt.pop %v2683
        %v2797 = vmul.f32 %v2796, %v2683
        %v2798 = vmul.f32 %v2797, %v2796
        %v2799 = vmul.f32 0.5, %v2798
        %v2800 = vsub.f32 1.5, %v2799
        %v2801 = vmul.f32 %v2796, %v2800
        %vm2802 = vweird.f32 %v2683
        %vm2803 = vweird.f32 %v2796
        %vm2804 = vmor %vm2802, %vm2803
        %v2805 = vsel %vm2804, %v2796, %v2801
        %v2806 = vrsqrt.pop %v2684
        %v2807 = vmul.f32 %v2806, %v2684
        %v2808 = vmul.f32 %v2807, %v2806
        %v2809 = vmul.f32 0.5, %v2808
        %v2810 = vsub.f32 1.5, %v2809
        %v2811 = vmul.f32 %v2806, %v2810
        %vm2812 = vweird.f32 %v2684
        %vm2813 = vweird.f32 %v2806
        %vm2814 = vmor %vm2812, %vm2813
        %v2815 = vsel %vm2814, %v2806, %v2811
        %v2816 = vrsqrt.pop %v2685
        %v2817 = vmul.f32 %v2816, %v2685
        %v2818 = vmul.f32 %v2817, %v2816
        %v2819 = vmul.f32 0.5, %v2818
        %v2820 = vsub.f32 1.5, %v2819
        %v2821 = vmul.f32 %v2816, %v2820
        %vm2822 = vweird.f32 %v2685
        %vm2823 = vweird.f32 %v2816
        %vm2824 = vmor %vm2822, %vm2823
        %v2825 = vsel %vm2824, %v2816, %v2821
        %v2826 = vrsqrt.pop %v2686
        %v2827 = vmul.f32 %v2826, %v2686
        %v2828 = vmul.f32 %v2827, %v2826
        %v2829 = vmul.f32 0.5, %v2828
        %v2830 = vsub.f32 1.5, %v2829
        %v2831 = vmul.f32 %v2826, %v2830
        %vm2832 = vweird.f32 %v2686
        %vm2833 = vweird.f32 %v2826
        %vm2834 = vmor %vm2832, %vm2833
        %v2835 = vsel %vm2834, %v2826, %v2831
        %v2836 = vrsqrt.pop %v2687
        %v2837 = vmul.f32 %v2836, %v2687
        %v2838 = vmul.f32 %v2837, %v2836
        %v2839 = vmul.f32 0.5, %v2838
        %v2840 = vsub.f32 1.5, %v2839
        %v2841 = vmul.f32 %v2836, %v2840
        %vm2842 = vweird.f32 %v2687
        %vm2843 = vweird.f32 %v2836
        %vm2844 = vmor %vm2842, %vm2843
        %v2845 = vsel %vm2844, %v2836, %v2841
        %v2846 = vrsqrt.pop %v2688
        %v2847 = vmul.f32 %v2846, %v2688
        %v2848 = vmul.f32 %v2847, %v2846
        %v2849 = vmul.f32 0.5, %v2848
        %v2850 = vsub.f32 1.5, %v2849
        %v2851 = vmul.f32 %v2846, %v2850
        %vm2852 = vweird.f32 %v2688
        %vm2853 = vweird.f32 %v2846
        %vm2854 = vmor %vm2852, %vm2853
        %v2855 = vsel %vm2854, %v2846, %v2851
        %v2856 = vrsqrt.pop %v2689
        %v2857 = vmul.f32 %v2856, %v2689
        %v2858 = vmul.f32 %v2857, %v2856
        %v2859 = vmul.f32 0.5, %v2858
        %v2860 = vsub.f32 1.5, %v2859
        %v2861 = vmul.f32 %v2856, %v2860
        %vm2862 = vweird.f32 %v2689
        %vm2863 = vweird.f32 %v2856
        %vm2864 = vmor %vm2862, %vm2863
        %v2865 = vsel %vm2864, %v2856, %v2861
        %v2866 = vrsqrt.pop %v2690
        %v2867 = vmul.f32 %v2866, %v2690
        %v2868 = vmul.f32 %v2867, %v2866
        %v2869 = vmul.f32 0.5, %v2868
        %v2870 = vsub.f32 1.5, %v2869
        %v2871 = vmul.f32 %v2866, %v2870
        %vm2872 = vweird.f32 %v2690
        %vm2873 = vweird.f32 %v2866
        %vm2874 = vmor %vm2872, %vm2873
        %v2875 = vsel %vm2874, %v2866, %v2871
        %v2876 = vrsqrt.pop %v2691
        %v2877 = vmul.f32 %v2876, %v2691
        %v2878 = vmul.f32 %v2877, %v2876
        %v2879 = vmul.f32 0.5, %v2878
        %v2880 = vsub.f32 1.5, %v2879
        %v2881 = vmul.f32 %v2876, %v2880
        %vm2882 = vweird.f32 %v2691
        %vm2883 = vweird.f32 %v2876
        %vm2884 = vmor %vm2882, %vm2883
        %v2885 = vsel %vm2884, %v2876, %v2881
        %v2886 = vrsqrt.pop %v2692
        %v2887 = vmul.f32 %v2886, %v2692
        %v2888 = vmul.f32 %v2887, %v2886
        %v2889 = vmul.f32 0.5, %v2888
        %v2890 = vsub.f32 1.5, %v2889
        %v2891 = vmul.f32 %v2886, %v2890
        %vm2892 = vweird.f32 %v2692
        %vm2893 = vweird.f32 %v2886
        %vm2894 = vmor %vm2892, %vm2893
        %v2895 = vsel %vm2894, %v2886, %v2891
        %v2896 = vrsqrt.pop %v2693
        %v2897 = vmul.f32 %v2896, %v2693
        %v2898 = vmul.f32 %v2897, %v2896
        %v2899 = vmul.f32 0.5, %v2898
        %v2900 = vsub.f32 1.5, %v2899
        %v2901 = vmul.f32 %v2896, %v2900
        %vm2902 = vweird.f32 %v2693
        %vm2903 = vweird.f32 %v2896
        %vm2904 = vmor %vm2902, %vm2903
        %v2905 = vsel %vm2904, %v2896, %v2901
        %v2906 = vrsqrt.pop %v2694
        %v2907 = vmul.f32 %v2906, %v2694
        %v2908 = vmul.f32 %v2907, %v2906
        %v2909 = vmul.f32 0.5, %v2908
        %v2910 = vsub.f32 1.5, %v2909
        %v2911 = vmul.f32 %v2906, %v2910
        %vm2912 = vweird.f32 %v2694
        %vm2913 = vweird.f32 %v2906
        %vm2914 = vmor %vm2912, %vm2913
        %v2915 = vsel %vm2914, %v2906, %v2911
        %v2916 = vrsqrt.pop %v2695
        %v2917 = vmul.f32 %v2916, %v2695
        %v2918 = vmul.f32 %v2917, %v2916
        %v2919 = vmul.f32 0.5, %v2918
        %v2920 = vsub.f32 1.5, %v2919
        %v2921 = vmul.f32 %v2916, %v2920
        %vm2922 = vweird.f32 %v2695
        %vm2923 = vweird.f32 %v2916
        %vm2924 = vmor %vm2922, %vm2923
        %v2925 = vsel %vm2924, %v2916, %v2921
        %v2926 = vrsqrt.pop %v2696
        %v2927 = vmul.f32 %v2926, %v2696
        %v2928 = vmul.f32 %v2927, %v2926
        %v2929 = vmul.f32 0.5, %v2928
        %v2930 = vsub.f32 1.5, %v2929
        %v2931 = vmul.f32 %v2926, %v2930
        %vm2932 = vweird.f32 %v2696
        %vm2933 = vweird.f32 %v2926
        %vm2934 = vmor %vm2932, %vm2933
        %v2935 = vsel %vm2934, %v2926, %v2931
        %v2936 = vrsqrt.pop %v2697
        %v2937 = vmul.f32 %v2936, %v2697
        %v2938 = vmul.f32 %v2937, %v2936
        %v2939 = vmul.f32 0.5, %v2938
        %v2940 = vsub.f32 1.5, %v2939
        %v2941 = vmul.f32 %v2936, %v2940
        %vm2942 = vweird.f32 %v2697
        %vm2943 = vweird.f32 %v2936
        %vm2944 = vmor %vm2942, %vm2943
        %v2945 = vsel %vm2944, %v2936, %v2941
        %v2946 = vrsqrt.pop %v2698
        %v2947 = vmul.f32 %v2946, %v2698
        %v2948 = vmul.f32 %v2947, %v2946
        %v2949 = vmul.f32 0.5, %v2948
        %v2950 = vsub.f32 1.5, %v2949
        %v2951 = vmul.f32 %v2946, %v2950
        %vm2952 = vweird.f32 %v2698
        %vm2953 = vweird.f32 %v2946
        %vm2954 = vmor %vm2952, %vm2953
        %v2955 = vsel %vm2954, %v2946, %v2951
        %v2956 = vrsqrt.pop %v2699
        %v2957 = vmul.f32 %v2956, %v2699
        %v2958 = vmul.f32 %v2957, %v2956
        %v2959 = vmul.f32 0.5, %v2958
        %v2960 = vsub.f32 1.5, %v2959
        %v2961 = vmul.f32 %v2956, %v2960
        %vm2962 = vweird.f32 %v2699
        %vm2963 = vweird.f32 %v2956
        %vm2964 = vmor %vm2962, %vm2963
        %v2965 = vsel %vm2964, %v2956, %v2961
        %v2966 = vrsqrt.pop %v2700
        %v2967 = vmul.f32 %v2966, %v2700
        %v2968 = vmul.f32 %v2967, %v2966
        %v2969 = vmul.f32 0.5, %v2968
        %v2970 = vsub.f32 1.5, %v2969
        %v2971 = vmul.f32 %v2966, %v2970
        %vm2972 = vweird.f32 %v2700
        %vm2973 = vweird.f32 %v2966
        %vm2974 = vmor %vm2972, %vm2973
        %v2975 = vsel %vm2974, %v2966, %v2971
        %v2976 = vrsqrt.pop %v2701
        %v2977 = vmul.f32 %v2976, %v2701
        %v2978 = vmul.f32 %v2977, %v2976
        %v2979 = vmul.f32 0.5, %v2978
        %v2980 = vsub.f32 1.5, %v2979
        %v2981 = vmul.f32 %v2976, %v2980
        %vm2982 = vweird.f32 %v2701
        %vm2983 = vweird.f32 %v2976
        %vm2984 = vmor %vm2982, %vm2983
        %v2985 = vsel %vm2984, %v2976, %v2981
        %v2986 = vrsqrt.pop %v2702
        %v2987 = vmul.f32 %v2986, %v2702
        %v2988 = vmul.f32 %v2987, %v2986
        %v2989 = vmul.f32 0.5, %v2988
        %v2990 = vsub.f32 1.5, %v2989
        %v2991 = vmul.f32 %v2986, %v2990
        %vm2992 = vweird.f32 %v2702
        %vm2993 = vweird.f32 %v2986
        %vm2994 = vmor %vm2992, %vm2993
        %v2995 = vsel %vm2994, %v2986, %v2991
        %v2996 = vrsqrt.pop %v2703
        %v2997 = vmul.f32 %v2996, %v2703
        %v2998 = vmul.f32 %v2997, %v2996
        %v2999 = vmul.f32 0.5, %v2998
        %v3000 = vsub.f32 1.5, %v2999
        %v3001 = vmul.f32 %v2996, %v3000
        %vm3002 = vweird.f32 %v2703
        %vm3003 = vweird.f32 %v2996
        %vm3004 = vmor %vm3002, %vm3003
        %v3005 = vsel %vm3004, %v2996, %v3001
        %v3006 = vrsqrt.pop %v2704
        %v3007 = vmul.f32 %v3006, %v2704
        %v3008 = vmul.f32 %v3007, %v3006
        %v3009 = vmul.f32 0.5, %v3008
        %v3010 = vsub.f32 1.5, %v3009
        %v3011 = vmul.f32 %v3006, %v3010
        %vm3012 = vweird.f32 %v2704
        %vm3013 = vweird.f32 %v3006
        %vm3014 = vmor %vm3012, %vm3013
        %v3015 = vsel %vm3014, %v3006, %v3011
        %v3016 = vrsqrt.pop %v2705
        %v3017 = vmul.f32 %v3016, %v2705
        %v3018 = vmul.f32 %v3017, %v3016
        %v3019 = vmul.f32 0.5, %v3018
        %v3020 = vsub.f32 1.5, %v3019
        %v3021 = vmul.f32 %v3016, %v3020
        %vm3022 = vweird.f32 %v2705
        %vm3023 = vweird.f32 %v3016
        %vm3024 = vmor %vm3022, %vm3023
        %v3025 = vsel %vm3024, %v3016, %v3021
        %v3026 = vmul.f32 %v2514, %v2715
        %v3027 = vmul.f32 %v2515, %v2725
        %v3028 = vmul.f32 %v2516, %v2735
        %v3029 = vmul.f32 %v2517, %v2745
        %v3030 = vmul.f32 %v2518, %v2755
        %v3031 = vmul.f32 %v2519, %v2765
        %v3032 = vmul.f32 %v2520, %v2775
        %v3033 = vmul.f32 %v2521, %v2785
        %v3034 = vmul.f32 %v2522, %v2795
        %v3035 = vmul.f32 %v2523, %v2805
        %v3036 = vmul.f32 %v2524, %v2815
        %v3037 = vmul.f32 %v2525, %v2825
        %v3038 = vmul.f32 %v2526, %v2835
        %v3039 = vmul.f32 %v2527, %v2845
        %v3040 = vmul.f32 %v2528, %v2855
        %v3041 = vmul.f32 %v2529, %v2865
        %v3042 = vmul.f32 %v2530, %v2875
        %v3043 = vmul.f32 %v2531, %v2885
        %v3044 = vmul.f32 %v2532, %v2895
        %v3045 = vmul.f32 %v2533, %v2905
        %v3046 = vmul.f32 %v2534, %v2915
        %v3047 = vmul.f32 %v2535, %v2925
        %v3048 = vmul.f32 %v2536, %v2935
        %v3049 = vmul.f32 %v2537, %v2945
        %v3050 = vmul.f32 %v2538, %v2955
        %v3051 = vmul.f32 %v2539, %v2965
        %v3052 = vmul.f32 %v2540, %v2975
        %v3053 = vmul.f32 %v2541, %v2985
        %v3054 = vmul.f32 %v2542, %v2995
        %v3055 = vmul.f32 %v2543, %v3005
        %v3056 = vmul.f32 %v2544, %v3015
        %v3057 = vmul.f32 %v2545, %v3025
        %v3058 = vld [vmem:[#allocation8] sm:$0x1]
        %v3060 = vperm.slane %v3058, 0
        %v3062 = vmul.f32 %v3026, %v3060
        %v3063 = vmul.f32 %v3027, %v3060
        %v3064 = vmul.f32 %v3028, %v3060
        %v3065 = vmul.f32 %v3029, %v3060
        %v3066 = vmul.f32 %v3030, %v3060
        %v3067 = vmul.f32 %v3031, %v3060
        %v3068 = vmul.f32 %v3032, %v3060
        %v3069 = vmul.f32 %v3033, %v3060
        %v3070 = vmul.f32 %v3034, %v3060
        %v3071 = vmul.f32 %v3035, %v3060
        %v3072 = vmul.f32 %v3036, %v3060
        %v3073 = vmul.f32 %v3037, %v3060
        %v3074 = vmul.f32 %v3038, %v3060
        %v3075 = vmul.f32 %v3039, %v3060
        %v3076 = vmul.f32 %v3040, %v3060
        %v3077 = vmul.f32 %v3041, %v3060
        %v3078 = vmul.f32 %v3042, %v3060
        %v3079 = vmul.f32 %v3043, %v3060
        %v3080 = vmul.f32 %v3044, %v3060
        %v3081 = vmul.f32 %v3045, %v3060
        %v3082 = vmul.f32 %v3046, %v3060
        %v3083 = vmul.f32 %v3047, %v3060
        %v3084 = vmul.f32 %v3048, %v3060
        %v3085 = vmul.f32 %v3049, %v3060
        %v3086 = vmul.f32 %v3050, %v3060
        %v3087 = vmul.f32 %v3051, %v3060
        %v3088 = vmul.f32 %v3052, %v3060
        %v3089 = vmul.f32 %v3053, %v3060
        %v3090 = vmul.f32 %v3054, %v3060
        %v3091 = vmul.f32 %v3055, %v3060
        %v3092 = vmul.f32 %v3056, %v3060
        %v3093 = vmul.f32 %v3057, %v3060
        %v3094 = vld [vmem:[#allocation10] sm:$0x1]
        %v3096 = vperm.slane %v3094, 0
        %v3098 = vadd.f32 %v3062, %v3096
        %v3099 = vadd.f32 %v3063, %v3096
        %v3100 = vadd.f32 %v3064, %v3096
        %v3101 = vadd.f32 %v3065, %v3096
        %v3102 = vadd.f32 %v3066, %v3096
        %v3103 = vadd.f32 %v3067, %v3096
        %v3104 = vadd.f32 %v3068, %v3096
        %v3105 = vadd.f32 %v3069, %v3096
        %v3106 = vadd.f32 %v3070, %v3096
        %v3107 = vadd.f32 %v3071, %v3096
        %v3108 = vadd.f32 %v3072, %v3096
        %v3109 = vadd.f32 %v3073, %v3096
        %v3110 = vadd.f32 %v3074, %v3096
        %v3111 = vadd.f32 %v3075, %v3096
        %v3112 = vadd.f32 %v3076, %v3096
        %v3113 = vadd.f32 %v3077, %v3096
        %v3114 = vadd.f32 %v3078, %v3096
        %v3115 = vadd.f32 %v3079, %v3096
        %v3116 = vadd.f32 %v3080, %v3096
        %v3117 = vadd.f32 %v3081, %v3096
        %v3118 = vadd.f32 %v3082, %v3096
        %v3119 = vadd.f32 %v3083, %v3096
        %v3120 = vadd.f32 %v3084, %v3096
        %v3121 = vadd.f32 %v3085, %v3096
        %v3122 = vadd.f32 %v3086, %v3096
        %v3123 = vadd.f32 %v3087, %v3096
        %v3124 = vadd.f32 %v3088, %v3096
        %v3125 = vadd.f32 %v3089, %v3096
        %v3126 = vadd.f32 %v3090, %v3096
        %v3127 = vadd.f32 %v3091, %v3096
        %v3128 = vadd.f32 %v3092, %v3096
        %v3129 = vadd.f32 %v3093, %v3096
        %v3130 = vpack.c.bf16 %v3099, %v3098
        %v3131 = vpack.c.bf16 %v3101, %v3100
        %v3132 = vpack.c.bf16 %v3103, %v3102
        %v3133 = vpack.c.bf16 %v3105, %v3104
        %v3134 = vpack.c.bf16 %v3107, %v3106
        %v3135 = vpack.c.bf16 %v3109, %v3108
        %v3136 = vpack.c.bf16 %v3111, %v3110
        %v3137 = vpack.c.bf16 %v3113, %v3112
        %v3138 = vpack.c.bf16 %v3115, %v3114
        %v3139 = vpack.c.bf16 %v3117, %v3116
        %v3140 = vpack.c.bf16 %v3119, %v3118
        %v3141 = vpack.c.bf16 %v3121, %v3120
        %v3142 = vpack.c.bf16 %v3123, %v3122
        %v3143 = vpack.c.bf16 %v3125, %v3124
        %v3144 = vpack.c.bf16 %v3127, %v3126
        %v3145 = vpack.c.bf16 %v3129, %v3128
        %v3146 = vld [vmem:[%s9] sm:$0xf]
        %v3147 = vld [vmem:[%s9 + $0x4] sm:$0xf]
        %v3148 = vld [vmem:[%s9 + $0x8] sm:$0xf]
        %v3149 = vld [vmem:[%s9 + $0xc] sm:$0xf]
        %v3150 = vld [vmem:[%s9 + $0x10] sm:$0xf]
        %v3151 = vld [vmem:[%s9 + $0x14] sm:$0xf]
        %v3152 = vld [vmem:[%s9 + $0x18] sm:$0xf]
        %v3153 = vld [vmem:[%s9 + $0x1c] sm:$0xf]
        %v3154 = vld [vmem:[%s9 + $0x20] sm:$0xf]
        %v3155 = vld [vmem:[%s9 + $0x24] sm:$0xf]
        %v3156 = vld [vmem:[%s9 + $0x28] sm:$0xf]
        %v3157 = vld [vmem:[%s9 + $0x2c] sm:$0xf]
        %v3158 = vld [vmem:[%s9 + $0x30] sm:$0xf]
        %v3159 = vld [vmem:[%s9 + $0x34] sm:$0xf]
        %v3160 = vld [vmem:[%s9 + $0x38] sm:$0xf]
        %v3161 = vld [vmem:[%s9 + $0x3c] sm:$0xf]
        %v3162 = vld [vmem:[%s10] sm:$0x1]
        %v3164 = vperm.slane %v3162, 0
        %v3182 = vunpack.c.l.b16 %v3146
        %v3183 = vunpack.c.l.b16 %v3147
        %v3184 = vunpack.c.l.b16 %v3148
        %v3185 = vunpack.c.l.b16 %v3149
        %v3186 = vunpack.c.l.b16 %v3150
        %v3187 = vunpack.c.l.b16 %v3151
        %v3188 = vunpack.c.l.b16 %v3152
        %v3189 = vunpack.c.l.b16 %v3153
        %v3190 = vunpack.c.l.b16 %v3154
        %v3191 = vunpack.c.l.b16 %v3155
        %v3192 = vunpack.c.l.b16 %v3156
        %v3193 = vunpack.c.l.b16 %v3157
        %v3194 = vunpack.c.l.b16 %v3158
        %v3195 = vunpack.c.l.b16 %v3159
        %v3196 = vunpack.c.l.b16 %v3160
        %v3197 = vunpack.c.l.b16 %v3161
        %v3198 = vpack.c.b16 %v3183, %v3182
        %v3199 = vpack.c.b16 %v3185, %v3184
        %v3200 = vpack.c.b16 %v3187, %v3186
        %v3201 = vpack.c.b16 %v3189, %v3188
        %v3202 = vpack.c.b16 %v3191, %v3190
        %v3203 = vpack.c.b16 %v3193, %v3192
        %v3204 = vpack.c.b16 %v3195, %v3194
        %v3205 = vpack.c.b16 %v3197, %v3196
        %3214 = vmatpush.bf16.msra.mxu0 %v3205
        %3215 = vmatpush.bf16.msra.mxu0 %v3204
        %3216 = vmatpush.bf16.msra.mxu0 %v3203
        %3217 = vmatpush.bf16.msra.mxu0 %v3202
        %3218 = vmatpush.bf16.msra.mxu0 %v3201
        %3219 = vmatpush.bf16.msra.mxu0 %v3200
        %3220 = vmatpush.bf16.msra.mxu0 %v3199
        %3221 = vmatpush.bf16.msra.mxu0 %v3198
        %3222 = vmatmul.bf16.gmra.mxu0 %v3130
        %v3223 = vpop.f32.mrf.mxu0
        %v3224 = vadd.f32 %v3164, %v3223
        %v3225 = vpop.f32.mrf.mxu0
        %v3226 = vadd.f32 %v3164, %v3225
        %3227 = vmatmul.bf16.gmra.mxu0 %v3131
        %v3228 = vpop.f32.mrf.mxu0
        %v3229 = vadd.f32 %v3164, %v3228
        %v3230 = vpop.f32.mrf.mxu0
        %v3231 = vadd.f32 %v3164, %v3230
        %3232 = vmatmul.bf16.gmra.mxu0 %v3132
        %v3233 = vpop.f32.mrf.mxu0
        %v3234 = vadd.f32 %v3164, %v3233
        %v3235 = vpop.f32.mrf.mxu0
        %v3236 = vadd.f32 %v3164, %v3235
        %3237 = vmatmul.bf16.gmra.mxu0 %v3133
        %v3238 = vpop.f32.mrf.mxu0
        %v3239 = vadd.f32 %v3164, %v3238
        %v3240 = vpop.f32.mrf.mxu0
        %v3241 = vadd.f32 %v3164, %v3240
        %3242 = vmatmul.bf16.gmra.mxu0 %v3134
        %v3243 = vpop.f32.mrf.mxu0
        %v3244 = vadd.f32 %v3164, %v3243
        %v3245 = vpop.f32.mrf.mxu0
        %v3246 = vadd.f32 %v3164, %v3245
        %3247 = vmatmul.bf16.gmra.mxu0 %v3135
        %v3248 = vpop.f32.mrf.mxu0
        %v3249 = vadd.f32 %v3164, %v3248
        %v3250 = vpop.f32.mrf.mxu0
        %v3251 = vadd.f32 %v3164, %v3250
        %3252 = vmatmul.bf16.gmra.mxu0 %v3136
        %v3253 = vpop.f32.mrf.mxu0
        %v3254 = vadd.f32 %v3164, %v3253
        %v3255 = vpop.f32.mrf.mxu0
        %v3256 = vadd.f32 %v3164, %v3255
        %3257 = vmatmul.bf16.gmra.mxu0 %v3137
        %v3258 = vpop.f32.mrf.mxu0
        %v3259 = vadd.f32 %v3164, %v3258
        %v3260 = vpop.f32.mrf.mxu0
        %v3261 = vadd.f32 %v3164, %v3260
        %3262 = vmatmul.bf16.gmra.mxu0 %v3138
        %v3263 = vpop.f32.mrf.mxu0
        %v3264 = vadd.f32 %v3164, %v3263
        %v3265 = vpop.f32.mrf.mxu0
        %v3266 = vadd.f32 %v3164, %v3265
        %3267 = vmatmul.bf16.gmra.mxu0 %v3139
        %v3268 = vpop.f32.mrf.mxu0
        %v3269 = vadd.f32 %v3164, %v3268
        %v3270 = vpop.f32.mrf.mxu0
        %v3271 = vadd.f32 %v3164, %v3270
        %3272 = vmatmul.bf16.gmra.mxu0 %v3140
        %v3273 = vpop.f32.mrf.mxu0
        %v3274 = vadd.f32 %v3164, %v3273
        %v3275 = vpop.f32.mrf.mxu0
        %v3276 = vadd.f32 %v3164, %v3275
        %3277 = vmatmul.bf16.gmra.mxu0 %v3141
        %v3278 = vpop.f32.mrf.mxu0
        %v3279 = vadd.f32 %v3164, %v3278
        %v3280 = vpop.f32.mrf.mxu0
        %v3281 = vadd.f32 %v3164, %v3280
        %3282 = vmatmul.bf16.gmra.mxu0 %v3142
        %v3283 = vpop.f32.mrf.mxu0
        %v3284 = vadd.f32 %v3164, %v3283
        %v3285 = vpop.f32.mrf.mxu0
        %v3286 = vadd.f32 %v3164, %v3285
        %3287 = vmatmul.bf16.gmra.mxu0 %v3143
        %v3288 = vpop.f32.mrf.mxu0
        %v3289 = vadd.f32 %v3164, %v3288
        %v3290 = vpop.f32.mrf.mxu0
        %v3291 = vadd.f32 %v3164, %v3290
        %3292 = vmatmul.bf16.gmra.mxu0 %v3144
        %v3293 = vpop.f32.mrf.mxu0
        %v3294 = vadd.f32 %v3164, %v3293
        %v3295 = vpop.f32.mrf.mxu0
        %v3296 = vadd.f32 %v3164, %v3295
        %3297 = vmatmul.bf16.gmra.mxu0 %v3145
        %v3298 = vpop.f32.mrf.mxu0
        %v3299 = vadd.f32 %v3164, %v3298
        %v3300 = vpop.f32.mrf.mxu0
        %v3301 = vadd.f32 %v3164, %v3300
        %3302 = vdwg.mxu0
        %3303 = vmax.xlane.f32.xlu0 %v3224
        %v3304 = vpop.xlane.xlu0 %3303
        %3305 = vmax.xlane.f32.xlu0 %v3226
        %v3306 = vpop.xlane.xlu0 %3305
        %3307 = vmax.xlane.f32.xlu0 %v3229
        %v3308 = vpop.xlane.xlu0 %3307
        %3309 = vmax.xlane.f32.xlu0 %v3231
        %v3310 = vpop.xlane.xlu0 %3309
        %3311 = vmax.xlane.f32.xlu0 %v3234
        %v3312 = vpop.xlane.xlu0 %3311
        %3313 = vmax.xlane.f32.xlu0 %v3236
        %v3314 = vpop.xlane.xlu0 %3313
        %3315 = vmax.xlane.f32.xlu0 %v3239
        %v3316 = vpop.xlane.xlu0 %3315
        %3317 = vmax.xlane.f32.xlu0 %v3241
        %v3318 = vpop.xlane.xlu0 %3317
        %3319 = vmax.xlane.f32.xlu0 %v3244
        %v3320 = vpop.xlane.xlu0 %3319
        %3321 = vmax.xlane.f32.xlu0 %v3246
        %v3322 = vpop.xlane.xlu0 %3321
        %3323 = vmax.xlane.f32.xlu0 %v3249
        %v3324 = vpop.xlane.xlu0 %3323
        %3325 = vmax.xlane.f32.xlu0 %v3251
        %v3326 = vpop.xlane.xlu0 %3325
        %3327 = vmax.xlane.f32.xlu0 %v3254
        %v3328 = vpop.xlane.xlu0 %3327
        %3329 = vmax.xlane.f32.xlu0 %v3256
        %v3330 = vpop.xlane.xlu0 %3329
        %3331 = vmax.xlane.f32.xlu0 %v3259
        %v3332 = vpop.xlane.xlu0 %3331
        %3333 = vmax.xlane.f32.xlu0 %v3261
        %v3334 = vpop.xlane.xlu0 %3333
        %3335 = vmax.xlane.f32.xlu0 %v3264
        %v3336 = vpop.xlane.xlu0 %3335
        %3337 = vmax.xlane.f32.xlu0 %v3266
        %v3338 = vpop.xlane.xlu0 %3337
        %3339 = vmax.xlane.f32.xlu0 %v3269
        %v3340 = vpop.xlane.xlu0 %3339
        %3341 = vmax.xlane.f32.xlu0 %v3271
        %v3342 = vpop.xlane.xlu0 %3341
        %3343 = vmax.xlane.f32.xlu0 %v3274
        %v3344 = vpop.xlane.xlu0 %3343
        %3345 = vmax.xlane.f32.xlu0 %v3276
        %v3346 = vpop.xlane.xlu0 %3345
        %3347 = vmax.xlane.f32.xlu0 %v3279
        %v3348 = vpop.xlane.xlu0 %3347
        %3349 = vmax.xlane.f32.xlu0 %v3281
        %v3350 = vpop.xlane.xlu0 %3349
        %3351 = vmax.xlane.f32.xlu0 %v3284
        %v3352 = vpop.xlane.xlu0 %3351
        %3353 = vmax.xlane.f32.xlu0 %v3286
        %v3354 = vpop.xlane.xlu0 %3353
        %3355 = vmax.xlane.f32.xlu0 %v3289
        %v3356 = vpop.xlane.xlu0 %3355
        %3357 = vmax.xlane.f32.xlu0 %v3291
        %v3358 = vpop.xlane.xlu0 %3357
        %3359 = vmax.xlane.f32.xlu0 %v3294
        %v3360 = vpop.xlane.xlu0 %3359
        %3361 = vmax.xlane.f32.xlu0 %v3296
        %v3362 = vpop.xlane.xlu0 %3361
        %3363 = vmax.xlane.f32.xlu0 %v3299
        %v3364 = vpop.xlane.xlu0 %3363
        %3365 = vmax.xlane.f32.xlu0 %v3301
        %v3366 = vpop.xlane.xlu0 %3365
        %v3367 = vsub.f32 %v3224, %v3304
        %v3368 = vsub.f32 %v3226, %v3306
        %v3369 = vsub.f32 %v3229, %v3308
        %v3370 = vsub.f32 %v3231, %v3310
        %v3371 = vsub.f32 %v3234, %v3312
        %v3372 = vsub.f32 %v3236, %v3314
        %v3373 = vsub.f32 %v3239, %v3316
        %v3374 = vsub.f32 %v3241, %v3318
        %v3375 = vsub.f32 %v3244, %v3320
        %v3376 = vsub.f32 %v3246, %v3322
        %v3377 = vsub.f32 %v3249, %v3324
        %v3378 = vsub.f32 %v3251, %v3326
        %v3379 = vsub.f32 %v3254, %v3328
        %v3380 = vsub.f32 %v3256, %v3330
        %v3381 = vsub.f32 %v3259, %v3332
        %v3382 = vsub.f32 %v3261, %v3334
        %v3383 = vsub.f32 %v3264, %v3336
        %v3384 = vsub.f32 %v3266, %v3338
        %v3385 = vsub.f32 %v3269, %v3340
        %v3386 = vsub.f32 %v3271, %v3342
        %v3387 = vsub.f32 %v3274, %v3344
        %v3388 = vsub.f32 %v3276, %v3346
        %v3389 = vsub.f32 %v3279, %v3348
        %v3390 = vsub.f32 %v3281, %v3350
        %v3391 = vsub.f32 %v3284, %v3352
        %v3392 = vsub.f32 %v3286, %v3354
        %v3393 = vsub.f32 %v3289, %v3356
        %v3394 = vsub.f32 %v3291, %v3358
        %v3395 = vsub.f32 %v3294, %v3360
        %v3396 = vsub.f32 %v3296, %v3362
        %v3397 = vsub.f32 %v3299, %v3364
        %v3398 = vsub.f32 %v3301, %v3366
        %v3399 = vmul.f32 %v3367, 1.442695
        %v3400 = vpow.pop %v3399
        %v3401 = vmul.f32 %v3368, 1.442695
        %v3402 = vpow.pop %v3401
        %v3403 = vmul.f32 %v3369, 1.442695
        %v3404 = vpow.pop %v3403
        %v3405 = vmul.f32 %v3370, 1.442695
        %v3406 = vpow.pop %v3405
        %v3407 = vmul.f32 %v3371, 1.442695
        %v3408 = vpow.pop %v3407
        %v3409 = vmul.f32 %v3372, 1.442695
        %v3410 = vpow.pop %v3409
        %v3411 = vmul.f32 %v3373, 1.442695
        %v3412 = vpow.pop %v3411
        %v3413 = vmul.f32 %v3374, 1.442695
        %v3414 = vpow.pop %v3413
        %v3415 = vmul.f32 %v3375, 1.442695
        %v3416 = vpow.pop %v3415
        %v3417 = vmul.f32 %v3376, 1.442695
        %v3418 = vpow.pop %v3417
        %v3419 = vmul.f32 %v3377, 1.442695
        %v3420 = vpow.pop %v3419
        %v3421 = vmul.f32 %v3378, 1.442695
        %v3422 = vpow.pop %v3421
        %v3423 = vmul.f32 %v3379, 1.442695
        %v3424 = vpow.pop %v3423
        %v3425 = vmul.f32 %v3380, 1.442695
        %v3426 = vpow.pop %v3425
        %v3427 = vmul.f32 %v3381, 1.442695
        %v3428 = vpow.pop %v3427
        %v3429 = vmul.f32 %v3382, 1.442695
        %v3430 = vpow.pop %v3429
        %v3431 = vmul.f32 %v3383, 1.442695
        %v3432 = vpow.pop %v3431
        %v3433 = vmul.f32 %v3384, 1.442695
        %v3434 = vpow.pop %v3433
        %v3435 = vmul.f32 %v3385, 1.442695
        %v3436 = vpow.pop %v3435
        %v3437 = vmul.f32 %v3386, 1.442695
        %v3438 = vpow.pop %v3437
        %v3439 = vmul.f32 %v3387, 1.442695
        %v3440 = vpow.pop %v3439
        %v3441 = vmul.f32 %v3388, 1.442695
        %v3442 = vpow.pop %v3441
        %v3443 = vmul.f32 %v3389, 1.442695
        %v3444 = vpow.pop %v3443
        %v3445 = vmul.f32 %v3390, 1.442695
        %v3446 = vpow.pop %v3445
        %v3447 = vmul.f32 %v3391, 1.442695
        %v3448 = vpow.pop %v3447
        %v3449 = vmul.f32 %v3392, 1.442695
        %v3450 = vpow.pop %v3449
        %v3451 = vmul.f32 %v3393, 1.442695
        %v3452 = vpow.pop %v3451
        %v3453 = vmul.f32 %v3394, 1.442695
        %v3454 = vpow.pop %v3453
        %v3455 = vmul.f32 %v3395, 1.442695
        %v3456 = vpow.pop %v3455
        %v3457 = vmul.f32 %v3396, 1.442695
        %v3458 = vpow.pop %v3457
        %v3459 = vmul.f32 %v3397, 1.442695
        %v3460 = vpow.pop %v3459
        %v3461 = vmul.f32 %v3398, 1.442695
        %v3462 = vpow.pop %v3461
        %v3463 = vld [vmem:[%s20] sm:$0xff]
        %v3464 = vld [vmem:[%s20 + $0x8] sm:$0xff]
        %v3465 = vld [vmem:[%s20 + $0x10] sm:$0xff]
        %v3466 = vld [vmem:[%s20 + $0x18] sm:$0xff]
        %v3467 = vld [vmem:[%s20 + $0x20] sm:$0xff]
        %v3468 = vld [vmem:[%s20 + $0x28] sm:$0xff]
        %v3469 = vld [vmem:[%s20 + $0x30] sm:$0xff]
        %v3470 = vld [vmem:[%s20 + $0x38] sm:$0xff]
        %v3471 = vld [vmem:[%s20 + $0x40] sm:$0xff]
        %v3472 = vld [vmem:[%s20 + $0x48] sm:$0xff]
        %v3473 = vld [vmem:[%s20 + $0x50] sm:$0xff]
        %v3474 = vld [vmem:[%s20 + $0x58] sm:$0xff]
        %v3475 = vld [vmem:[%s20 + $0x60] sm:$0xff]
        %v3476 = vld [vmem:[%s20 + $0x68] sm:$0xff]
        %v3477 = vld [vmem:[%s20 + $0x70] sm:$0xff]
        %v3478 = vld [vmem:[%s20 + $0x78] sm:$0xff]
        %3479 = vmatpush.msra.mxu0 %v3478
        %3480 = vmatpush.msra.mxu0 %v3477
        %3481 = vmatpush.msra.mxu0 %v3476
        %3482 = vmatpush.msra.mxu0 %v3475
        %3483 = vmatpush.msra.mxu0 %v3474
        %3484 = vmatpush.msra.mxu0 %v3473
        %3485 = vmatpush.msra.mxu0 %v3472
        %3486 = vmatpush.msra.mxu0 %v3471
        %3487 = vmatpush.msra.mxu0 %v3470
        %3488 = vmatpush.msra.mxu0 %v3469
        %3489 = vmatpush.msra.mxu0 %v3468
        %3490 = vmatpush.msra.mxu0 %v3467
        %3491 = vmatpush.msra.mxu0 %v3466
        %3492 = vmatpush.msra.mxu0 %v3465
        %3493 = vmatpush.msra.mxu0 %v3464
        %3494 = vmatpush.msra.mxu0 %v3463
        %3495 = vmatmul.f32.gmra.mxu0 %v3400
        %v3496 = vpop.f32.mrf.mxu0
        %v3497 = vadd.f32 0.0, %v3496
        %3498 = vmatmul.f32.gmra.mxu0 %v3402
        %v3499 = vpop.f32.mrf.mxu0
        %v3500 = vadd.f32 0.0, %v3499
        %3501 = vmatmul.f32.gmra.mxu0 %v3404
        %v3502 = vpop.f32.mrf.mxu0
        %v3503 = vadd.f32 0.0, %v3502
        %3504 = vmatmul.f32.gmra.mxu0 %v3406
        %v3505 = vpop.f32.mrf.mxu0
        %v3506 = vadd.f32 0.0, %v3505
        %3507 = vmatmul.f32.gmra.mxu0 %v3408
        %v3508 = vpop.f32.mrf.mxu0
        %v3509 = vadd.f32 0.0, %v3508
        %3510 = vmatmul.f32.gmra.mxu0 %v3410
        %v3511 = vpop.f32.mrf.mxu0
        %v3512 = vadd.f32 0.0, %v3511
        %3513 = vmatmul.f32.gmra.mxu0 %v3412
        %v3514 = vpop.f32.mrf.mxu0
        %v3515 = vadd.f32 0.0, %v3514
        %3516 = vmatmul.f32.gmra.mxu0 %v3414
        %v3517 = vpop.f32.mrf.mxu0
        %v3518 = vadd.f32 0.0, %v3517
        %3519 = vmatmul.f32.gmra.mxu0 %v3416
        %v3520 = vpop.f32.mrf.mxu0
        %v3521 = vadd.f32 0.0, %v3520
        %3522 = vmatmul.f32.gmra.mxu0 %v3418
        %v3523 = vpop.f32.mrf.mxu0
        %v3524 = vadd.f32 0.0, %v3523
        %3525 = vmatmul.f32.gmra.mxu0 %v3420
        %v3526 = vpop.f32.mrf.mxu0
        %v3527 = vadd.f32 0.0, %v3526
        %3528 = vmatmul.f32.gmra.mxu0 %v3422
        %v3529 = vpop.f32.mrf.mxu0
        %v3530 = vadd.f32 0.0, %v3529
        %3531 = vmatmul.f32.gmra.mxu0 %v3424
        %v3532 = vpop.f32.mrf.mxu0
        %v3533 = vadd.f32 0.0, %v3532
        %3534 = vmatmul.f32.gmra.mxu0 %v3426
        %v3535 = vpop.f32.mrf.mxu0
        %v3536 = vadd.f32 0.0, %v3535
        %3537 = vmatmul.f32.gmra.mxu0 %v3428
        %v3538 = vpop.f32.mrf.mxu0
        %v3539 = vadd.f32 0.0, %v3538
        %3540 = vmatmul.f32.gmra.mxu0 %v3430
        %v3541 = vpop.f32.mrf.mxu0
        %v3542 = vadd.f32 0.0, %v3541
        %3543 = vmatmul.f32.gmra.mxu0 %v3432
        %v3544 = vpop.f32.mrf.mxu0
        %v3545 = vadd.f32 0.0, %v3544
        %3546 = vmatmul.f32.gmra.mxu0 %v3434
        %v3547 = vpop.f32.mrf.mxu0
        %v3548 = vadd.f32 0.0, %v3547
        %3549 = vmatmul.f32.gmra.mxu0 %v3436
        %v3550 = vpop.f32.mrf.mxu0
        %v3551 = vadd.f32 0.0, %v3550
        %3552 = vmatmul.f32.gmra.mxu0 %v3438
        %v3553 = vpop.f32.mrf.mxu0
        %v3554 = vadd.f32 0.0, %v3553
        %3555 = vmatmul.f32.gmra.mxu0 %v3440
        %v3556 = vpop.f32.mrf.mxu0
        %v3557 = vadd.f32 0.0, %v3556
        %3558 = vmatmul.f32.gmra.mxu0 %v3442
        %v3559 = vpop.f32.mrf.mxu0
        %v3560 = vadd.f32 0.0, %v3559
        %3561 = vmatmul.f32.gmra.mxu0 %v3444
        %v3562 = vpop.f32.mrf.mxu0
        %v3563 = vadd.f32 0.0, %v3562
        %3564 = vmatmul.f32.gmra.mxu0 %v3446
        %v3565 = vpop.f32.mrf.mxu0
        %v3566 = vadd.f32 0.0, %v3565
        %3567 = vmatmul.f32.gmra.mxu0 %v3448
        %v3568 = vpop.f32.mrf.mxu0
        %v3569 = vadd.f32 0.0, %v3568
        %3570 = vmatmul.f32.gmra.mxu0 %v3450
        %v3571 = vpop.f32.mrf.mxu0
        %v3572 = vadd.f32 0.0, %v3571
        %3573 = vmatmul.f32.gmra.mxu0 %v3452
        %v3574 = vpop.f32.mrf.mxu0
        %v3575 = vadd.f32 0.0, %v3574
        %3576 = vmatmul.f32.gmra.mxu0 %v3454
        %v3577 = vpop.f32.mrf.mxu0
        %v3578 = vadd.f32 0.0, %v3577
        %3579 = vmatmul.f32.gmra.mxu0 %v3456
        %v3580 = vpop.f32.mrf.mxu0
        %v3581 = vadd.f32 0.0, %v3580
        %3582 = vmatmul.f32.gmra.mxu0 %v3458
        %v3583 = vpop.f32.mrf.mxu0
        %v3584 = vadd.f32 0.0, %v3583
        %3585 = vmatmul.f32.gmra.mxu0 %v3460
        %v3586 = vpop.f32.mrf.mxu0
        %v3587 = vadd.f32 0.0, %v3586
        %3588 = vmatmul.f32.gmra.mxu0 %v3462
        %v3589 = vpop.f32.mrf.mxu0
        %v3590 = vadd.f32 0.0, %v3589
        %3591 = vdwg.mxu0
        %v3592 = vrcp.pop %v3497
        %v3593 = vmul.f32 %v3497, %v3592
        %v3594 = vsub.f32 1.0, %v3593
        %v3595 = vmul.f32 %v3592, %v3594
        %v3596 = vadd.f32 %v3592, %v3595
        %vm3597 = vweird.f32 %v3497
        %vm3598 = vweird.f32 %v3592
        %vm3599 = vmor %vm3597, %vm3598
        %v3600 = vsel %vm3599, %v3592, %v3596
        %v3601 = vand.u32 2147483647, %v3497
        %vm3602 = vcmp.eq.f32.partialorder %v3601, 8.507059e+37
        %v3603 = vand.u32 %v3497, 2147483648
        %v3604 = vor.u32 1.1754944e-38, %v3603
        %v3605 = vsel %vm3602, %v3604, %v3600
        %v3606 = vmul.f32 %v3400, %v3605
        %v3607 = vrcp.pop %v3500
        %v3608 = vmul.f32 %v3500, %v3607
        %v3609 = vsub.f32 1.0, %v3608
        %v3610 = vmul.f32 %v3607, %v3609
        %v3611 = vadd.f32 %v3607, %v3610
        %vm3612 = vweird.f32 %v3500
        %vm3613 = vweird.f32 %v3607
        %vm3614 = vmor %vm3612, %vm3613
        %v3615 = vsel %vm3614, %v3607, %v3611
        %v3616 = vand.u32 2147483647, %v3500
        %vm3617 = vcmp.eq.f32.partialorder %v3616, 8.507059e+37
        %v3618 = vand.u32 %v3500, 2147483648
        %v3619 = vor.u32 1.1754944e-38, %v3618
        %v3620 = vsel %vm3617, %v3619, %v3615
        %v3621 = vmul.f32 %v3402, %v3620
        %v3622 = vrcp.pop %v3503
        %v3623 = vmul.f32 %v3503, %v3622
        %v3624 = vsub.f32 1.0, %v3623
        %v3625 = vmul.f32 %v3622, %v3624
        %v3626 = vadd.f32 %v3622, %v3625
        %vm3627 = vweird.f32 %v3503
        %vm3628 = vweird.f32 %v3622
        %vm3629 = vmor %vm3627, %vm3628
        %v3630 = vsel %vm3629, %v3622, %v3626
        %v3631 = vand.u32 2147483647, %v3503
        %vm3632 = vcmp.eq.f32.partialorder %v3631, 8.507059e+37
        %v3633 = vand.u32 %v3503, 2147483648
        %v3634 = vor.u32 1.1754944e-38, %v3633
        %v3635 = vsel %vm3632, %v3634, %v3630
        %v3636 = vmul.f32 %v3404, %v3635
        %v3637 = vrcp.pop %v3506
        %v3638 = vmul.f32 %v3506, %v3637
        %v3639 = vsub.f32 1.0, %v3638
        %v3640 = vmul.f32 %v3637, %v3639
        %v3641 = vadd.f32 %v3637, %v3640
        %vm3642 = vweird.f32 %v3506
        %vm3643 = vweird.f32 %v3637
        %vm3644 = vmor %vm3642, %vm3643
        %v3645 = vsel %vm3644, %v3637, %v3641
        %v3646 = vand.u32 2147483647, %v3506
        %vm3647 = vcmp.eq.f32.partialorder %v3646, 8.507059e+37
        %v3648 = vand.u32 %v3506, 2147483648
        %v3649 = vor.u32 1.1754944e-38, %v3648
        %v3650 = vsel %vm3647, %v3649, %v3645
        %v3651 = vmul.f32 %v3406, %v3650
        %v3652 = vrcp.pop %v3509
        %v3653 = vmul.f32 %v3509, %v3652
        %v3654 = vsub.f32 1.0, %v3653
        %v3655 = vmul.f32 %v3652, %v3654
        %v3656 = vadd.f32 %v3652, %v3655
        %vm3657 = vweird.f32 %v3509
        %vm3658 = vweird.f32 %v3652
        %vm3659 = vmor %vm3657, %vm3658
        %v3660 = vsel %vm3659, %v3652, %v3656
        %v3661 = vand.u32 2147483647, %v3509
        %vm3662 = vcmp.eq.f32.partialorder %v3661, 8.507059e+37
        %v3663 = vand.u32 %v3509, 2147483648
        %v3664 = vor.u32 1.1754944e-38, %v3663
        %v3665 = vsel %vm3662, %v3664, %v3660
        %v3666 = vmul.f32 %v3408, %v3665
        %v3667 = vrcp.pop %v3512
        %v3668 = vmul.f32 %v3512, %v3667
        %v3669 = vsub.f32 1.0, %v3668
        %v3670 = vmul.f32 %v3667, %v3669
        %v3671 = vadd.f32 %v3667, %v3670
        %vm3672 = vweird.f32 %v3512
        %vm3673 = vweird.f32 %v3667
        %vm3674 = vmor %vm3672, %vm3673
        %v3675 = vsel %vm3674, %v3667, %v3671
        %v3676 = vand.u32 2147483647, %v3512
        %vm3677 = vcmp.eq.f32.partialorder %v3676, 8.507059e+37
        %v3678 = vand.u32 %v3512, 2147483648
        %v3679 = vor.u32 1.1754944e-38, %v3678
        %v3680 = vsel %vm3677, %v3679, %v3675
        %v3681 = vmul.f32 %v3410, %v3680
        %v3682 = vrcp.pop %v3515
        %v3683 = vmul.f32 %v3515, %v3682
        %v3684 = vsub.f32 1.0, %v3683
        %v3685 = vmul.f32 %v3682, %v3684
        %v3686 = vadd.f32 %v3682, %v3685
        %vm3687 = vweird.f32 %v3515
        %vm3688 = vweird.f32 %v3682
        %vm3689 = vmor %vm3687, %vm3688
        %v3690 = vsel %vm3689, %v3682, %v3686
        %v3691 = vand.u32 2147483647, %v3515
        %vm3692 = vcmp.eq.f32.partialorder %v3691, 8.507059e+37
        %v3693 = vand.u32 %v3515, 2147483648
        %v3694 = vor.u32 1.1754944e-38, %v3693
        %v3695 = vsel %vm3692, %v3694, %v3690
        %v3696 = vmul.f32 %v3412, %v3695
        %v3697 = vrcp.pop %v3518
        %v3698 = vmul.f32 %v3518, %v3697
        %v3699 = vsub.f32 1.0, %v3698
        %v3700 = vmul.f32 %v3697, %v3699
        %v3701 = vadd.f32 %v3697, %v3700
        %vm3702 = vweird.f32 %v3518
        %vm3703 = vweird.f32 %v3697
        %vm3704 = vmor %vm3702, %vm3703
        %v3705 = vsel %vm3704, %v3697, %v3701
        %v3706 = vand.u32 2147483647, %v3518
        %vm3707 = vcmp.eq.f32.partialorder %v3706, 8.507059e+37
        %v3708 = vand.u32 %v3518, 2147483648
        %v3709 = vor.u32 1.1754944e-38, %v3708
        %v3710 = vsel %vm3707, %v3709, %v3705
        %v3711 = vmul.f32 %v3414, %v3710
        %v3712 = vrcp.pop %v3521
        %v3713 = vmul.f32 %v3521, %v3712
        %v3714 = vsub.f32 1.0, %v3713
        %v3715 = vmul.f32 %v3712, %v3714
        %v3716 = vadd.f32 %v3712, %v3715
        %vm3717 = vweird.f32 %v3521
        %vm3718 = vweird.f32 %v3712
        %vm3719 = vmor %vm3717, %vm3718
        %v3720 = vsel %vm3719, %v3712, %v3716
        %v3721 = vand.u32 2147483647, %v3521
        %vm3722 = vcmp.eq.f32.partialorder %v3721, 8.507059e+37
        %v3723 = vand.u32 %v3521, 2147483648
        %v3724 = vor.u32 1.1754944e-38, %v3723
        %v3725 = vsel %vm3722, %v3724, %v3720
        %v3726 = vmul.f32 %v3416, %v3725
        %v3727 = vrcp.pop %v3524
        %v3728 = vmul.f32 %v3524, %v3727
        %v3729 = vsub.f32 1.0, %v3728
        %v3730 = vmul.f32 %v3727, %v3729
        %v3731 = vadd.f32 %v3727, %v3730
        %vm3732 = vweird.f32 %v3524
        %vm3733 = vweird.f32 %v3727
        %vm3734 = vmor %vm3732, %vm3733
        %v3735 = vsel %vm3734, %v3727, %v3731
        %v3736 = vand.u32 2147483647, %v3524
        %vm3737 = vcmp.eq.f32.partialorder %v3736, 8.507059e+37
        %v3738 = vand.u32 %v3524, 2147483648
        %v3739 = vor.u32 1.1754944e-38, %v3738
        %v3740 = vsel %vm3737, %v3739, %v3735
        %v3741 = vmul.f32 %v3418, %v3740
        %v3742 = vrcp.pop %v3527
        %v3743 = vmul.f32 %v3527, %v3742
        %v3744 = vsub.f32 1.0, %v3743
        %v3745 = vmul.f32 %v3742, %v3744
        %v3746 = vadd.f32 %v3742, %v3745
        %vm3747 = vweird.f32 %v3527
        %vm3748 = vweird.f32 %v3742
        %vm3749 = vmor %vm3747, %vm3748
        %v3750 = vsel %vm3749, %v3742, %v3746
        %v3751 = vand.u32 2147483647, %v3527
        %vm3752 = vcmp.eq.f32.partialorder %v3751, 8.507059e+37
        %v3753 = vand.u32 %v3527, 2147483648
        %v3754 = vor.u32 1.1754944e-38, %v3753
        %v3755 = vsel %vm3752, %v3754, %v3750
        %v3756 = vmul.f32 %v3420, %v3755
        %v3757 = vrcp.pop %v3530
        %v3758 = vmul.f32 %v3530, %v3757
        %v3759 = vsub.f32 1.0, %v3758
        %v3760 = vmul.f32 %v3757, %v3759
        %v3761 = vadd.f32 %v3757, %v3760
        %vm3762 = vweird.f32 %v3530
        %vm3763 = vweird.f32 %v3757
        %vm3764 = vmor %vm3762, %vm3763
        %v3765 = vsel %vm3764, %v3757, %v3761
        %v3766 = vand.u32 2147483647, %v3530
        %vm3767 = vcmp.eq.f32.partialorder %v3766, 8.507059e+37
        %v3768 = vand.u32 %v3530, 2147483648
        %v3769 = vor.u32 1.1754944e-38, %v3768
        %v3770 = vsel %vm3767, %v3769, %v3765
        %v3771 = vmul.f32 %v3422, %v3770
        %v3772 = vrcp.pop %v3533
        %v3773 = vmul.f32 %v3533, %v3772
        %v3774 = vsub.f32 1.0, %v3773
        %v3775 = vmul.f32 %v3772, %v3774
        %v3776 = vadd.f32 %v3772, %v3775
        %vm3777 = vweird.f32 %v3533
        %vm3778 = vweird.f32 %v3772
        %vm3779 = vmor %vm3777, %vm3778
        %v3780 = vsel %vm3779, %v3772, %v3776
        %v3781 = vand.u32 2147483647, %v3533
        %vm3782 = vcmp.eq.f32.partialorder %v3781, 8.507059e+37
        %v3783 = vand.u32 %v3533, 2147483648
        %v3784 = vor.u32 1.1754944e-38, %v3783
        %v3785 = vsel %vm3782, %v3784, %v3780
        %v3786 = vmul.f32 %v3424, %v3785
        %v3787 = vrcp.pop %v3536
        %v3788 = vmul.f32 %v3536, %v3787
        %v3789 = vsub.f32 1.0, %v3788
        %v3790 = vmul.f32 %v3787, %v3789
        %v3791 = vadd.f32 %v3787, %v3790
        %vm3792 = vweird.f32 %v3536
        %vm3793 = vweird.f32 %v3787
        %vm3794 = vmor %vm3792, %vm3793
        %v3795 = vsel %vm3794, %v3787, %v3791
        %v3796 = vand.u32 2147483647, %v3536
        %vm3797 = vcmp.eq.f32.partialorder %v3796, 8.507059e+37
        %v3798 = vand.u32 %v3536, 2147483648
        %v3799 = vor.u32 1.1754944e-38, %v3798
        %v3800 = vsel %vm3797, %v3799, %v3795
        %v3801 = vmul.f32 %v3426, %v3800
        %v3802 = vrcp.pop %v3539
        %v3803 = vmul.f32 %v3539, %v3802
        %v3804 = vsub.f32 1.0, %v3803
        %v3805 = vmul.f32 %v3802, %v3804
        %v3806 = vadd.f32 %v3802, %v3805
        %vm3807 = vweird.f32 %v3539
        %vm3808 = vweird.f32 %v3802
        %vm3809 = vmor %vm3807, %vm3808
        %v3810 = vsel %vm3809, %v3802, %v3806
        %v3811 = vand.u32 2147483647, %v3539
        %vm3812 = vcmp.eq.f32.partialorder %v3811, 8.507059e+37
        %v3813 = vand.u32 %v3539, 2147483648
        %v3814 = vor.u32 1.1754944e-38, %v3813
        %v3815 = vsel %vm3812, %v3814, %v3810
        %v3816 = vmul.f32 %v3428, %v3815
        %v3817 = vrcp.pop %v3542
        %v3818 = vmul.f32 %v3542, %v3817
        %v3819 = vsub.f32 1.0, %v3818
        %v3820 = vmul.f32 %v3817, %v3819
        %v3821 = vadd.f32 %v3817, %v3820
        %vm3822 = vweird.f32 %v3542
        %vm3823 = vweird.f32 %v3817
        %vm3824 = vmor %vm3822, %vm3823
        %v3825 = vsel %vm3824, %v3817, %v3821
        %v3826 = vand.u32 2147483647, %v3542
        %vm3827 = vcmp.eq.f32.partialorder %v3826, 8.507059e+37
        %v3828 = vand.u32 %v3542, 2147483648
        %v3829 = vor.u32 1.1754944e-38, %v3828
        %v3830 = vsel %vm3827, %v3829, %v3825
        %v3831 = vmul.f32 %v3430, %v3830
        %v3832 = vrcp.pop %v3545
        %v3833 = vmul.f32 %v3545, %v3832
        %v3834 = vsub.f32 1.0, %v3833
        %v3835 = vmul.f32 %v3832, %v3834
        %v3836 = vadd.f32 %v3832, %v3835
        %vm3837 = vweird.f32 %v3545
        %vm3838 = vweird.f32 %v3832
        %vm3839 = vmor %vm3837, %vm3838
        %v3840 = vsel %vm3839, %v3832, %v3836
        %v3841 = vand.u32 2147483647, %v3545
        %vm3842 = vcmp.eq.f32.partialorder %v3841, 8.507059e+37
        %v3843 = vand.u32 %v3545, 2147483648
        %v3844 = vor.u32 1.1754944e-38, %v3843
        %v3845 = vsel %vm3842, %v3844, %v3840
        %v3846 = vmul.f32 %v3432, %v3845
        %v3847 = vrcp.pop %v3548
        %v3848 = vmul.f32 %v3548, %v3847
        %v3849 = vsub.f32 1.0, %v3848
        %v3850 = vmul.f32 %v3847, %v3849
        %v3851 = vadd.f32 %v3847, %v3850
        %vm3852 = vweird.f32 %v3548
        %vm3853 = vweird.f32 %v3847
        %vm3854 = vmor %vm3852, %vm3853
        %v3855 = vsel %vm3854, %v3847, %v3851
        %v3856 = vand.u32 2147483647, %v3548
        %vm3857 = vcmp.eq.f32.partialorder %v3856, 8.507059e+37
        %v3858 = vand.u32 %v3548, 2147483648
        %v3859 = vor.u32 1.1754944e-38, %v3858
        %v3860 = vsel %vm3857, %v3859, %v3855
        %v3861 = vmul.f32 %v3434, %v3860
        %v3862 = vrcp.pop %v3551
        %v3863 = vmul.f32 %v3551, %v3862
        %v3864 = vsub.f32 1.0, %v3863
        %v3865 = vmul.f32 %v3862, %v3864
        %v3866 = vadd.f32 %v3862, %v3865
        %vm3867 = vweird.f32 %v3551
        %vm3868 = vweird.f32 %v3862
        %vm3869 = vmor %vm3867, %vm3868
        %v3870 = vsel %vm3869, %v3862, %v3866
        %v3871 = vand.u32 2147483647, %v3551
        %vm3872 = vcmp.eq.f32.partialorder %v3871, 8.507059e+37
        %v3873 = vand.u32 %v3551, 2147483648
        %v3874 = vor.u32 1.1754944e-38, %v3873
        %v3875 = vsel %vm3872, %v3874, %v3870
        %v3876 = vmul.f32 %v3436, %v3875
        %v3877 = vrcp.pop %v3554
        %v3878 = vmul.f32 %v3554, %v3877
        %v3879 = vsub.f32 1.0, %v3878
        %v3880 = vmul.f32 %v3877, %v3879
        %v3881 = vadd.f32 %v3877, %v3880
        %vm3882 = vweird.f32 %v3554
        %vm3883 = vweird.f32 %v3877
        %vm3884 = vmor %vm3882, %vm3883
        %v3885 = vsel %vm3884, %v3877, %v3881
        %v3886 = vand.u32 2147483647, %v3554
        %vm3887 = vcmp.eq.f32.partialorder %v3886, 8.507059e+37
        %v3888 = vand.u32 %v3554, 2147483648
        %v3889 = vor.u32 1.1754944e-38, %v3888
        %v3890 = vsel %vm3887, %v3889, %v3885
        %v3891 = vmul.f32 %v3438, %v3890
        %v3892 = vrcp.pop %v3557
        %v3893 = vmul.f32 %v3557, %v3892
        %v3894 = vsub.f32 1.0, %v3893
        %v3895 = vmul.f32 %v3892, %v3894
        %v3896 = vadd.f32 %v3892, %v3895
        %vm3897 = vweird.f32 %v3557
        %vm3898 = vweird.f32 %v3892
        %vm3899 = vmor %vm3897, %vm3898
        %v3900 = vsel %vm3899, %v3892, %v3896
        %v3901 = vand.u32 2147483647, %v3557
        %vm3902 = vcmp.eq.f32.partialorder %v3901, 8.507059e+37
        %v3903 = vand.u32 %v3557, 2147483648
        %v3904 = vor.u32 1.1754944e-38, %v3903
        %v3905 = vsel %vm3902, %v3904, %v3900
        %v3906 = vmul.f32 %v3440, %v3905
        %v3907 = vrcp.pop %v3560
        %v3908 = vmul.f32 %v3560, %v3907
        %v3909 = vsub.f32 1.0, %v3908
        %v3910 = vmul.f32 %v3907, %v3909
        %v3911 = vadd.f32 %v3907, %v3910
        %vm3912 = vweird.f32 %v3560
        %vm3913 = vweird.f32 %v3907
        %vm3914 = vmor %vm3912, %vm3913
        %v3915 = vsel %vm3914, %v3907, %v3911
        %v3916 = vand.u32 2147483647, %v3560
        %vm3917 = vcmp.eq.f32.partialorder %v3916, 8.507059e+37
        %v3918 = vand.u32 %v3560, 2147483648
        %v3919 = vor.u32 1.1754944e-38, %v3918
        %v3920 = vsel %vm3917, %v3919, %v3915
        %v3921 = vmul.f32 %v3442, %v3920
        %v3922 = vrcp.pop %v3563
        %v3923 = vmul.f32 %v3563, %v3922
        %v3924 = vsub.f32 1.0, %v3923
        %v3925 = vmul.f32 %v3922, %v3924
        %v3926 = vadd.f32 %v3922, %v3925
        %vm3927 = vweird.f32 %v3563
        %vm3928 = vweird.f32 %v3922
        %vm3929 = vmor %vm3927, %vm3928
        %v3930 = vsel %vm3929, %v3922, %v3926
        %v3931 = vand.u32 2147483647, %v3563
        %vm3932 = vcmp.eq.f32.partialorder %v3931, 8.507059e+37
        %v3933 = vand.u32 %v3563, 2147483648
        %v3934 = vor.u32 1.1754944e-38, %v3933
        %v3935 = vsel %vm3932, %v3934, %v3930
        %v3936 = vmul.f32 %v3444, %v3935
        %v3937 = vrcp.pop %v3566
        %v3938 = vmul.f32 %v3566, %v3937
        %v3939 = vsub.f32 1.0, %v3938
        %v3940 = vmul.f32 %v3937, %v3939
        %v3941 = vadd.f32 %v3937, %v3940
        %vm3942 = vweird.f32 %v3566
        %vm3943 = vweird.f32 %v3937
        %vm3944 = vmor %vm3942, %vm3943
        %v3945 = vsel %vm3944, %v3937, %v3941
        %v3946 = vand.u32 2147483647, %v3566
        %vm3947 = vcmp.eq.f32.partialorder %v3946, 8.507059e+37
        %v3948 = vand.u32 %v3566, 2147483648
        %v3949 = vor.u32 1.1754944e-38, %v3948
        %v3950 = vsel %vm3947, %v3949, %v3945
        %v3951 = vmul.f32 %v3446, %v3950
        %v3952 = vrcp.pop %v3569
        %v3953 = vmul.f32 %v3569, %v3952
        %v3954 = vsub.f32 1.0, %v3953
        %v3955 = vmul.f32 %v3952, %v3954
        %v3956 = vadd.f32 %v3952, %v3955
        %vm3957 = vweird.f32 %v3569
        %vm3958 = vweird.f32 %v3952
        %vm3959 = vmor %vm3957, %vm3958
        %v3960 = vsel %vm3959, %v3952, %v3956
        %v3961 = vand.u32 2147483647, %v3569
        %vm3962 = vcmp.eq.f32.partialorder %v3961, 8.507059e+37
        %v3963 = vand.u32 %v3569, 2147483648
        %v3964 = vor.u32 1.1754944e-38, %v3963
        %v3965 = vsel %vm3962, %v3964, %v3960
        %v3966 = vmul.f32 %v3448, %v3965
        %v3967 = vrcp.pop %v3572
        %v3968 = vmul.f32 %v3572, %v3967
        %v3969 = vsub.f32 1.0, %v3968
        %v3970 = vmul.f32 %v3967, %v3969
        %v3971 = vadd.f32 %v3967, %v3970
        %vm3972 = vweird.f32 %v3572
        %vm3973 = vweird.f32 %v3967
        %vm3974 = vmor %vm3972, %vm3973
        %v3975 = vsel %vm3974, %v3967, %v3971
        %v3976 = vand.u32 2147483647, %v3572
        %vm3977 = vcmp.eq.f32.partialorder %v3976, 8.507059e+37
        %v3978 = vand.u32 %v3572, 2147483648
        %v3979 = vor.u32 1.1754944e-38, %v3978
        %v3980 = vsel %vm3977, %v3979, %v3975
        %v3981 = vmul.f32 %v3450, %v3980
        %v3982 = vrcp.pop %v3575
        %v3983 = vmul.f32 %v3575, %v3982
        %v3984 = vsub.f32 1.0, %v3983
        %v3985 = vmul.f32 %v3982, %v3984
        %v3986 = vadd.f32 %v3982, %v3985
        %vm3987 = vweird.f32 %v3575
        %vm3988 = vweird.f32 %v3982
        %vm3989 = vmor %vm3987, %vm3988
        %v3990 = vsel %vm3989, %v3982, %v3986
        %v3991 = vand.u32 2147483647, %v3575
        %vm3992 = vcmp.eq.f32.partialorder %v3991, 8.507059e+37
        %v3993 = vand.u32 %v3575, 2147483648
        %v3994 = vor.u32 1.1754944e-38, %v3993
        %v3995 = vsel %vm3992, %v3994, %v3990
        %v3996 = vmul.f32 %v3452, %v3995
        %v3997 = vrcp.pop %v3578
        %v3998 = vmul.f32 %v3578, %v3997
        %v3999 = vsub.f32 1.0, %v3998
        %v4000 = vmul.f32 %v3997, %v3999
        %v4001 = vadd.f32 %v3997, %v4000
        %vm4002 = vweird.f32 %v3578
        %vm4003 = vweird.f32 %v3997
        %vm4004 = vmor %vm4002, %vm4003
        %v4005 = vsel %vm4004, %v3997, %v4001
        %v4006 = vand.u32 2147483647, %v3578
        %vm4007 = vcmp.eq.f32.partialorder %v4006, 8.507059e+37
        %v4008 = vand.u32 %v3578, 2147483648
        %v4009 = vor.u32 1.1754944e-38, %v4008
        %v4010 = vsel %vm4007, %v4009, %v4005
        %v4011 = vmul.f32 %v3454, %v4010
        %v4012 = vrcp.pop %v3581
        %v4013 = vmul.f32 %v3581, %v4012
        %v4014 = vsub.f32 1.0, %v4013
        %v4015 = vmul.f32 %v4012, %v4014
        %v4016 = vadd.f32 %v4012, %v4015
        %vm4017 = vweird.f32 %v3581
        %vm4018 = vweird.f32 %v4012
        %vm4019 = vmor %vm4017, %vm4018
        %v4020 = vsel %vm4019, %v4012, %v4016
        %v4021 = vand.u32 2147483647, %v3581
        %vm4022 = vcmp.eq.f32.partialorder %v4021, 8.507059e+37
        %v4023 = vand.u32 %v3581, 2147483648
        %v4024 = vor.u32 1.1754944e-38, %v4023
        %v4025 = vsel %vm4022, %v4024, %v4020
        %v4026 = vmul.f32 %v3456, %v4025
        %v4027 = vrcp.pop %v3584
        %v4028 = vmul.f32 %v3584, %v4027
        %v4029 = vsub.f32 1.0, %v4028
        %v4030 = vmul.f32 %v4027, %v4029
        %v4031 = vadd.f32 %v4027, %v4030
        %vm4032 = vweird.f32 %v3584
        %vm4033 = vweird.f32 %v4027
        %vm4034 = vmor %vm4032, %vm4033
        %v4035 = vsel %vm4034, %v4027, %v4031
        %v4036 = vand.u32 2147483647, %v3584
        %vm4037 = vcmp.eq.f32.partialorder %v4036, 8.507059e+37
        %v4038 = vand.u32 %v3584, 2147483648
        %v4039 = vor.u32 1.1754944e-38, %v4038
        %v4040 = vsel %vm4037, %v4039, %v4035
        %v4041 = vmul.f32 %v3458, %v4040
        %v4042 = vrcp.pop %v3587
        %v4043 = vmul.f32 %v3587, %v4042
        %v4044 = vsub.f32 1.0, %v4043
        %v4045 = vmul.f32 %v4042, %v4044
        %v4046 = vadd.f32 %v4042, %v4045
        %vm4047 = vweird.f32 %v3587
        %vm4048 = vweird.f32 %v4042
        %vm4049 = vmor %vm4047, %vm4048
        %v4050 = vsel %vm4049, %v4042, %v4046
        %v4051 = vand.u32 2147483647, %v3587
        %vm4052 = vcmp.eq.f32.partialorder %v4051, 8.507059e+37
        %v4053 = vand.u32 %v3587, 2147483648
        %v4054 = vor.u32 1.1754944e-38, %v4053
        %v4055 = vsel %vm4052, %v4054, %v4050
        %v4056 = vmul.f32 %v3460, %v4055
        %v4057 = vrcp.pop %v3590
        %v4058 = vmul.f32 %v3590, %v4057
        %v4059 = vsub.f32 1.0, %v4058
        %v4060 = vmul.f32 %v4057, %v4059
        %v4061 = vadd.f32 %v4057, %v4060
        %vm4062 = vweird.f32 %v3590
        %vm4063 = vweird.f32 %v4057
        %vm4064 = vmor %vm4062, %vm4063
        %v4065 = vsel %vm4064, %v4057, %v4061
        %v4066 = vand.u32 2147483647, %v3590
        %vm4067 = vcmp.eq.f32.partialorder %v4066, 8.507059e+37
        %v4068 = vand.u32 %v3590, 2147483648
        %v4069 = vor.u32 1.1754944e-38, %v4068
        %v4070 = vsel %vm4067, %v4069, %v4065
        %v4071 = vmul.f32 %v3462, %v4070
        %v4072 = vld [vmem:[%s19] sm:$0xff]
        %v4073 = vld [vmem:[%s19 + $0x8] sm:$0xff]
        %v4074 = vld [vmem:[%s19 + $0x10] sm:$0xff]
        %v4075 = vld [vmem:[%s19 + $0x18] sm:$0xff]
        %v4076 = vld [vmem:[%s19 + $0x20] sm:$0xff]
        %v4077 = vld [vmem:[%s19 + $0x28] sm:$0xff]
        %v4078 = vld [vmem:[%s19 + $0x30] sm:$0xff]
        %v4079 = vld [vmem:[%s19 + $0x38] sm:$0xff]
        %v4080 = vld [vmem:[%s19 + $0x40] sm:$0xff]
        %v4081 = vld [vmem:[%s19 + $0x48] sm:$0xff]
        %v4082 = vld [vmem:[%s19 + $0x50] sm:$0xff]
        %v4083 = vld [vmem:[%s19 + $0x58] sm:$0xff]
        %v4084 = vld [vmem:[%s19 + $0x60] sm:$0xff]
        %v4085 = vld [vmem:[%s19 + $0x68] sm:$0xff]
        %v4086 = vld [vmem:[%s19 + $0x70] sm:$0xff]
        %v4087 = vld [vmem:[%s19 + $0x78] sm:$0xff]
        %v4088 = vld [vmem:[%s11] sm:$0xff]
        %v4089 = vld [vmem:[%s11 + $0x8] sm:$0xff]
        %v4090 = vld [vmem:[%s11 + $0x10] sm:$0xff]
        %v4091 = vld [vmem:[%s11 + $0x18] sm:$0xff]
        %v4092 = vld [vmem:[%s11 + $0x20] sm:$0xff]
        %v4093 = vld [vmem:[%s11 + $0x28] sm:$0xff]
        %v4094 = vld [vmem:[%s11 + $0x30] sm:$0xff]
        %v4095 = vld [vmem:[%s11 + $0x38] sm:$0xff]
        %v4096 = vld [vmem:[%s12] sm:$0x3]
        %v4098 = vperm.slane %v4096, 0
        %v4099 = vperm.slane %v4096, 1
        %v4110 = vunpack.c.l.b16 %v4088
        %v4111 = vunpack.c.h.b16 %v4088
        %v4112 = vunpack.c.l.b16 %v4089
        %v4113 = vunpack.c.h.b16 %v4089
        %v4114 = vunpack.c.l.b16 %v4090
        %v4115 = vunpack.c.h.b16 %v4090
        %v4116 = vunpack.c.l.b16 %v4091
        %v4117 = vunpack.c.h.b16 %v4091
        %v4118 = vunpack.c.l.b16 %v4092
        %v4119 = vunpack.c.h.b16 %v4092
        %v4120 = vunpack.c.l.b16 %v4093
        %v4121 = vunpack.c.h.b16 %v4093
        %v4122 = vunpack.c.l.b16 %v4094
        %v4123 = vunpack.c.h.b16 %v4094
        %v4124 = vunpack.c.l.b16 %v4095
        %v4125 = vunpack.c.h.b16 %v4095
        %v4126 = vpack.c.b16 %v4112, %v4110
        %v4127 = vpack.c.b16 %v4113, %v4111
        %v4128 = vpack.c.b16 %v4116, %v4114
        %v4129 = vpack.c.b16 %v4117, %v4115
        %v4130 = vpack.c.b16 %v4120, %v4118
        %v4131 = vpack.c.b16 %v4121, %v4119
        %v4132 = vpack.c.b16 %v4124, %v4122
        %v4133 = vpack.c.b16 %v4125, %v4123
        %4142 = vmatpush.bf16.msra.mxu0 0
        %4143 = vmatpush.bf16.msra.mxu0 0
        %4144 = vmatpush.bf16.msra.mxu0 0
        %4145 = vmatpush.bf16.msra.mxu0 0
        %4146 = vmatpush.bf16.msra.mxu0 %v4132
        %4147 = vmatpush.bf16.msra.mxu0 %v4130
        %4148 = vmatpush.bf16.msra.mxu0 %v4128
        %4149 = vmatpush.bf16.msra.mxu0 %v4126
        %4150 = vmatmul.bf16.gmra.mxu0 %v853
        %v4151 = vpop.f32.mrf.mxu0
        %v4152 = vadd.f32 %v4098, %v4151
        %v4153 = vpop.f32.mrf.mxu0
        %v4154 = vadd.f32 %v4098, %v4153
        %4155 = vmatmul.bf16.gmra.mxu0 %v856
        %v4156 = vpop.f32.mrf.mxu0
        %v4157 = vadd.f32 %v4098, %v4156
        %v4158 = vpop.f32.mrf.mxu0
        %v4159 = vadd.f32 %v4098, %v4158
        %4160 = vmatmul.bf16.gmra.mxu0 %v859
        %v4161 = vpop.f32.mrf.mxu0
        %v4162 = vadd.f32 %v4098, %v4161
        %v4163 = vpop.f32.mrf.mxu0
        %v4164 = vadd.f32 %v4098, %v4163
        %4165 = vmatmul.bf16.gmra.mxu0 %v862
        %v4166 = vpop.f32.mrf.mxu0
        %v4167 = vadd.f32 %v4098, %v4166
        %v4168 = vpop.f32.mrf.mxu0
        %v4169 = vadd.f32 %v4098, %v4168
        %4170 = vmatmul.bf16.gmra.mxu0 %v865
        %v4171 = vpop.f32.mrf.mxu0
        %v4172 = vadd.f32 %v4098, %v4171
        %v4173 = vpop.f32.mrf.mxu0
        %v4174 = vadd.f32 %v4098, %v4173
        %4175 = vmatmul.bf16.gmra.mxu0 %v868
        %v4176 = vpop.f32.mrf.mxu0
        %v4177 = vadd.f32 %v4098, %v4176
        %v4178 = vpop.f32.mrf.mxu0
        %v4179 = vadd.f32 %v4098, %v4178
        %4180 = vmatmul.bf16.gmra.mxu0 %v871
        %v4181 = vpop.f32.mrf.mxu0
        %v4182 = vadd.f32 %v4098, %v4181
        %v4183 = vpop.f32.mrf.mxu0
        %v4184 = vadd.f32 %v4098, %v4183
        %4185 = vmatmul.bf16.gmra.mxu0 %v874
        %v4186 = vpop.f32.mrf.mxu0
        %v4187 = vadd.f32 %v4098, %v4186
        %v4188 = vpop.f32.mrf.mxu0
        %v4189 = vadd.f32 %v4098, %v4188
        %4190 = vmatmul.bf16.gmra.mxu0 %v877
        %v4191 = vpop.f32.mrf.mxu0
        %v4192 = vadd.f32 %v4098, %v4191
        %v4193 = vpop.f32.mrf.mxu0
        %v4194 = vadd.f32 %v4098, %v4193
        %4195 = vmatmul.bf16.gmra.mxu0 %v880
        %v4196 = vpop.f32.mrf.mxu0
        %v4197 = vadd.f32 %v4098, %v4196
        %v4198 = vpop.f32.mrf.mxu0
        %v4199 = vadd.f32 %v4098, %v4198
        %4200 = vmatmul.bf16.gmra.mxu0 %v883
        %v4201 = vpop.f32.mrf.mxu0
        %v4202 = vadd.f32 %v4098, %v4201
        %v4203 = vpop.f32.mrf.mxu0
        %v4204 = vadd.f32 %v4098, %v4203
        %4205 = vmatmul.bf16.gmra.mxu0 %v886
        %v4206 = vpop.f32.mrf.mxu0
        %v4207 = vadd.f32 %v4098, %v4206
        %v4208 = vpop.f32.mrf.mxu0
        %v4209 = vadd.f32 %v4098, %v4208
        %4210 = vmatmul.bf16.gmra.mxu0 %v889
        %v4211 = vpop.f32.mrf.mxu0
        %v4212 = vadd.f32 %v4098, %v4211
        %v4213 = vpop.f32.mrf.mxu0
        %v4214 = vadd.f32 %v4098, %v4213
        %4215 = vmatmul.bf16.gmra.mxu0 %v892
        %v4216 = vpop.f32.mrf.mxu0
        %v4217 = vadd.f32 %v4098, %v4216
        %v4218 = vpop.f32.mrf.mxu0
        %v4219 = vadd.f32 %v4098, %v4218
        %4220 = vmatmul.bf16.gmra.mxu0 %v895
        %v4221 = vpop.f32.mrf.mxu0
        %v4222 = vadd.f32 %v4098, %v4221
        %v4223 = vpop.f32.mrf.mxu0
        %v4224 = vadd.f32 %v4098, %v4223
        %4225 = vmatmul.bf16.gmra.mxu0 %v898
        %v4226 = vpop.f32.mrf.mxu0
        %v4227 = vadd.f32 %v4098, %v4226
        %v4228 = vpop.f32.mrf.mxu0
        %v4229 = vadd.f32 %v4098, %v4228
        %4230 = vdwg.mxu0
        %4231 = vmatpush.bf16.msra.mxu0 0
        %4232 = vmatpush.bf16.msra.mxu0 0
        %4233 = vmatpush.bf16.msra.mxu0 0
        %4234 = vmatpush.bf16.msra.mxu0 0
        %4235 = vmatpush.bf16.msra.mxu0 %v4133
        %4236 = vmatpush.bf16.msra.mxu0 %v4131
        %4237 = vmatpush.bf16.msra.mxu0 %v4129
        %4238 = vmatpush.bf16.msra.mxu0 %v4127
        %4239 = vmatmul.bf16.gmra.mxu0 %v853
        %v4240 = vpop.f32.mrf.mxu0
        %v4241 = vadd.f32 %v4099, %v4240
        %v4242 = vpop.f32.mrf.mxu0
        %v4243 = vadd.f32 %v4099, %v4242
        %4244 = vmatmul.bf16.gmra.mxu0 %v856
        %v4245 = vpop.f32.mrf.mxu0
        %v4246 = vadd.f32 %v4099, %v4245
        %v4247 = vpop.f32.mrf.mxu0
        %v4248 = vadd.f32 %v4099, %v4247
        %4249 = vmatmul.bf16.gmra.mxu0 %v859
        %v4250 = vpop.f32.mrf.mxu0
        %v4251 = vadd.f32 %v4099, %v4250
        %v4252 = vpop.f32.mrf.mxu0
        %v4253 = vadd.f32 %v4099, %v4252
        %4254 = vmatmul.bf16.gmra.mxu0 %v862
        %v4255 = vpop.f32.mrf.mxu0
        %v4256 = vadd.f32 %v4099, %v4255
        %v4257 = vpop.f32.mrf.mxu0
        %v4258 = vadd.f32 %v4099, %v4257
        %4259 = vmatmul.bf16.gmra.mxu0 %v865
        %v4260 = vpop.f32.mrf.mxu0
        %v4261 = vadd.f32 %v4099, %v4260
        %v4262 = vpop.f32.mrf.mxu0
        %v4263 = vadd.f32 %v4099, %v4262
        %4264 = vmatmul.bf16.gmra.mxu0 %v868
        %v4265 = vpop.f32.mrf.mxu0
        %v4266 = vadd.f32 %v4099, %v4265
        %v4267 = vpop.f32.mrf.mxu0
        %v4268 = vadd.f32 %v4099, %v4267
        %4269 = vmatmul.bf16.gmra.mxu0 %v871
        %v4270 = vpop.f32.mrf.mxu0
        %v4271 = vadd.f32 %v4099, %v4270
        %v4272 = vpop.f32.mrf.mxu0
        %v4273 = vadd.f32 %v4099, %v4272
        %4274 = vmatmul.bf16.gmra.mxu0 %v874
        %v4275 = vpop.f32.mrf.mxu0
        %v4276 = vadd.f32 %v4099, %v4275
        %v4277 = vpop.f32.mrf.mxu0
        %v4278 = vadd.f32 %v4099, %v4277
        %4279 = vmatmul.bf16.gmra.mxu0 %v877
        %v4280 = vpop.f32.mrf.mxu0
        %v4281 = vadd.f32 %v4099, %v4280
        %v4282 = vpop.f32.mrf.mxu0
        %v4283 = vadd.f32 %v4099, %v4282
        %4284 = vmatmul.bf16.gmra.mxu0 %v880
        %v4285 = vpop.f32.mrf.mxu0
        %v4286 = vadd.f32 %v4099, %v4285
        %v4287 = vpop.f32.mrf.mxu0
        %v4288 = vadd.f32 %v4099, %v4287
        %4289 = vmatmul.bf16.gmra.mxu0 %v883
        %v4290 = vpop.f32.mrf.mxu0
        %v4291 = vadd.f32 %v4099, %v4290
        %v4292 = vpop.f32.mrf.mxu0
        %v4293 = vadd.f32 %v4099, %v4292
        %4294 = vmatmul.bf16.gmra.mxu0 %v886
        %v4295 = vpop.f32.mrf.mxu0
        %v4296 = vadd.f32 %v4099, %v4295
        %v4297 = vpop.f32.mrf.mxu0
        %v4298 = vadd.f32 %v4099, %v4297
        %4299 = vmatmul.bf16.gmra.mxu0 %v889
        %v4300 = vpop.f32.mrf.mxu0
        %v4301 = vadd.f32 %v4099, %v4300
        %v4302 = vpop.f32.mrf.mxu0
        %v4303 = vadd.f32 %v4099, %v4302
        %4304 = vmatmul.bf16.gmra.mxu0 %v892
        %v4305 = vpop.f32.mrf.mxu0
        %v4306 = vadd.f32 %v4099, %v4305
        %v4307 = vpop.f32.mrf.mxu0
        %v4308 = vadd.f32 %v4099, %v4307
        %4309 = vmatmul.bf16.gmra.mxu0 %v895
        %v4310 = vpop.f32.mrf.mxu0
        %v4311 = vadd.f32 %v4099, %v4310
        %v4312 = vpop.f32.mrf.mxu0
        %v4313 = vadd.f32 %v4099, %v4312
        %4314 = vmatmul.bf16.gmra.mxu0 %v898
        %v4315 = vpop.f32.mrf.mxu0
        %v4316 = vadd.f32 %v4099, %v4315
        %v4317 = vpop.f32.mrf.mxu0
        %v4318 = vadd.f32 %v4099, %v4317
        %4319 = vdwg.mxu0
        %vm4320 = vcmp.gt.f32.partialorder %v4152, 0.0
        %vm4321 = vcmp.gt.f32.partialorder %v4154, 0.0
        %vm4322 = vcmp.gt.f32.partialorder %v4157, 0.0
        %vm4323 = vcmp.gt.f32.partialorder %v4159, 0.0
        %vm4324 = vcmp.gt.f32.partialorder %v4162, 0.0
        %vm4325 = vcmp.gt.f32.partialorder %v4164, 0.0
        %vm4326 = vcmp.gt.f32.partialorder %v4167, 0.0
        %vm4327 = vcmp.gt.f32.partialorder %v4169, 0.0
        %vm4328 = vcmp.gt.f32.partialorder %v4172, 0.0
        %vm4329 = vcmp.gt.f32.partialorder %v4174, 0.0
        %vm4330 = vcmp.gt.f32.partialorder %v4177, 0.0
        %vm4331 = vcmp.gt.f32.partialorder %v4179, 0.0
        %vm4332 = vcmp.gt.f32.partialorder %v4182, 0.0
        %vm4333 = vcmp.gt.f32.partialorder %v4184, 0.0
        %vm4334 = vcmp.gt.f32.partialorder %v4187, 0.0
        %vm4335 = vcmp.gt.f32.partialorder %v4189, 0.0
        %vm4336 = vcmp.gt.f32.partialorder %v4192, 0.0
        %vm4337 = vcmp.gt.f32.partialorder %v4194, 0.0
        %vm4338 = vcmp.gt.f32.partialorder %v4197, 0.0
        %vm4339 = vcmp.gt.f32.partialorder %v4199, 0.0
        %vm4340 = vcmp.gt.f32.partialorder %v4202, 0.0
        %vm4341 = vcmp.gt.f32.partialorder %v4204, 0.0
        %vm4342 = vcmp.gt.f32.partialorder %v4207, 0.0
        %vm4343 = vcmp.gt.f32.partialorder %v4209, 0.0
        %vm4344 = vcmp.gt.f32.partialorder %v4212, 0.0
        %vm4345 = vcmp.gt.f32.partialorder %v4214, 0.0
        %vm4346 = vcmp.gt.f32.partialorder %v4217, 0.0
        %vm4347 = vcmp.gt.f32.partialorder %v4219, 0.0
        %vm4348 = vcmp.gt.f32.partialorder %v4222, 0.0
        %vm4349 = vcmp.gt.f32.partialorder %v4224, 0.0
        %vm4350 = vcmp.gt.f32.partialorder %v4227, 0.0
        %vm4351 = vcmp.gt.f32.partialorder %v4229, 0.0
        %v4352 = vmin.f32 %v4152, 0.0
        %v4353 = vmin.f32 %v4154, 0.0
        %v4354 = vmin.f32 %v4157, 0.0
        %v4355 = vmin.f32 %v4159, 0.0
        %v4356 = vmin.f32 %v4162, 0.0
        %v4357 = vmin.f32 %v4164, 0.0
        %v4358 = vmin.f32 %v4167, 0.0
        %v4359 = vmin.f32 %v4169, 0.0
        %v4360 = vmin.f32 %v4172, 0.0
        %v4361 = vmin.f32 %v4174, 0.0
        %v4362 = vmin.f32 %v4177, 0.0
        %v4363 = vmin.f32 %v4179, 0.0
        %v4364 = vmin.f32 %v4182, 0.0
        %v4365 = vmin.f32 %v4184, 0.0
        %v4366 = vmin.f32 %v4187, 0.0
        %v4367 = vmin.f32 %v4189, 0.0
        %v4368 = vmin.f32 %v4192, 0.0
        %v4369 = vmin.f32 %v4194, 0.0
        %v4370 = vmin.f32 %v4197, 0.0
        %v4371 = vmin.f32 %v4199, 0.0
        %v4372 = vmin.f32 %v4202, 0.0
        %v4373 = vmin.f32 %v4204, 0.0
        %v4374 = vmin.f32 %v4207, 0.0
        %v4375 = vmin.f32 %v4209, 0.0
        %v4376 = vmin.f32 %v4212, 0.0
        %v4377 = vmin.f32 %v4214, 0.0
        %v4378 = vmin.f32 %v4217, 0.0
        %v4379 = vmin.f32 %v4219, 0.0
        %v4380 = vmin.f32 %v4222, 0.0
        %v4381 = vmin.f32 %v4224, 0.0
        %v4382 = vmin.f32 %v4227, 0.0
        %v4383 = vmin.f32 %v4229, 0.0
        %v4384 = vmul.f32 %v4352, 1.442695
        %v4385 = vpow.pop %v4384
        %v4386 = vmul.f32 %v4353, 1.442695
        %v4387 = vpow.pop %v4386
        %v4388 = vmul.f32 %v4354, 1.442695
        %v4389 = vpow.pop %v4388
        %v4390 = vmul.f32 %v4355, 1.442695
        %v4391 = vpow.pop %v4390
        %v4392 = vmul.f32 %v4356, 1.442695
        %v4393 = vpow.pop %v4392
        %v4394 = vmul.f32 %v4357, 1.442695
        %v4395 = vpow.pop %v4394
        %v4396 = vmul.f32 %v4358, 1.442695
        %v4397 = vpow.pop %v4396
        %v4398 = vmul.f32 %v4359, 1.442695
        %v4399 = vpow.pop %v4398
        %v4400 = vmul.f32 %v4360, 1.442695
        %v4401 = vpow.pop %v4400
        %v4402 = vmul.f32 %v4361, 1.442695
        %v4403 = vpow.pop %v4402
        %v4404 = vmul.f32 %v4362, 1.442695
        %v4405 = vpow.pop %v4404
        %v4406 = vmul.f32 %v4363, 1.442695
        %v4407 = vpow.pop %v4406
        %v4408 = vmul.f32 %v4364, 1.442695
        %v4409 = vpow.pop %v4408
        %v4410 = vmul.f32 %v4365, 1.442695
        %v4411 = vpow.pop %v4410
        %v4412 = vmul.f32 %v4366, 1.442695
        %v4413 = vpow.pop %v4412
        %v4414 = vmul.f32 %v4367, 1.442695
        %v4415 = vpow.pop %v4414
        %v4416 = vmul.f32 %v4368, 1.442695
        %v4417 = vpow.pop %v4416
        %v4418 = vmul.f32 %v4369, 1.442695
        %v4419 = vpow.pop %v4418
        %v4420 = vmul.f32 %v4370, 1.442695
        %v4421 = vpow.pop %v4420
        %v4422 = vmul.f32 %v4371, 1.442695
        %v4423 = vpow.pop %v4422
        %v4424 = vmul.f32 %v4372, 1.442695
        %v4425 = vpow.pop %v4424
        %v4426 = vmul.f32 %v4373, 1.442695
        %v4427 = vpow.pop %v4426
        %v4428 = vmul.f32 %v4374, 1.442695
        %v4429 = vpow.pop %v4428
        %v4430 = vmul.f32 %v4375, 1.442695
        %v4431 = vpow.pop %v4430
        %v4432 = vmul.f32 %v4376, 1.442695
        %v4433 = vpow.pop %v4432
        %v4434 = vmul.f32 %v4377, 1.442695
        %v4435 = vpow.pop %v4434
        %v4436 = vmul.f32 %v4378, 1.442695
        %v4437 = vpow.pop %v4436
        %v4438 = vmul.f32 %v4379, 1.442695
        %v4439 = vpow.pop %v4438
        %v4440 = vmul.f32 %v4380, 1.442695
        %v4441 = vpow.pop %v4440
        %v4442 = vmul.f32 %v4381, 1.442695
        %v4443 = vpow.pop %v4442
        %v4444 = vmul.f32 %v4382, 1.442695
        %v4445 = vpow.pop %v4444
        %v4446 = vmul.f32 %v4383, 1.442695
        %v4447 = vpow.pop %v4446
        %v4448 = vsub.f32 %v4385, 1.0
        %v4449 = vsub.f32 %v4387, 1.0
        %v4450 = vsub.f32 %v4389, 1.0
        %v4451 = vsub.f32 %v4391, 1.0
        %v4452 = vsub.f32 %v4393, 1.0
        %v4453 = vsub.f32 %v4395, 1.0
        %v4454 = vsub.f32 %v4397, 1.0
        %v4455 = vsub.f32 %v4399, 1.0
        %v4456 = vsub.f32 %v4401, 1.0
        %v4457 = vsub.f32 %v4403, 1.0
        %v4458 = vsub.f32 %v4405, 1.0
        %v4459 = vsub.f32 %v4407, 1.0
        %v4460 = vsub.f32 %v4409, 1.0
        %v4461 = vsub.f32 %v4411, 1.0
        %v4462 = vsub.f32 %v4413, 1.0
        %v4463 = vsub.f32 %v4415, 1.0
        %v4464 = vsub.f32 %v4417, 1.0
        %v4465 = vsub.f32 %v4419, 1.0
        %v4466 = vsub.f32 %v4421, 1.0
        %v4467 = vsub.f32 %v4423, 1.0
        %v4468 = vsub.f32 %v4425, 1.0
        %v4469 = vsub.f32 %v4427, 1.0
        %v4470 = vsub.f32 %v4429, 1.0
        %v4471 = vsub.f32 %v4431, 1.0
        %v4472 = vsub.f32 %v4433, 1.0
        %v4473 = vsub.f32 %v4435, 1.0
        %v4474 = vsub.f32 %v4437, 1.0
        %v4475 = vsub.f32 %v4439, 1.0
        %v4476 = vsub.f32 %v4441, 1.0
        %v4477 = vsub.f32 %v4443, 1.0
        %v4478 = vsub.f32 %v4445, 1.0
        %v4479 = vsub.f32 %v4447, 1.0
        %v4480 = vsel %vm4320, %v4152, %v4448
        %v4481 = vsel %vm4321, %v4154, %v4449
        %v4482 = vsel %vm4322, %v4157, %v4450
        %v4483 = vsel %vm4323, %v4159, %v4451
        %v4484 = vsel %vm4324, %v4162, %v4452
        %v4485 = vsel %vm4325, %v4164, %v4453
        %v4486 = vsel %vm4326, %v4167, %v4454
        %v4487 = vsel %vm4327, %v4169, %v4455
        %v4488 = vsel %vm4328, %v4172, %v4456
        %v4489 = vsel %vm4329, %v4174, %v4457
        %v4490 = vsel %vm4330, %v4177, %v4458
        %v4491 = vsel %vm4331, %v4179, %v4459
        %v4492 = vsel %vm4332, %v4182, %v4460
        %v4493 = vsel %vm4333, %v4184, %v4461
        %v4494 = vsel %vm4334, %v4187, %v4462
        %v4495 = vsel %vm4335, %v4189, %v4463
        %v4496 = vsel %vm4336, %v4192, %v4464
        %v4497 = vsel %vm4337, %v4194, %v4465
        %v4498 = vsel %vm4338, %v4197, %v4466
        %v4499 = vsel %vm4339, %v4199, %v4467
        %v4500 = vsel %vm4340, %v4202, %v4468
        %v4501 = vsel %vm4341, %v4204, %v4469
        %v4502 = vsel %vm4342, %v4207, %v4470
        %v4503 = vsel %vm4343, %v4209, %v4471
        %v4504 = vsel %vm4344, %v4212, %v4472
        %v4505 = vsel %vm4345, %v4214, %v4473
        %v4506 = vsel %vm4346, %v4217, %v4474
        %v4507 = vsel %vm4347, %v4219, %v4475
        %v4508 = vsel %vm4348, %v4222, %v4476
        %v4509 = vsel %vm4349, %v4224, %v4477
        %v4510 = vsel %vm4350, %v4227, %v4478
        %v4511 = vsel %vm4351, %v4229, %v4479
        %v4512 = vpack.c.bf16 %v4481, %v4480
        %v4513 = vpack.c.bf16 %v4483, %v4482
        %v4514 = vpack.c.bf16 %v4485, %v4484
        %v4515 = vpack.c.bf16 %v4487, %v4486
        %v4516 = vpack.c.bf16 %v4489, %v4488
        %v4517 = vpack.c.bf16 %v4491, %v4490
        %v4518 = vpack.c.bf16 %v4493, %v4492
        %v4519 = vpack.c.bf16 %v4495, %v4494
        %v4520 = vpack.c.bf16 %v4497, %v4496
        %v4521 = vpack.c.bf16 %v4499, %v4498
        %v4522 = vpack.c.bf16 %v4501, %v4500
        %v4523 = vpack.c.bf16 %v4503, %v4502
        %v4524 = vpack.c.bf16 %v4505, %v4504
        %v4525 = vpack.c.bf16 %v4507, %v4506
        %v4526 = vpack.c.bf16 %v4509, %v4508
        %v4527 = vpack.c.bf16 %v4511, %v4510
        %v4528 = vld [vmem:[#allocation11] sm:$0xf]
        %v4529 = vld [vmem:[#allocation11 + $0x4] sm:$0xf]
        %v4530 = vld [vmem:[#allocation11 + $0x8] sm:$0xf]
        %v4531 = vld [vmem:[#allocation11 + $0xc] sm:$0xf]
        %v4532 = vld [vmem:[#allocation11 + $0x10] sm:$0xf]
        %v4533 = vld [vmem:[#allocation11 + $0x14] sm:$0xf]
        %v4534 = vld [vmem:[#allocation11 + $0x18] sm:$0xf]
        %v4535 = vld [vmem:[#allocation11 + $0x1c] sm:$0xf]
        %v4536 = vld [vmem:[#allocation11 + $0x20] sm:$0xf]
        %v4537 = vld [vmem:[#allocation11 + $0x24] sm:$0xf]
        %v4538 = vld [vmem:[#allocation11 + $0x28] sm:$0xf]
        %v4539 = vld [vmem:[#allocation11 + $0x2c] sm:$0xf]
        %v4540 = vld [vmem:[#allocation11 + $0x30] sm:$0xf]
        %v4541 = vld [vmem:[#allocation11 + $0x34] sm:$0xf]
        %v4542 = vld [vmem:[#allocation11 + $0x38] sm:$0xf]
        %v4543 = vld [vmem:[#allocation11 + $0x3c] sm:$0xf]
        %v4544 = vld [vmem:[%s14] sm:$0x1]
        %v4546 = vperm.slane %v4544, 0
        %v4564 = vunpack.c.l.b16 %v4528
        %v4565 = vunpack.c.l.b16 %v4529
        %v4566 = vunpack.c.l.b16 %v4530
        %v4567 = vunpack.c.l.b16 %v4531
        %v4568 = vunpack.c.l.b16 %v4532
        %v4569 = vunpack.c.l.b16 %v4533
        %v4570 = vunpack.c.l.b16 %v4534
        %v4571 = vunpack.c.l.b16 %v4535
        %v4572 = vunpack.c.l.b16 %v4536
        %v4573 = vunpack.c.l.b16 %v4537
        %v4574 = vunpack.c.l.b16 %v4538
        %v4575 = vunpack.c.l.b16 %v4539
        %v4576 = vunpack.c.l.b16 %v4540
        %v4577 = vunpack.c.l.b16 %v4541
        %v4578 = vunpack.c.l.b16 %v4542
        %v4579 = vunpack.c.l.b16 %v4543
        %v4580 = vpack.c.b16 %v4565, %v4564
        %v4581 = vpack.c.b16 %v4567, %v4566
        %v4582 = vpack.c.b16 %v4569, %v4568
        %v4583 = vpack.c.b16 %v4571, %v4570
        %v4584 = vpack.c.b16 %v4573, %v4572
        %v4585 = vpack.c.b16 %v4575, %v4574
        %v4586 = vpack.c.b16 %v4577, %v4576
        %v4587 = vpack.c.b16 %v4579, %v4578
        %4596 = vmatpush.bf16.msra.mxu0 %v4587
        %4597 = vmatpush.bf16.msra.mxu0 %v4586
        %4598 = vmatpush.bf16.msra.mxu0 %v4585
        %4599 = vmatpush.bf16.msra.mxu0 %v4584
        %4600 = vmatpush.bf16.msra.mxu0 %v4583
        %4601 = vmatpush.bf16.msra.mxu0 %v4582
        %4602 = vmatpush.bf16.msra.mxu0 %v4581
        %4603 = vmatpush.bf16.msra.mxu0 %v4580
        %4604 = vmatmul.bf16.gmra.mxu0 %v4512
        %v4605 = vpop.f32.mrf.mxu0
        %v4606 = vadd.f32 %v4546, %v4605
        %v4607 = vpop.f32.mrf.mxu0
        %v4608 = vadd.f32 %v4546, %v4607
        %4609 = vmatmul.bf16.gmra.mxu0 %v4513
        %v4610 = vpop.f32.mrf.mxu0
        %v4611 = vadd.f32 %v4546, %v4610
        %v4612 = vpop.f32.mrf.mxu0
        %v4613 = vadd.f32 %v4546, %v4612
        %4614 = vmatmul.bf16.gmra.mxu0 %v4514
        %v4615 = vpop.f32.mrf.mxu0
        %v4616 = vadd.f32 %v4546, %v4615
        %v4617 = vpop.f32.mrf.mxu0
        %v4618 = vadd.f32 %v4546, %v4617
        %4619 = vmatmul.bf16.gmra.mxu0 %v4515
        %v4620 = vpop.f32.mrf.mxu0
        %v4621 = vadd.f32 %v4546, %v4620
        %v4622 = vpop.f32.mrf.mxu0
        %v4623 = vadd.f32 %v4546, %v4622
        %4624 = vmatmul.bf16.gmra.mxu0 %v4516
        %v4625 = vpop.f32.mrf.mxu0
        %v4626 = vadd.f32 %v4546, %v4625
        %v4627 = vpop.f32.mrf.mxu0
        %v4628 = vadd.f32 %v4546, %v4627
        %4629 = vmatmul.bf16.gmra.mxu0 %v4517
        %v4630 = vpop.f32.mrf.mxu0
        %v4631 = vadd.f32 %v4546, %v4630
        %v4632 = vpop.f32.mrf.mxu0
        %v4633 = vadd.f32 %v4546, %v4632
        %4634 = vmatmul.bf16.gmra.mxu0 %v4518
        %v4635 = vpop.f32.mrf.mxu0
        %v4636 = vadd.f32 %v4546, %v4635
        %v4637 = vpop.f32.mrf.mxu0
        %v4638 = vadd.f32 %v4546, %v4637
        %4639 = vmatmul.bf16.gmra.mxu0 %v4519
        %v4640 = vpop.f32.mrf.mxu0
        %v4641 = vadd.f32 %v4546, %v4640
        %v4642 = vpop.f32.mrf.mxu0
        %v4643 = vadd.f32 %v4546, %v4642
        %4644 = vmatmul.bf16.gmra.mxu0 %v4520
        %v4645 = vpop.f32.mrf.mxu0
        %v4646 = vadd.f32 %v4546, %v4645
        %v4647 = vpop.f32.mrf.mxu0
        %v4648 = vadd.f32 %v4546, %v4647
        %4649 = vmatmul.bf16.gmra.mxu0 %v4521
        %v4650 = vpop.f32.mrf.mxu0
        %v4651 = vadd.f32 %v4546, %v4650
        %v4652 = vpop.f32.mrf.mxu0
        %v4653 = vadd.f32 %v4546, %v4652
        %4654 = vmatmul.bf16.gmra.mxu0 %v4522
        %v4655 = vpop.f32.mrf.mxu0
        %v4656 = vadd.f32 %v4546, %v4655
        %v4657 = vpop.f32.mrf.mxu0
        %v4658 = vadd.f32 %v4546, %v4657
        %4659 = vmatmul.bf16.gmra.mxu0 %v4523
        %v4660 = vpop.f32.mrf.mxu0
        %v4661 = vadd.f32 %v4546, %v4660
        %v4662 = vpop.f32.mrf.mxu0
        %v4663 = vadd.f32 %v4546, %v4662
        %4664 = vmatmul.bf16.gmra.mxu0 %v4524
        %v4665 = vpop.f32.mrf.mxu0
        %v4666 = vadd.f32 %v4546, %v4665
        %v4667 = vpop.f32.mrf.mxu0
        %v4668 = vadd.f32 %v4546, %v4667
        %4669 = vmatmul.bf16.gmra.mxu0 %v4525
        %v4670 = vpop.f32.mrf.mxu0
        %v4671 = vadd.f32 %v4546, %v4670
        %v4672 = vpop.f32.mrf.mxu0
        %v4673 = vadd.f32 %v4546, %v4672
        %4674 = vmatmul.bf16.gmra.mxu0 %v4526
        %v4675 = vpop.f32.mrf.mxu0
        %v4676 = vadd.f32 %v4546, %v4675
        %v4677 = vpop.f32.mrf.mxu0
        %v4678 = vadd.f32 %v4546, %v4677
        %4679 = vmatmul.bf16.gmra.mxu0 %v4527
        %v4680 = vpop.f32.mrf.mxu0
        %v4681 = vadd.f32 %v4546, %v4680
        %v4682 = vpop.f32.mrf.mxu0
        %v4683 = vadd.f32 %v4546, %v4682
        %4684 = vdwg.mxu0
        %v4685 = vpack.c.bf16 %v4608, %v4606
        %v4686 = vpack.c.bf16 %v4613, %v4611
        %v4687 = vpack.c.bf16 %v4618, %v4616
        %v4688 = vpack.c.bf16 %v4623, %v4621
        %v4689 = vpack.c.bf16 %v4628, %v4626
        %v4690 = vpack.c.bf16 %v4633, %v4631
        %v4691 = vpack.c.bf16 %v4638, %v4636
        %v4692 = vpack.c.bf16 %v4643, %v4641
        %v4693 = vpack.c.bf16 %v4648, %v4646
        %v4694 = vpack.c.bf16 %v4653, %v4651
        %v4695 = vpack.c.bf16 %v4658, %v4656
        %v4696 = vpack.c.bf16 %v4663, %v4661
        %v4697 = vpack.c.bf16 %v4668, %v4666
        %v4698 = vpack.c.bf16 %v4673, %v4671
        %v4699 = vpack.c.bf16 %v4678, %v4676
        %v4700 = vpack.c.bf16 %v4683, %v4681
        %v4701 = vld [vmem:[%s15] sm:$0xff]
        %v4702 = vld [vmem:[%s15 + $0x8] sm:$0xff]
        %v4703 = vld [vmem:[%s15 + $0x10] sm:$0xff]
        %v4704 = vld [vmem:[%s15 + $0x18] sm:$0xff]
        %v4705 = vld [vmem:[%s15 + $0x20] sm:$0xff]
        %v4706 = vld [vmem:[%s15 + $0x28] sm:$0xff]
        %v4707 = vld [vmem:[%s15 + $0x30] sm:$0xff]
        %v4708 = vld [vmem:[%s15 + $0x38] sm:$0xff]
        %v4709 = vld [vmem:[%s15 + $0x40] sm:$0xff]
        %v4710 = vld [vmem:[%s15 + $0x48] sm:$0xff]
        %v4711 = vld [vmem:[%s15 + $0x50] sm:$0xff]
        %v4712 = vld [vmem:[%s15 + $0x58] sm:$0xff]
        %v4713 = vld [vmem:[%s15 + $0x60] sm:$0xff]
        %v4714 = vld [vmem:[%s15 + $0x68] sm:$0xff]
        %v4715 = vld [vmem:[%s15 + $0x70] sm:$0xff]
        %v4716 = vld [vmem:[%s15 + $0x78] sm:$0xff]
        %v4717 = vld [vmem:[%s16] sm:$0x3]
        %v4719 = vperm.slane %v4717, 0
        %v4720 = vperm.slane %v4717, 1
        %v4739 = vunpack.c.l.b16 %v4701
        %v4740 = vunpack.c.h.b16 %v4701
        %v4741 = vunpack.c.l.b16 %v4702
        %v4742 = vunpack.c.h.b16 %v4702
        %v4743 = vunpack.c.l.b16 %v4703
        %v4744 = vunpack.c.h.b16 %v4703
        %v4745 = vunpack.c.l.b16 %v4704
        %v4746 = vunpack.c.h.b16 %v4704
        %v4747 = vunpack.c.l.b16 %v4705
        %v4748 = vunpack.c.h.b16 %v4705
        %v4749 = vunpack.c.l.b16 %v4706
        %v4750 = vunpack.c.h.b16 %v4706
        %v4751 = vunpack.c.l.b16 %v4707
        %v4752 = vunpack.c.h.b16 %v4707
        %v4753 = vunpack.c.l.b16 %v4708
        %v4754 = vunpack.c.h.b16 %v4708
        %v4755 = vunpack.c.l.b16 %v4709
        %v4756 = vunpack.c.h.b16 %v4709
        %v4757 = vunpack.c.l.b16 %v4710
        %v4758 = vunpack.c.h.b16 %v4710
        %v4759 = vunpack.c.l.b16 %v4711
        %v4760 = vunpack.c.h.b16 %v4711
        %v4761 = vunpack.c.l.b16 %v4712
        %v4762 = vunpack.c.h.b16 %v4712
        %v4763 = vunpack.c.l.b16 %v4713
        %v4764 = vunpack.c.h.b16 %v4713
        %v4765 = vunpack.c.l.b16 %v4714
        %v4766 = vunpack.c.h.b16 %v4714
        %v4767 = vunpack.c.l.b16 %v4715
        %v4768 = vunpack.c.h.b16 %v4715
        %v4769 = vunpack.c.l.b16 %v4716
        %v4770 = vunpack.c.h.b16 %v4716
        %v4771 = vpack.c.b16 %v4741, %v4739
        %v4772 = vpack.c.b16 %v4742, %v4740
        %v4773 = vpack.c.b16 %v4745, %v4743
        %v4774 = vpack.c.b16 %v4746, %v4744
        %v4775 = vpack.c.b16 %v4749, %v4747
        %v4776 = vpack.c.b16 %v4750, %v4748
        %v4777 = vpack.c.b16 %v4753, %v4751
        %v4778 = vpack.c.b16 %v4754, %v4752
        %v4779 = vpack.c.b16 %v4757, %v4755
        %v4780 = vpack.c.b16 %v4758, %v4756
        %v4781 = vpack.c.b16 %v4761, %v4759
        %v4782 = vpack.c.b16 %v4762, %v4760
        %v4783 = vpack.c.b16 %v4765, %v4763
        %v4784 = vpack.c.b16 %v4766, %v4764
        %v4785 = vpack.c.b16 %v4769, %v4767
        %v4786 = vpack.c.b16 %v4770, %v4768
        %4803 = vmatpush.bf16.msra.mxu0 %v4785
        %4804 = vmatpush.bf16.msra.mxu0 %v4783
        %4805 = vmatpush.bf16.msra.mxu0 %v4781
        %4806 = vmatpush.bf16.msra.mxu0 %v4779
        %4807 = vmatpush.bf16.msra.mxu0 %v4777
        %4808 = vmatpush.bf16.msra.mxu0 %v4775
        %4809 = vmatpush.bf16.msra.mxu0 %v4773
        %4810 = vmatpush.bf16.msra.mxu0 %v4771
        %4811 = vmatmul.bf16.gmra.mxu0 %v4685
        %v4812 = vpop.f32.mrf.mxu0
        %v4813 = vadd.f32 %v4719, %v4812
        %v4814 = vpop.f32.mrf.mxu0
        %v4815 = vadd.f32 %v4719, %v4814
        %4816 = vmatmul.bf16.gmra.mxu0 %v4686
        %v4817 = vpop.f32.mrf.mxu0
        %v4818 = vadd.f32 %v4719, %v4817
        %v4819 = vpop.f32.mrf.mxu0
        %v4820 = vadd.f32 %v4719, %v4819
        %4821 = vmatmul.bf16.gmra.mxu0 %v4687
        %v4822 = vpop.f32.mrf.mxu0
        %v4823 = vadd.f32 %v4719, %v4822
        %v4824 = vpop.f32.mrf.mxu0
        %v4825 = vadd.f32 %v4719, %v4824
        %4826 = vmatmul.bf16.gmra.mxu0 %v4688
        %v4827 = vpop.f32.mrf.mxu0
        %v4828 = vadd.f32 %v4719, %v4827
        %v4829 = vpop.f32.mrf.mxu0
        %v4830 = vadd.f32 %v4719, %v4829
        %4831 = vmatmul.bf16.gmra.mxu0 %v4689
        %v4832 = vpop.f32.mrf.mxu0
        %v4833 = vadd.f32 %v4719, %v4832
        %v4834 = vpop.f32.mrf.mxu0
        %v4835 = vadd.f32 %v4719, %v4834
        %4836 = vmatmul.bf16.gmra.mxu0 %v4690
        %v4837 = vpop.f32.mrf.mxu0
        %v4838 = vadd.f32 %v4719, %v4837
        %v4839 = vpop.f32.mrf.mxu0
        %v4840 = vadd.f32 %v4719, %v4839
        %4841 = vmatmul.bf16.gmra.mxu0 %v4691
        %v4842 = vpop.f32.mrf.mxu0
        %v4843 = vadd.f32 %v4719, %v4842
        %v4844 = vpop.f32.mrf.mxu0
        %v4845 = vadd.f32 %v4719, %v4844
        %4846 = vmatmul.bf16.gmra.mxu0 %v4692
        %v4847 = vpop.f32.mrf.mxu0
        %v4848 = vadd.f32 %v4719, %v4847
        %v4849 = vpop.f32.mrf.mxu0
        %v4850 = vadd.f32 %v4719, %v4849
        %4851 = vmatmul.bf16.gmra.mxu0 %v4693
        %v4852 = vpop.f32.mrf.mxu0
        %v4853 = vadd.f32 %v4719, %v4852
        %v4854 = vpop.f32.mrf.mxu0
        %v4855 = vadd.f32 %v4719, %v4854
        %4856 = vmatmul.bf16.gmra.mxu0 %v4694
        %v4857 = vpop.f32.mrf.mxu0
        %v4858 = vadd.f32 %v4719, %v4857
        %v4859 = vpop.f32.mrf.mxu0
        %v4860 = vadd.f32 %v4719, %v4859
        %4861 = vmatmul.bf16.gmra.mxu0 %v4695
        %v4862 = vpop.f32.mrf.mxu0
        %v4863 = vadd.f32 %v4719, %v4862
        %v4864 = vpop.f32.mrf.mxu0
        %v4865 = vadd.f32 %v4719, %v4864
        %4866 = vmatmul.bf16.gmra.mxu0 %v4696
        %v4867 = vpop.f32.mrf.mxu0
        %v4868 = vadd.f32 %v4719, %v4867
        %v4869 = vpop.f32.mrf.mxu0
        %v4870 = vadd.f32 %v4719, %v4869
        %4871 = vmatmul.bf16.gmra.mxu0 %v4697
        %v4872 = vpop.f32.mrf.mxu0
        %v4873 = vadd.f32 %v4719, %v4872
        %v4874 = vpop.f32.mrf.mxu0
        %v4875 = vadd.f32 %v4719, %v4874
        %4876 = vmatmul.bf16.gmra.mxu0 %v4698
        %v4877 = vpop.f32.mrf.mxu0
        %v4878 = vadd.f32 %v4719, %v4877
        %v4879 = vpop.f32.mrf.mxu0
        %v4880 = vadd.f32 %v4719, %v4879
        %4881 = vmatmul.bf16.gmra.mxu0 %v4699
        %v4882 = vpop.f32.mrf.mxu0
        %v4883 = vadd.f32 %v4719, %v4882
        %v4884 = vpop.f32.mrf.mxu0
        %v4885 = vadd.f32 %v4719, %v4884
        %4886 = vmatmul.bf16.gmra.mxu0 %v4700
        %v4887 = vpop.f32.mrf.mxu0
        %v4888 = vadd.f32 %v4719, %v4887
        %v4889 = vpop.f32.mrf.mxu0
        %v4890 = vadd.f32 %v4719, %v4889
        %4891 = vdwg.mxu0
        %4892 = vmatpush.bf16.msra.mxu0 %v4786
        %4893 = vmatpush.bf16.msra.mxu0 %v4784
        %4894 = vmatpush.bf16.msra.mxu0 %v4782
        %4895 = vmatpush.bf16.msra.mxu0 %v4780
        %4896 = vmatpush.bf16.msra.mxu0 %v4778
        %4897 = vmatpush.bf16.msra.mxu0 %v4776
        %4898 = vmatpush.bf16.msra.mxu0 %v4774
        %4899 = vmatpush.bf16.msra.mxu0 %v4772
        %4900 = vmatmul.bf16.gmra.mxu0 %v4685
        %v4901 = vpop.f32.mrf.mxu0
        %v4902 = vadd.f32 %v4720, %v4901
        %v4903 = vpop.f32.mrf.mxu0
        %v4904 = vadd.f32 %v4720, %v4903
        %4905 = vmatmul.bf16.gmra.mxu0 %v4686
        %v4906 = vpop.f32.mrf.mxu0
        %v4907 = vadd.f32 %v4720, %v4906
        %v4908 = vpop.f32.mrf.mxu0
        %v4909 = vadd.f32 %v4720, %v4908
        %4910 = vmatmul.bf16.gmra.mxu0 %v4687
        %v4911 = vpop.f32.mrf.mxu0
        %v4912 = vadd.f32 %v4720, %v4911
        %v4913 = vpop.f32.mrf.mxu0
        %v4914 = vadd.f32 %v4720, %v4913
        %4915 = vmatmul.bf16.gmra.mxu0 %v4688
        %v4916 = vpop.f32.mrf.mxu0
        %v4917 = vadd.f32 %v4720, %v4916
        %v4918 = vpop.f32.mrf.mxu0
        %v4919 = vadd.f32 %v4720, %v4918
        %4920 = vmatmul.bf16.gmra.mxu0 %v4689
        %v4921 = vpop.f32.mrf.mxu0
        %v4922 = vadd.f32 %v4720, %v4921
        %v4923 = vpop.f32.mrf.mxu0
        %v4924 = vadd.f32 %v4720, %v4923
        %4925 = vmatmul.bf16.gmra.mxu0 %v4690
        %v4926 = vpop.f32.mrf.mxu0
        %v4927 = vadd.f32 %v4720, %v4926
        %v4928 = vpop.f32.mrf.mxu0
        %v4929 = vadd.f32 %v4720, %v4928
        %4930 = vmatmul.bf16.gmra.mxu0 %v4691
        %v4931 = vpop.f32.mrf.mxu0
        %v4932 = vadd.f32 %v4720, %v4931
        %v4933 = vpop.f32.mrf.mxu0
        %v4934 = vadd.f32 %v4720, %v4933
        %4935 = vmatmul.bf16.gmra.mxu0 %v4692
        %v4936 = vpop.f32.mrf.mxu0
        %v4937 = vadd.f32 %v4720, %v4936
        %v4938 = vpop.f32.mrf.mxu0
        %v4939 = vadd.f32 %v4720, %v4938
        %4940 = vmatmul.bf16.gmra.mxu0 %v4693
        %v4941 = vpop.f32.mrf.mxu0
        %v4942 = vadd.f32 %v4720, %v4941
        %v4943 = vpop.f32.mrf.mxu0
        %v4944 = vadd.f32 %v4720, %v4943
        %4945 = vmatmul.bf16.gmra.mxu0 %v4694
        %v4946 = vpop.f32.mrf.mxu0
        %v4947 = vadd.f32 %v4720, %v4946
        %v4948 = vpop.f32.mrf.mxu0
        %v4949 = vadd.f32 %v4720, %v4948
        %4950 = vmatmul.bf16.gmra.mxu0 %v4695
        %v4951 = vpop.f32.mrf.mxu0
        %v4952 = vadd.f32 %v4720, %v4951
        %v4953 = vpop.f32.mrf.mxu0
        %v4954 = vadd.f32 %v4720, %v4953
        %4955 = vmatmul.bf16.gmra.mxu0 %v4696
        %v4956 = vpop.f32.mrf.mxu0
        %v4957 = vadd.f32 %v4720, %v4956
        %v4958 = vpop.f32.mrf.mxu0
        %v4959 = vadd.f32 %v4720, %v4958
        %4960 = vmatmul.bf16.gmra.mxu0 %v4697
        %v4961 = vpop.f32.mrf.mxu0
        %v4962 = vadd.f32 %v4720, %v4961
        %v4963 = vpop.f32.mrf.mxu0
        %v4964 = vadd.f32 %v4720, %v4963
        %4965 = vmatmul.bf16.gmra.mxu0 %v4698
        %v4966 = vpop.f32.mrf.mxu0
        %v4967 = vadd.f32 %v4720, %v4966
        %v4968 = vpop.f32.mrf.mxu0
        %v4969 = vadd.f32 %v4720, %v4968
        %4970 = vmatmul.bf16.gmra.mxu0 %v4699
        %v4971 = vpop.f32.mrf.mxu0
        %v4972 = vadd.f32 %v4720, %v4971
        %v4973 = vpop.f32.mrf.mxu0
        %v4974 = vadd.f32 %v4720, %v4973
        %4975 = vmatmul.bf16.gmra.mxu0 %v4700
        %v4976 = vpop.f32.mrf.mxu0
        %v4977 = vadd.f32 %v4720, %v4976
        %v4978 = vpop.f32.mrf.mxu0
        %v4979 = vadd.f32 %v4720, %v4978
        %4980 = vdwg.mxu0
        %v4981 = vxor.u32 %v4813, 2147483648
        %v4982 = vxor.u32 %v4815, 2147483648
        %v4983 = vxor.u32 %v4818, 2147483648
        %v4984 = vxor.u32 %v4820, 2147483648
        %v4985 = vxor.u32 %v4823, 2147483648
        %v4986 = vxor.u32 %v4825, 2147483648
        %v4987 = vxor.u32 %v4828, 2147483648
        %v4988 = vxor.u32 %v4830, 2147483648
        %v4989 = vxor.u32 %v4833, 2147483648
        %v4990 = vxor.u32 %v4835, 2147483648
        %v4991 = vxor.u32 %v4838, 2147483648
        %v4992 = vxor.u32 %v4840, 2147483648
        %v4993 = vxor.u32 %v4843, 2147483648
        %v4994 = vxor.u32 %v4845, 2147483648
        %v4995 = vxor.u32 %v4848, 2147483648
        %v4996 = vxor.u32 %v4850, 2147483648
        %v4997 = vxor.u32 %v4853, 2147483648
        %v4998 = vxor.u32 %v4855, 2147483648
        %v4999 = vxor.u32 %v4858, 2147483648
        %v5000 = vxor.u32 %v4860, 2147483648
        %v5001 = vxor.u32 %v4863, 2147483648
        %v5002 = vxor.u32 %v4865, 2147483648
        %v5003 = vxor.u32 %v4868, 2147483648
        %v5004 = vxor.u32 %v4870, 2147483648
        %v5005 = vxor.u32 %v4873, 2147483648
        %v5006 = vxor.u32 %v4875, 2147483648
        %v5007 = vxor.u32 %v4878, 2147483648
        %v5008 = vxor.u32 %v4880, 2147483648
        %v5009 = vxor.u32 %v4883, 2147483648
        %v5010 = vxor.u32 %v4885, 2147483648
        %v5011 = vxor.u32 %v4888, 2147483648
        %v5012 = vxor.u32 %v4890, 2147483648
        %v5013 = vmul.f32 %v4981, 1.442695
        %v5014 = vpow.pop %v5013
        %v5015 = vmul.f32 %v4982, 1.442695
        %v5016 = vpow.pop %v5015
        %v5017 = vmul.f32 %v4983, 1.442695
        %v5018 = vpow.pop %v5017
        %v5019 = vmul.f32 %v4984, 1.442695
        %v5020 = vpow.pop %v5019
        %v5021 = vmul.f32 %v4985, 1.442695
        %v5022 = vpow.pop %v5021
        %v5023 = vmul.f32 %v4986, 1.442695
        %v5024 = vpow.pop %v5023
        %v5025 = vmul.f32 %v4987, 1.442695
        %v5026 = vpow.pop %v5025
        %v5027 = vmul.f32 %v4988, 1.442695
        %v5028 = vpow.pop %v5027
        %v5029 = vmul.f32 %v4989, 1.442695
        %v5030 = vpow.pop %v5029
        %v5031 = vmul.f32 %v4990, 1.442695
        %v5032 = vpow.pop %v5031
        %v5033 = vmul.f32 %v4991, 1.442695
        %v5034 = vpow.pop %v5033
        %v5035 = vmul.f32 %v4992, 1.442695
        %v5036 = vpow.pop %v5035
        %v5037 = vmul.f32 %v4993, 1.442695
        %v5038 = vpow.pop %v5037
        %v5039 = vmul.f32 %v4994, 1.442695
        %v5040 = vpow.pop %v5039
        %v5041 = vmul.f32 %v4995, 1.442695
        %v5042 = vpow.pop %v5041
        %v5043 = vmul.f32 %v4996, 1.442695
        %v5044 = vpow.pop %v5043
        %v5045 = vmul.f32 %v4997, 1.442695
        %v5046 = vpow.pop %v5045
        %v5047 = vmul.f32 %v4998, 1.442695
        %v5048 = vpow.pop %v5047
        %v5049 = vmul.f32 %v4999, 1.442695
        %v5050 = vpow.pop %v5049
        %v5051 = vmul.f32 %v5000, 1.442695
        %v5052 = vpow.pop %v5051
        %v5053 = vmul.f32 %v5001, 1.442695
        %v5054 = vpow.pop %v5053
        %v5055 = vmul.f32 %v5002, 1.442695
        %v5056 = vpow.pop %v5055
        %v5057 = vmul.f32 %v5003, 1.442695
        %v5058 = vpow.pop %v5057
        %v5059 = vmul.f32 %v5004, 1.442695
        %v5060 = vpow.pop %v5059
        %v5061 = vmul.f32 %v5005, 1.442695
        %v5062 = vpow.pop %v5061
        %v5063 = vmul.f32 %v5006, 1.442695
        %v5064 = vpow.pop %v5063
        %v5065 = vmul.f32 %v5007, 1.442695
        %v5066 = vpow.pop %v5065
        %v5067 = vmul.f32 %v5008, 1.442695
        %v5068 = vpow.pop %v5067
        %v5069 = vmul.f32 %v5009, 1.442695
        %v5070 = vpow.pop %v5069
        %v5071 = vmul.f32 %v5010, 1.442695
        %v5072 = vpow.pop %v5071
        %v5073 = vmul.f32 %v5011, 1.442695
        %v5074 = vpow.pop %v5073
        %v5075 = vmul.f32 %v5012, 1.442695
        %v5076 = vpow.pop %v5075
        %v5077 = vadd.f32 %v5014, 1.0
        %v5078 = vadd.f32 %v5016, 1.0
        %v5079 = vadd.f32 %v5018, 1.0
        %v5080 = vadd.f32 %v5020, 1.0
        %v5081 = vadd.f32 %v5022, 1.0
        %v5082 = vadd.f32 %v5024, 1.0
        %v5083 = vadd.f32 %v5026, 1.0
        %v5084 = vadd.f32 %v5028, 1.0
        %v5085 = vadd.f32 %v5030, 1.0
        %v5086 = vadd.f32 %v5032, 1.0
        %v5087 = vadd.f32 %v5034, 1.0
        %v5088 = vadd.f32 %v5036, 1.0
        %v5089 = vadd.f32 %v5038, 1.0
        %v5090 = vadd.f32 %v5040, 1.0
        %v5091 = vadd.f32 %v5042, 1.0
        %v5092 = vadd.f32 %v5044, 1.0
        %v5093 = vadd.f32 %v5046, 1.0
        %v5094 = vadd.f32 %v5048, 1.0
        %v5095 = vadd.f32 %v5050, 1.0
        %v5096 = vadd.f32 %v5052, 1.0
        %v5097 = vadd.f32 %v5054, 1.0
        %v5098 = vadd.f32 %v5056, 1.0
        %v5099 = vadd.f32 %v5058, 1.0
        %v5100 = vadd.f32 %v5060, 1.0
        %v5101 = vadd.f32 %v5062, 1.0
        %v5102 = vadd.f32 %v5064, 1.0
        %v5103 = vadd.f32 %v5066, 1.0
        %v5104 = vadd.f32 %v5068, 1.0
        %v5105 = vadd.f32 %v5070, 1.0
        %v5106 = vadd.f32 %v5072, 1.0
        %v5107 = vadd.f32 %v5074, 1.0
        %v5108 = vadd.f32 %v5076, 1.0
        %v5109 = vrcp.pop %v5077
        %v5110 = vmul.f32 %v5077, %v5109
        %v5111 = vsub.f32 1.0, %v5110
        %v5112 = vmul.f32 %v5109, %v5111
        %v5113 = vadd.f32 %v5109, %v5112
        %vm5114 = vweird.f32 %v5077
        %vm5115 = vweird.f32 %v5109
        %vm5116 = vmor %vm5114, %vm5115
        %v5117 = vsel %vm5116, %v5109, %v5113
        %v5118 = vand.u32 2147483647, %v5077
        %vm5119 = vcmp.eq.f32.partialorder %v5118, 8.507059e+37
        %v5120 = vand.u32 %v5077, 2147483648
        %v5121 = vor.u32 1.1754944e-38, %v5120
        %v5122 = vsel %vm5119, %v5121, %v5117
        %v5123 = vmul.f32 1.0, %v5122
        %v5124 = vrcp.pop %v5078
        %v5125 = vmul.f32 %v5078, %v5124
        %v5126 = vsub.f32 1.0, %v5125
        %v5127 = vmul.f32 %v5124, %v5126
        %v5128 = vadd.f32 %v5124, %v5127
        %vm5129 = vweird.f32 %v5078
        %vm5130 = vweird.f32 %v5124
        %vm5131 = vmor %vm5129, %vm5130
        %v5132 = vsel %vm5131, %v5124, %v5128
        %v5133 = vand.u32 2147483647, %v5078
        %vm5134 = vcmp.eq.f32.partialorder %v5133, 8.507059e+37
        %v5135 = vand.u32 %v5078, 2147483648
        %v5136 = vor.u32 1.1754944e-38, %v5135
        %v5137 = vsel %vm5134, %v5136, %v5132
        %v5138 = vmul.f32 1.0, %v5137
        %v5139 = vrcp.pop %v5079
        %v5140 = vmul.f32 %v5079, %v5139
        %v5141 = vsub.f32 1.0, %v5140
        %v5142 = vmul.f32 %v5139, %v5141
        %v5143 = vadd.f32 %v5139, %v5142
        %vm5144 = vweird.f32 %v5079
        %vm5145 = vweird.f32 %v5139
        %vm5146 = vmor %vm5144, %vm5145
        %v5147 = vsel %vm5146, %v5139, %v5143
        %v5148 = vand.u32 2147483647, %v5079
        %vm5149 = vcmp.eq.f32.partialorder %v5148, 8.507059e+37
        %v5150 = vand.u32 %v5079, 2147483648
        %v5151 = vor.u32 1.1754944e-38, %v5150
        %v5152 = vsel %vm5149, %v5151, %v5147
        %v5153 = vmul.f32 1.0, %v5152
        %v5154 = vrcp.pop %v5080
        %v5155 = vmul.f32 %v5080, %v5154
        %v5156 = vsub.f32 1.0, %v5155
        %v5157 = vmul.f32 %v5154, %v5156
        %v5158 = vadd.f32 %v5154, %v5157
        %vm5159 = vweird.f32 %v5080
        %vm5160 = vweird.f32 %v5154
        %vm5161 = vmor %vm5159, %vm5160
        %v5162 = vsel %vm5161, %v5154, %v5158
        %v5163 = vand.u32 2147483647, %v5080
        %vm5164 = vcmp.eq.f32.partialorder %v5163, 8.507059e+37
        %v5165 = vand.u32 %v5080, 2147483648
        %v5166 = vor.u32 1.1754944e-38, %v5165
        %v5167 = vsel %vm5164, %v5166, %v5162
        %v5168 = vmul.f32 1.0, %v5167
        %v5169 = vrcp.pop %v5081
        %v5170 = vmul.f32 %v5081, %v5169
        %v5171 = vsub.f32 1.0, %v5170
        %v5172 = vmul.f32 %v5169, %v5171
        %v5173 = vadd.f32 %v5169, %v5172
        %vm5174 = vweird.f32 %v5081
        %vm5175 = vweird.f32 %v5169
        %vm5176 = vmor %vm5174, %vm5175
        %v5177 = vsel %vm5176, %v5169, %v5173
        %v5178 = vand.u32 2147483647, %v5081
        %vm5179 = vcmp.eq.f32.partialorder %v5178, 8.507059e+37
        %v5180 = vand.u32 %v5081, 2147483648
        %v5181 = vor.u32 1.1754944e-38, %v5180
        %v5182 = vsel %vm5179, %v5181, %v5177
        %v5183 = vmul.f32 1.0, %v5182
        %v5184 = vrcp.pop %v5082
        %v5185 = vmul.f32 %v5082, %v5184
        %v5186 = vsub.f32 1.0, %v5185
        %v5187 = vmul.f32 %v5184, %v5186
        %v5188 = vadd.f32 %v5184, %v5187
        %vm5189 = vweird.f32 %v5082
        %vm5190 = vweird.f32 %v5184
        %vm5191 = vmor %vm5189, %vm5190
        %v5192 = vsel %vm5191, %v5184, %v5188
        %v5193 = vand.u32 2147483647, %v5082
        %vm5194 = vcmp.eq.f32.partialorder %v5193, 8.507059e+37
        %v5195 = vand.u32 %v5082, 2147483648
        %v5196 = vor.u32 1.1754944e-38, %v5195
        %v5197 = vsel %vm5194, %v5196, %v5192
        %v5198 = vmul.f32 1.0, %v5197
        %v5199 = vrcp.pop %v5083
        %v5200 = vmul.f32 %v5083, %v5199
        %v5201 = vsub.f32 1.0, %v5200
        %v5202 = vmul.f32 %v5199, %v5201
        %v5203 = vadd.f32 %v5199, %v5202
        %vm5204 = vweird.f32 %v5083
        %vm5205 = vweird.f32 %v5199
        %vm5206 = vmor %vm5204, %vm5205
        %v5207 = vsel %vm5206, %v5199, %v5203
        %v5208 = vand.u32 2147483647, %v5083
        %vm5209 = vcmp.eq.f32.partialorder %v5208, 8.507059e+37
        %v5210 = vand.u32 %v5083, 2147483648
        %v5211 = vor.u32 1.1754944e-38, %v5210
        %v5212 = vsel %vm5209, %v5211, %v5207
        %v5213 = vmul.f32 1.0, %v5212
        %v5214 = vrcp.pop %v5084
        %v5215 = vmul.f32 %v5084, %v5214
        %v5216 = vsub.f32 1.0, %v5215
        %v5217 = vmul.f32 %v5214, %v5216
        %v5218 = vadd.f32 %v5214, %v5217
        %vm5219 = vweird.f32 %v5084
        %vm5220 = vweird.f32 %v5214
        %vm5221 = vmor %vm5219, %vm5220
        %v5222 = vsel %vm5221, %v5214, %v5218
        %v5223 = vand.u32 2147483647, %v5084
        %vm5224 = vcmp.eq.f32.partialorder %v5223, 8.507059e+37
        %v5225 = vand.u32 %v5084, 2147483648
        %v5226 = vor.u32 1.1754944e-38, %v5225
        %v5227 = vsel %vm5224, %v5226, %v5222
        %v5228 = vmul.f32 1.0, %v5227
        %v5229 = vrcp.pop %v5085
        %v5230 = vmul.f32 %v5085, %v5229
        %v5231 = vsub.f32 1.0, %v5230
        %v5232 = vmul.f32 %v5229, %v5231
        %v5233 = vadd.f32 %v5229, %v5232
        %vm5234 = vweird.f32 %v5085
        %vm5235 = vweird.f32 %v5229
        %vm5236 = vmor %vm5234, %vm5235
        %v5237 = vsel %vm5236, %v5229, %v5233
        %v5238 = vand.u32 2147483647, %v5085
        %vm5239 = vcmp.eq.f32.partialorder %v5238, 8.507059e+37
        %v5240 = vand.u32 %v5085, 2147483648
        %v5241 = vor.u32 1.1754944e-38, %v5240
        %v5242 = vsel %vm5239, %v5241, %v5237
        %v5243 = vmul.f32 1.0, %v5242
        %v5244 = vrcp.pop %v5086
        %v5245 = vmul.f32 %v5086, %v5244
        %v5246 = vsub.f32 1.0, %v5245
        %v5247 = vmul.f32 %v5244, %v5246
        %v5248 = vadd.f32 %v5244, %v5247
        %vm5249 = vweird.f32 %v5086
        %vm5250 = vweird.f32 %v5244
        %vm5251 = vmor %vm5249, %vm5250
        %v5252 = vsel %vm5251, %v5244, %v5248
        %v5253 = vand.u32 2147483647, %v5086
        %vm5254 = vcmp.eq.f32.partialorder %v5253, 8.507059e+37
        %v5255 = vand.u32 %v5086, 2147483648
        %v5256 = vor.u32 1.1754944e-38, %v5255
        %v5257 = vsel %vm5254, %v5256, %v5252
        %v5258 = vmul.f32 1.0, %v5257
        %v5259 = vrcp.pop %v5087
        %v5260 = vmul.f32 %v5087, %v5259
        %v5261 = vsub.f32 1.0, %v5260
        %v5262 = vmul.f32 %v5259, %v5261
        %v5263 = vadd.f32 %v5259, %v5262
        %vm5264 = vweird.f32 %v5087
        %vm5265 = vweird.f32 %v5259
        %vm5266 = vmor %vm5264, %vm5265
        %v5267 = vsel %vm5266, %v5259, %v5263
        %v5268 = vand.u32 2147483647, %v5087
        %vm5269 = vcmp.eq.f32.partialorder %v5268, 8.507059e+37
        %v5270 = vand.u32 %v5087, 2147483648
        %v5271 = vor.u32 1.1754944e-38, %v5270
        %v5272 = vsel %vm5269, %v5271, %v5267
        %v5273 = vmul.f32 1.0, %v5272
        %v5274 = vrcp.pop %v5088
        %v5275 = vmul.f32 %v5088, %v5274
        %v5276 = vsub.f32 1.0, %v5275
        %v5277 = vmul.f32 %v5274, %v5276
        %v5278 = vadd.f32 %v5274, %v5277
        %vm5279 = vweird.f32 %v5088
        %vm5280 = vweird.f32 %v5274
        %vm5281 = vmor %vm5279, %vm5280
        %v5282 = vsel %vm5281, %v5274, %v5278
        %v5283 = vand.u32 2147483647, %v5088
        %vm5284 = vcmp.eq.f32.partialorder %v5283, 8.507059e+37
        %v5285 = vand.u32 %v5088, 2147483648
        %v5286 = vor.u32 1.1754944e-38, %v5285
        %v5287 = vsel %vm5284, %v5286, %v5282
        %v5288 = vmul.f32 1.0, %v5287
        %v5289 = vrcp.pop %v5089
        %v5290 = vmul.f32 %v5089, %v5289
        %v5291 = vsub.f32 1.0, %v5290
        %v5292 = vmul.f32 %v5289, %v5291
        %v5293 = vadd.f32 %v5289, %v5292
        %vm5294 = vweird.f32 %v5089
        %vm5295 = vweird.f32 %v5289
        %vm5296 = vmor %vm5294, %vm5295
        %v5297 = vsel %vm5296, %v5289, %v5293
        %v5298 = vand.u32 2147483647, %v5089
        %vm5299 = vcmp.eq.f32.partialorder %v5298, 8.507059e+37
        %v5300 = vand.u32 %v5089, 2147483648
        %v5301 = vor.u32 1.1754944e-38, %v5300
        %v5302 = vsel %vm5299, %v5301, %v5297
        %v5303 = vmul.f32 1.0, %v5302
        %v5304 = vrcp.pop %v5090
        %v5305 = vmul.f32 %v5090, %v5304
        %v5306 = vsub.f32 1.0, %v5305
        %v5307 = vmul.f32 %v5304, %v5306
        %v5308 = vadd.f32 %v5304, %v5307
        %vm5309 = vweird.f32 %v5090
        %vm5310 = vweird.f32 %v5304
        %vm5311 = vmor %vm5309, %vm5310
        %v5312 = vsel %vm5311, %v5304, %v5308
        %v5313 = vand.u32 2147483647, %v5090
        %vm5314 = vcmp.eq.f32.partialorder %v5313, 8.507059e+37
        %v5315 = vand.u32 %v5090, 2147483648
        %v5316 = vor.u32 1.1754944e-38, %v5315
        %v5317 = vsel %vm5314, %v5316, %v5312
        %v5318 = vmul.f32 1.0, %v5317
        %v5319 = vrcp.pop %v5091
        %v5320 = vmul.f32 %v5091, %v5319
        %v5321 = vsub.f32 1.0, %v5320
        %v5322 = vmul.f32 %v5319, %v5321
        %v5323 = vadd.f32 %v5319, %v5322
        %vm5324 = vweird.f32 %v5091
        %vm5325 = vweird.f32 %v5319
        %vm5326 = vmor %vm5324, %vm5325
        %v5327 = vsel %vm5326, %v5319, %v5323
        %v5328 = vand.u32 2147483647, %v5091
        %vm5329 = vcmp.eq.f32.partialorder %v5328, 8.507059e+37
        %v5330 = vand.u32 %v5091, 2147483648
        %v5331 = vor.u32 1.1754944e-38, %v5330
        %v5332 = vsel %vm5329, %v5331, %v5327
        %v5333 = vmul.f32 1.0, %v5332
        %v5334 = vrcp.pop %v5092
        %v5335 = vmul.f32 %v5092, %v5334
        %v5336 = vsub.f32 1.0, %v5335
        %v5337 = vmul.f32 %v5334, %v5336
        %v5338 = vadd.f32 %v5334, %v5337
        %vm5339 = vweird.f32 %v5092
        %vm5340 = vweird.f32 %v5334
        %vm5341 = vmor %vm5339, %vm5340
        %v5342 = vsel %vm5341, %v5334, %v5338
        %v5343 = vand.u32 2147483647, %v5092
        %vm5344 = vcmp.eq.f32.partialorder %v5343, 8.507059e+37
        %v5345 = vand.u32 %v5092, 2147483648
        %v5346 = vor.u32 1.1754944e-38, %v5345
        %v5347 = vsel %vm5344, %v5346, %v5342
        %v5348 = vmul.f32 1.0, %v5347
        %v5349 = vrcp.pop %v5093
        %v5350 = vmul.f32 %v5093, %v5349
        %v5351 = vsub.f32 1.0, %v5350
        %v5352 = vmul.f32 %v5349, %v5351
        %v5353 = vadd.f32 %v5349, %v5352
        %vm5354 = vweird.f32 %v5093
        %vm5355 = vweird.f32 %v5349
        %vm5356 = vmor %vm5354, %vm5355
        %v5357 = vsel %vm5356, %v5349, %v5353
        %v5358 = vand.u32 2147483647, %v5093
        %vm5359 = vcmp.eq.f32.partialorder %v5358, 8.507059e+37
        %v5360 = vand.u32 %v5093, 2147483648
        %v5361 = vor.u32 1.1754944e-38, %v5360
        %v5362 = vsel %vm5359, %v5361, %v5357
        %v5363 = vmul.f32 1.0, %v5362
        %v5364 = vrcp.pop %v5094
        %v5365 = vmul.f32 %v5094, %v5364
        %v5366 = vsub.f32 1.0, %v5365
        %v5367 = vmul.f32 %v5364, %v5366
        %v5368 = vadd.f32 %v5364, %v5367
        %vm5369 = vweird.f32 %v5094
        %vm5370 = vweird.f32 %v5364
        %vm5371 = vmor %vm5369, %vm5370
        %v5372 = vsel %vm5371, %v5364, %v5368
        %v5373 = vand.u32 2147483647, %v5094
        %vm5374 = vcmp.eq.f32.partialorder %v5373, 8.507059e+37
        %v5375 = vand.u32 %v5094, 2147483648
        %v5376 = vor.u32 1.1754944e-38, %v5375
        %v5377 = vsel %vm5374, %v5376, %v5372
        %v5378 = vmul.f32 1.0, %v5377
        %v5379 = vrcp.pop %v5095
        %v5380 = vmul.f32 %v5095, %v5379
        %v5381 = vsub.f32 1.0, %v5380
        %v5382 = vmul.f32 %v5379, %v5381
        %v5383 = vadd.f32 %v5379, %v5382
        %vm5384 = vweird.f32 %v5095
        %vm5385 = vweird.f32 %v5379
        %vm5386 = vmor %vm5384, %vm5385
        %v5387 = vsel %vm5386, %v5379, %v5383
        %v5388 = vand.u32 2147483647, %v5095
        %vm5389 = vcmp.eq.f32.partialorder %v5388, 8.507059e+37
        %v5390 = vand.u32 %v5095, 2147483648
        %v5391 = vor.u32 1.1754944e-38, %v5390
        %v5392 = vsel %vm5389, %v5391, %v5387
        %v5393 = vmul.f32 1.0, %v5392
        %v5394 = vrcp.pop %v5096
        %v5395 = vmul.f32 %v5096, %v5394
        %v5396 = vsub.f32 1.0, %v5395
        %v5397 = vmul.f32 %v5394, %v5396
        %v5398 = vadd.f32 %v5394, %v5397
        %vm5399 = vweird.f32 %v5096
        %vm5400 = vweird.f32 %v5394
        %vm5401 = vmor %vm5399, %vm5400
        %v5402 = vsel %vm5401, %v5394, %v5398
        %v5403 = vand.u32 2147483647, %v5096
        %vm5404 = vcmp.eq.f32.partialorder %v5403, 8.507059e+37
        %v5405 = vand.u32 %v5096, 2147483648
        %v5406 = vor.u32 1.1754944e-38, %v5405
        %v5407 = vsel %vm5404, %v5406, %v5402
        %v5408 = vmul.f32 1.0, %v5407
        %v5409 = vrcp.pop %v5097
        %v5410 = vmul.f32 %v5097, %v5409
        %v5411 = vsub.f32 1.0, %v5410
        %v5412 = vmul.f32 %v5409, %v5411
        %v5413 = vadd.f32 %v5409, %v5412
        %vm5414 = vweird.f32 %v5097
        %vm5415 = vweird.f32 %v5409
        %vm5416 = vmor %vm5414, %vm5415
        %v5417 = vsel %vm5416, %v5409, %v5413
        %v5418 = vand.u32 2147483647, %v5097
        %vm5419 = vcmp.eq.f32.partialorder %v5418, 8.507059e+37
        %v5420 = vand.u32 %v5097, 2147483648
        %v5421 = vor.u32 1.1754944e-38, %v5420
        %v5422 = vsel %vm5419, %v5421, %v5417
        %v5423 = vmul.f32 1.0, %v5422
        %v5424 = vrcp.pop %v5098
        %v5425 = vmul.f32 %v5098, %v5424
        %v5426 = vsub.f32 1.0, %v5425
        %v5427 = vmul.f32 %v5424, %v5426
        %v5428 = vadd.f32 %v5424, %v5427
        %vm5429 = vweird.f32 %v5098
        %vm5430 = vweird.f32 %v5424
        %vm5431 = vmor %vm5429, %vm5430
        %v5432 = vsel %vm5431, %v5424, %v5428
        %v5433 = vand.u32 2147483647, %v5098
        %vm5434 = vcmp.eq.f32.partialorder %v5433, 8.507059e+37
        %v5435 = vand.u32 %v5098, 2147483648
        %v5436 = vor.u32 1.1754944e-38, %v5435
        %v5437 = vsel %vm5434, %v5436, %v5432
        %v5438 = vmul.f32 1.0, %v5437
        %v5439 = vrcp.pop %v5099
        %v5440 = vmul.f32 %v5099, %v5439
        %v5441 = vsub.f32 1.0, %v5440
        %v5442 = vmul.f32 %v5439, %v5441
        %v5443 = vadd.f32 %v5439, %v5442
        %vm5444 = vweird.f32 %v5099
        %vm5445 = vweird.f32 %v5439
        %vm5446 = vmor %vm5444, %vm5445
        %v5447 = vsel %vm5446, %v5439, %v5443
        %v5448 = vand.u32 2147483647, %v5099
        %vm5449 = vcmp.eq.f32.partialorder %v5448, 8.507059e+37
        %v5450 = vand.u32 %v5099, 2147483648
        %v5451 = vor.u32 1.1754944e-38, %v5450
        %v5452 = vsel %vm5449, %v5451, %v5447
        %v5453 = vmul.f32 1.0, %v5452
        %v5454 = vrcp.pop %v5100
        %v5455 = vmul.f32 %v5100, %v5454
        %v5456 = vsub.f32 1.0, %v5455
        %v5457 = vmul.f32 %v5454, %v5456
        %v5458 = vadd.f32 %v5454, %v5457
        %vm5459 = vweird.f32 %v5100
        %vm5460 = vweird.f32 %v5454
        %vm5461 = vmor %vm5459, %vm5460
        %v5462 = vsel %vm5461, %v5454, %v5458
        %v5463 = vand.u32 2147483647, %v5100
        %vm5464 = vcmp.eq.f32.partialorder %v5463, 8.507059e+37
        %v5465 = vand.u32 %v5100, 2147483648
        %v5466 = vor.u32 1.1754944e-38, %v5465
        %v5467 = vsel %vm5464, %v5466, %v5462
        %v5468 = vmul.f32 1.0, %v5467
        %v5469 = vrcp.pop %v5101
        %v5470 = vmul.f32 %v5101, %v5469
        %v5471 = vsub.f32 1.0, %v5470
        %v5472 = vmul.f32 %v5469, %v5471
        %v5473 = vadd.f32 %v5469, %v5472
        %vm5474 = vweird.f32 %v5101
        %vm5475 = vweird.f32 %v5469
        %vm5476 = vmor %vm5474, %vm5475
        %v5477 = vsel %vm5476, %v5469, %v5473
        %v5478 = vand.u32 2147483647, %v5101
        %vm5479 = vcmp.eq.f32.partialorder %v5478, 8.507059e+37
        %v5480 = vand.u32 %v5101, 2147483648
        %v5481 = vor.u32 1.1754944e-38, %v5480
        %v5482 = vsel %vm5479, %v5481, %v5477
        %v5483 = vmul.f32 1.0, %v5482
        %v5484 = vrcp.pop %v5102
        %v5485 = vmul.f32 %v5102, %v5484
        %v5486 = vsub.f32 1.0, %v5485
        %v5487 = vmul.f32 %v5484, %v5486
        %v5488 = vadd.f32 %v5484, %v5487
        %vm5489 = vweird.f32 %v5102
        %vm5490 = vweird.f32 %v5484
        %vm5491 = vmor %vm5489, %vm5490
        %v5492 = vsel %vm5491, %v5484, %v5488
        %v5493 = vand.u32 2147483647, %v5102
        %vm5494 = vcmp.eq.f32.partialorder %v5493, 8.507059e+37
        %v5495 = vand.u32 %v5102, 2147483648
        %v5496 = vor.u32 1.1754944e-38, %v5495
        %v5497 = vsel %vm5494, %v5496, %v5492
        %v5498 = vmul.f32 1.0, %v5497
        %v5499 = vrcp.pop %v5103
        %v5500 = vmul.f32 %v5103, %v5499
        %v5501 = vsub.f32 1.0, %v5500
        %v5502 = vmul.f32 %v5499, %v5501
        %v5503 = vadd.f32 %v5499, %v5502
        %vm5504 = vweird.f32 %v5103
        %vm5505 = vweird.f32 %v5499
        %vm5506 = vmor %vm5504, %vm5505
        %v5507 = vsel %vm5506, %v5499, %v5503
        %v5508 = vand.u32 2147483647, %v5103
        %vm5509 = vcmp.eq.f32.partialorder %v5508, 8.507059e+37
        %v5510 = vand.u32 %v5103, 2147483648
        %v5511 = vor.u32 1.1754944e-38, %v5510
        %v5512 = vsel %vm5509, %v5511, %v5507
        %v5513 = vmul.f32 1.0, %v5512
        %v5514 = vrcp.pop %v5104
        %v5515 = vmul.f32 %v5104, %v5514
        %v5516 = vsub.f32 1.0, %v5515
        %v5517 = vmul.f32 %v5514, %v5516
        %v5518 = vadd.f32 %v5514, %v5517
        %vm5519 = vweird.f32 %v5104
        %vm5520 = vweird.f32 %v5514
        %vm5521 = vmor %vm5519, %vm5520
        %v5522 = vsel %vm5521, %v5514, %v5518
        %v5523 = vand.u32 2147483647, %v5104
        %vm5524 = vcmp.eq.f32.partialorder %v5523, 8.507059e+37
        %v5525 = vand.u32 %v5104, 2147483648
        %v5526 = vor.u32 1.1754944e-38, %v5525
        %v5527 = vsel %vm5524, %v5526, %v5522
        %v5528 = vmul.f32 1.0, %v5527
        %v5529 = vrcp.pop %v5105
        %v5530 = vmul.f32 %v5105, %v5529
        %v5531 = vsub.f32 1.0, %v5530
        %v5532 = vmul.f32 %v5529, %v5531
        %v5533 = vadd.f32 %v5529, %v5532
        %vm5534 = vweird.f32 %v5105
        %vm5535 = vweird.f32 %v5529
        %vm5536 = vmor %vm5534, %vm5535
        %v5537 = vsel %vm5536, %v5529, %v5533
        %v5538 = vand.u32 2147483647, %v5105
        %vm5539 = vcmp.eq.f32.partialorder %v5538, 8.507059e+37
        %v5540 = vand.u32 %v5105, 2147483648
        %v5541 = vor.u32 1.1754944e-38, %v5540
        %v5542 = vsel %vm5539, %v5541, %v5537
        %v5543 = vmul.f32 1.0, %v5542
        %v5544 = vrcp.pop %v5106
        %v5545 = vmul.f32 %v5106, %v5544
        %v5546 = vsub.f32 1.0, %v5545
        %v5547 = vmul.f32 %v5544, %v5546
        %v5548 = vadd.f32 %v5544, %v5547
        %vm5549 = vweird.f32 %v5106
        %vm5550 = vweird.f32 %v5544
        %vm5551 = vmor %vm5549, %vm5550
        %v5552 = vsel %vm5551, %v5544, %v5548
        %v5553 = vand.u32 2147483647, %v5106
        %vm5554 = vcmp.eq.f32.partialorder %v5553, 8.507059e+37
        %v5555 = vand.u32 %v5106, 2147483648
        %v5556 = vor.u32 1.1754944e-38, %v5555
        %v5557 = vsel %vm5554, %v5556, %v5552
        %v5558 = vmul.f32 1.0, %v5557
        %v5559 = vrcp.pop %v5107
        %v5560 = vmul.f32 %v5107, %v5559
        %v5561 = vsub.f32 1.0, %v5560
        %v5562 = vmul.f32 %v5559, %v5561
        %v5563 = vadd.f32 %v5559, %v5562
        %vm5564 = vweird.f32 %v5107
        %vm5565 = vweird.f32 %v5559
        %vm5566 = vmor %vm5564, %vm5565
        %v5567 = vsel %vm5566, %v5559, %v5563
        %v5568 = vand.u32 2147483647, %v5107
        %vm5569 = vcmp.eq.f32.partialorder %v5568, 8.507059e+37
        %v5570 = vand.u32 %v5107, 2147483648
        %v5571 = vor.u32 1.1754944e-38, %v5570
        %v5572 = vsel %vm5569, %v5571, %v5567
        %v5573 = vmul.f32 1.0, %v5572
        %v5574 = vrcp.pop %v5108
        %v5575 = vmul.f32 %v5108, %v5574
        %v5576 = vsub.f32 1.0, %v5575
        %v5577 = vmul.f32 %v5574, %v5576
        %v5578 = vadd.f32 %v5574, %v5577
        %vm5579 = vweird.f32 %v5108
        %vm5580 = vweird.f32 %v5574
        %vm5581 = vmor %vm5579, %vm5580
        %v5582 = vsel %vm5581, %v5574, %v5578
        %v5583 = vand.u32 2147483647, %v5108
        %vm5584 = vcmp.eq.f32.partialorder %v5583, 8.507059e+37
        %v5585 = vand.u32 %v5108, 2147483648
        %v5586 = vor.u32 1.1754944e-38, %v5585
        %v5587 = vsel %vm5584, %v5586, %v5582
        %v5588 = vmul.f32 1.0, %v5587
        %v5589 = vmul.f32 %v5123, %v4902
        %v5590 = vmul.f32 %v5138, %v4904
        %v5591 = vmul.f32 %v5153, %v4907
        %v5592 = vmul.f32 %v5168, %v4909
        %v5593 = vmul.f32 %v5183, %v4912
        %v5594 = vmul.f32 %v5198, %v4914
        %v5595 = vmul.f32 %v5213, %v4917
        %v5596 = vmul.f32 %v5228, %v4919
        %v5597 = vmul.f32 %v5243, %v4922
        %v5598 = vmul.f32 %v5258, %v4924
        %v5599 = vmul.f32 %v5273, %v4927
        %v5600 = vmul.f32 %v5288, %v4929
        %v5601 = vmul.f32 %v5303, %v4932
        %v5602 = vmul.f32 %v5318, %v4934
        %v5603 = vmul.f32 %v5333, %v4937
        %v5604 = vmul.f32 %v5348, %v4939
        %v5605 = vmul.f32 %v5363, %v4942
        %v5606 = vmul.f32 %v5378, %v4944
        %v5607 = vmul.f32 %v5393, %v4947
        %v5608 = vmul.f32 %v5408, %v4949
        %v5609 = vmul.f32 %v5423, %v4952
        %v5610 = vmul.f32 %v5438, %v4954
        %v5611 = vmul.f32 %v5453, %v4957
        %v5612 = vmul.f32 %v5468, %v4959
        %v5613 = vmul.f32 %v5483, %v4962
        %v5614 = vmul.f32 %v5498, %v4964
        %v5615 = vmul.f32 %v5513, %v4967
        %v5616 = vmul.f32 %v5528, %v4969
        %v5617 = vmul.f32 %v5543, %v4972
        %v5618 = vmul.f32 %v5558, %v4974
        %v5619 = vmul.f32 %v5573, %v4977
        %v5620 = vmul.f32 %v5588, %v4979
        %v5621 = vadd.f32 %v5589, %v4241
        %v5622 = vadd.f32 %v5590, %v4243
        %v5623 = vadd.f32 %v5591, %v4246
        %v5624 = vadd.f32 %v5592, %v4248
        %v5625 = vadd.f32 %v5593, %v4251
        %v5626 = vadd.f32 %v5594, %v4253
        %v5627 = vadd.f32 %v5595, %v4256
        %v5628 = vadd.f32 %v5596, %v4258
        %v5629 = vadd.f32 %v5597, %v4261
        %v5630 = vadd.f32 %v5598, %v4263
        %v5631 = vadd.f32 %v5599, %v4266
        %v5632 = vadd.f32 %v5600, %v4268
        %v5633 = vadd.f32 %v5601, %v4271
        %v5634 = vadd.f32 %v5602, %v4273
        %v5635 = vadd.f32 %v5603, %v4276
        %v5636 = vadd.f32 %v5604, %v4278
        %v5637 = vadd.f32 %v5605, %v4281
        %v5638 = vadd.f32 %v5606, %v4283
        %v5639 = vadd.f32 %v5607, %v4286
        %v5640 = vadd.f32 %v5608, %v4288
        %v5641 = vadd.f32 %v5609, %v4291
        %v5642 = vadd.f32 %v5610, %v4293
        %v5643 = vadd.f32 %v5611, %v4296
        %v5644 = vadd.f32 %v5612, %v4298
        %v5645 = vadd.f32 %v5613, %v4301
        %v5646 = vadd.f32 %v5614, %v4303
        %v5647 = vadd.f32 %v5615, %v4306
        %v5648 = vadd.f32 %v5616, %v4308
        %v5649 = vadd.f32 %v5617, %v4311
        %v5650 = vadd.f32 %v5618, %v4313
        %v5651 = vadd.f32 %v5619, %v4316
        %v5652 = vadd.f32 %v5620, %v4318
        %5653 = vmatpush.msra.mxu0 %v4087
        %5654 = vmatpush.msra.mxu0 %v4086
        %5655 = vmatpush.msra.mxu0 %v4085
        %5656 = vmatpush.msra.mxu0 %v4084
        %5657 = vmatpush.msra.mxu0 %v4083
        %5658 = vmatpush.msra.mxu0 %v4082
        %5659 = vmatpush.msra.mxu0 %v4081
        %5660 = vmatpush.msra.mxu0 %v4080
        %5661 = vmatpush.msra.mxu0 %v4079
        %5662 = vmatpush.msra.mxu0 %v4078
        %5663 = vmatpush.msra.mxu0 %v4077
        %5664 = vmatpush.msra.mxu0 %v4076
        %5665 = vmatpush.msra.mxu0 %v4075
        %5666 = vmatpush.msra.mxu0 %v4074
        %5667 = vmatpush.msra.mxu0 %v4073
        %5668 = vmatpush.msra.mxu0 %v4072
        %5669 = vmatmul.f32.gmra.mxu0 %v5621
        %v5670 = vpop.f32.mrf.mxu0
        %v5671 = vadd.f32 0.0, %v5670
        %5672 = vmatmul.f32.gmra.mxu0 %v5622
        %v5673 = vpop.f32.mrf.mxu0
        %v5674 = vadd.f32 0.0, %v5673
        %5675 = vmatmul.f32.gmra.mxu0 %v5623
        %v5676 = vpop.f32.mrf.mxu0
        %v5677 = vadd.f32 0.0, %v5676
        %5678 = vmatmul.f32.gmra.mxu0 %v5624
        %v5679 = vpop.f32.mrf.mxu0
        %v5680 = vadd.f32 0.0, %v5679
        %5681 = vmatmul.f32.gmra.mxu0 %v5625
        %v5682 = vpop.f32.mrf.mxu0
        %v5683 = vadd.f32 0.0, %v5682
        %5684 = vmatmul.f32.gmra.mxu0 %v5626
        %v5685 = vpop.f32.mrf.mxu0
        %v5686 = vadd.f32 0.0, %v5685
        %5687 = vmatmul.f32.gmra.mxu0 %v5627
        %v5688 = vpop.f32.mrf.mxu0
        %v5689 = vadd.f32 0.0, %v5688
        %5690 = vmatmul.f32.gmra.mxu0 %v5628
        %v5691 = vpop.f32.mrf.mxu0
        %v5692 = vadd.f32 0.0, %v5691
        %5693 = vmatmul.f32.gmra.mxu0 %v5629
        %v5694 = vpop.f32.mrf.mxu0
        %v5695 = vadd.f32 0.0, %v5694
        %5696 = vmatmul.f32.gmra.mxu0 %v5630
        %v5697 = vpop.f32.mrf.mxu0
        %v5698 = vadd.f32 0.0, %v5697
        %5699 = vmatmul.f32.gmra.mxu0 %v5631
        %v5700 = vpop.f32.mrf.mxu0
        %v5701 = vadd.f32 0.0, %v5700
        %5702 = vmatmul.f32.gmra.mxu0 %v5632
        %v5703 = vpop.f32.mrf.mxu0
        %v5704 = vadd.f32 0.0, %v5703
        %5705 = vmatmul.f32.gmra.mxu0 %v5633
        %v5706 = vpop.f32.mrf.mxu0
        %v5707 = vadd.f32 0.0, %v5706
        %5708 = vmatmul.f32.gmra.mxu0 %v5634
        %v5709 = vpop.f32.mrf.mxu0
        %v5710 = vadd.f32 0.0, %v5709
        %5711 = vmatmul.f32.gmra.mxu0 %v5635
        %v5712 = vpop.f32.mrf.mxu0
        %v5713 = vadd.f32 0.0, %v5712
        %5714 = vmatmul.f32.gmra.mxu0 %v5636
        %v5715 = vpop.f32.mrf.mxu0
        %v5716 = vadd.f32 0.0, %v5715
        %5717 = vmatmul.f32.gmra.mxu0 %v5637
        %v5718 = vpop.f32.mrf.mxu0
        %v5719 = vadd.f32 0.0, %v5718
        %5720 = vmatmul.f32.gmra.mxu0 %v5638
        %v5721 = vpop.f32.mrf.mxu0
        %v5722 = vadd.f32 0.0, %v5721
        %5723 = vmatmul.f32.gmra.mxu0 %v5639
        %v5724 = vpop.f32.mrf.mxu0
        %v5725 = vadd.f32 0.0, %v5724
        %5726 = vmatmul.f32.gmra.mxu0 %v5640
        %v5727 = vpop.f32.mrf.mxu0
        %v5728 = vadd.f32 0.0, %v5727
        %5729 = vmatmul.f32.gmra.mxu0 %v5641
        %v5730 = vpop.f32.mrf.mxu0
        %v5731 = vadd.f32 0.0, %v5730
        %5732 = vmatmul.f32.gmra.mxu0 %v5642
        %v5733 = vpop.f32.mrf.mxu0
        %v5734 = vadd.f32 0.0, %v5733
        %5735 = vmatmul.f32.gmra.mxu0 %v5643
        %v5736 = vpop.f32.mrf.mxu0
        %v5737 = vadd.f32 0.0, %v5736
        %5738 = vmatmul.f32.gmra.mxu0 %v5644
        %v5739 = vpop.f32.mrf.mxu0
        %v5740 = vadd.f32 0.0, %v5739
        %5741 = vmatmul.f32.gmra.mxu0 %v5645
        %v5742 = vpop.f32.mrf.mxu0
        %v5743 = vadd.f32 0.0, %v5742
        %5744 = vmatmul.f32.gmra.mxu0 %v5646
        %v5745 = vpop.f32.mrf.mxu0
        %v5746 = vadd.f32 0.0, %v5745
        %5747 = vmatmul.f32.gmra.mxu0 %v5647
        %v5748 = vpop.f32.mrf.mxu0
        %v5749 = vadd.f32 0.0, %v5748
        %5750 = vmatmul.f32.gmra.mxu0 %v5648
        %v5751 = vpop.f32.mrf.mxu0
        %v5752 = vadd.f32 0.0, %v5751
        %5753 = vmatmul.f32.gmra.mxu0 %v5649
        %v5754 = vpop.f32.mrf.mxu0
        %v5755 = vadd.f32 0.0, %v5754
        %5756 = vmatmul.f32.gmra.mxu0 %v5650
        %v5757 = vpop.f32.mrf.mxu0
        %v5758 = vadd.f32 0.0, %v5757
        %5759 = vmatmul.f32.gmra.mxu0 %v5651
        %v5760 = vpop.f32.mrf.mxu0
        %v5761 = vadd.f32 0.0, %v5760
        %5762 = vmatmul.f32.gmra.mxu0 %v5652
        %v5763 = vpop.f32.mrf.mxu0
        %v5764 = vadd.f32 0.0, %v5763
        %5765 = vdwg.mxu0
        %v5766 = vmul.f32 %v5671, 0.03125
        %v5767 = vmul.f32 %v5674, 0.03125
        %v5768 = vmul.f32 %v5677, 0.03125
        %v5769 = vmul.f32 %v5680, 0.03125
        %v5770 = vmul.f32 %v5683, 0.03125
        %v5771 = vmul.f32 %v5686, 0.03125
        %v5772 = vmul.f32 %v5689, 0.03125
        %v5773 = vmul.f32 %v5692, 0.03125
        %v5774 = vmul.f32 %v5695, 0.03125
        %v5775 = vmul.f32 %v5698, 0.03125
        %v5776 = vmul.f32 %v5701, 0.03125
        %v5777 = vmul.f32 %v5704, 0.03125
        %v5778 = vmul.f32 %v5707, 0.03125
        %v5779 = vmul.f32 %v5710, 0.03125
        %v5780 = vmul.f32 %v5713, 0.03125
        %v5781 = vmul.f32 %v5716, 0.03125
        %v5782 = vmul.f32 %v5719, 0.03125
        %v5783 = vmul.f32 %v5722, 0.03125
        %v5784 = vmul.f32 %v5725, 0.03125
        %v5785 = vmul.f32 %v5728, 0.03125
        %v5786 = vmul.f32 %v5731, 0.03125
        %v5787 = vmul.f32 %v5734, 0.03125
        %v5788 = vmul.f32 %v5737, 0.03125
        %v5789 = vmul.f32 %v5740, 0.03125
        %v5790 = vmul.f32 %v5743, 0.03125
        %v5791 = vmul.f32 %v5746, 0.03125
        %v5792 = vmul.f32 %v5749, 0.03125
        %v5793 = vmul.f32 %v5752, 0.03125
        %v5794 = vmul.f32 %v5755, 0.03125
        %v5795 = vmul.f32 %v5758, 0.03125
        %v5796 = vmul.f32 %v5761, 0.03125
        %v5797 = vmul.f32 %v5764, 0.03125
        %v5798 = vsub.f32 %v5621, %v5766
        %v5799 = vsub.f32 %v5622, %v5767
        %v5800 = vsub.f32 %v5623, %v5768
        %v5801 = vsub.f32 %v5624, %v5769
        %v5802 = vsub.f32 %v5625, %v5770
        %v5803 = vsub.f32 %v5626, %v5771
        %v5804 = vsub.f32 %v5627, %v5772
        %v5805 = vsub.f32 %v5628, %v5773
        %v5806 = vsub.f32 %v5629, %v5774
        %v5807 = vsub.f32 %v5630, %v5775
        %v5808 = vsub.f32 %v5631, %v5776
        %v5809 = vsub.f32 %v5632, %v5777
        %v5810 = vsub.f32 %v5633, %v5778
        %v5811 = vsub.f32 %v5634, %v5779
        %v5812 = vsub.f32 %v5635, %v5780
        %v5813 = vsub.f32 %v5636, %v5781
        %v5814 = vsub.f32 %v5637, %v5782
        %v5815 = vsub.f32 %v5638, %v5783
        %v5816 = vsub.f32 %v5639, %v5784
        %v5817 = vsub.f32 %v5640, %v5785
        %v5818 = vsub.f32 %v5641, %v5786
        %v5819 = vsub.f32 %v5642, %v5787
        %v5820 = vsub.f32 %v5643, %v5788
        %v5821 = vsub.f32 %v5644, %v5789
        %v5822 = vsub.f32 %v5645, %v5790
        %v5823 = vsub.f32 %v5646, %v5791
        %v5824 = vsub.f32 %v5647, %v5792
        %v5825 = vsub.f32 %v5648, %v5793
        %v5826 = vsub.f32 %v5649, %v5794
        %v5827 = vsub.f32 %v5650, %v5795
        %v5828 = vsub.f32 %v5651, %v5796
        %v5829 = vsub.f32 %v5652, %v5797
        %v5830 = vmul.f32 %v5798, %v5798
        %v5831 = vmul.f32 %v5799, %v5799
        %v5832 = vmul.f32 %v5800, %v5800
        %v5833 = vmul.f32 %v5801, %v5801
        %v5834 = vmul.f32 %v5802, %v5802
        %v5835 = vmul.f32 %v5803, %v5803
        %v5836 = vmul.f32 %v5804, %v5804
        %v5837 = vmul.f32 %v5805, %v5805
        %v5838 = vmul.f32 %v5806, %v5806
        %v5839 = vmul.f32 %v5807, %v5807
        %v5840 = vmul.f32 %v5808, %v5808
        %v5841 = vmul.f32 %v5809, %v5809
        %v5842 = vmul.f32 %v5810, %v5810
        %v5843 = vmul.f32 %v5811, %v5811
        %v5844 = vmul.f32 %v5812, %v5812
        %v5845 = vmul.f32 %v5813, %v5813
        %v5846 = vmul.f32 %v5814, %v5814
        %v5847 = vmul.f32 %v5815, %v5815
        %v5848 = vmul.f32 %v5816, %v5816
        %v5849 = vmul.f32 %v5817, %v5817
        %v5850 = vmul.f32 %v5818, %v5818
        %v5851 = vmul.f32 %v5819, %v5819
        %v5852 = vmul.f32 %v5820, %v5820
        %v5853 = vmul.f32 %v5821, %v5821
        %v5854 = vmul.f32 %v5822, %v5822
        %v5855 = vmul.f32 %v5823, %v5823
        %v5856 = vmul.f32 %v5824, %v5824
        %v5857 = vmul.f32 %v5825, %v5825
        %v5858 = vmul.f32 %v5826, %v5826
        %v5859 = vmul.f32 %v5827, %v5827
        %v5860 = vmul.f32 %v5828, %v5828
        %v5861 = vmul.f32 %v5829, %v5829
        %5862 = vmatpush.msra.mxu0 %v4087
        %5863 = vmatpush.msra.mxu0 %v4086
        %5864 = vmatpush.msra.mxu0 %v4085
        %5865 = vmatpush.msra.mxu0 %v4084
        %5866 = vmatpush.msra.mxu0 %v4083
        %5867 = vmatpush.msra.mxu0 %v4082
        %5868 = vmatpush.msra.mxu0 %v4081
        %5869 = vmatpush.msra.mxu0 %v4080
        %5870 = vmatpush.msra.mxu0 %v4079
        %5871 = vmatpush.msra.mxu0 %v4078
        %5872 = vmatpush.msra.mxu0 %v4077
        %5873 = vmatpush.msra.mxu0 %v4076
        %5874 = vmatpush.msra.mxu0 %v4075
        %5875 = vmatpush.msra.mxu0 %v4074
        %5876 = vmatpush.msra.mxu0 %v4073
        %5877 = vmatpush.msra.mxu0 %v4072
        %5878 = vmatmul.f32.gmra.mxu0 %v5830
        %v5879 = vpop.f32.mrf.mxu0
        %v5880 = vadd.f32 0.0, %v5879
        %5881 = vmatmul.f32.gmra.mxu0 %v5831
        %v5882 = vpop.f32.mrf.mxu0
        %v5883 = vadd.f32 0.0, %v5882
        %5884 = vmatmul.f32.gmra.mxu0 %v5832
        %v5885 = vpop.f32.mrf.mxu0
        %v5886 = vadd.f32 0.0, %v5885
        %5887 = vmatmul.f32.gmra.mxu0 %v5833
        %v5888 = vpop.f32.mrf.mxu0
        %v5889 = vadd.f32 0.0, %v5888
        %5890 = vmatmul.f32.gmra.mxu0 %v5834
        %v5891 = vpop.f32.mrf.mxu0
        %v5892 = vadd.f32 0.0, %v5891
        %5893 = vmatmul.f32.gmra.mxu0 %v5835
        %v5894 = vpop.f32.mrf.mxu0
        %v5895 = vadd.f32 0.0, %v5894
        %5896 = vmatmul.f32.gmra.mxu0 %v5836
        %v5897 = vpop.f32.mrf.mxu0
        %v5898 = vadd.f32 0.0, %v5897
        %5899 = vmatmul.f32.gmra.mxu0 %v5837
        %v5900 = vpop.f32.mrf.mxu0
        %v5901 = vadd.f32 0.0, %v5900
        %5902 = vmatmul.f32.gmra.mxu0 %v5838
        %v5903 = vpop.f32.mrf.mxu0
        %v5904 = vadd.f32 0.0, %v5903
        %5905 = vmatmul.f32.gmra.mxu0 %v5839
        %v5906 = vpop.f32.mrf.mxu0
        %v5907 = vadd.f32 0.0, %v5906
        %5908 = vmatmul.f32.gmra.mxu0 %v5840
        %v5909 = vpop.f32.mrf.mxu0
        %v5910 = vadd.f32 0.0, %v5909
        %5911 = vmatmul.f32.gmra.mxu0 %v5841
        %v5912 = vpop.f32.mrf.mxu0
        %v5913 = vadd.f32 0.0, %v5912
        %5914 = vmatmul.f32.gmra.mxu0 %v5842
        %v5915 = vpop.f32.mrf.mxu0
        %v5916 = vadd.f32 0.0, %v5915
        %5917 = vmatmul.f32.gmra.mxu0 %v5843
        %v5918 = vpop.f32.mrf.mxu0
        %v5919 = vadd.f32 0.0, %v5918
        %5920 = vmatmul.f32.gmra.mxu0 %v5844
        %v5921 = vpop.f32.mrf.mxu0
        %v5922 = vadd.f32 0.0, %v5921
        %5923 = vmatmul.f32.gmra.mxu0 %v5845
        %v5924 = vpop.f32.mrf.mxu0
        %v5925 = vadd.f32 0.0, %v5924
        %5926 = vmatmul.f32.gmra.mxu0 %v5846
        %v5927 = vpop.f32.mrf.mxu0
        %v5928 = vadd.f32 0.0, %v5927
        %5929 = vmatmul.f32.gmra.mxu0 %v5847
        %v5930 = vpop.f32.mrf.mxu0
        %v5931 = vadd.f32 0.0, %v5930
        %5932 = vmatmul.f32.gmra.mxu0 %v5848
        %v5933 = vpop.f32.mrf.mxu0
        %v5934 = vadd.f32 0.0, %v5933
        %5935 = vmatmul.f32.gmra.mxu0 %v5849
        %v5936 = vpop.f32.mrf.mxu0
        %v5937 = vadd.f32 0.0, %v5936
        %5938 = vmatmul.f32.gmra.mxu0 %v5850
        %v5939 = vpop.f32.mrf.mxu0
        %v5940 = vadd.f32 0.0, %v5939
        %5941 = vmatmul.f32.gmra.mxu0 %v5851
        %v5942 = vpop.f32.mrf.mxu0
        %v5943 = vadd.f32 0.0, %v5942
        %5944 = vmatmul.f32.gmra.mxu0 %v5852
        %v5945 = vpop.f32.mrf.mxu0
        %v5946 = vadd.f32 0.0, %v5945
        %5947 = vmatmul.f32.gmra.mxu0 %v5853
        %v5948 = vpop.f32.mrf.mxu0
        %v5949 = vadd.f32 0.0, %v5948
        %5950 = vmatmul.f32.gmra.mxu0 %v5854
        %v5951 = vpop.f32.mrf.mxu0
        %v5952 = vadd.f32 0.0, %v5951
        %5953 = vmatmul.f32.gmra.mxu0 %v5855
        %v5954 = vpop.f32.mrf.mxu0
        %v5955 = vadd.f32 0.0, %v5954
        %5956 = vmatmul.f32.gmra.mxu0 %v5856
        %v5957 = vpop.f32.mrf.mxu0
        %v5958 = vadd.f32 0.0, %v5957
        %5959 = vmatmul.f32.gmra.mxu0 %v5857
        %v5960 = vpop.f32.mrf.mxu0
        %v5961 = vadd.f32 0.0, %v5960
        %5962 = vmatmul.f32.gmra.mxu0 %v5858
        %v5963 = vpop.f32.mrf.mxu0
        %v5964 = vadd.f32 0.0, %v5963
        %5965 = vmatmul.f32.gmra.mxu0 %v5859
        %v5966 = vpop.f32.mrf.mxu0
        %v5967 = vadd.f32 0.0, %v5966
        %5968 = vmatmul.f32.gmra.mxu0 %v5860
        %v5969 = vpop.f32.mrf.mxu0
        %v5970 = vadd.f32 0.0, %v5969
        %5971 = vmatmul.f32.gmra.mxu0 %v5861
        %v5972 = vpop.f32.mrf.mxu0
        %v5973 = vadd.f32 0.0, %v5972
        %5974 = vdwg.mxu0
        %v5975 = vmul.f32 %v5880, 0.03125
        %v5976 = vmul.f32 %v5883, 0.03125
        %v5977 = vmul.f32 %v5886, 0.03125
        %v5978 = vmul.f32 %v5889, 0.03125
        %v5979 = vmul.f32 %v5892, 0.03125
        %v5980 = vmul.f32 %v5895, 0.03125
        %v5981 = vmul.f32 %v5898, 0.03125
        %v5982 = vmul.f32 %v5901, 0.03125
        %v5983 = vmul.f32 %v5904, 0.03125
        %v5984 = vmul.f32 %v5907, 0.03125
        %v5985 = vmul.f32 %v5910, 0.03125
        %v5986 = vmul.f32 %v5913, 0.03125
        %v5987 = vmul.f32 %v5916, 0.03125
        %v5988 = vmul.f32 %v5919, 0.03125
        %v5989 = vmul.f32 %v5922, 0.03125
        %v5990 = vmul.f32 %v5925, 0.03125
        %v5991 = vmul.f32 %v5928, 0.03125
        %v5992 = vmul.f32 %v5931, 0.03125
        %v5993 = vmul.f32 %v5934, 0.03125
        %v5994 = vmul.f32 %v5937, 0.03125
        %v5995 = vmul.f32 %v5940, 0.03125
        %v5996 = vmul.f32 %v5943, 0.03125
        %v5997 = vmul.f32 %v5946, 0.03125
        %v5998 = vmul.f32 %v5949, 0.03125
        %v5999 = vmul.f32 %v5952, 0.03125
        %v6000 = vmul.f32 %v5955, 0.03125
        %v6001 = vmul.f32 %v5958, 0.03125
        %v6002 = vmul.f32 %v5961, 0.03125
        %v6003 = vmul.f32 %v5964, 0.03125
        %v6004 = vmul.f32 %v5967, 0.03125
        %v6005 = vmul.f32 %v5970, 0.03125
        %v6006 = vmul.f32 %v5973, 0.03125
        %v6007 = vadd.f32 %v5975, 1e-05
        %v6008 = vadd.f32 %v5976, 1e-05
        %v6009 = vadd.f32 %v5977, 1e-05
        %v6010 = vadd.f32 %v5978, 1e-05
        %v6011 = vadd.f32 %v5979, 1e-05
        %v6012 = vadd.f32 %v5980, 1e-05
        %v6013 = vadd.f32 %v5981, 1e-05
        %v6014 = vadd.f32 %v5982, 1e-05
        %v6015 = vadd.f32 %v5983, 1e-05
        %v6016 = vadd.f32 %v5984, 1e-05
        %v6017 = vadd.f32 %v5985, 1e-05
        %v6018 = vadd.f32 %v5986, 1e-05
        %v6019 = vadd.f32 %v5987, 1e-05
        %v6020 = vadd.f32 %v5988, 1e-05
        %v6021 = vadd.f32 %v5989, 1e-05
        %v6022 = vadd.f32 %v5990, 1e-05
        %v6023 = vadd.f32 %v5991, 1e-05
        %v6024 = vadd.f32 %v5992, 1e-05
        %v6025 = vadd.f32 %v5993, 1e-05
        %v6026 = vadd.f32 %v5994, 1e-05
        %v6027 = vadd.f32 %v5995, 1e-05
        %v6028 = vadd.f32 %v5996, 1e-05
        %v6029 = vadd.f32 %v5997, 1e-05
        %v6030 = vadd.f32 %v5998, 1e-05
        %v6031 = vadd.f32 %v5999, 1e-05
        %v6032 = vadd.f32 %v6000, 1e-05
        %v6033 = vadd.f32 %v6001, 1e-05
        %v6034 = vadd.f32 %v6002, 1e-05
        %v6035 = vadd.f32 %v6003, 1e-05
        %v6036 = vadd.f32 %v6004, 1e-05
        %v6037 = vadd.f32 %v6005, 1e-05
        %v6038 = vadd.f32 %v6006, 1e-05
        %v6039 = vrsqrt.pop %v6007
        %v6040 = vmul.f32 %v6039, %v6007
        %v6041 = vmul.f32 %v6040, %v6039
        %v6042 = vmul.f32 0.5, %v6041
        %v6043 = vsub.f32 1.5, %v6042
        %v6044 = vmul.f32 %v6039, %v6043
        %vm6045 = vweird.f32 %v6007
        %vm6046 = vweird.f32 %v6039
        %vm6047 = vmor %vm6045, %vm6046
        %v6048 = vsel %vm6047, %v6039, %v6044
        %v6049 = vrsqrt.pop %v6008
        %v6050 = vmul.f32 %v6049, %v6008
        %v6051 = vmul.f32 %v6050, %v6049
        %v6052 = vmul.f32 0.5, %v6051
        %v6053 = vsub.f32 1.5, %v6052
        %v6054 = vmul.f32 %v6049, %v6053
        %vm6055 = vweird.f32 %v6008
        %vm6056 = vweird.f32 %v6049
        %vm6057 = vmor %vm6055, %vm6056
        %v6058 = vsel %vm6057, %v6049, %v6054
        %v6059 = vrsqrt.pop %v6009
        %v6060 = vmul.f32 %v6059, %v6009
        %v6061 = vmul.f32 %v6060, %v6059
        %v6062 = vmul.f32 0.5, %v6061
        %v6063 = vsub.f32 1.5, %v6062
        %v6064 = vmul.f32 %v6059, %v6063
        %vm6065 = vweird.f32 %v6009
        %vm6066 = vweird.f32 %v6059
        %vm6067 = vmor %vm6065, %vm6066
        %v6068 = vsel %vm6067, %v6059, %v6064
        %v6069 = vrsqrt.pop %v6010
        %v6070 = vmul.f32 %v6069, %v6010
        %v6071 = vmul.f32 %v6070, %v6069
        %v6072 = vmul.f32 0.5, %v6071
        %v6073 = vsub.f32 1.5, %v6072
        %v6074 = vmul.f32 %v6069, %v6073
        %vm6075 = vweird.f32 %v6010
        %vm6076 = vweird.f32 %v6069
        %vm6077 = vmor %vm6075, %vm6076
        %v6078 = vsel %vm6077, %v6069, %v6074
        %v6079 = vrsqrt.pop %v6011
        %v6080 = vmul.f32 %v6079, %v6011
        %v6081 = vmul.f32 %v6080, %v6079
        %v6082 = vmul.f32 0.5, %v6081
        %v6083 = vsub.f32 1.5, %v6082
        %v6084 = vmul.f32 %v6079, %v6083
        %vm6085 = vweird.f32 %v6011
        %vm6086 = vweird.f32 %v6079
        %vm6087 = vmor %vm6085, %vm6086
        %v6088 = vsel %vm6087, %v6079, %v6084
        %v6089 = vrsqrt.pop %v6012
        %v6090 = vmul.f32 %v6089, %v6012
        %v6091 = vmul.f32 %v6090, %v6089
        %v6092 = vmul.f32 0.5, %v6091
        %v6093 = vsub.f32 1.5, %v6092
        %v6094 = vmul.f32 %v6089, %v6093
        %vm6095 = vweird.f32 %v6012
        %vm6096 = vweird.f32 %v6089
        %vm6097 = vmor %vm6095, %vm6096
        %v6098 = vsel %vm6097, %v6089, %v6094
        %v6099 = vrsqrt.pop %v6013
        %v6100 = vmul.f32 %v6099, %v6013
        %v6101 = vmul.f32 %v6100, %v6099
        %v6102 = vmul.f32 0.5, %v6101
        %v6103 = vsub.f32 1.5, %v6102
        %v6104 = vmul.f32 %v6099, %v6103
        %vm6105 = vweird.f32 %v6013
        %vm6106 = vweird.f32 %v6099
        %vm6107 = vmor %vm6105, %vm6106
        %v6108 = vsel %vm6107, %v6099, %v6104
        %v6109 = vrsqrt.pop %v6014
        %v6110 = vmul.f32 %v6109, %v6014
        %v6111 = vmul.f32 %v6110, %v6109
        %v6112 = vmul.f32 0.5, %v6111
        %v6113 = vsub.f32 1.5, %v6112
        %v6114 = vmul.f32 %v6109, %v6113
        %vm6115 = vweird.f32 %v6014
        %vm6116 = vweird.f32 %v6109
        %vm6117 = vmor %vm6115, %vm6116
        %v6118 = vsel %vm6117, %v6109, %v6114
        %v6119 = vrsqrt.pop %v6015
        %v6120 = vmul.f32 %v6119, %v6015
        %v6121 = vmul.f32 %v6120, %v6119
        %v6122 = vmul.f32 0.5, %v6121
        %v6123 = vsub.f32 1.5, %v6122
        %v6124 = vmul.f32 %v6119, %v6123
        %vm6125 = vweird.f32 %v6015
        %vm6126 = vweird.f32 %v6119
        %vm6127 = vmor %vm6125, %vm6126
        %v6128 = vsel %vm6127, %v6119, %v6124
        %v6129 = vrsqrt.pop %v6016
        %v6130 = vmul.f32 %v6129, %v6016
        %v6131 = vmul.f32 %v6130, %v6129
        %v6132 = vmul.f32 0.5, %v6131
        %v6133 = vsub.f32 1.5, %v6132
        %v6134 = vmul.f32 %v6129, %v6133
        %vm6135 = vweird.f32 %v6016
        %vm6136 = vweird.f32 %v6129
        %vm6137 = vmor %vm6135, %vm6136
        %v6138 = vsel %vm6137, %v6129, %v6134
        %v6139 = vrsqrt.pop %v6017
        %v6140 = vmul.f32 %v6139, %v6017
        %v6141 = vmul.f32 %v6140, %v6139
        %v6142 = vmul.f32 0.5, %v6141
        %v6143 = vsub.f32 1.5, %v6142
        %v6144 = vmul.f32 %v6139, %v6143
        %vm6145 = vweird.f32 %v6017
        %vm6146 = vweird.f32 %v6139
        %vm6147 = vmor %vm6145, %vm6146
        %v6148 = vsel %vm6147, %v6139, %v6144
        %v6149 = vrsqrt.pop %v6018
        %v6150 = vmul.f32 %v6149, %v6018
        %v6151 = vmul.f32 %v6150, %v6149
        %v6152 = vmul.f32 0.5, %v6151
        %v6153 = vsub.f32 1.5, %v6152
        %v6154 = vmul.f32 %v6149, %v6153
        %vm6155 = vweird.f32 %v6018
        %vm6156 = vweird.f32 %v6149
        %vm6157 = vmor %vm6155, %vm6156
        %v6158 = vsel %vm6157, %v6149, %v6154
        %v6159 = vrsqrt.pop %v6019
        %v6160 = vmul.f32 %v6159, %v6019
        %v6161 = vmul.f32 %v6160, %v6159
        %v6162 = vmul.f32 0.5, %v6161
        %v6163 = vsub.f32 1.5, %v6162
        %v6164 = vmul.f32 %v6159, %v6163
        %vm6165 = vweird.f32 %v6019
        %vm6166 = vweird.f32 %v6159
        %vm6167 = vmor %vm6165, %vm6166
        %v6168 = vsel %vm6167, %v6159, %v6164
        %v6169 = vrsqrt.pop %v6020
        %v6170 = vmul.f32 %v6169, %v6020
        %v6171 = vmul.f32 %v6170, %v6169
        %v6172 = vmul.f32 0.5, %v6171
        %v6173 = vsub.f32 1.5, %v6172
        %v6174 = vmul.f32 %v6169, %v6173
        %vm6175 = vweird.f32 %v6020
        %vm6176 = vweird.f32 %v6169
        %vm6177 = vmor %vm6175, %vm6176
        %v6178 = vsel %vm6177, %v6169, %v6174
        %v6179 = vrsqrt.pop %v6021
        %v6180 = vmul.f32 %v6179, %v6021
        %v6181 = vmul.f32 %v6180, %v6179
        %v6182 = vmul.f32 0.5, %v6181
        %v6183 = vsub.f32 1.5, %v6182
        %v6184 = vmul.f32 %v6179, %v6183
        %vm6185 = vweird.f32 %v6021
        %vm6186 = vweird.f32 %v6179
        %vm6187 = vmor %vm6185, %vm6186
        %v6188 = vsel %vm6187, %v6179, %v6184
        %v6189 = vrsqrt.pop %v6022
        %v6190 = vmul.f32 %v6189, %v6022
        %v6191 = vmul.f32 %v6190, %v6189
        %v6192 = vmul.f32 0.5, %v6191
        %v6193 = vsub.f32 1.5, %v6192
        %v6194 = vmul.f32 %v6189, %v6193
        %vm6195 = vweird.f32 %v6022
        %vm6196 = vweird.f32 %v6189
        %vm6197 = vmor %vm6195, %vm6196
        %v6198 = vsel %vm6197, %v6189, %v6194
        %v6199 = vrsqrt.pop %v6023
        %v6200 = vmul.f32 %v6199, %v6023
        %v6201 = vmul.f32 %v6200, %v6199
        %v6202 = vmul.f32 0.5, %v6201
        %v6203 = vsub.f32 1.5, %v6202
        %v6204 = vmul.f32 %v6199, %v6203
        %vm6205 = vweird.f32 %v6023
        %vm6206 = vweird.f32 %v6199
        %vm6207 = vmor %vm6205, %vm6206
        %v6208 = vsel %vm6207, %v6199, %v6204
        %v6209 = vrsqrt.pop %v6024
        %v6210 = vmul.f32 %v6209, %v6024
        %v6211 = vmul.f32 %v6210, %v6209
        %v6212 = vmul.f32 0.5, %v6211
        %v6213 = vsub.f32 1.5, %v6212
        %v6214 = vmul.f32 %v6209, %v6213
        %vm6215 = vweird.f32 %v6024
        %vm6216 = vweird.f32 %v6209
        %vm6217 = vmor %vm6215, %vm6216
        %v6218 = vsel %vm6217, %v6209, %v6214
        %v6219 = vrsqrt.pop %v6025
        %v6220 = vmul.f32 %v6219, %v6025
        %v6221 = vmul.f32 %v6220, %v6219
        %v6222 = vmul.f32 0.5, %v6221
        %v6223 = vsub.f32 1.5, %v6222
        %v6224 = vmul.f32 %v6219, %v6223
        %vm6225 = vweird.f32 %v6025
        %vm6226 = vweird.f32 %v6219
        %vm6227 = vmor %vm6225, %vm6226
        %v6228 = vsel %vm6227, %v6219, %v6224
        %v6229 = vrsqrt.pop %v6026
        %v6230 = vmul.f32 %v6229, %v6026
        %v6231 = vmul.f32 %v6230, %v6229
        %v6232 = vmul.f32 0.5, %v6231
        %v6233 = vsub.f32 1.5, %v6232
        %v6234 = vmul.f32 %v6229, %v6233
        %vm6235 = vweird.f32 %v6026
        %vm6236 = vweird.f32 %v6229
        %vm6237 = vmor %vm6235, %vm6236
        %v6238 = vsel %vm6237, %v6229, %v6234
        %v6239 = vrsqrt.pop %v6027
        %v6240 = vmul.f32 %v6239, %v6027
        %v6241 = vmul.f32 %v6240, %v6239
        %v6242 = vmul.f32 0.5, %v6241
        %v6243 = vsub.f32 1.5, %v6242
        %v6244 = vmul.f32 %v6239, %v6243
        %vm6245 = vweird.f32 %v6027
        %vm6246 = vweird.f32 %v6239
        %vm6247 = vmor %vm6245, %vm6246
        %v6248 = vsel %vm6247, %v6239, %v6244
        %v6249 = vrsqrt.pop %v6028
        %v6250 = vmul.f32 %v6249, %v6028
        %v6251 = vmul.f32 %v6250, %v6249
        %v6252 = vmul.f32 0.5, %v6251
        %v6253 = vsub.f32 1.5, %v6252
        %v6254 = vmul.f32 %v6249, %v6253
        %vm6255 = vweird.f32 %v6028
        %vm6256 = vweird.f32 %v6249
        %vm6257 = vmor %vm6255, %vm6256
        %v6258 = vsel %vm6257, %v6249, %v6254
        %v6259 = vrsqrt.pop %v6029
        %v6260 = vmul.f32 %v6259, %v6029
        %v6261 = vmul.f32 %v6260, %v6259
        %v6262 = vmul.f32 0.5, %v6261
        %v6263 = vsub.f32 1.5, %v6262
        %v6264 = vmul.f32 %v6259, %v6263
        %vm6265 = vweird.f32 %v6029
        %vm6266 = vweird.f32 %v6259
        %vm6267 = vmor %vm6265, %vm6266
        %v6268 = vsel %vm6267, %v6259, %v6264
        %v6269 = vrsqrt.pop %v6030
        %v6270 = vmul.f32 %v6269, %v6030
        %v6271 = vmul.f32 %v6270, %v6269
        %v6272 = vmul.f32 0.5, %v6271
        %v6273 = vsub.f32 1.5, %v6272
        %v6274 = vmul.f32 %v6269, %v6273
        %vm6275 = vweird.f32 %v6030
        %vm6276 = vweird.f32 %v6269
        %vm6277 = vmor %vm6275, %vm6276
        %v6278 = vsel %vm6277, %v6269, %v6274
        %v6279 = vrsqrt.pop %v6031
        %v6280 = vmul.f32 %v6279, %v6031
        %v6281 = vmul.f32 %v6280, %v6279
        %v6282 = vmul.f32 0.5, %v6281
        %v6283 = vsub.f32 1.5, %v6282
        %v6284 = vmul.f32 %v6279, %v6283
        %vm6285 = vweird.f32 %v6031
        %vm6286 = vweird.f32 %v6279
        %vm6287 = vmor %vm6285, %vm6286
        %v6288 = vsel %vm6287, %v6279, %v6284
        %v6289 = vrsqrt.pop %v6032
        %v6290 = vmul.f32 %v6289, %v6032
        %v6291 = vmul.f32 %v6290, %v6289
        %v6292 = vmul.f32 0.5, %v6291
        %v6293 = vsub.f32 1.5, %v6292
        %v6294 = vmul.f32 %v6289, %v6293
        %vm6295 = vweird.f32 %v6032
        %vm6296 = vweird.f32 %v6289
        %vm6297 = vmor %vm6295, %vm6296
        %v6298 = vsel %vm6297, %v6289, %v6294
        %v6299 = vrsqrt.pop %v6033
        %v6300 = vmul.f32 %v6299, %v6033
        %v6301 = vmul.f32 %v6300, %v6299
        %v6302 = vmul.f32 0.5, %v6301
        %v6303 = vsub.f32 1.5, %v6302
        %v6304 = vmul.f32 %v6299, %v6303
        %vm6305 = vweird.f32 %v6033
        %vm6306 = vweird.f32 %v6299
        %vm6307 = vmor %vm6305, %vm6306
        %v6308 = vsel %vm6307, %v6299, %v6304
        %v6309 = vrsqrt.pop %v6034
        %v6310 = vmul.f32 %v6309, %v6034
        %v6311 = vmul.f32 %v6310, %v6309
        %v6312 = vmul.f32 0.5, %v6311
        %v6313 = vsub.f32 1.5, %v6312
        %v6314 = vmul.f32 %v6309, %v6313
        %vm6315 = vweird.f32 %v6034
        %vm6316 = vweird.f32 %v6309
        %vm6317 = vmor %vm6315, %vm6316
        %v6318 = vsel %vm6317, %v6309, %v6314
        %v6319 = vrsqrt.pop %v6035
        %v6320 = vmul.f32 %v6319, %v6035
        %v6321 = vmul.f32 %v6320, %v6319
        %v6322 = vmul.f32 0.5, %v6321
        %v6323 = vsub.f32 1.5, %v6322
        %v6324 = vmul.f32 %v6319, %v6323
        %vm6325 = vweird.f32 %v6035
        %vm6326 = vweird.f32 %v6319
        %vm6327 = vmor %vm6325, %vm6326
        %v6328 = vsel %vm6327, %v6319, %v6324
        %v6329 = vrsqrt.pop %v6036
        %v6330 = vmul.f32 %v6329, %v6036
        %v6331 = vmul.f32 %v6330, %v6329
        %v6332 = vmul.f32 0.5, %v6331
        %v6333 = vsub.f32 1.5, %v6332
        %v6334 = vmul.f32 %v6329, %v6333
        %vm6335 = vweird.f32 %v6036
        %vm6336 = vweird.f32 %v6329
        %vm6337 = vmor %vm6335, %vm6336
        %v6338 = vsel %vm6337, %v6329, %v6334
        %v6339 = vrsqrt.pop %v6037
        %v6340 = vmul.f32 %v6339, %v6037
        %v6341 = vmul.f32 %v6340, %v6339
        %v6342 = vmul.f32 0.5, %v6341
        %v6343 = vsub.f32 1.5, %v6342
        %v6344 = vmul.f32 %v6339, %v6343
        %vm6345 = vweird.f32 %v6037
        %vm6346 = vweird.f32 %v6339
        %vm6347 = vmor %vm6345, %vm6346
        %v6348 = vsel %vm6347, %v6339, %v6344
        %v6349 = vrsqrt.pop %v6038
        %v6350 = vmul.f32 %v6349, %v6038
        %v6351 = vmul.f32 %v6350, %v6349
        %v6352 = vmul.f32 0.5, %v6351
        %v6353 = vsub.f32 1.5, %v6352
        %v6354 = vmul.f32 %v6349, %v6353
        %vm6355 = vweird.f32 %v6038
        %vm6356 = vweird.f32 %v6349
        %vm6357 = vmor %vm6355, %vm6356
        %v6358 = vsel %vm6357, %v6349, %v6354
        %v6359 = vmul.f32 %v5798, %v6048
        %v6360 = vmul.f32 %v5799, %v6058
        %v6361 = vmul.f32 %v5800, %v6068
        %v6362 = vmul.f32 %v5801, %v6078
        %v6363 = vmul.f32 %v5802, %v6088
        %v6364 = vmul.f32 %v5803, %v6098
        %v6365 = vmul.f32 %v5804, %v6108
        %v6366 = vmul.f32 %v5805, %v6118
        %v6367 = vmul.f32 %v5806, %v6128
        %v6368 = vmul.f32 %v5807, %v6138
        %v6369 = vmul.f32 %v5808, %v6148
        %v6370 = vmul.f32 %v5809, %v6158
        %v6371 = vmul.f32 %v5810, %v6168
        %v6372 = vmul.f32 %v5811, %v6178
        %v6373 = vmul.f32 %v5812, %v6188
        %v6374 = vmul.f32 %v5813, %v6198
        %v6375 = vmul.f32 %v5814, %v6208
        %v6376 = vmul.f32 %v5815, %v6218
        %v6377 = vmul.f32 %v5816, %v6228
        %v6378 = vmul.f32 %v5817, %v6238
        %v6379 = vmul.f32 %v5818, %v6248
        %v6380 = vmul.f32 %v5819, %v6258
        %v6381 = vmul.f32 %v5820, %v6268
        %v6382 = vmul.f32 %v5821, %v6278
        %v6383 = vmul.f32 %v5822, %v6288
        %v6384 = vmul.f32 %v5823, %v6298
        %v6385 = vmul.f32 %v5824, %v6308
        %v6386 = vmul.f32 %v5825, %v6318
        %v6387 = vmul.f32 %v5826, %v6328
        %v6388 = vmul.f32 %v5827, %v6338
        %v6389 = vmul.f32 %v5828, %v6348
        %v6390 = vmul.f32 %v5829, %v6358
        %v6391 = vld [vmem:[%s17] sm:$0x1]
        %v6393 = vperm.slane %v6391, 0
        %v6395 = vmul.f32 %v6359, %v6393
        %v6396 = vmul.f32 %v6360, %v6393
        %v6397 = vmul.f32 %v6361, %v6393
        %v6398 = vmul.f32 %v6362, %v6393
        %v6399 = vmul.f32 %v6363, %v6393
        %v6400 = vmul.f32 %v6364, %v6393
        %v6401 = vmul.f32 %v6365, %v6393
        %v6402 = vmul.f32 %v6366, %v6393
        %v6403 = vmul.f32 %v6367, %v6393
        %v6404 = vmul.f32 %v6368, %v6393
        %v6405 = vmul.f32 %v6369, %v6393
        %v6406 = vmul.f32 %v6370, %v6393
        %v6407 = vmul.f32 %v6371, %v6393
        %v6408 = vmul.f32 %v6372, %v6393
        %v6409 = vmul.f32 %v6373, %v6393
        %v6410 = vmul.f32 %v6374, %v6393
        %v6411 = vmul.f32 %v6375, %v6393
        %v6412 = vmul.f32 %v6376, %v6393
        %v6413 = vmul.f32 %v6377, %v6393
        %v6414 = vmul.f32 %v6378, %v6393
        %v6415 = vmul.f32 %v6379, %v6393
        %v6416 = vmul.f32 %v6380, %v6393
        %v6417 = vmul.f32 %v6381, %v6393
        %v6418 = vmul.f32 %v6382, %v6393
        %v6419 = vmul.f32 %v6383, %v6393
        %v6420 = vmul.f32 %v6384, %v6393
        %v6421 = vmul.f32 %v6385, %v6393
        %v6422 = vmul.f32 %v6386, %v6393
        %v6423 = vmul.f32 %v6387, %v6393
        %v6424 = vmul.f32 %v6388, %v6393
        %v6425 = vmul.f32 %v6389, %v6393
        %v6426 = vmul.f32 %v6390, %v6393
        %v6427 = vld [vmem:[%s18] sm:$0x1]
        %v6429 = vperm.slane %v6427, 0
        %v6431 = vadd.f32 %v6395, %v6429
        %v6432 = vadd.f32 %v6396, %v6429
        %v6433 = vadd.f32 %v6397, %v6429
        %v6434 = vadd.f32 %v6398, %v6429
        %v6435 = vadd.f32 %v6399, %v6429
        %v6436 = vadd.f32 %v6400, %v6429
        %v6437 = vadd.f32 %v6401, %v6429
        %v6438 = vadd.f32 %v6402, %v6429
        %v6439 = vadd.f32 %v6403, %v6429
        %v6440 = vadd.f32 %v6404, %v6429
        %v6441 = vadd.f32 %v6405, %v6429
        %v6442 = vadd.f32 %v6406, %v6429
        %v6443 = vadd.f32 %v6407, %v6429
        %v6444 = vadd.f32 %v6408, %v6429
        %v6445 = vadd.f32 %v6409, %v6429
        %v6446 = vadd.f32 %v6410, %v6429
        %v6447 = vadd.f32 %v6411, %v6429
        %v6448 = vadd.f32 %v6412, %v6429
        %v6449 = vadd.f32 %v6413, %v6429
        %v6450 = vadd.f32 %v6414, %v6429
        %v6451 = vadd.f32 %v6415, %v6429
        %v6452 = vadd.f32 %v6416, %v6429
        %v6453 = vadd.f32 %v6417, %v6429
        %v6454 = vadd.f32 %v6418, %v6429
        %v6455 = vadd.f32 %v6419, %v6429
        %v6456 = vadd.f32 %v6420, %v6429
        %v6457 = vadd.f32 %v6421, %v6429
        %v6458 = vadd.f32 %v6422, %v6429
        %v6459 = vadd.f32 %v6423, %v6429
        %v6460 = vadd.f32 %v6424, %v6429
        %v6461 = vadd.f32 %v6425, %v6429
        %v6462 = vadd.f32 %v6426, %v6429
        %v6463 = vmul.f32 %v3606, %v6431
        %v6464 = vmul.f32 %v3621, %v6432
        %v6465 = vmul.f32 %v3636, %v6433
        %v6466 = vmul.f32 %v3651, %v6434
        %v6467 = vmul.f32 %v3666, %v6435
        %v6468 = vmul.f32 %v3681, %v6436
        %v6469 = vmul.f32 %v3696, %v6437
        %v6470 = vmul.f32 %v3711, %v6438
        %v6471 = vmul.f32 %v3726, %v6439
        %v6472 = vmul.f32 %v3741, %v6440
        %v6473 = vmul.f32 %v3756, %v6441
        %v6474 = vmul.f32 %v3771, %v6442
        %v6475 = vmul.f32 %v3786, %v6443
        %v6476 = vmul.f32 %v3801, %v6444
        %v6477 = vmul.f32 %v3816, %v6445
        %v6478 = vmul.f32 %v3831, %v6446
        %v6479 = vmul.f32 %v3846, %v6447
        %v6480 = vmul.f32 %v3861, %v6448
        %v6481 = vmul.f32 %v3876, %v6449
        %v6482 = vmul.f32 %v3891, %v6450
        %v6483 = vmul.f32 %v3906, %v6451
        %v6484 = vmul.f32 %v3921, %v6452
        %v6485 = vmul.f32 %v3936, %v6453
        %v6486 = vmul.f32 %v3951, %v6454
        %v6487 = vmul.f32 %v3966, %v6455
        %v6488 = vmul.f32 %v3981, %v6456
        %v6489 = vmul.f32 %v3996, %v6457
        %v6490 = vmul.f32 %v4011, %v6458
        %v6491 = vmul.f32 %v4026, %v6459
        %v6492 = vmul.f32 %v4041, %v6460
        %v6493 = vmul.f32 %v4056, %v6461
        %v6494 = vmul.f32 %v4071, %v6462
        %6495 = vst [vmem:[%s740] sm:$0xff] %v6463
        %6496 = vst [vmem:[%s740 + $0x8] sm:$0xff] %v6464
        %6497 = vst [vmem:[%s740 + $0x10] sm:$0xff] %v6465
        %6498 = vst [vmem:[%s740 + $0x18] sm:$0xff] %v6466
        %6499 = vst [vmem:[%s740 + $0x20] sm:$0xff] %v6467
        %6500 = vst [vmem:[%s740 + $0x28] sm:$0xff] %v6468
        %6501 = vst [vmem:[%s740 + $0x30] sm:$0xff] %v6469
        %6502 = vst [vmem:[%s740 + $0x38] sm:$0xff] %v6470
        %6503 = vst [vmem:[%s740 + $0x40] sm:$0xff] %v6471
        %6504 = vst [vmem:[%s740 + $0x48] sm:$0xff] %v6472
        %6505 = vst [vmem:[%s740 + $0x50] sm:$0xff] %v6473
        %6506 = vst [vmem:[%s740 + $0x58] sm:$0xff] %v6474
        %6507 = vst [vmem:[%s740 + $0x60] sm:$0xff] %v6475
        %6508 = vst [vmem:[%s740 + $0x68] sm:$0xff] %v6476
        %6509 = vst [vmem:[%s740 + $0x70] sm:$0xff] %v6477
        %6510 = vst [vmem:[%s740 + $0x78] sm:$0xff] %v6478
        %6511 = vst [vmem:[%s740 + $0x80] sm:$0xff] %v6479
        %6512 = vst [vmem:[%s740 + $0x88] sm:$0xff] %v6480
        %6513 = vst [vmem:[%s740 + $0x90] sm:$0xff] %v6481
        %6514 = vst [vmem:[%s740 + $0x98] sm:$0xff] %v6482
        %6515 = vst [vmem:[%s740 + $0xa0] sm:$0xff] %v6483
        %6516 = vst [vmem:[%s740 + $0xa8] sm:$0xff] %v6484
        %6517 = vst [vmem:[%s740 + $0xb0] sm:$0xff] %v6485
        %6518 = vst [vmem:[%s740 + $0xb8] sm:$0xff] %v6486
        %6519 = vst [vmem:[%s740 + $0xc0] sm:$0xff] %v6487
        %6520 = vst [vmem:[%s740 + $0xc8] sm:$0xff] %v6488
        %6521 = vst [vmem:[%s740 + $0xd0] sm:$0xff] %v6489
        %6522 = vst [vmem:[%s740 + $0xd8] sm:$0xff] %v6490
        %6523 = vst [vmem:[%s740 + $0xe0] sm:$0xff] %v6491
        %6524 = vst [vmem:[%s740 + $0xe8] sm:$0xff] %v6492
        %6525 = vst [vmem:[%s740 + $0xf0] sm:$0xff] %v6493
        %6526 = vst [vmem:[%s740 + $0xf8] sm:$0xff] %v6494
        %s6527 = sand.u32 %s493, 1
        %s6528 = scalar_lea.sflag [#allocation4], %s6527
        %s6529 = sand.u32 %s493, 1
        %s6530 = smul.addr %s6529, 256
        %s6531 = scalar_lea.vmem [#allocation13], %s6530
        // Predicated region
        $region129: #{tpu_custom_call.1} parent=103 // pred_check
          %p6532 = pneg %p503
        $region130: #{tpu_custom_call.1} parent=103 // pred_check_branch
          %6534 = sbr.rel (%p6532) target = $region132
        $region131: #{tpu_custom_call.1} parent=103 // pred_region
          %s6535 = smul.u32 32, %s39
          %6537 = vsyncadd %s6528, 0
          %s6538 = smul.addr %s6535, 8
          %s6539 = scalar_lea.hbm %s21, %s6538
          %s6540 = sshll.u32 %s6531, 4
          %s6541 = int_to_ptr.vmem [resolvable:$true] %s6540
          %s6542 = sshll.u32 %s6539, 4
          %s6543 = int_to_ptr.hbm [resolvable:$true] %s6542
          %6548 = dma.vmem_to_hbm [thread:$0]  %s6541, 4096, %s6543, %s6528, 128, 128, 8
        $region132: #{tpu_custom_call.1} parent=103 // pred_fallthru
          _
      $region104: #{tpu_custom_call.1} parent=5 // pred_fallthru
        _
      %p6549 = scmp.le.s32.totalorder 2, %s34
      // Predicated region
      $region133: #{tpu_custom_call.1} parent=5 // pred_check
        %p6550 = pneg %p6549
      $region134: #{tpu_custom_call.1} parent=5 // pred_check_branch
        %6552 = sbr.rel (%p6550) target = $region136
      $region135: #{tpu_custom_call.1} parent=5 // pred_region
        %s6553 = ssub.s32 %s34, 2
        // Predicated region
        $region137: #{tpu_custom_call.1} parent=135 // pred_check
          %p6554 = pneg %p509
        $region138: #{tpu_custom_call.1} parent=135 // pred_check_branch
          %6556 = sbr.rel (%p6554) target = $region140
        $region139: #{tpu_custom_call.1} parent=135 // pred_region
          %s6557 = sand.u32 %s494, 1
          %s6558 = scalar_lea.sflag [#allocation4], %s6557
          %s6559 = sand.u32 %s494, 1
          %s6560 = smul.addr %s6559, 256
          %s6561 = scalar_lea.vmem [#allocation13], %s6560
          %6563 = dma.done %s6558, 4096
        $region140: #{tpu_custom_call.1} parent=135 // pred_fallthru
          _
      $region136: #{tpu_custom_call.1} parent=5 // pred_fallthru
        _
    $region6: #{tpu_custom_call.1} parent=1 // loop_footer
      %s38 = sadd.s32 1, %s34
    $region7: #{tpu_custom_call.1} parent=1 // loop_footer_branch
      %33 = sbr.rel target = $region3
    $region8: #{tpu_custom_call.1} parent=1 // loop_exit
      _
    %6564 = vsyncpa [#allocation3], 1
    %s6565 = scalar_lea.sflag [#allocation3], 1
    %6566 = vsyncpa %s6565, 1
    %6567 = vsyncpa [#allocation6], 1
    %6568 = vsyncpa [#allocation9], 1
    %6569 = vsyncpa [#allocation12], 1
    %6570 = vsyncpa [#allocation4], 1
    %s6571 = scalar_lea.sflag [#allocation4], 1
    %6572 = vsyncpa %s6571, 1

</llo_original>
